<compile_context>
chip_gen: v6e
topology: v6e:2x2x1
jax: 0.10.0
libtpu: 0.0.40
codegen_flags: <defaults>
</compile_context>

<pallas_src>
import numpy as np
import jax
import jax.numpy as jnp
from jax.experimental import pallas as pl
from jax.experimental.pallas import tpu as pltpu

INPUT_SIZE = 300
PADDED_INPUT = 384      # 300 zero-padded up to 3*128 lanes
HIDDEN = 128
NUM_LAYERS = 4


def _vmem():
    return pl.BlockSpec(memory_space=pltpu.MemorySpace.VMEM)


def fused_lstm_kernel(x_ref, h0_ref, c0_ref,
                      wih0_ref, whh0_ref,
                      wf1_ref, wf2_ref, wf3_ref,
                      b_ref, fcw_ref, fcb_ref,
                      hN_ref, cN_ref, out_ref):
    """Wavefronted 4-layer LSTM + FC/sigmoid head, fully VMEM-resident.

    x_ref   : (T*B, 384) bf16  flattened, zero-padded layer-0 input (row = t*B + b)
    h0/c0   : (L, B, H) f32 initial states
    wih0    : (384, 4H) bf16   layer-0 input weights  (g-gate columns pre-scaled by 2)
    whh0    : (H,   4H) bf16   layer-0 recurrent weights (g cols x2)
    wf1..3  : (2H,  4H) bf16   fused [W_hh_l ; W_ih_l] per layer (g cols x2)
    b_ref   : (L, 1, 4H) f32   combined b_ih + b_hh per layer (g slice x2)
    fcw/fcb : (1, H) / (1, 1) f32
    hN/cN   : (L, B, H) f32 final states
    out     : (1, 1) f32 = sigmoid(fc(h_top[T-1, B-1]))
    """
    B = h0_ref.shape[1]
    H = h0_ref.shape[2]
    G4 = 4 * H
    T = x_ref.shape[0] // B
    L = NUM_LAYERS

    # Hoisted layer-0 input projection: ONE (T*B, 384) @ (384, 4H) bf16 MXU matmul,
    # off the per-wave recurrence chain (bias is added with the stacked bias below).
    gx0 = jnp.dot(x_ref[...], wih0_ref[...], preferred_element_type=jnp.float32)

    # Per-layer biases broadcast to (B, 4H) rows, stacked once (hoisted out of the loop).
    bias_full = jnp.concatenate(
        [jnp.broadcast_to(b_ref[l], (B, G4)) for l in range(L)], axis=0)   # (L*B, 4H)

    wf_refs = (None, wf1_ref, wf2_ref, wf3_ref)

    # h/c states live as f32 SSA values (no scratch traffic on the critical path).
    h = [h0_ref[l] for l in range(L)]
    c = [c0_ref[l] for l in range(L)]

    # Wavefront: wave w runs (layer l, step t = w - l).  All layers active in a wave read
    # only wave w-1 results, so their matmuls are data-independent and overlap on the MXU.
    for w in range(T + L - 1):
        lo = max(0, w - (T - 1))
        hi = min(L - 1, w)

        # --- Independent per-layer matmuls (read only previous-wave h values). ---
        mms = []
        for l in range(lo, hi + 1):
            t = w - l
            if l == 0:
                mm = jnp.dot(h[0].astype(jnp.bfloat16), whh0_ref[...],
                             preferred_element_type=jnp.float32)
                mm = mm + gx0[t * B:(t + 1) * B, :]
            else:
                # Fused input+recurrent projection: [h_l, h_{l-1}] @ [W_hh_l ; W_ih_l].
                lhs = jnp.concatenate([h[l], h[l - 1]], axis=1).astype(jnp.bfloat16)
                mm = jnp.dot(lhs, wf_refs[l][...],
                             preferred_element_type=jnp.float32)
            mms.append(mm)

        # --- Stacked gate math on full (nact*B, 4H) sublane blocks. ---
        gates = jnp.concatenate(mms, axis=0) + bias_full[lo * B:(hi + 1) * B, :]
        c_old = jnp.concatenate([c[l] for l in range(lo, hi + 1)], axis=0)

        # Single sigmoid over all 4 gate blocks; g-gate pre-activations were pre-scaled
        # by 2 in the weights/bias, so tanh(pre_g) == 2*sigmoid(2*pre_g) - 1.
        s = jax.nn.sigmoid(gates)
        i_g = s[:, 0:H]
        f_g = s[:, H:2 * H]
        g_g = 2.0 * s[:, 2 * H:3 * H] - 1.0
        o_g = s[:, 3 * H:4 * H]

        c_new = f_g * c_old + i_g * g_g
        h_new = o_g * jnp.tanh(c_new)

        for idx, l in enumerate(range(lo, hi + 1)):
            h[l] = h_new[idx * B:(idx + 1) * B, :]
            c[l] = c_new[idx * B:(idx + 1) * B, :]

    for l in range(L):
        hN_ref[l] = h[l]
        cN_ref[l] = c[l]

    # --- FC + sigmoid head. out.view(-1,1)[-1] of the original module depends only on
    #     the TOP layer's hidden state at (t = T-1, batch = B-1); if the output semantics
    #     or batching ever change, this row selection must be revisited. ---
    h_last = h[L - 1][B - 1:B, :]                                   # (1, H)
    z = jnp.sum(h_last * fcw_ref[...], axis=1, keepdims=True) + fcb_ref[...]
    out_ref[...] = jax.nn.sigmoid(z)


def _scale_g_gate(a):
    """Double the g-gate block (columns 2H:3H, PyTorch gate order i,f,g,o) of (..., 4H)."""
    return jnp.concatenate(
        [a[..., :2 * HIDDEN], 2.0 * a[..., 2 * HIDDEN:3 * HIDDEN], a[..., 3 * HIDDEN:]],
        axis=-1)


def prepare_kernel_weights(params):
    """One-time host-side weight prep (kept OFF the per-call path):
    pad layer-0 W_ih to 384, fuse [W_hh; W_ih] for layers 1..3, scale g-gate columns and
    bias by 2 (for the single-sigmoid trick), cast matmul operands to bf16."""
    lst = params["lstm"]

    wih0_t, whh0_t, _ = lst[0]
    wih0 = jnp.pad(wih0_t, ((0, PADDED_INPUT - wih0_t.shape[0]), (0, 0)))
    wih0 = _scale_g_gate(wih0).astype(jnp.bfloat16)                  # (384, 4H)
    whh0 = _scale_g_gate(whh0_t).astype(jnp.bfloat16)                # (H, 4H)

    wf = []
    for l in range(1, NUM_LAYERS):
        wih_t, whh_t, _ = lst[l]
        wf_l = jnp.concatenate([whh_t, wih_t], axis=0)               # rows 0:H -> h_l, H:2H -> y_{l-1}
        wf.append(_scale_g_gate(wf_l).astype(jnp.bfloat16))          # (2H, 4H)

    b_all = jnp.stack([_scale_g_gate(lst[l][2]) for l in range(NUM_LAYERS)], axis=0)  # (L,1,4H) f32

    return {"wih0": wih0, "whh0": whh0, "wf": tuple(wf), "b": b_all,
            "fcw": params["fc_w_t"].T,                               # (1, H)
            "fcb": params["fc_b"]}                                   # (1, 1)


def lstm_forward(kw, x, hidden):
    """Matches LSTM.forward(x, hidden): returns (sigmoid(fc(out)).view(-1,1)[-1], (h_n, c_n))."""
    h0, c0 = hidden
    T, B, D = x.shape
    H = HIDDEN

    # Layer-0 input: zero-pad 300 -> 384 features, flatten (T, B) -> rows, cast to bf16.
    x_flat = jnp.pad(x, ((0, 0), (0, 0), (0, PADDED_INPUT - D)))
    x_flat = x_flat.reshape(T * B, PADDED_INPUT).astype(jnp.bfloat16)

    h_n, c_n, out = pl.pallas_call(
        fused_lstm_kernel,
        out_shape=(jax.ShapeDtypeStruct((NUM_LAYERS, B, H), jnp.float32),
                   jax.ShapeDtypeStruct((NUM_LAYERS, B, H), jnp.float32),
                   jax.ShapeDtypeStruct((1, 1), jnp.float32)),
        in_specs=[_vmem()] * 11,
        out_specs=(_vmem(), _vmem(), _vmem()),
    )(x_flat, h0, c0,
      kw["wih0"], kw["whh0"], kw["wf"][0], kw["wf"][1], kw["wf"][2],
      kw["b"], kw["fcw"], kw["fcb"])

    return out.reshape(1), (h_n, c_n)


def init_params(key):
    """Deterministic init mimicking PyTorch's uniform(-1/sqrt(H), 1/sqrt(H)); weights pre-transposed."""
    stdv = 1.0 / np.sqrt(HIDDEN)
    lstm = []
    for l in range(NUM_LAYERS):
        d_in = INPUT_SIZE if l == 0 else HIDDEN
        key, k1, k2, k3, k4 = jax.random.split(key, 5)
        w_ih = jax.random.uniform(k1, (4 * HIDDEN, d_in), jnp.float32, -stdv, stdv)
        w_hh = jax.random.uniform(k2, (4 * HIDDEN, HIDDEN), jnp.float32, -stdv, stdv)
        b_ih = jax.random.uniform(k3, (4 * HIDDEN,), jnp.float32, -stdv, stdv)
        b_hh = jax.random.uniform(k4, (4 * HIDDEN,), jnp.float32, -stdv, stdv)
        lstm.append((w_ih.T, w_hh.T, (b_ih + b_hh).reshape(1, 4 * HIDDEN)))
    key, k1, k2 = jax.random.split(key, 3)
    fc_w = jax.random.uniform(k1, (1, HIDDEN), jnp.float32, -stdv, stdv)
    fc_b = jax.random.uniform(k2, (1,), jnp.float32, -stdv, stdv)
    return {"lstm": lstm, "fc_w_t": fc_w.T, "fc_b": fc_b.reshape(1, 1)}


def _matmul_f32(a, b):
    return jnp.dot(a, b, preferred_element_type=jnp.float32)


def _matmul_bf16(a, b):
    # Same precision model as the kernel: bf16 operands, f32 MXU accumulation.
    return jnp.dot(a.astype(jnp.bfloat16), b.astype(jnp.bfloat16),
                   preferred_element_type=jnp.float32)


def reference_forward(params, x, hidden, matmul=_matmul_f32):
    """Pure-JAX reference mirroring the PyTorch module (matmul precision is pluggable)."""
    h0, c0 = hidden
    T, B, _ = x.shape
    layer_in = x
    hs, cs = [], []
    for l in range(NUM_LAYERS):
        wih_t, whh_t, b = params["lstm"][l]
        d_in = wih_t.shape[0]
        gx = (matmul(layer_in.reshape(T * B, d_in), wih_t) + b).reshape(T, B, 4 * HIDDEN)
        h, c = h0[l], c0[l]
        ys = []
        for t in range(T):
            gates = gx[t] + matmul(h, whh_t)
            i = jax.nn.sigmoid(gates[:, :HIDDEN])
            f = jax.nn.sigmoid(gates[:, HIDDEN:2 * HIDDEN])
            g = jnp.tanh(gates[:, 2 * HIDDEN:3 * HIDDEN])
            o = jax.nn.sigmoid(gates[:, 3 * HIDDEN:])
            c = f * c + i * g
            h = o * jnp.tanh(c)
            ys.append(h)
        layer_in = jnp.stack(ys)
        hs.append(h)
        cs.append(c)
    out = jax.nn.sigmoid(layer_in.reshape(T * B, HIDDEN) @ params["fc_w_t"]
                         + params["fc_b"])
    return out[-1], (jnp.stack(hs), jnp.stack(cs))


if __name__ == "__main__":
    SEQ, BATCH = 8, 2

    key = jax.random.PRNGKey(0)
    key, kp, kx, kh, kc = jax.random.split(key, 5)
    params = init_params(kp)
    kernel_weights = prepare_kernel_weights(params)   # one-time prep, off the hot path

    x = jax.random.normal(kx, (SEQ, BATCH, INPUT_SIZE), jnp.float32)
    h0 = jax.random.normal(kh, (NUM_LAYERS, BATCH, HIDDEN), jnp.float32) * 0.1
    c0 = jax.random.normal(kc, (NUM_LAYERS, BATCH, HIDDEN), jnp.float32) * 0.1

    fwd = jax.jit(lstm_forward)
    out, (h_n, c_n) = fwd(kernel_weights, x, (h0, c0))
    out = jax.block_until_ready(out)
    h_n = jax.block_until_ready(h_n)
    c_n = jax.block_until_ready(c_n)

    # Primary check: reference using the kernel's precision model (bf16 matmul operands,
    # f32 accumulation) -- tight agreement expected.
    ref_out, (ref_h, ref_c) = reference_forward(params, x, (h0, c0), matmul=_matmul_bf16)
    np.testing.assert_allclose(np.asarray(out), np.asarray(ref_out), rtol=2e-3, atol=2e-3)
    np.testing.assert_allclose(np.asarray(h_n), np.asarray(ref_h), rtol=2e-3, atol=2e-3)
    np.testing.assert_allclose(np.asarray(c_n), np.asarray(ref_c), rtol=2e-3, atol=2e-3)

    # Sanity check vs. a full-f32 reference (bf16 matmul operands trade a little accuracy
    # for much lower MXU latency on the serial recurrence chain).
    f32_out, (f32_h, f32_c) = reference_forward(params, x, (h0, c0), matmul=_matmul_f32)
    np.testing.assert_allclose(np.asarray(out), np.asarray(f32_out), rtol=5e-2, atol=5e-2)
    np.testing.assert_allclose(np.asarray(h_n), np.asarray(f32_h), rtol=5e-2, atol=5e-2)
    np.testing.assert_allclose(np.asarray(c_n), np.asarray(f32_c), rtol=5e-2, atol=5e-2)

    print("KERNEL_OK")
</pallas_src>

<mosaic_0001>
module attributes {stable_mosaic.version = 11 : i64} {
  func.func @fused_lstm_kernel(%arg0: memref<16x384xbf16, #tpu.memory_space<vmem>>, %arg1: memref<4x2x128xf32, #tpu.memory_space<vmem>>, %arg2: memref<4x2x128xf32, #tpu.memory_space<vmem>>, %arg3: memref<384x512xbf16, #tpu.memory_space<vmem>>, %arg4: memref<128x512xbf16, #tpu.memory_space<vmem>>, %arg5: memref<256x512xbf16, #tpu.memory_space<vmem>>, %arg6: memref<256x512xbf16, #tpu.memory_space<vmem>>, %arg7: memref<256x512xbf16, #tpu.memory_space<vmem>>, %arg8: memref<4x1x512xf32, #tpu.memory_space<vmem>>, %arg9: memref<1x128xf32, #tpu.memory_space<vmem>>, %arg10: memref<1x1xf32, #tpu.memory_space<vmem>>, %arg11: memref<4x2x128xf32, #tpu.memory_space<vmem>>, %arg12: memref<4x2x128xf32, #tpu.memory_space<vmem>>, %arg13: memref<1x1xf32, #tpu.memory_space<vmem>>) attributes {dimension_semantics = [], scalar_prefetch = 0 : i64, scratch_operands = 0 : i64, tpu.core_type = #tpu.core_type<tc>} {
    %c0 = arith.constant 0 : index
    %c0_0 = arith.constant 0 : index
    %0 = vector.load %arg0[%c0, %c0_0] : memref<16x384xbf16, #tpu.memory_space<vmem>>, vector<16x384xbf16>
    %c0_1 = arith.constant 0 : index
    %c0_2 = arith.constant 0 : index
    %1 = vector.load %arg3[%c0_1, %c0_2] : memref<384x512xbf16, #tpu.memory_space<vmem>>, vector<384x512xbf16>
    %cst = arith.constant dense<0.000000e+00> : vector<16x512xf32>
    %2 = tpu.matmul %0, %1, %cst {dimension_numbers = #tpu.dot_dimension_numbers<[1], [0], [0], [1], [0, 0, 1, 1], [], []>} : vector<16x384xbf16>, vector<384x512xbf16>, vector<16x512xf32> -> vector<16x512xf32>
    %c0_3 = arith.constant 0 : index
    %c0_4 = arith.constant 0 : index
    %c0_5 = arith.constant 0 : index
    %3 = vector.load %arg8[%c0_3, %c0_4, %c0_5] : memref<4x1x512xf32, #tpu.memory_space<vmem>>, vector<1x1x512xf32>
    %4 = vector.shape_cast %3 : vector<1x1x512xf32> to vector<1x512xf32>
    %5 = vector.shape_cast %4 : vector<1x512xf32> to vector<1x512xf32>
    %6 = vector.broadcast %5 : vector<1x512xf32> to vector<2x512xf32>
    %c1 = arith.constant 1 : index
    %c0_6 = arith.constant 0 : index
    %c0_7 = arith.constant 0 : index
    %7 = vector.load %arg8[%c1, %c0_6, %c0_7] : memref<4x1x512xf32, #tpu.memory_space<vmem>>, vector<1x1x512xf32>
    %8 = vector.shape_cast %7 : vector<1x1x512xf32> to vector<1x512xf32>
    %9 = vector.shape_cast %8 : vector<1x512xf32> to vector<1x512xf32>
    %10 = vector.broadcast %9 : vector<1x512xf32> to vector<2x512xf32>
    %c2 = arith.constant 2 : index
    %c0_8 = arith.constant 0 : index
    %c0_9 = arith.constant 0 : index
    %11 = vector.load %arg8[%c2, %c0_8, %c0_9] : memref<4x1x512xf32, #tpu.memory_space<vmem>>, vector<1x1x512xf32>
    %12 = vector.shape_cast %11 : vector<1x1x512xf32> to vector<1x512xf32>
    %13 = vector.shape_cast %12 : vector<1x512xf32> to vector<1x512xf32>
    %14 = vector.broadcast %13 : vector<1x512xf32> to vector<2x512xf32>
    %c3 = arith.constant 3 : index
    %c0_10 = arith.constant 0 : index
    %c0_11 = arith.constant 0 : index
    %15 = vector.load %arg8[%c3, %c0_10, %c0_11] : memref<4x1x512xf32, #tpu.memory_space<vmem>>, vector<1x1x512xf32>
    %16 = vector.shape_cast %15 : vector<1x1x512xf32> to vector<1x512xf32>
    %17 = vector.shape_cast %16 : vector<1x512xf32> to vector<1x512xf32>
    %18 = vector.broadcast %17 : vector<1x512xf32> to vector<2x512xf32>
    %19 = tpu.concatenate %6, %10, %14, %18 in 0 : vector<2x512xf32>, vector<2x512xf32>, vector<2x512xf32>, vector<2x512xf32> -> vector<8x512xf32>
    %c0_12 = arith.constant 0 : index
    %c0_13 = arith.constant 0 : index
    %c0_14 = arith.constant 0 : index
    %20 = vector.load %arg1[%c0_12, %c0_13, %c0_14] : memref<4x2x128xf32, #tpu.memory_space<vmem>>, vector<1x2x128xf32>
    %21 = vector.shape_cast %20 : vector<1x2x128xf32> to vector<2x128xf32>
    %c1_15 = arith.constant 1 : index
    %c0_16 = arith.constant 0 : index
    %c0_17 = arith.constant 0 : index
    %22 = vector.load %arg1[%c1_15, %c0_16, %c0_17] : memref<4x2x128xf32, #tpu.memory_space<vmem>>, vector<1x2x128xf32>
    %23 = vector.shape_cast %22 : vector<1x2x128xf32> to vector<2x128xf32>
    %c2_18 = arith.constant 2 : index
    %c0_19 = arith.constant 0 : index
    %c0_20 = arith.constant 0 : index
    %24 = vector.load %arg1[%c2_18, %c0_19, %c0_20] : memref<4x2x128xf32, #tpu.memory_space<vmem>>, vector<1x2x128xf32>
    %25 = vector.shape_cast %24 : vector<1x2x128xf32> to vector<2x128xf32>
    %c3_21 = arith.constant 3 : index
    %c0_22 = arith.constant 0 : index
    %c0_23 = arith.constant 0 : index
    %26 = vector.load %arg1[%c3_21, %c0_22, %c0_23] : memref<4x2x128xf32, #tpu.memory_space<vmem>>, vector<1x2x128xf32>
    %27 = vector.shape_cast %26 : vector<1x2x128xf32> to vector<2x128xf32>
    %c0_24 = arith.constant 0 : index
    %c0_25 = arith.constant 0 : index
    %c0_26 = arith.constant 0 : index
    %28 = vector.load %arg2[%c0_24, %c0_25, %c0_26] : memref<4x2x128xf32, #tpu.memory_space<vmem>>, vector<1x2x128xf32>
    %29 = vector.shape_cast %28 : vector<1x2x128xf32> to vector<2x128xf32>
    %c1_27 = arith.constant 1 : index
    %c0_28 = arith.constant 0 : index
    %c0_29 = arith.constant 0 : index
    %30 = vector.load %arg2[%c1_27, %c0_28, %c0_29] : memref<4x2x128xf32, #tpu.memory_space<vmem>>, vector<1x2x128xf32>
    %31 = vector.shape_cast %30 : vector<1x2x128xf32> to vector<2x128xf32>
    %c2_30 = arith.constant 2 : index
    %c0_31 = arith.constant 0 : index
    %c0_32 = arith.constant 0 : index
    %32 = vector.load %arg2[%c2_30, %c0_31, %c0_32] : memref<4x2x128xf32, #tpu.memory_space<vmem>>, vector<1x2x128xf32>
    %33 = vector.shape_cast %32 : vector<1x2x128xf32> to vector<2x128xf32>
    %c3_33 = arith.constant 3 : index
    %c0_34 = arith.constant 0 : index
    %c0_35 = arith.constant 0 : index
    %34 = vector.load %arg2[%c3_33, %c0_34, %c0_35] : memref<4x2x128xf32, #tpu.memory_space<vmem>>, vector<1x2x128xf32>
    %35 = vector.shape_cast %34 : vector<1x2x128xf32> to vector<2x128xf32>
    %36 = arith.truncf %21 : vector<2x128xf32> to vector<2x128xbf16>
    %c0_36 = arith.constant 0 : index
    %c0_37 = arith.constant 0 : index
    %37 = vector.load %arg4[%c0_36, %c0_37] : memref<128x512xbf16, #tpu.memory_space<vmem>>, vector<128x512xbf16>
    %cst_38 = arith.constant dense<0.000000e+00> : vector<2x512xf32>
    %38 = tpu.matmul %36, %37, %cst_38 {dimension_numbers = #tpu.dot_dimension_numbers<[1], [0], [0], [1], [0, 0, 1, 1], [], []>} : vector<2x128xbf16>, vector<128x512xbf16>, vector<2x512xf32> -> vector<2x512xf32>
    %39 = vector.extract_strided_slice %2 {offsets = [0, 0], sizes = [2, 512], strides = [1, 1]} : vector<16x512xf32> to vector<2x512xf32>
    %40 = arith.addf %38, %39 : vector<2x512xf32>
    %41 = vector.extract_strided_slice %19 {offsets = [0, 0], sizes = [2, 512], strides = [1, 1]} : vector<8x512xf32> to vector<2x512xf32>
    %42 = arith.addf %40, %41 : vector<2x512xf32>
    %43 = arith.negf %42 : vector<2x512xf32>
    %44 = math.exp %43 : vector<2x512xf32>
    %cst_39 = arith.constant 1.000000e+00 : f32
    %45 = vector.broadcast %cst_39 : f32 to vector<2x512xf32>
    %46 = arith.addf %45, %44 : vector<2x512xf32>
    %47 = arith.divf %45, %46 : vector<2x512xf32>
    %48 = vector.extract_strided_slice %47 {offsets = [0, 0], sizes = [2, 128], strides = [1, 1]} : vector<2x512xf32> to vector<2x128xf32>
    %49 = vector.extract_strided_slice %47 {offsets = [0, 128], sizes = [2, 128], strides = [1, 1]} : vector<2x512xf32> to vector<2x128xf32>
    %50 = vector.extract_strided_slice %47 {offsets = [0, 256], sizes = [2, 128], strides = [1, 1]} : vector<2x512xf32> to vector<2x128xf32>
    %cst_40 = arith.constant 2.000000e+00 : f32
    %51 = vector.broadcast %cst_40 : f32 to vector<2x128xf32>
    %52 = arith.mulf %51, %50 : vector<2x128xf32>
    %cst_41 = arith.constant 1.000000e+00 : f32
    %53 = vector.broadcast %cst_41 : f32 to vector<2x128xf32>
    %54 = arith.subf %52, %53 : vector<2x128xf32>
    %55 = vector.extract_strided_slice %47 {offsets = [0, 384], sizes = [2, 128], strides = [1, 1]} : vector<2x512xf32> to vector<2x128xf32>
    %56 = arith.mulf %49, %29 : vector<2x128xf32>
    %57 = arith.mulf %48, %54 : vector<2x128xf32>
    %58 = arith.addf %56, %57 : vector<2x128xf32>
    %59 = math.tanh %58 : vector<2x128xf32>
    %60 = arith.mulf %55, %59 : vector<2x128xf32>
    %61 = arith.truncf %60 : vector<2x128xf32> to vector<2x128xbf16>
    %c0_42 = arith.constant 0 : index
    %c0_43 = arith.constant 0 : index
    %62 = vector.load %arg4[%c0_42, %c0_43] : memref<128x512xbf16, #tpu.memory_space<vmem>>, vector<128x512xbf16>
    %cst_44 = arith.constant dense<0.000000e+00> : vector<2x512xf32>
    %63 = tpu.matmul %61, %62, %cst_44 {dimension_numbers = #tpu.dot_dimension_numbers<[1], [0], [0], [1], [0, 0, 1, 1], [], []>} : vector<2x128xbf16>, vector<128x512xbf16>, vector<2x512xf32> -> vector<2x512xf32>
    %64 = vector.extract_strided_slice %2 {offsets = [2, 0], sizes = [2, 512], strides = [1, 1]} : vector<16x512xf32> to vector<2x512xf32>
    %65 = arith.addf %63, %64 : vector<2x512xf32>
    %66 = tpu.concatenate %23, %60 in 1 : vector<2x128xf32>, vector<2x128xf32> -> vector<2x256xf32>
    %67 = arith.truncf %66 : vector<2x256xf32> to vector<2x256xbf16>
    %c0_45 = arith.constant 0 : index
    %c0_46 = arith.constant 0 : index
    %68 = vector.load %arg5[%c0_45, %c0_46] : memref<256x512xbf16, #tpu.memory_space<vmem>>, vector<256x512xbf16>
    %cst_47 = arith.constant dense<0.000000e+00> : vector<2x512xf32>
    %69 = tpu.matmul %67, %68, %cst_47 {dimension_numbers = #tpu.dot_dimension_numbers<[1], [0], [0], [1], [0, 0, 1, 1], [], []>} : vector<2x256xbf16>, vector<256x512xbf16>, vector<2x512xf32> -> vector<2x512xf32>
    %70 = tpu.concatenate %65, %69 in 0 : vector<2x512xf32>, vector<2x512xf32> -> vector<4x512xf32>
    %71 = vector.extract_strided_slice %19 {offsets = [0, 0], sizes = [4, 512], strides = [1, 1]} : vector<8x512xf32> to vector<4x512xf32>
    %72 = arith.addf %70, %71 : vector<4x512xf32>
    %73 = tpu.concatenate %58, %31 in 0 : vector<2x128xf32>, vector<2x128xf32> -> vector<4x128xf32>
    %74 = arith.negf %72 : vector<4x512xf32>
    %75 = math.exp %74 : vector<4x512xf32>
    %cst_48 = arith.constant 1.000000e+00 : f32
    %76 = vector.broadcast %cst_48 : f32 to vector<4x512xf32>
    %77 = arith.addf %76, %75 : vector<4x512xf32>
    %78 = arith.divf %76, %77 : vector<4x512xf32>
    %79 = vector.extract_strided_slice %78 {offsets = [0, 0], sizes = [4, 128], strides = [1, 1]} : vector<4x512xf32> to vector<4x128xf32>
    %80 = vector.extract_strided_slice %78 {offsets = [0, 128], sizes = [4, 128], strides = [1, 1]} : vector<4x512xf32> to vector<4x128xf32>
    %81 = vector.extract_strided_slice %78 {offsets = [0, 256], sizes = [4, 128], strides = [1, 1]} : vector<4x512xf32> to vector<4x128xf32>
    %cst_49 = arith.constant 2.000000e+00 : f32
    %82 = vector.broadcast %cst_49 : f32 to vector<4x128xf32>
    %83 = arith.mulf %82, %81 : vector<4x128xf32>
    %cst_50 = arith.constant 1.000000e+00 : f32
    %84 = vector.broadcast %cst_50 : f32 to vector<4x128xf32>
    %85 = arith.subf %83, %84 : vector<4x128xf32>
    %86 = vector.extract_strided_slice %78 {offsets = [0, 384], sizes = [4, 128], strides = [1, 1]} : vector<4x512xf32> to vector<4x128xf32>
    %87 = arith.mulf %80, %73 : vector<4x128xf32>
    %88 = arith.mulf %79, %85 : vector<4x128xf32>
    %89 = arith.addf %87, %88 : vector<4x128xf32>
    %90 = math.tanh %89 : vector<4x128xf32>
    %91 = arith.mulf %86, %90 : vector<4x128xf32>
    %92 = vector.extract_strided_slice %91 {offsets = [0, 0], sizes = [2, 128], strides = [1, 1]} : vector<4x128xf32> to vector<2x128xf32>
    %93 = vector.extract_strided_slice %89 {offsets = [0, 0], sizes = [2, 128], strides = [1, 1]} : vector<4x128xf32> to vector<2x128xf32>
    %94 = vector.extract_strided_slice %91 {offsets = [2, 0], sizes = [2, 128], strides = [1, 1]} : vector<4x128xf32> to vector<2x128xf32>
    %95 = vector.extract_strided_slice %89 {offsets = [2, 0], sizes = [2, 128], strides = [1, 1]} : vector<4x128xf32> to vector<2x128xf32>
    %96 = arith.truncf %92 : vector<2x128xf32> to vector<2x128xbf16>
    %c0_51 = arith.constant 0 : index
    %c0_52 = arith.constant 0 : index
    %97 = vector.load %arg4[%c0_51, %c0_52] : memref<128x512xbf16, #tpu.memory_space<vmem>>, vector<128x512xbf16>
    %cst_53 = arith.constant dense<0.000000e+00> : vector<2x512xf32>
    %98 = tpu.matmul %96, %97, %cst_53 {dimension_numbers = #tpu.dot_dimension_numbers<[1], [0], [0], [1], [0, 0, 1, 1], [], []>} : vector<2x128xbf16>, vector<128x512xbf16>, vector<2x512xf32> -> vector<2x512xf32>
    %99 = vector.extract_strided_slice %2 {offsets = [4, 0], sizes = [2, 512], strides = [1, 1]} : vector<16x512xf32> to vector<2x512xf32>
    %100 = arith.addf %98, %99 : vector<2x512xf32>
    %101 = tpu.concatenate %94, %92 in 1 : vector<2x128xf32>, vector<2x128xf32> -> vector<2x256xf32>
    %102 = arith.truncf %101 : vector<2x256xf32> to vector<2x256xbf16>
    %c0_54 = arith.constant 0 : index
    %c0_55 = arith.constant 0 : index
    %103 = vector.load %arg5[%c0_54, %c0_55] : memref<256x512xbf16, #tpu.memory_space<vmem>>, vector<256x512xbf16>
    %cst_56 = arith.constant dense<0.000000e+00> : vector<2x512xf32>
    %104 = tpu.matmul %102, %103, %cst_56 {dimension_numbers = #tpu.dot_dimension_numbers<[1], [0], [0], [1], [0, 0, 1, 1], [], []>} : vector<2x256xbf16>, vector<256x512xbf16>, vector<2x512xf32> -> vector<2x512xf32>
    %105 = tpu.concatenate %25, %94 in 1 : vector<2x128xf32>, vector<2x128xf32> -> vector<2x256xf32>
    %106 = arith.truncf %105 : vector<2x256xf32> to vector<2x256xbf16>
    %c0_57 = arith.constant 0 : index
    %c0_58 = arith.constant 0 : index
    %107 = vector.load %arg6[%c0_57, %c0_58] : memref<256x512xbf16, #tpu.memory_space<vmem>>, vector<256x512xbf16>
    %cst_59 = arith.constant dense<0.000000e+00> : vector<2x512xf32>
    %108 = tpu.matmul %106, %107, %cst_59 {dimension_numbers = #tpu.dot_dimension_numbers<[1], [0], [0], [1], [0, 0, 1, 1], [], []>} : vector<2x256xbf16>, vector<256x512xbf16>, vector<2x512xf32> -> vector<2x512xf32>
    %109 = tpu.concatenate %100, %104, %108 in 0 : vector<2x512xf32>, vector<2x512xf32>, vector<2x512xf32> -> vector<6x512xf32>
    %110 = vector.extract_strided_slice %19 {offsets = [0, 0], sizes = [6, 512], strides = [1, 1]} : vector<8x512xf32> to vector<6x512xf32>
    %111 = arith.addf %109, %110 : vector<6x512xf32>
    %112 = tpu.concatenate %93, %95, %33 in 0 : vector<2x128xf32>, vector<2x128xf32>, vector<2x128xf32> -> vector<6x128xf32>
    %113 = arith.negf %111 : vector<6x512xf32>
    %114 = math.exp %113 : vector<6x512xf32>
    %cst_60 = arith.constant 1.000000e+00 : f32
    %115 = vector.broadcast %cst_60 : f32 to vector<6x512xf32>
    %116 = arith.addf %115, %114 : vector<6x512xf32>
    %117 = arith.divf %115, %116 : vector<6x512xf32>
    %118 = vector.extract_strided_slice %117 {offsets = [0, 0], sizes = [6, 128], strides = [1, 1]} : vector<6x512xf32> to vector<6x128xf32>
    %119 = vector.extract_strided_slice %117 {offsets = [0, 128], sizes = [6, 128], strides = [1, 1]} : vector<6x512xf32> to vector<6x128xf32>
    %120 = vector.extract_strided_slice %117 {offsets = [0, 256], sizes = [6, 128], strides = [1, 1]} : vector<6x512xf32> to vector<6x128xf32>
    %cst_61 = arith.constant 2.000000e+00 : f32
    %121 = vector.broadcast %cst_61 : f32 to vector<6x128xf32>
    %122 = arith.mulf %121, %120 : vector<6x128xf32>
    %cst_62 = arith.constant 1.000000e+00 : f32
    %123 = vector.broadcast %cst_62 : f32 to vector<6x128xf32>
    %124 = arith.subf %122, %123 : vector<6x128xf32>
    %125 = vector.extract_strided_slice %117 {offsets = [0, 384], sizes = [6, 128], strides = [1, 1]} : vector<6x512xf32> to vector<6x128xf32>
    %126 = arith.mulf %119, %112 : vector<6x128xf32>
    %127 = arith.mulf %118, %124 : vector<6x128xf32>
    %128 = arith.addf %126, %127 : vector<6x128xf32>
    %129 = math.tanh %128 : vector<6x128xf32>
    %130 = arith.mulf %125, %129 : vector<6x128xf32>
    %131 = vector.extract_strided_slice %130 {offsets = [0, 0], sizes = [2, 128], strides = [1, 1]} : vector<6x128xf32> to vector<2x128xf32>
    %132 = vector.extract_strided_slice %128 {offsets = [0, 0], sizes = [2, 128], strides = [1, 1]} : vector<6x128xf32> to vector<2x128xf32>
    %133 = vector.extract_strided_slice %130 {offsets = [2, 0], sizes = [2, 128], strides = [1, 1]} : vector<6x128xf32> to vector<2x128xf32>
    %134 = vector.extract_strided_slice %128 {offsets = [2, 0], sizes = [2, 128], strides = [1, 1]} : vector<6x128xf32> to vector<2x128xf32>
    %135 = vector.extract_strided_slice %130 {offsets = [4, 0], sizes = [2, 128], strides = [1, 1]} : vector<6x128xf32> to vector<2x128xf32>
    %136 = vector.extract_strided_slice %128 {offsets = [4, 0], sizes = [2, 128], strides = [1, 1]} : vector<6x128xf32> to vector<2x128xf32>
    %137 = arith.truncf %131 : vector<2x128xf32> to vector<2x128xbf16>
    %c0_63 = arith.constant 0 : index
    %c0_64 = arith.constant 0 : index
    %138 = vector.load %arg4[%c0_63, %c0_64] : memref<128x512xbf16, #tpu.memory_space<vmem>>, vector<128x512xbf16>
    %cst_65 = arith.constant dense<0.000000e+00> : vector<2x512xf32>
    %139 = tpu.matmul %137, %138, %cst_65 {dimension_numbers = #tpu.dot_dimension_numbers<[1], [0], [0], [1], [0, 0, 1, 1], [], []>} : vector<2x128xbf16>, vector<128x512xbf16>, vector<2x512xf32> -> vector<2x512xf32>
    %140 = vector.extract_strided_slice %2 {offsets = [6, 0], sizes = [2, 512], strides = [1, 1]} : vector<16x512xf32> to vector<2x512xf32>
    %141 = arith.addf %139, %140 : vector<2x512xf32>
    %142 = tpu.concatenate %133, %131 in 1 : vector<2x128xf32>, vector<2x128xf32> -> vector<2x256xf32>
    %143 = arith.truncf %142 : vector<2x256xf32> to vector<2x256xbf16>
    %c0_66 = arith.constant 0 : index
    %c0_67 = arith.constant 0 : index
    %144 = vector.load %arg5[%c0_66, %c0_67] : memref<256x512xbf16, #tpu.memory_space<vmem>>, vector<256x512xbf16>
    %cst_68 = arith.constant dense<0.000000e+00> : vector<2x512xf32>
    %145 = tpu.matmul %143, %144, %cst_68 {dimension_numbers = #tpu.dot_dimension_numbers<[1], [0], [0], [1], [0, 0, 1, 1], [], []>} : vector<2x256xbf16>, vector<256x512xbf16>, vector<2x512xf32> -> vector<2x512xf32>
    %146 = tpu.concatenate %135, %133 in 1 : vector<2x128xf32>, vector<2x128xf32> -> vector<2x256xf32>
    %147 = arith.truncf %146 : vector<2x256xf32> to vector<2x256xbf16>
    %c0_69 = arith.constant 0 : index
    %c0_70 = arith.constant 0 : index
    %148 = vector.load %arg6[%c0_69, %c0_70] : memref<256x512xbf16, #tpu.memory_space<vmem>>, vector<256x512xbf16>
    %cst_71 = arith.constant dense<0.000000e+00> : vector<2x512xf32>
    %149 = tpu.matmul %147, %148, %cst_71 {dimension_numbers = #tpu.dot_dimension_numbers<[1], [0], [0], [1], [0, 0, 1, 1], [], []>} : vector<2x256xbf16>, vector<256x512xbf16>, vector<2x512xf32> -> vector<2x512xf32>
    %150 = tpu.concatenate %27, %135 in 1 : vector<2x128xf32>, vector<2x128xf32> -> vector<2x256xf32>
    %151 = arith.truncf %150 : vector<2x256xf32> to vector<2x256xbf16>
    %c0_72 = arith.constant 0 : index
    %c0_73 = arith.constant 0 : index
    %152 = vector.load %arg7[%c0_72, %c0_73] : memref<256x512xbf16, #tpu.memory_space<vmem>>, vector<256x512xbf16>
    %cst_74 = arith.constant dense<0.000000e+00> : vector<2x512xf32>
    %153 = tpu.matmul %151, %152, %cst_74 {dimension_numbers = #tpu.dot_dimension_numbers<[1], [0], [0], [1], [0, 0, 1, 1], [], []>} : vector<2x256xbf16>, vector<256x512xbf16>, vector<2x512xf32> -> vector<2x512xf32>
    %154 = tpu.concatenate %141, %145, %149, %153 in 0 : vector<2x512xf32>, vector<2x512xf32>, vector<2x512xf32>, vector<2x512xf32> -> vector<8x512xf32>
    %155 = arith.addf %154, %19 : vector<8x512xf32>
    %156 = tpu.concatenate %132, %134, %136, %35 in 0 : vector<2x128xf32>, vector<2x128xf32>, vector<2x128xf32>, vector<2x128xf32> -> vector<8x128xf32>
    %157 = arith.negf %155 : vector<8x512xf32>
    %158 = math.exp %157 : vector<8x512xf32>
    %cst_75 = arith.constant 1.000000e+00 : f32
    %159 = vector.broadcast %cst_75 : f32 to vector<8x512xf32>
    %160 = arith.addf %159, %158 : vector<8x512xf32>
    %161 = arith.divf %159, %160 : vector<8x512xf32>
    %162 = vector.extract_strided_slice %161 {offsets = [0, 0], sizes = [8, 128], strides = [1, 1]} : vector<8x512xf32> to vector<8x128xf32>
    %163 = vector.extract_strided_slice %161 {offsets = [0, 128], sizes = [8, 128], strides = [1, 1]} : vector<8x512xf32> to vector<8x128xf32>
    %164 = vector.extract_strided_slice %161 {offsets = [0, 256], sizes = [8, 128], strides = [1, 1]} : vector<8x512xf32> to vector<8x128xf32>
    %cst_76 = arith.constant 2.000000e+00 : f32
    %165 = vector.broadcast %cst_76 : f32 to vector<8x128xf32>
    %166 = arith.mulf %165, %164 : vector<8x128xf32>
    %cst_77 = arith.constant 1.000000e+00 : f32
    %167 = vector.broadcast %cst_77 : f32 to vector<8x128xf32>
    %168 = arith.subf %166, %167 : vector<8x128xf32>
    %169 = vector.extract_strided_slice %161 {offsets = [0, 384], sizes = [8, 128], strides = [1, 1]} : vector<8x512xf32> to vector<8x128xf32>
    %170 = arith.mulf %163, %156 : vector<8x128xf32>
    %171 = arith.mulf %162, %168 : vector<8x128xf32>
    %172 = arith.addf %170, %171 : vector<8x128xf32>
    %173 = math.tanh %172 : vector<8x128xf32>
    %174 = arith.mulf %169, %173 : vector<8x128xf32>
    %175 = vector.extract_strided_slice %174 {offsets = [0, 0], sizes = [2, 128], strides = [1, 1]} : vector<8x128xf32> to vector<2x128xf32>
    %176 = vector.extract_strided_slice %172 {offsets = [0, 0], sizes = [2, 128], strides = [1, 1]} : vector<8x128xf32> to vector<2x128xf32>
    %177 = vector.extract_strided_slice %174 {offsets = [2, 0], sizes = [2, 128], strides = [1, 1]} : vector<8x128xf32> to vector<2x128xf32>
    %178 = vector.extract_strided_slice %172 {offsets = [2, 0], sizes = [2, 128], strides = [1, 1]} : vector<8x128xf32> to vector<2x128xf32>
    %179 = vector.extract_strided_slice %174 {offsets = [4, 0], sizes = [2, 128], strides = [1, 1]} : vector<8x128xf32> to vector<2x128xf32>
    %180 = vector.extract_strided_slice %172 {offsets = [4, 0], sizes = [2, 128], strides = [1, 1]} : vector<8x128xf32> to vector<2x128xf32>
    %181 = vector.extract_strided_slice %174 {offsets = [6, 0], sizes = [2, 128], strides = [1, 1]} : vector<8x128xf32> to vector<2x128xf32>
    %182 = vector.extract_strided_slice %172 {offsets = [6, 0], sizes = [2, 128], strides = [1, 1]} : vector<8x128xf32> to vector<2x128xf32>
    %183 = arith.truncf %175 : vector<2x128xf32> to vector<2x128xbf16>
    %c0_78 = arith.constant 0 : index
    %c0_79 = arith.constant 0 : index
    %184 = vector.load %arg4[%c0_78, %c0_79] : memref<128x512xbf16, #tpu.memory_space<vmem>>, vector<128x512xbf16>
    %cst_80 = arith.constant dense<0.000000e+00> : vector<2x512xf32>
    %185 = tpu.matmul %183, %184, %cst_80 {dimension_numbers = #tpu.dot_dimension_numbers<[1], [0], [0], [1], [0, 0, 1, 1], [], []>} : vector<2x128xbf16>, vector<128x512xbf16>, vector<2x512xf32> -> vector<2x512xf32>
    %186 = vector.extract_strided_slice %2 {offsets = [8, 0], sizes = [2, 512], strides = [1, 1]} : vector<16x512xf32> to vector<2x512xf32>
    %187 = arith.addf %185, %186 : vector<2x512xf32>
    %188 = tpu.concatenate %177, %175 in 1 : vector<2x128xf32>, vector<2x128xf32> -> vector<2x256xf32>
    %189 = arith.truncf %188 : vector<2x256xf32> to vector<2x256xbf16>
    %c0_81 = arith.constant 0 : index
    %c0_82 = arith.constant 0 : index
    %190 = vector.load %arg5[%c0_81, %c0_82] : memref<256x512xbf16, #tpu.memory_space<vmem>>, vector<256x512xbf16>
    %cst_83 = arith.constant dense<0.000000e+00> : vector<2x512xf32>
    %191 = tpu.matmul %189, %190, %cst_83 {dimension_numbers = #tpu.dot_dimension_numbers<[1], [0], [0], [1], [0, 0, 1, 1], [], []>} : vector<2x256xbf16>, vector<256x512xbf16>, vector<2x512xf32> -> vector<2x512xf32>
    %192 = tpu.concatenate %179, %177 in 1 : vector<2x128xf32>, vector<2x128xf32> -> vector<2x256xf32>
    %193 = arith.truncf %192 : vector<2x256xf32> to vector<2x256xbf16>
    %c0_84 = arith.constant 0 : index
    %c0_85 = arith.constant 0 : index
    %194 = vector.load %arg6[%c0_84, %c0_85] : memref<256x512xbf16, #tpu.memory_space<vmem>>, vector<256x512xbf16>
    %cst_86 = arith.constant dense<0.000000e+00> : vector<2x512xf32>
    %195 = tpu.matmul %193, %194, %cst_86 {dimension_numbers = #tpu.dot_dimension_numbers<[1], [0], [0], [1], [0, 0, 1, 1], [], []>} : vector<2x256xbf16>, vector<256x512xbf16>, vector<2x512xf32> -> vector<2x512xf32>
    %196 = tpu.concatenate %181, %179 in 1 : vector<2x128xf32>, vector<2x128xf32> -> vector<2x256xf32>
    %197 = arith.truncf %196 : vector<2x256xf32> to vector<2x256xbf16>
    %c0_87 = arith.constant 0 : index
    %c0_88 = arith.constant 0 : index
    %198 = vector.load %arg7[%c0_87, %c0_88] : memref<256x512xbf16, #tpu.memory_space<vmem>>, vector<256x512xbf16>
    %cst_89 = arith.constant dense<0.000000e+00> : vector<2x512xf32>
    %199 = tpu.matmul %197, %198, %cst_89 {dimension_numbers = #tpu.dot_dimension_numbers<[1], [0], [0], [1], [0, 0, 1, 1], [], []>} : vector<2x256xbf16>, vector<256x512xbf16>, vector<2x512xf32> -> vector<2x512xf32>
    %200 = tpu.concatenate %187, %191, %195, %199 in 0 : vector<2x512xf32>, vector<2x512xf32>, vector<2x512xf32>, vector<2x512xf32> -> vector<8x512xf32>
    %201 = arith.addf %200, %19 : vector<8x512xf32>
    %202 = tpu.concatenate %176, %178, %180, %182 in 0 : vector<2x128xf32>, vector<2x128xf32>, vector<2x128xf32>, vector<2x128xf32> -> vector<8x128xf32>
    %203 = arith.negf %201 : vector<8x512xf32>
    %204 = math.exp %203 : vector<8x512xf32>
    %cst_90 = arith.constant 1.000000e+00 : f32
    %205 = vector.broadcast %cst_90 : f32 to vector<8x512xf32>
    %206 = arith.addf %205, %204 : vector<8x512xf32>
    %207 = arith.divf %205, %206 : vector<8x512xf32>
    %208 = vector.extract_strided_slice %207 {offsets = [0, 0], sizes = [8, 128], strides = [1, 1]} : vector<8x512xf32> to vector<8x128xf32>
    %209 = vector.extract_strided_slice %207 {offsets = [0, 128], sizes = [8, 128], strides = [1, 1]} : vector<8x512xf32> to vector<8x128xf32>
    %210 = vector.extract_strided_slice %207 {offsets = [0, 256], sizes = [8, 128], strides = [1, 1]} : vector<8x512xf32> to vector<8x128xf32>
    %cst_91 = arith.constant 2.000000e+00 : f32
    %211 = vector.broadcast %cst_91 : f32 to vector<8x128xf32>
    %212 = arith.mulf %211, %210 : vector<8x128xf32>
    %cst_92 = arith.constant 1.000000e+00 : f32
    %213 = vector.broadcast %cst_92 : f32 to vector<8x128xf32>
    %214 = arith.subf %212, %213 : vector<8x128xf32>
    %215 = vector.extract_strided_slice %207 {offsets = [0, 384], sizes = [8, 128], strides = [1, 1]} : vector<8x512xf32> to vector<8x128xf32>
    %216 = arith.mulf %209, %202 : vector<8x128xf32>
    %217 = arith.mulf %208, %214 : vector<8x128xf32>
    %218 = arith.addf %216, %217 : vector<8x128xf32>
    %219 = math.tanh %218 : vector<8x128xf32>
    %220 = arith.mulf %215, %219 : vector<8x128xf32>
    %221 = vector.extract_strided_slice %220 {offsets = [0, 0], sizes = [2, 128], strides = [1, 1]} : vector<8x128xf32> to vector<2x128xf32>
    %222 = vector.extract_strided_slice %218 {offsets = [0, 0], sizes = [2, 128], strides = [1, 1]} : vector<8x128xf32> to vector<2x128xf32>
    %223 = vector.extract_strided_slice %220 {offsets = [2, 0], sizes = [2, 128], strides = [1, 1]} : vector<8x128xf32> to vector<2x128xf32>
    %224 = vector.extract_strided_slice %218 {offsets = [2, 0], sizes = [2, 128], strides = [1, 1]} : vector<8x128xf32> to vector<2x128xf32>
    %225 = vector.extract_strided_slice %220 {offsets = [4, 0], sizes = [2, 128], strides = [1, 1]} : vector<8x128xf32> to vector<2x128xf32>
    %226 = vector.extract_strided_slice %218 {offsets = [4, 0], sizes = [2, 128], strides = [1, 1]} : vector<8x128xf32> to vector<2x128xf32>
    %227 = vector.extract_strided_slice %220 {offsets = [6, 0], sizes = [2, 128], strides = [1, 1]} : vector<8x128xf32> to vector<2x128xf32>
    %228 = vector.extract_strided_slice %218 {offsets = [6, 0], sizes = [2, 128], strides = [1, 1]} : vector<8x128xf32> to vector<2x128xf32>
    %229 = arith.truncf %221 : vector<2x128xf32> to vector<2x128xbf16>
    %c0_93 = arith.constant 0 : index
    %c0_94 = arith.constant 0 : index
    %230 = vector.load %arg4[%c0_93, %c0_94] : memref<128x512xbf16, #tpu.memory_space<vmem>>, vector<128x512xbf16>
    %cst_95 = arith.constant dense<0.000000e+00> : vector<2x512xf32>
    %231 = tpu.matmul %229, %230, %cst_95 {dimension_numbers = #tpu.dot_dimension_numbers<[1], [0], [0], [1], [0, 0, 1, 1], [], []>} : vector<2x128xbf16>, vector<128x512xbf16>, vector<2x512xf32> -> vector<2x512xf32>
    %232 = vector.extract_strided_slice %2 {offsets = [10, 0], sizes = [2, 512], strides = [1, 1]} : vector<16x512xf32> to vector<2x512xf32>
    %233 = arith.addf %231, %232 : vector<2x512xf32>
    %234 = tpu.concatenate %223, %221 in 1 : vector<2x128xf32>, vector<2x128xf32> -> vector<2x256xf32>
    %235 = arith.truncf %234 : vector<2x256xf32> to vector<2x256xbf16>
    %c0_96 = arith.constant 0 : index
    %c0_97 = arith.constant 0 : index
    %236 = vector.load %arg5[%c0_96, %c0_97] : memref<256x512xbf16, #tpu.memory_space<vmem>>, vector<256x512xbf16>
    %cst_98 = arith.constant dense<0.000000e+00> : vector<2x512xf32>
    %237 = tpu.matmul %235, %236, %cst_98 {dimension_numbers = #tpu.dot_dimension_numbers<[1], [0], [0], [1], [0, 0, 1, 1], [], []>} : vector<2x256xbf16>, vector<256x512xbf16>, vector<2x512xf32> -> vector<2x512xf32>
    %238 = tpu.concatenate %225, %223 in 1 : vector<2x128xf32>, vector<2x128xf32> -> vector<2x256xf32>
    %239 = arith.truncf %238 : vector<2x256xf32> to vector<2x256xbf16>
    %c0_99 = arith.constant 0 : index
    %c0_100 = arith.constant 0 : index
    %240 = vector.load %arg6[%c0_99, %c0_100] : memref<256x512xbf16, #tpu.memory_space<vmem>>, vector<256x512xbf16>
    %cst_101 = arith.constant dense<0.000000e+00> : vector<2x512xf32>
    %241 = tpu.matmul %239, %240, %cst_101 {dimension_numbers = #tpu.dot_dimension_numbers<[1], [0], [0], [1], [0, 0, 1, 1], [], []>} : vector<2x256xbf16>, vector<256x512xbf16>, vector<2x512xf32> -> vector<2x512xf32>
    %242 = tpu.concatenate %227, %225 in 1 : vector<2x128xf32>, vector<2x128xf32> -> vector<2x256xf32>
    %243 = arith.truncf %242 : vector<2x256xf32> to vector<2x256xbf16>
    %c0_102 = arith.constant 0 : index
    %c0_103 = arith.constant 0 : index
    %244 = vector.load %arg7[%c0_102, %c0_103] : memref<256x512xbf16, #tpu.memory_space<vmem>>, vector<256x512xbf16>
    %cst_104 = arith.constant dense<0.000000e+00> : vector<2x512xf32>
    %245 = tpu.matmul %243, %244, %cst_104 {dimension_numbers = #tpu.dot_dimension_numbers<[1], [0], [0], [1], [0, 0, 1, 1], [], []>} : vector<2x256xbf16>, vector<256x512xbf16>, vector<2x512xf32> -> vector<2x512xf32>
    %246 = tpu.concatenate %233, %237, %241, %245 in 0 : vector<2x512xf32>, vector<2x512xf32>, vector<2x512xf32>, vector<2x512xf32> -> vector<8x512xf32>
    %247 = arith.addf %246, %19 : vector<8x512xf32>
    %248 = tpu.concatenate %222, %224, %226, %228 in 0 : vector<2x128xf32>, vector<2x128xf32>, vector<2x128xf32>, vector<2x128xf32> -> vector<8x128xf32>
    %249 = arith.negf %247 : vector<8x512xf32>
    %250 = math.exp %249 : vector<8x512xf32>
    %cst_105 = arith.constant 1.000000e+00 : f32
    %251 = vector.broadcast %cst_105 : f32 to vector<8x512xf32>
    %252 = arith.addf %251, %250 : vector<8x512xf32>
    %253 = arith.divf %251, %252 : vector<8x512xf32>
    %254 = vector.extract_strided_slice %253 {offsets = [0, 0], sizes = [8, 128], strides = [1, 1]} : vector<8x512xf32> to vector<8x128xf32>
    %255 = vector.extract_strided_slice %253 {offsets = [0, 128], sizes = [8, 128], strides = [1, 1]} : vector<8x512xf32> to vector<8x128xf32>
    %256 = vector.extract_strided_slice %253 {offsets = [0, 256], sizes = [8, 128], strides = [1, 1]} : vector<8x512xf32> to vector<8x128xf32>
    %cst_106 = arith.constant 2.000000e+00 : f32
    %257 = vector.broadcast %cst_106 : f32 to vector<8x128xf32>
    %258 = arith.mulf %257, %256 : vector<8x128xf32>
    %cst_107 = arith.constant 1.000000e+00 : f32
    %259 = vector.broadcast %cst_107 : f32 to vector<8x128xf32>
    %260 = arith.subf %258, %259 : vector<8x128xf32>
    %261 = vector.extract_strided_slice %253 {offsets = [0, 384], sizes = [8, 128], strides = [1, 1]} : vector<8x512xf32> to vector<8x128xf32>
    %262 = arith.mulf %255, %248 : vector<8x128xf32>
    %263 = arith.mulf %254, %260 : vector<8x128xf32>
    %264 = arith.addf %262, %263 : vector<8x128xf32>
    %265 = math.tanh %264 : vector<8x128xf32>
    %266 = arith.mulf %261, %265 : vector<8x128xf32>
    %267 = vector.extract_strided_slice %266 {offsets = [0, 0], sizes = [2, 128], strides = [1, 1]} : vector<8x128xf32> to vector<2x128xf32>
    %268 = vector.extract_strided_slice %264 {offsets = [0, 0], sizes = [2, 128], strides = [1, 1]} : vector<8x128xf32> to vector<2x128xf32>
    %269 = vector.extract_strided_slice %266 {offsets = [2, 0], sizes = [2, 128], strides = [1, 1]} : vector<8x128xf32> to vector<2x128xf32>
    %270 = vector.extract_strided_slice %264 {offsets = [2, 0], sizes = [2, 128], strides = [1, 1]} : vector<8x128xf32> to vector<2x128xf32>
    %271 = vector.extract_strided_slice %266 {offsets = [4, 0], sizes = [2, 128], strides = [1, 1]} : vector<8x128xf32> to vector<2x128xf32>
    %272 = vector.extract_strided_slice %264 {offsets = [4, 0], sizes = [2, 128], strides = [1, 1]} : vector<8x128xf32> to vector<2x128xf32>
    %273 = vector.extract_strided_slice %266 {offsets = [6, 0], sizes = [2, 128], strides = [1, 1]} : vector<8x128xf32> to vector<2x128xf32>
    %274 = vector.extract_strided_slice %264 {offsets = [6, 0], sizes = [2, 128], strides = [1, 1]} : vector<8x128xf32> to vector<2x128xf32>
    %275 = arith.truncf %267 : vector<2x128xf32> to vector<2x128xbf16>
    %c0_108 = arith.constant 0 : index
    %c0_109 = arith.constant 0 : index
    %276 = vector.load %arg4[%c0_108, %c0_109] : memref<128x512xbf16, #tpu.memory_space<vmem>>, vector<128x512xbf16>
    %cst_110 = arith.constant dense<0.000000e+00> : vector<2x512xf32>
    %277 = tpu.matmul %275, %276, %cst_110 {dimension_numbers = #tpu.dot_dimension_numbers<[1], [0], [0], [1], [0, 0, 1, 1], [], []>} : vector<2x128xbf16>, vector<128x512xbf16>, vector<2x512xf32> -> vector<2x512xf32>
    %278 = vector.extract_strided_slice %2 {offsets = [12, 0], sizes = [2, 512], strides = [1, 1]} : vector<16x512xf32> to vector<2x512xf32>
    %279 = arith.addf %277, %278 : vector<2x512xf32>
    %280 = tpu.concatenate %269, %267 in 1 : vector<2x128xf32>, vector<2x128xf32> -> vector<2x256xf32>
    %281 = arith.truncf %280 : vector<2x256xf32> to vector<2x256xbf16>
    %c0_111 = arith.constant 0 : index
    %c0_112 = arith.constant 0 : index
    %282 = vector.load %arg5[%c0_111, %c0_112] : memref<256x512xbf16, #tpu.memory_space<vmem>>, vector<256x512xbf16>
    %cst_113 = arith.constant dense<0.000000e+00> : vector<2x512xf32>
    %283 = tpu.matmul %281, %282, %cst_113 {dimension_numbers = #tpu.dot_dimension_numbers<[1], [0], [0], [1], [0, 0, 1, 1], [], []>} : vector<2x256xbf16>, vector<256x512xbf16>, vector<2x512xf32> -> vector<2x512xf32>
    %284 = tpu.concatenate %271, %269 in 1 : vector<2x128xf32>, vector<2x128xf32> -> vector<2x256xf32>
    %285 = arith.truncf %284 : vector<2x256xf32> to vector<2x256xbf16>
    %c0_114 = arith.constant 0 : index
    %c0_115 = arith.constant 0 : index
    %286 = vector.load %arg6[%c0_114, %c0_115] : memref<256x512xbf16, #tpu.memory_space<vmem>>, vector<256x512xbf16>
    %cst_116 = arith.constant dense<0.000000e+00> : vector<2x512xf32>
    %287 = tpu.matmul %285, %286, %cst_116 {dimension_numbers = #tpu.dot_dimension_numbers<[1], [0], [0], [1], [0, 0, 1, 1], [], []>} : vector<2x256xbf16>, vector<256x512xbf16>, vector<2x512xf32> -> vector<2x512xf32>
    %288 = tpu.concatenate %273, %271 in 1 : vector<2x128xf32>, vector<2x128xf32> -> vector<2x256xf32>
    %289 = arith.truncf %288 : vector<2x256xf32> to vector<2x256xbf16>
    %c0_117 = arith.constant 0 : index
    %c0_118 = arith.constant 0 : index
    %290 = vector.load %arg7[%c0_117, %c0_118] : memref<256x512xbf16, #tpu.memory_space<vmem>>, vector<256x512xbf16>
    %cst_119 = arith.constant dense<0.000000e+00> : vector<2x512xf32>
    %291 = tpu.matmul %289, %290, %cst_119 {dimension_numbers = #tpu.dot_dimension_numbers<[1], [0], [0], [1], [0, 0, 1, 1], [], []>} : vector<2x256xbf16>, vector<256x512xbf16>, vector<2x512xf32> -> vector<2x512xf32>
    %292 = tpu.concatenate %279, %283, %287, %291 in 0 : vector<2x512xf32>, vector<2x512xf32>, vector<2x512xf32>, vector<2x512xf32> -> vector<8x512xf32>
    %293 = arith.addf %292, %19 : vector<8x512xf32>
    %294 = tpu.concatenate %268, %270, %272, %274 in 0 : vector<2x128xf32>, vector<2x128xf32>, vector<2x128xf32>, vector<2x128xf32> -> vector<8x128xf32>
    %295 = arith.negf %293 : vector<8x512xf32>
    %296 = math.exp %295 : vector<8x512xf32>
    %cst_120 = arith.constant 1.000000e+00 : f32
    %297 = vector.broadcast %cst_120 : f32 to vector<8x512xf32>
    %298 = arith.addf %297, %296 : vector<8x512xf32>
    %299 = arith.divf %297, %298 : vector<8x512xf32>
    %300 = vector.extract_strided_slice %299 {offsets = [0, 0], sizes = [8, 128], strides = [1, 1]} : vector<8x512xf32> to vector<8x128xf32>
    %301 = vector.extract_strided_slice %299 {offsets = [0, 128], sizes = [8, 128], strides = [1, 1]} : vector<8x512xf32> to vector<8x128xf32>
    %302 = vector.extract_strided_slice %299 {offsets = [0, 256], sizes = [8, 128], strides = [1, 1]} : vector<8x512xf32> to vector<8x128xf32>
    %cst_121 = arith.constant 2.000000e+00 : f32
    %303 = vector.broadcast %cst_121 : f32 to vector<8x128xf32>
    %304 = arith.mulf %303, %302 : vector<8x128xf32>
    %cst_122 = arith.constant 1.000000e+00 : f32
    %305 = vector.broadcast %cst_122 : f32 to vector<8x128xf32>
    %306 = arith.subf %304, %305 : vector<8x128xf32>
    %307 = vector.extract_strided_slice %299 {offsets = [0, 384], sizes = [8, 128], strides = [1, 1]} : vector<8x512xf32> to vector<8x128xf32>
    %308 = arith.mulf %301, %294 : vector<8x128xf32>
    %309 = arith.mulf %300, %306 : vector<8x128xf32>
    %310 = arith.addf %308, %309 : vector<8x128xf32>
    %311 = math.tanh %310 : vector<8x128xf32>
    %312 = arith.mulf %307, %311 : vector<8x128xf32>
    %313 = vector.extract_strided_slice %312 {offsets = [0, 0], sizes = [2, 128], strides = [1, 1]} : vector<8x128xf32> to vector<2x128xf32>
    %314 = vector.extract_strided_slice %310 {offsets = [0, 0], sizes = [2, 128], strides = [1, 1]} : vector<8x128xf32> to vector<2x128xf32>
    %315 = vector.extract_strided_slice %312 {offsets = [2, 0], sizes = [2, 128], strides = [1, 1]} : vector<8x128xf32> to vector<2x128xf32>
    %316 = vector.extract_strided_slice %310 {offsets = [2, 0], sizes = [2, 128], strides = [1, 1]} : vector<8x128xf32> to vector<2x128xf32>
    %317 = vector.extract_strided_slice %312 {offsets = [4, 0], sizes = [2, 128], strides = [1, 1]} : vector<8x128xf32> to vector<2x128xf32>
    %318 = vector.extract_strided_slice %310 {offsets = [4, 0], sizes = [2, 128], strides = [1, 1]} : vector<8x128xf32> to vector<2x128xf32>
    %319 = vector.extract_strided_slice %312 {offsets = [6, 0], sizes = [2, 128], strides = [1, 1]} : vector<8x128xf32> to vector<2x128xf32>
    %320 = vector.extract_strided_slice %310 {offsets = [6, 0], sizes = [2, 128], strides = [1, 1]} : vector<8x128xf32> to vector<2x128xf32>
    %321 = arith.truncf %313 : vector<2x128xf32> to vector<2x128xbf16>
    %c0_123 = arith.constant 0 : index
    %c0_124 = arith.constant 0 : index
    %322 = vector.load %arg4[%c0_123, %c0_124] : memref<128x512xbf16, #tpu.memory_space<vmem>>, vector<128x512xbf16>
    %cst_125 = arith.constant dense<0.000000e+00> : vector<2x512xf32>
    %323 = tpu.matmul %321, %322, %cst_125 {dimension_numbers = #tpu.dot_dimension_numbers<[1], [0], [0], [1], [0, 0, 1, 1], [], []>} : vector<2x128xbf16>, vector<128x512xbf16>, vector<2x512xf32> -> vector<2x512xf32>
    %324 = vector.extract_strided_slice %2 {offsets = [14, 0], sizes = [2, 512], strides = [1, 1]} : vector<16x512xf32> to vector<2x512xf32>
    %325 = arith.addf %323, %324 : vector<2x512xf32>
    %326 = tpu.concatenate %315, %313 in 1 : vector<2x128xf32>, vector<2x128xf32> -> vector<2x256xf32>
    %327 = arith.truncf %326 : vector<2x256xf32> to vector<2x256xbf16>
    %c0_126 = arith.constant 0 : index
    %c0_127 = arith.constant 0 : index
    %328 = vector.load %arg5[%c0_126, %c0_127] : memref<256x512xbf16, #tpu.memory_space<vmem>>, vector<256x512xbf16>
    %cst_128 = arith.constant dense<0.000000e+00> : vector<2x512xf32>
    %329 = tpu.matmul %327, %328, %cst_128 {dimension_numbers = #tpu.dot_dimension_numbers<[1], [0], [0], [1], [0, 0, 1, 1], [], []>} : vector<2x256xbf16>, vector<256x512xbf16>, vector<2x512xf32> -> vector<2x512xf32>
    %330 = tpu.concatenate %317, %315 in 1 : vector<2x128xf32>, vector<2x128xf32> -> vector<2x256xf32>
    %331 = arith.truncf %330 : vector<2x256xf32> to vector<2x256xbf16>
    %c0_129 = arith.constant 0 : index
    %c0_130 = arith.constant 0 : index
    %332 = vector.load %arg6[%c0_129, %c0_130] : memref<256x512xbf16, #tpu.memory_space<vmem>>, vector<256x512xbf16>
    %cst_131 = arith.constant dense<0.000000e+00> : vector<2x512xf32>
    %333 = tpu.matmul %331, %332, %cst_131 {dimension_numbers = #tpu.dot_dimension_numbers<[1], [0], [0], [1], [0, 0, 1, 1], [], []>} : vector<2x256xbf16>, vector<256x512xbf16>, vector<2x512xf32> -> vector<2x512xf32>
    %334 = tpu.concatenate %319, %317 in 1 : vector<2x128xf32>, vector<2x128xf32> -> vector<2x256xf32>
    %335 = arith.truncf %334 : vector<2x256xf32> to vector<2x256xbf16>
    %c0_132 = arith.constant 0 : index
    %c0_133 = arith.constant 0 : index
    %336 = vector.load %arg7[%c0_132, %c0_133] : memref<256x512xbf16, #tpu.memory_space<vmem>>, vector<256x512xbf16>
    %cst_134 = arith.constant dense<0.000000e+00> : vector<2x512xf32>
    %337 = tpu.matmul %335, %336, %cst_134 {dimension_numbers = #tpu.dot_dimension_numbers<[1], [0], [0], [1], [0, 0, 1, 1], [], []>} : vector<2x256xbf16>, vector<256x512xbf16>, vector<2x512xf32> -> vector<2x512xf32>
    %338 = tpu.concatenate %325, %329, %333, %337 in 0 : vector<2x512xf32>, vector<2x512xf32>, vector<2x512xf32>, vector<2x512xf32> -> vector<8x512xf32>
    %339 = arith.addf %338, %19 : vector<8x512xf32>
    %340 = tpu.concatenate %314, %316, %318, %320 in 0 : vector<2x128xf32>, vector<2x128xf32>, vector<2x128xf32>, vector<2x128xf32> -> vector<8x128xf32>
    %341 = arith.negf %339 : vector<8x512xf32>
    %342 = math.exp %341 : vector<8x512xf32>
    %cst_135 = arith.constant 1.000000e+00 : f32
    %343 = vector.broadcast %cst_135 : f32 to vector<8x512xf32>
    %344 = arith.addf %343, %342 : vector<8x512xf32>
    %345 = arith.divf %343, %344 : vector<8x512xf32>
    %346 = vector.extract_strided_slice %345 {offsets = [0, 0], sizes = [8, 128], strides = [1, 1]} : vector<8x512xf32> to vector<8x128xf32>
    %347 = vector.extract_strided_slice %345 {offsets = [0, 128], sizes = [8, 128], strides = [1, 1]} : vector<8x512xf32> to vector<8x128xf32>
    %348 = vector.extract_strided_slice %345 {offsets = [0, 256], sizes = [8, 128], strides = [1, 1]} : vector<8x512xf32> to vector<8x128xf32>
    %cst_136 = arith.constant 2.000000e+00 : f32
    %349 = vector.broadcast %cst_136 : f32 to vector<8x128xf32>
    %350 = arith.mulf %349, %348 : vector<8x128xf32>
    %cst_137 = arith.constant 1.000000e+00 : f32
    %351 = vector.broadcast %cst_137 : f32 to vector<8x128xf32>
    %352 = arith.subf %350, %351 : vector<8x128xf32>
    %353 = vector.extract_strided_slice %345 {offsets = [0, 384], sizes = [8, 128], strides = [1, 1]} : vector<8x512xf32> to vector<8x128xf32>
    %354 = arith.mulf %347, %340 : vector<8x128xf32>
    %355 = arith.mulf %346, %352 : vector<8x128xf32>
    %356 = arith.addf %354, %355 : vector<8x128xf32>
    %357 = math.tanh %356 : vector<8x128xf32>
    %358 = arith.mulf %353, %357 : vector<8x128xf32>
    %359 = vector.extract_strided_slice %358 {offsets = [0, 0], sizes = [2, 128], strides = [1, 1]} : vector<8x128xf32> to vector<2x128xf32>
    %360 = vector.extract_strided_slice %356 {offsets = [0, 0], sizes = [2, 128], strides = [1, 1]} : vector<8x128xf32> to vector<2x128xf32>
    %361 = vector.extract_strided_slice %358 {offsets = [2, 0], sizes = [2, 128], strides = [1, 1]} : vector<8x128xf32> to vector<2x128xf32>
    %362 = vector.extract_strided_slice %356 {offsets = [2, 0], sizes = [2, 128], strides = [1, 1]} : vector<8x128xf32> to vector<2x128xf32>
    %363 = vector.extract_strided_slice %358 {offsets = [4, 0], sizes = [2, 128], strides = [1, 1]} : vector<8x128xf32> to vector<2x128xf32>
    %364 = vector.extract_strided_slice %356 {offsets = [4, 0], sizes = [2, 128], strides = [1, 1]} : vector<8x128xf32> to vector<2x128xf32>
    %365 = vector.extract_strided_slice %358 {offsets = [6, 0], sizes = [2, 128], strides = [1, 1]} : vector<8x128xf32> to vector<2x128xf32>
    %366 = vector.extract_strided_slice %356 {offsets = [6, 0], sizes = [2, 128], strides = [1, 1]} : vector<8x128xf32> to vector<2x128xf32>
    %367 = tpu.concatenate %361, %359 in 1 : vector<2x128xf32>, vector<2x128xf32> -> vector<2x256xf32>
    %368 = arith.truncf %367 : vector<2x256xf32> to vector<2x256xbf16>
    %c0_138 = arith.constant 0 : index
    %c0_139 = arith.constant 0 : index
    %369 = vector.load %arg5[%c0_138, %c0_139] : memref<256x512xbf16, #tpu.memory_space<vmem>>, vector<256x512xbf16>
    %cst_140 = arith.constant dense<0.000000e+00> : vector<2x512xf32>
    %370 = tpu.matmul %368, %369, %cst_140 {dimension_numbers = #tpu.dot_dimension_numbers<[1], [0], [0], [1], [0, 0, 1, 1], [], []>} : vector<2x256xbf16>, vector<256x512xbf16>, vector<2x512xf32> -> vector<2x512xf32>
    %371 = tpu.concatenate %363, %361 in 1 : vector<2x128xf32>, vector<2x128xf32> -> vector<2x256xf32>
    %372 = arith.truncf %371 : vector<2x256xf32> to vector<2x256xbf16>
    %c0_141 = arith.constant 0 : index
    %c0_142 = arith.constant 0 : index
    %373 = vector.load %arg6[%c0_141, %c0_142] : memref<256x512xbf16, #tpu.memory_space<vmem>>, vector<256x512xbf16>
    %cst_143 = arith.constant dense<0.000000e+00> : vector<2x512xf32>
    %374 = tpu.matmul %372, %373, %cst_143 {dimension_numbers = #tpu.dot_dimension_numbers<[1], [0], [0], [1], [0, 0, 1, 1], [], []>} : vector<2x256xbf16>, vector<256x512xbf16>, vector<2x512xf32> -> vector<2x512xf32>
    %375 = tpu.concatenate %365, %363 in 1 : vector<2x128xf32>, vector<2x128xf32> -> vector<2x256xf32>
    %376 = arith.truncf %375 : vector<2x256xf32> to vector<2x256xbf16>
    %c0_144 = arith.constant 0 : index
    %c0_145 = arith.constant 0 : index
    %377 = vector.load %arg7[%c0_144, %c0_145] : memref<256x512xbf16, #tpu.memory_space<vmem>>, vector<256x512xbf16>
    %cst_146 = arith.constant dense<0.000000e+00> : vector<2x512xf32>
    %378 = tpu.matmul %376, %377, %cst_146 {dimension_numbers = #tpu.dot_dimension_numbers<[1], [0], [0], [1], [0, 0, 1, 1], [], []>} : vector<2x256xbf16>, vector<256x512xbf16>, vector<2x512xf32> -> vector<2x512xf32>
    %379 = tpu.concatenate %370, %374, %378 in 0 : vector<2x512xf32>, vector<2x512xf32>, vector<2x512xf32> -> vector<6x512xf32>
    %380 = vector.extract_strided_slice %19 {offsets = [2, 0], sizes = [6, 512], strides = [1, 1]} : vector<8x512xf32> to vector<6x512xf32>
    %381 = arith.addf %379, %380 : vector<6x512xf32>
    %382 = tpu.concatenate %362, %364, %366 in 0 : vector<2x128xf32>, vector<2x128xf32>, vector<2x128xf32> -> vector<6x128xf32>
    %383 = arith.negf %381 : vector<6x512xf32>
    %384 = math.exp %383 : vector<6x512xf32>
    %cst_147 = arith.constant 1.000000e+00 : f32
    %385 = vector.broadcast %cst_147 : f32 to vector<6x512xf32>
    %386 = arith.addf %385, %384 : vector<6x512xf32>
    %387 = arith.divf %385, %386 : vector<6x512xf32>
    %388 = vector.extract_strided_slice %387 {offsets = [0, 0], sizes = [6, 128], strides = [1, 1]} : vector<6x512xf32> to vector<6x128xf32>
    %389 = vector.extract_strided_slice %387 {offsets = [0, 128], sizes = [6, 128], strides = [1, 1]} : vector<6x512xf32> to vector<6x128xf32>
    %390 = vector.extract_strided_slice %387 {offsets = [0, 256], sizes = [6, 128], strides = [1, 1]} : vector<6x512xf32> to vector<6x128xf32>
    %cst_148 = arith.constant 2.000000e+00 : f32
    %391 = vector.broadcast %cst_148 : f32 to vector<6x128xf32>
    %392 = arith.mulf %391, %390 : vector<6x128xf32>
    %cst_149 = arith.constant 1.000000e+00 : f32
    %393 = vector.broadcast %cst_149 : f32 to vector<6x128xf32>
    %394 = arith.subf %392, %393 : vector<6x128xf32>
    %395 = vector.extract_strided_slice %387 {offsets = [0, 384], sizes = [6, 128], strides = [1, 1]} : vector<6x512xf32> to vector<6x128xf32>
    %396 = arith.mulf %389, %382 : vector<6x128xf32>
    %397 = arith.mulf %388, %394 : vector<6x128xf32>
    %398 = arith.addf %396, %397 : vector<6x128xf32>
    %399 = math.tanh %398 : vector<6x128xf32>
    %400 = arith.mulf %395, %399 : vector<6x128xf32>
    %401 = vector.extract_strided_slice %400 {offsets = [0, 0], sizes = [2, 128], strides = [1, 1]} : vector<6x128xf32> to vector<2x128xf32>
    %402 = vector.extract_strided_slice %398 {offsets = [0, 0], sizes = [2, 128], strides = [1, 1]} : vector<6x128xf32> to vector<2x128xf32>
    %403 = vector.extract_strided_slice %400 {offsets = [2, 0], sizes = [2, 128], strides = [1, 1]} : vector<6x128xf32> to vector<2x128xf32>
    %404 = vector.extract_strided_slice %398 {offsets = [2, 0], sizes = [2, 128], strides = [1, 1]} : vector<6x128xf32> to vector<2x128xf32>
    %405 = vector.extract_strided_slice %400 {offsets = [4, 0], sizes = [2, 128], strides = [1, 1]} : vector<6x128xf32> to vector<2x128xf32>
    %406 = vector.extract_strided_slice %398 {offsets = [4, 0], sizes = [2, 128], strides = [1, 1]} : vector<6x128xf32> to vector<2x128xf32>
    %407 = tpu.concatenate %403, %401 in 1 : vector<2x128xf32>, vector<2x128xf32> -> vector<2x256xf32>
    %408 = arith.truncf %407 : vector<2x256xf32> to vector<2x256xbf16>
    %c0_150 = arith.constant 0 : index
    %c0_151 = arith.constant 0 : index
    %409 = vector.load %arg6[%c0_150, %c0_151] : memref<256x512xbf16, #tpu.memory_space<vmem>>, vector<256x512xbf16>
    %cst_152 = arith.constant dense<0.000000e+00> : vector<2x512xf32>
    %410 = tpu.matmul %408, %409, %cst_152 {dimension_numbers = #tpu.dot_dimension_numbers<[1], [0], [0], [1], [0, 0, 1, 1], [], []>} : vector<2x256xbf16>, vector<256x512xbf16>, vector<2x512xf32> -> vector<2x512xf32>
    %411 = tpu.concatenate %405, %403 in 1 : vector<2x128xf32>, vector<2x128xf32> -> vector<2x256xf32>
    %412 = arith.truncf %411 : vector<2x256xf32> to vector<2x256xbf16>
    %c0_153 = arith.constant 0 : index
    %c0_154 = arith.constant 0 : index
    %413 = vector.load %arg7[%c0_153, %c0_154] : memref<256x512xbf16, #tpu.memory_space<vmem>>, vector<256x512xbf16>
    %cst_155 = arith.constant dense<0.000000e+00> : vector<2x512xf32>
    %414 = tpu.matmul %412, %413, %cst_155 {dimension_numbers = #tpu.dot_dimension_numbers<[1], [0], [0], [1], [0, 0, 1, 1], [], []>} : vector<2x256xbf16>, vector<256x512xbf16>, vector<2x512xf32> -> vector<2x512xf32>
    %415 = tpu.concatenate %410, %414 in 0 : vector<2x512xf32>, vector<2x512xf32> -> vector<4x512xf32>
    %416 = vector.extract_strided_slice %19 {offsets = [4, 0], sizes = [4, 512], strides = [1, 1]} : vector<8x512xf32> to vector<4x512xf32>
    %417 = arith.addf %415, %416 : vector<4x512xf32>
    %418 = tpu.concatenate %404, %406 in 0 : vector<2x128xf32>, vector<2x128xf32> -> vector<4x128xf32>
    %419 = arith.negf %417 : vector<4x512xf32>
    %420 = math.exp %419 : vector<4x512xf32>
    %cst_156 = arith.constant 1.000000e+00 : f32
    %421 = vector.broadcast %cst_156 : f32 to vector<4x512xf32>
    %422 = arith.addf %421, %420 : vector<4x512xf32>
    %423 = arith.divf %421, %422 : vector<4x512xf32>
    %424 = vector.extract_strided_slice %423 {offsets = [0, 0], sizes = [4, 128], strides = [1, 1]} : vector<4x512xf32> to vector<4x128xf32>
    %425 = vector.extract_strided_slice %423 {offsets = [0, 128], sizes = [4, 128], strides = [1, 1]} : vector<4x512xf32> to vector<4x128xf32>
    %426 = vector.extract_strided_slice %423 {offsets = [0, 256], sizes = [4, 128], strides = [1, 1]} : vector<4x512xf32> to vector<4x128xf32>
    %cst_157 = arith.constant 2.000000e+00 : f32
    %427 = vector.broadcast %cst_157 : f32 to vector<4x128xf32>
    %428 = arith.mulf %427, %426 : vector<4x128xf32>
    %cst_158 = arith.constant 1.000000e+00 : f32
    %429 = vector.broadcast %cst_158 : f32 to vector<4x128xf32>
    %430 = arith.subf %428, %429 : vector<4x128xf32>
    %431 = vector.extract_strided_slice %423 {offsets = [0, 384], sizes = [4, 128], strides = [1, 1]} : vector<4x512xf32> to vector<4x128xf32>
    %432 = arith.mulf %425, %418 : vector<4x128xf32>
    %433 = arith.mulf %424, %430 : vector<4x128xf32>
    %434 = arith.addf %432, %433 : vector<4x128xf32>
    %435 = math.tanh %434 : vector<4x128xf32>
    %436 = arith.mulf %431, %435 : vector<4x128xf32>
    %437 = vector.extract_strided_slice %436 {offsets = [0, 0], sizes = [2, 128], strides = [1, 1]} : vector<4x128xf32> to vector<2x128xf32>
    %438 = vector.extract_strided_slice %434 {offsets = [0, 0], sizes = [2, 128], strides = [1, 1]} : vector<4x128xf32> to vector<2x128xf32>
    %439 = vector.extract_strided_slice %436 {offsets = [2, 0], sizes = [2, 128], strides = [1, 1]} : vector<4x128xf32> to vector<2x128xf32>
    %440 = vector.extract_strided_slice %434 {offsets = [2, 0], sizes = [2, 128], strides = [1, 1]} : vector<4x128xf32> to vector<2x128xf32>
    %441 = tpu.concatenate %439, %437 in 1 : vector<2x128xf32>, vector<2x128xf32> -> vector<2x256xf32>
    %442 = arith.truncf %441 : vector<2x256xf32> to vector<2x256xbf16>
    %c0_159 = arith.constant 0 : index
    %c0_160 = arith.constant 0 : index
    %443 = vector.load %arg7[%c0_159, %c0_160] : memref<256x512xbf16, #tpu.memory_space<vmem>>, vector<256x512xbf16>
    %cst_161 = arith.constant dense<0.000000e+00> : vector<2x512xf32>
    %444 = tpu.matmul %442, %443, %cst_161 {dimension_numbers = #tpu.dot_dimension_numbers<[1], [0], [0], [1], [0, 0, 1, 1], [], []>} : vector<2x256xbf16>, vector<256x512xbf16>, vector<2x512xf32> -> vector<2x512xf32>
    %445 = vector.extract_strided_slice %19 {offsets = [6, 0], sizes = [2, 512], strides = [1, 1]} : vector<8x512xf32> to vector<2x512xf32>
    %446 = arith.addf %444, %445 : vector<2x512xf32>
    %447 = arith.negf %446 : vector<2x512xf32>
    %448 = math.exp %447 : vector<2x512xf32>
    %cst_162 = arith.constant 1.000000e+00 : f32
    %449 = vector.broadcast %cst_162 : f32 to vector<2x512xf32>
    %450 = arith.addf %449, %448 : vector<2x512xf32>
    %451 = arith.divf %449, %450 : vector<2x512xf32>
    %452 = vector.extract_strided_slice %451 {offsets = [0, 0], sizes = [2, 128], strides = [1, 1]} : vector<2x512xf32> to vector<2x128xf32>
    %453 = vector.extract_strided_slice %451 {offsets = [0, 128], sizes = [2, 128], strides = [1, 1]} : vector<2x512xf32> to vector<2x128xf32>
    %454 = vector.extract_strided_slice %451 {offsets = [0, 256], sizes = [2, 128], strides = [1, 1]} : vector<2x512xf32> to vector<2x128xf32>
    %cst_163 = arith.constant 2.000000e+00 : f32
    %455 = vector.broadcast %cst_163 : f32 to vector<2x128xf32>
    %456 = arith.mulf %455, %454 : vector<2x128xf32>
    %cst_164 = arith.constant 1.000000e+00 : f32
    %457 = vector.broadcast %cst_164 : f32 to vector<2x128xf32>
    %458 = arith.subf %456, %457 : vector<2x128xf32>
    %459 = vector.extract_strided_slice %451 {offsets = [0, 384], sizes = [2, 128], strides = [1, 1]} : vector<2x512xf32> to vector<2x128xf32>
    %460 = arith.mulf %453, %440 : vector<2x128xf32>
    %461 = arith.mulf %452, %458 : vector<2x128xf32>
    %462 = arith.addf %460, %461 : vector<2x128xf32>
    %463 = math.tanh %462 : vector<2x128xf32>
    %464 = arith.mulf %459, %463 : vector<2x128xf32>
    %c0_165 = arith.constant 0 : index
    %c0_166 = arith.constant 0 : index
    %c0_167 = arith.constant 0 : index
    %465 = vector.load %arg11[%c0_165, %c0_166, %c0_167] : memref<4x2x128xf32, #tpu.memory_space<vmem>>, vector<1x2x128xf32>
    %466 = vector.shape_cast %465 : vector<1x2x128xf32> to vector<2x128xf32>
    %467 = vector.shape_cast %359 : vector<2x128xf32> to vector<1x2x128xf32>
    tpu.vector_store %arg11[%c0_165, %c0_166, %c0_167], %467 {strides = array<i32>} : memref<4x2x128xf32, #tpu.memory_space<vmem>>, vector<1x2x128xf32>,
    %c0_168 = arith.constant 0 : index
    %c0_169 = arith.constant 0 : index
    %c0_170 = arith.constant 0 : index
    %468 = vector.load %arg12[%c0_168, %c0_169, %c0_170] : memref<4x2x128xf32, #tpu.memory_space<vmem>>, vector<1x2x128xf32>
    %469 = vector.shape_cast %468 : vector<1x2x128xf32> to vector<2x128xf32>
    %470 = vector.shape_cast %360 : vector<2x128xf32> to vector<1x2x128xf32>
    tpu.vector_store %arg12[%c0_168, %c0_169, %c0_170], %470 {strides = array<i32>} : memref<4x2x128xf32, #tpu.memory_space<vmem>>, vector<1x2x128xf32>,
    %c1_171 = arith.constant 1 : index
    %c0_172 = arith.constant 0 : index
    %c0_173 = arith.constant 0 : index
    %471 = vector.load %arg11[%c1_171, %c0_172, %c0_173] : memref<4x2x128xf32, #tpu.memory_space<vmem>>, vector<1x2x128xf32>
    %472 = vector.shape_cast %471 : vector<1x2x128xf32> to vector<2x128xf32>
    %473 = vector.shape_cast %401 : vector<2x128xf32> to vector<1x2x128xf32>
    tpu.vector_store %arg11[%c1_171, %c0_172, %c0_173], %473 {strides = array<i32>} : memref<4x2x128xf32, #tpu.memory_space<vmem>>, vector<1x2x128xf32>,
    %c1_174 = arith.constant 1 : index
    %c0_175 = arith.constant 0 : index
    %c0_176 = arith.constant 0 : index
    %474 = vector.load %arg12[%c1_174, %c0_175, %c0_176] : memref<4x2x128xf32, #tpu.memory_space<vmem>>, vector<1x2x128xf32>
    %475 = vector.shape_cast %474 : vector<1x2x128xf32> to vector<2x128xf32>
    %476 = vector.shape_cast %402 : vector<2x128xf32> to vector<1x2x128xf32>
    tpu.vector_store %arg12[%c1_174, %c0_175, %c0_176], %476 {strides = array<i32>} : memref<4x2x128xf32, #tpu.memory_space<vmem>>, vector<1x2x128xf32>,
    %c2_177 = arith.constant 2 : index
    %c0_178 = arith.constant 0 : index
    %c0_179 = arith.constant 0 : index
    %477 = vector.load %arg11[%c2_177, %c0_178, %c0_179] : memref<4x2x128xf32, #tpu.memory_space<vmem>>, vector<1x2x128xf32>
    %478 = vector.shape_cast %477 : vector<1x2x128xf32> to vector<2x128xf32>
    %479 = vector.shape_cast %437 : vector<2x128xf32> to vector<1x2x128xf32>
    tpu.vector_store %arg11[%c2_177, %c0_178, %c0_179], %479 {strides = array<i32>} : memref<4x2x128xf32, #tpu.memory_space<vmem>>, vector<1x2x128xf32>,
    %c2_180 = arith.constant 2 : index
    %c0_181 = arith.constant 0 : index
    %c0_182 = arith.constant 0 : index
    %480 = vector.load %arg12[%c2_180, %c0_181, %c0_182] : memref<4x2x128xf32, #tpu.memory_space<vmem>>, vector<1x2x128xf32>
    %481 = vector.shape_cast %480 : vector<1x2x128xf32> to vector<2x128xf32>
    %482 = vector.shape_cast %438 : vector<2x128xf32> to vector<1x2x128xf32>
    tpu.vector_store %arg12[%c2_180, %c0_181, %c0_182], %482 {strides = array<i32>} : memref<4x2x128xf32, #tpu.memory_space<vmem>>, vector<1x2x128xf32>,
    %c3_183 = arith.constant 3 : index
    %c0_184 = arith.constant 0 : index
    %c0_185 = arith.constant 0 : index
    %483 = vector.load %arg11[%c3_183, %c0_184, %c0_185] : memref<4x2x128xf32, #tpu.memory_space<vmem>>, vector<1x2x128xf32>
    %484 = vector.shape_cast %483 : vector<1x2x128xf32> to vector<2x128xf32>
    %485 = vector.shape_cast %464 : vector<2x128xf32> to vector<1x2x128xf32>
    tpu.vector_store %arg11[%c3_183, %c0_184, %c0_185], %485 {strides = array<i32>} : memref<4x2x128xf32, #tpu.memory_space<vmem>>, vector<1x2x128xf32>,
    %c3_186 = arith.constant 3 : index
    %c0_187 = arith.constant 0 : index
    %c0_188 = arith.constant 0 : index
    %486 = vector.load %arg12[%c3_186, %c0_187, %c0_188] : memref<4x2x128xf32, #tpu.memory_space<vmem>>, vector<1x2x128xf32>
    %487 = vector.shape_cast %486 : vector<1x2x128xf32> to vector<2x128xf32>
    %488 = vector.shape_cast %462 : vector<2x128xf32> to vector<1x2x128xf32>
    tpu.vector_store %arg12[%c3_186, %c0_187, %c0_188], %488 {strides = array<i32>} : memref<4x2x128xf32, #tpu.memory_space<vmem>>, vector<1x2x128xf32>,
    %489 = vector.extract_strided_slice %464 {offsets = [1, 0], sizes = [1, 128], strides = [1, 1]} : vector<2x128xf32> to vector<1x128xf32>
    %c0_189 = arith.constant 0 : index
    %c0_190 = arith.constant 0 : index
    %490 = vector.load %arg9[%c0_189, %c0_190] : memref<1x128xf32, #tpu.memory_space<vmem>>, vector<1x128xf32>
    %491 = arith.mulf %489, %490 : vector<1x128xf32>
    %cst_191 = arith.constant dense<0.000000e+00> : vector<1xf32>
    %492 = vector.multi_reduction <add>, %491, %cst_191 [1] : vector<1x128xf32> to vector<1xf32>
    %493 = vector.shape_cast %492 : vector<1xf32> to vector<1x1xf32>
    %c0_192 = arith.constant 0 : index
    %c0_193 = arith.constant 0 : index
    %494 = vector.load %arg10[%c0_192, %c0_193] : memref<1x1xf32, #tpu.memory_space<vmem>>, vector<1x1xf32>
    %495 = arith.addf %493, %494 : vector<1x1xf32>
    %496 = arith.negf %495 : vector<1x1xf32>
    %497 = math.exp %496 : vector<1x1xf32>
    %cst_194 = arith.constant 1.000000e+00 : f32
    %498 = vector.broadcast %cst_194 : f32 to vector<1x1xf32>
    %499 = arith.addf %498, %497 : vector<1x1xf32>
    %500 = arith.divf %498, %499 : vector<1x1xf32>
    %c0_195 = arith.constant 0 : index
    %c0_196 = arith.constant 0 : index
    %501 = vector.load %arg13[%c0_195, %c0_196] : memref<1x1xf32, #tpu.memory_space<vmem>>, vector<1x1xf32>
    tpu.vector_store %arg13[%c0_195, %c0_196], %500 {strides = array<i32>} : memref<1x1xf32, #tpu.memory_space<vmem>>, vector<1x1xf32>,
    return
  }
}

</mosaic_0001>

<llo_original>
// kernel: lstm_forward.1
$region0: #{lstm_forward.1}
  #allocation0 [shape = 'u32[]', space=smem, size = 0x4, offset = 0x4, fixed_abs, tag = 'smem constant byte address 0x4 - core index']
  #allocation1 [shape = 'u32[144,128]{1,0:T(1,128)}', space=vmem, size = 0x12000, scoped, tag = 'internal scratch']
  #allocation2 [shape = 'f32[1,1]{1,0:T(1,128)S(1)}', space=vmem, size = 0x200, scoped, tag = 'scoped memory for lstm_forward.1']
  %s0 = inlined_call_operand.vmem [shape: bf16[16,384], index: 0, kind: input, shape index: {}]
  %s1 = inlined_call_operand.vmem [shape: f32[4,2,128], index: 1, kind: input, shape index: {}]
  %s2 = inlined_call_operand.vmem [shape: f32[4,2,128], index: 2, kind: input, shape index: {}]
  %s3 = inlined_call_operand.hbm [shape: bf16[384,512], index: 3, kind: input, shape index: {}]
  %s4 = inlined_call_operand.hbm [shape: bf16[128,512], index: 4, kind: input, shape index: {}]
  %s5 = inlined_call_operand.hbm [shape: bf16[256,512], index: 5, kind: input, shape index: {}]
  %s6 = inlined_call_operand.hbm [shape: bf16[256,512], index: 6, kind: input, shape index: {}]
  %s7 = inlined_call_operand.hbm [shape: bf16[256,512], index: 7, kind: input, shape index: {}]
  %s8 = inlined_call_operand.vmem [shape: f32[4,1,512], index: 8, kind: input, shape index: {}]
  %s9 = inlined_call_operand.vmem [shape: f32[1,128], index: 9, kind: input, shape index: {}]
  %s10 = inlined_call_operand.<no memory space> [shape: f32[1,1], index: 10, kind: input, shape index: {}]
  %s11 = inlined_call_operand.hbm [shape: f32[4,2,128], index: 11, kind: output, shape index: {0}]
  %s12 = inlined_call_operand.hbm [shape: f32[4,2,128], index: 12, kind: output, shape index: {1}]
  %s13 = inlined_call_operand.hbm [shape: f32[1,1], index: 13, kind: output, shape index: {2}]
  %14 = xla_tuple %s11, %s12, %s13
  %s15 = sld [smem:[#allocation0]]
  $region90: #{lstm_forward.1} parent=0
    _
  %s17 = ssub.s32 1, %s15
  %s18 = scalar_select 0, %s17, %s15
  %v19 = vstv %s10
  %20 = vst [vmem:[#allocation2] sm:$0x1] %v19
  $region1: #{lstm_forward.1} parent=0
    #allocation3 [shape = 'u8[393216]{0}', space=vmem, size = 0x60000, scoped, tag = 'input window, operand 3, single buffered']
    #allocation4 [shape = 's32[1]{0}', space=sflag, size = 0x4, scoped, tag = 'scoped memory for lstm_forward.1']
    #allocation5 [shape = 's32[1]{0}', space=sflag, size = 0x4, scoped, tag = 'scoped memory for lstm_forward.1']
    #allocation6 [shape = 'u8[131072]{0}', space=vmem, size = 0x20000, scoped, tag = 'input window, operand 4, single buffered']
    #allocation7 [shape = 's32[1]{0}', space=sflag, size = 0x4, scoped, tag = 'scoped memory for lstm_forward.1']
    #allocation8 [shape = 'u8[262144]{0}', space=vmem, size = 0x40000, scoped, tag = 'input window, operand 5, single buffered']
    #allocation9 [shape = 'u8[262144]{0}', space=vmem, size = 0x40000, scoped, tag = 'input window, operand 6, single buffered']
    #allocation10 [shape = 's32[1]{0}', space=sflag, size = 0x4, scoped, tag = 'scoped memory for lstm_forward.1']
    #allocation11 [shape = 'u8[262144]{0}', space=vmem, size = 0x40000, scoped, tag = 'input window, operand 7, single buffered']
    #allocation12 [shape = 'u8[4096]{0}', space=vmem, size = 0x1000, scoped, tag = 'output window, operand 0, single buffered']
    #allocation13 [shape = 'u8[4096]{0}', space=vmem, size = 0x1000, scoped, tag = 'output window, operand 1, single buffered']
    #allocation14 [shape = 's32[1]{0}', space=sflag, size = 0x4, scoped, tag = 'scoped memory for lstm_forward.1']
    #allocation15 [shape = 'u8[512]{0}', space=vmem, size = 0x400, scoped, tag = 'output window, operand 2, single buffered']
    %21 = vsyncpa [#allocation4], 0
    %22 = vsyncpa [#allocation7], 0
    %23 = vsyncpa [#allocation10], 0
    %24 = vsyncpa [#allocation5], 0
    %25 = vsyncpa [#allocation14], 0
    // Predicated region
    $region2: #{lstm_forward.1} parent=1 // pred_check
      _
    $region3: #{lstm_forward.1} parent=1 // pred_check_branch
      %27 = sbr.rel (0) target = $region5
    $region4: #{lstm_forward.1} parent=1 // pred_region
      _
    $region5: #{lstm_forward.1} parent=1 // pred_fallthru
      _
    // Predicated region
    $region6: #{lstm_forward.1} parent=1 // pred_check
      _
    $region7: #{lstm_forward.1} parent=1 // pred_check_branch
      %29 = sbr.rel (0) target = $region9
    $region8: #{lstm_forward.1} parent=1 // pred_region
      _
    $region9: #{lstm_forward.1} parent=1 // pred_fallthru
      _
    // Predicated region
    $region10: #{lstm_forward.1} parent=1 // pred_check
      _
    $region11: #{lstm_forward.1} parent=1 // pred_check_branch
      %31 = sbr.rel (0) target = $region13
    $region12: #{lstm_forward.1} parent=1 // pred_region
      _
    $region13: #{lstm_forward.1} parent=1 // pred_fallthru
      _
    // Predicated region
    $region14: #{lstm_forward.1} parent=1 // pred_check
      _
    $region15: #{lstm_forward.1} parent=1 // pred_check_branch
      %33 = sbr.rel (0) target = $region17
    $region16: #{lstm_forward.1} parent=1 // pred_region
      %s35 = ssub.s32 12288, 12288
      %36 = vsyncadd [#allocation4], %s35
      %s37 = sshll.u32 [#allocation3], 4
      %s38 = int_to_ptr.vmem [resolvable:$true] %s37
      %43 = dma.hbm_to_vmem [thread:$0]  %s3, 12288, %s38, [#allocation4], 256, 256, 16
    $region17: #{lstm_forward.1} parent=1 // pred_fallthru
      _
    // Predicated region
    $region18: #{lstm_forward.1} parent=1 // pred_check
      _
    $region19: #{lstm_forward.1} parent=1 // pred_check_branch
      %45 = sbr.rel (0) target = $region21
    $region20: #{lstm_forward.1} parent=1 // pred_region
      %s47 = ssub.s32 4096, 4096
      %48 = vsyncadd [#allocation7], %s47
      %s49 = sshll.u32 [#allocation6], 4
      %s50 = int_to_ptr.vmem [resolvable:$true] %s49
      %55 = dma.hbm_to_vmem [thread:$0]  %s4, 4096, %s50, [#allocation7], 256, 256, 16
    $region21: #{lstm_forward.1} parent=1 // pred_fallthru
      _
    // Predicated region
    $region22: #{lstm_forward.1} parent=1 // pred_check
      _
    $region23: #{lstm_forward.1} parent=1 // pred_check_branch
      %57 = sbr.rel (0) target = $region25
    $region24: #{lstm_forward.1} parent=1 // pred_region
      %s59 = ssub.s32 8192, 8192
      %60 = vsyncadd [#allocation7], %s59
      %s61 = sshll.u32 [#allocation8], 4
      %s62 = int_to_ptr.vmem [resolvable:$true] %s61
      %67 = dma.hbm_to_vmem [thread:$0]  %s5, 8192, %s62, [#allocation7], 256, 256, 16
    $region25: #{lstm_forward.1} parent=1 // pred_fallthru
      _
    // Predicated region
    $region26: #{lstm_forward.1} parent=1 // pred_check
      _
    $region27: #{lstm_forward.1} parent=1 // pred_check_branch
      %69 = sbr.rel (0) target = $region29
    $region28: #{lstm_forward.1} parent=1 // pred_region
      %s71 = ssub.s32 8192, 8192
      %72 = vsyncadd [#allocation10], %s71
      %s73 = sshll.u32 [#allocation9], 4
      %s74 = int_to_ptr.vmem [resolvable:$true] %s73
      %79 = dma.hbm_to_vmem [thread:$0]  %s6, 8192, %s74, [#allocation10], 256, 256, 16
    $region29: #{lstm_forward.1} parent=1 // pred_fallthru
      _
    // Predicated region
    $region30: #{lstm_forward.1} parent=1 // pred_check
      _
    $region31: #{lstm_forward.1} parent=1 // pred_check_branch
      %81 = sbr.rel (0) target = $region33
    $region32: #{lstm_forward.1} parent=1 // pred_region
      %s83 = ssub.s32 8192, 8192
      %84 = vsyncadd [#allocation10], %s83
      %s85 = sshll.u32 [#allocation11], 4
      %s86 = int_to_ptr.vmem [resolvable:$true] %s85
      %91 = dma.hbm_to_vmem [thread:$0]  %s7, 8192, %s86, [#allocation10], 256, 256, 16
    $region33: #{lstm_forward.1} parent=1 // pred_fallthru
      _
    // Predicated region
    $region34: #{lstm_forward.1} parent=1 // pred_check
      _
    $region35: #{lstm_forward.1} parent=1 // pred_check_branch
      %93 = sbr.rel (0) target = $region37
    $region36: #{lstm_forward.1} parent=1 // pred_region
      _
    $region37: #{lstm_forward.1} parent=1 // pred_fallthru
      _
    // Predicated region
    $region38: #{lstm_forward.1} parent=1 // pred_check
      _
    $region39: #{lstm_forward.1} parent=1 // pred_check_branch
      %95 = sbr.rel (0) target = $region41
    $region40: #{lstm_forward.1} parent=1 // pred_region
      _
    $region41: #{lstm_forward.1} parent=1 // pred_fallthru
      _
    // Predicated region
    $region42: #{lstm_forward.1} parent=1 // pred_check
      _
    $region43: #{lstm_forward.1} parent=1 // pred_check_branch
      %97 = sbr.rel (0) target = $region45
    $region44: #{lstm_forward.1} parent=1 // pred_region
      _
    $region45: #{lstm_forward.1} parent=1 // pred_fallthru
      _
    // Predicated region
    $region46: #{lstm_forward.1} parent=1 // pred_check
      _
    $region47: #{lstm_forward.1} parent=1 // pred_check_branch
      %99 = sbr.rel (0) target = $region49
    $region48: #{lstm_forward.1} parent=1 // pred_region
      %100 = dma.done [#allocation4], 12288
    $region49: #{lstm_forward.1} parent=1 // pred_fallthru
      _
    // Predicated region
    $region50: #{lstm_forward.1} parent=1 // pred_check
      _
    $region51: #{lstm_forward.1} parent=1 // pred_check_branch
      %102 = sbr.rel (0) target = $region53
    $region52: #{lstm_forward.1} parent=1 // pred_region
      %103 = dma.done [#allocation7], 4096
    $region53: #{lstm_forward.1} parent=1 // pred_fallthru
      _
    // Predicated region
    $region54: #{lstm_forward.1} parent=1 // pred_check
      _
    $region55: #{lstm_forward.1} parent=1 // pred_check_branch
      %105 = sbr.rel (0) target = $region57
    $region56: #{lstm_forward.1} parent=1 // pred_region
      %106 = dma.done [#allocation7], 8192
    $region57: #{lstm_forward.1} parent=1 // pred_fallthru
      _
    // Predicated region
    $region58: #{lstm_forward.1} parent=1 // pred_check
      _
    $region59: #{lstm_forward.1} parent=1 // pred_check_branch
      %108 = sbr.rel (0) target = $region61
    $region60: #{lstm_forward.1} parent=1 // pred_region
      %109 = dma.done [#allocation10], 8192
    $region61: #{lstm_forward.1} parent=1 // pred_fallthru
      _
    // Predicated region
    $region62: #{lstm_forward.1} parent=1 // pred_check
      _
    $region63: #{lstm_forward.1} parent=1 // pred_check_branch
      %111 = sbr.rel (0) target = $region65
    $region64: #{lstm_forward.1} parent=1 // pred_region
      %112 = dma.done [#allocation10], 8192
    $region65: #{lstm_forward.1} parent=1 // pred_fallthru
      _
    %v114 = vld [vmem:[%s0] sm:$0xff]
    %v115 = vld [vmem:[%s0 + $0x8] sm:$0xf]
    %v116 = vld [vmem:[%s0 + $0xc] sm:$0xff]
    %v117 = vld [vmem:[%s0 + $0x14] sm:$0xf]
    %v118 = vld [vmem:[#allocation3] sm:$0xff]
    %v119 = vld [vmem:[#allocation3 + $0x8] sm:$0xff]
    %v120 = vld [vmem:[#allocation3 + $0x10] sm:$0xff]
    %v121 = vld [vmem:[#allocation3 + $0x18] sm:$0xff]
    %v122 = vld [vmem:[#allocation3 + $0x20] sm:$0xff]
    %v123 = vld [vmem:[#allocation3 + $0x28] sm:$0xff]
    %v124 = vld [vmem:[#allocation3 + $0x30] sm:$0xff]
    %v125 = vld [vmem:[#allocation3 + $0x38] sm:$0xff]
    %v126 = vld [vmem:[#allocation3 + $0x40] sm:$0xff]
    %v127 = vld [vmem:[#allocation3 + $0x48] sm:$0xff]
    %v128 = vld [vmem:[#allocation3 + $0x50] sm:$0xff]
    %v129 = vld [vmem:[#allocation3 + $0x58] sm:$0xff]
    %v130 = vld [vmem:[#allocation3 + $0x60] sm:$0xff]
    %v131 = vld [vmem:[#allocation3 + $0x68] sm:$0xff]
    %v132 = vld [vmem:[#allocation3 + $0x70] sm:$0xff]
    %v133 = vld [vmem:[#allocation3 + $0x78] sm:$0xff]
    %v134 = vld [vmem:[#allocation3 + $0x80] sm:$0xff]
    %v135 = vld [vmem:[#allocation3 + $0x88] sm:$0xff]
    %v136 = vld [vmem:[#allocation3 + $0x90] sm:$0xff]
    %v137 = vld [vmem:[#allocation3 + $0x98] sm:$0xff]
    %v138 = vld [vmem:[#allocation3 + $0xa0] sm:$0xff]
    %v139 = vld [vmem:[#allocation3 + $0xa8] sm:$0xff]
    %v140 = vld [vmem:[#allocation3 + $0xb0] sm:$0xff]
    %v141 = vld [vmem:[#allocation3 + $0xb8] sm:$0xff]
    %v142 = vld [vmem:[#allocation3 + $0xc0] sm:$0xff]
    %v143 = vld [vmem:[#allocation3 + $0xc8] sm:$0xff]
    %v144 = vld [vmem:[#allocation3 + $0xd0] sm:$0xff]
    %v145 = vld [vmem:[#allocation3 + $0xd8] sm:$0xff]
    %v146 = vld [vmem:[#allocation3 + $0xe0] sm:$0xff]
    %v147 = vld [vmem:[#allocation3 + $0xe8] sm:$0xff]
    %v148 = vld [vmem:[#allocation3 + $0xf0] sm:$0xff]
    %v149 = vld [vmem:[#allocation3 + $0xf8] sm:$0xff]
    %v150 = vld [vmem:[#allocation3 + $0x100] sm:$0xff]
    %v151 = vld [vmem:[#allocation3 + $0x108] sm:$0xff]
    %v152 = vld [vmem:[#allocation3 + $0x110] sm:$0xff]
    %v153 = vld [vmem:[#allocation3 + $0x118] sm:$0xff]
    %v154 = vld [vmem:[#allocation3 + $0x120] sm:$0xff]
    %v155 = vld [vmem:[#allocation3 + $0x128] sm:$0xff]
    %v156 = vld [vmem:[#allocation3 + $0x130] sm:$0xff]
    %v157 = vld [vmem:[#allocation3 + $0x138] sm:$0xff]
    %v158 = vld [vmem:[#allocation3 + $0x140] sm:$0xff]
    %v159 = vld [vmem:[#allocation3 + $0x148] sm:$0xff]
    %v160 = vld [vmem:[#allocation3 + $0x150] sm:$0xff]
    %v161 = vld [vmem:[#allocation3 + $0x158] sm:$0xff]
    %v162 = vld [vmem:[#allocation3 + $0x160] sm:$0xff]
    %v163 = vld [vmem:[#allocation3 + $0x168] sm:$0xff]
    %v164 = vld [vmem:[#allocation3 + $0x170] sm:$0xff]
    %v165 = vld [vmem:[#allocation3 + $0x178] sm:$0xff]
    %v166 = vld [vmem:[#allocation3 + $0x180] sm:$0xff]
    %v167 = vld [vmem:[#allocation3 + $0x188] sm:$0xff]
    %v168 = vld [vmem:[#allocation3 + $0x190] sm:$0xff]
    %v169 = vld [vmem:[#allocation3 + $0x198] sm:$0xff]
    %v170 = vld [vmem:[#allocation3 + $0x1a0] sm:$0xff]
    %v171 = vld [vmem:[#allocation3 + $0x1a8] sm:$0xff]
    %v172 = vld [vmem:[#allocation3 + $0x1b0] sm:$0xff]
    %v173 = vld [vmem:[#allocation3 + $0x1b8] sm:$0xff]
    %v174 = vld [vmem:[#allocation3 + $0x1c0] sm:$0xff]
    %v175 = vld [vmem:[#allocation3 + $0x1c8] sm:$0xff]
    %v176 = vld [vmem:[#allocation3 + $0x1d0] sm:$0xff]
    %v177 = vld [vmem:[#allocation3 + $0x1d8] sm:$0xff]
    %v178 = vld [vmem:[#allocation3 + $0x1e0] sm:$0xff]
    %v179 = vld [vmem:[#allocation3 + $0x1e8] sm:$0xff]
    %v180 = vld [vmem:[#allocation3 + $0x1f0] sm:$0xff]
    %v181 = vld [vmem:[#allocation3 + $0x1f8] sm:$0xff]
    %v182 = vld [vmem:[#allocation3 + $0x200] sm:$0xff]
    %v183 = vld [vmem:[#allocation3 + $0x208] sm:$0xff]
    %v184 = vld [vmem:[#allocation3 + $0x210] sm:$0xff]
    %v185 = vld [vmem:[#allocation3 + $0x218] sm:$0xff]
    %v186 = vld [vmem:[#allocation3 + $0x220] sm:$0xff]
    %v187 = vld [vmem:[#allocation3 + $0x228] sm:$0xff]
    %v188 = vld [vmem:[#allocation3 + $0x230] sm:$0xff]
    %v189 = vld [vmem:[#allocation3 + $0x238] sm:$0xff]
    %v190 = vld [vmem:[#allocation3 + $0x240] sm:$0xff]
    %v191 = vld [vmem:[#allocation3 + $0x248] sm:$0xff]
    %v192 = vld [vmem:[#allocation3 + $0x250] sm:$0xff]
    %v193 = vld [vmem:[#allocation3 + $0x258] sm:$0xff]
    %v194 = vld [vmem:[#allocation3 + $0x260] sm:$0xff]
    %v195 = vld [vmem:[#allocation3 + $0x268] sm:$0xff]
    %v196 = vld [vmem:[#allocation3 + $0x270] sm:$0xff]
    %v197 = vld [vmem:[#allocation3 + $0x278] sm:$0xff]
    %v198 = vld [vmem:[#allocation3 + $0x280] sm:$0xff]
    %v199 = vld [vmem:[#allocation3 + $0x288] sm:$0xff]
    %v200 = vld [vmem:[#allocation3 + $0x290] sm:$0xff]
    %v201 = vld [vmem:[#allocation3 + $0x298] sm:$0xff]
    %v202 = vld [vmem:[#allocation3 + $0x2a0] sm:$0xff]
    %v203 = vld [vmem:[#allocation3 + $0x2a8] sm:$0xff]
    %v204 = vld [vmem:[#allocation3 + $0x2b0] sm:$0xff]
    %v205 = vld [vmem:[#allocation3 + $0x2b8] sm:$0xff]
    %v206 = vld [vmem:[#allocation3 + $0x2c0] sm:$0xff]
    %v207 = vld [vmem:[#allocation3 + $0x2c8] sm:$0xff]
    %v208 = vld [vmem:[#allocation3 + $0x2d0] sm:$0xff]
    %v209 = vld [vmem:[#allocation3 + $0x2d8] sm:$0xff]
    %v210 = vld [vmem:[#allocation3 + $0x2e0] sm:$0xff]
    %v211 = vld [vmem:[#allocation3 + $0x2e8] sm:$0xff]
    %v212 = vld [vmem:[#allocation3 + $0x2f0] sm:$0xff]
    %v213 = vld [vmem:[#allocation3 + $0x2f8] sm:$0xff]
    %v218 = vunpack.c.l.b16 %v114
    %v219 = vunpack.c.h.b16 %v114
    %v220 = vunpack.c.l.b16 %v115
    %v221 = vunpack.c.l.b16 %v116
    %v222 = vunpack.c.h.b16 %v116
    %v223 = vunpack.c.l.b16 %v117
    %v224 = vpack.c.b16 %v221, %v218
    %v225 = vpack.c.b16 %v222, %v219
    %v226 = vpack.c.b16 %v223, %v220
    %v326 = vunpack.c.l.b16 %v118
    %v327 = vunpack.c.h.b16 %v118
    %v328 = vunpack.c.l.b16 %v119
    %v329 = vunpack.c.h.b16 %v119
    %v330 = vunpack.c.l.b16 %v120
    %v331 = vunpack.c.h.b16 %v120
    %v332 = vunpack.c.l.b16 %v121
    %v333 = vunpack.c.h.b16 %v121
    %v334 = vunpack.c.l.b16 %v122
    %v335 = vunpack.c.h.b16 %v122
    %v336 = vunpack.c.l.b16 %v123
    %v337 = vunpack.c.h.b16 %v123
    %v338 = vunpack.c.l.b16 %v124
    %v339 = vunpack.c.h.b16 %v124
    %v340 = vunpack.c.l.b16 %v125
    %v341 = vunpack.c.h.b16 %v125
    %v342 = vunpack.c.l.b16 %v126
    %v343 = vunpack.c.h.b16 %v126
    %v344 = vunpack.c.l.b16 %v127
    %v345 = vunpack.c.h.b16 %v127
    %v346 = vunpack.c.l.b16 %v128
    %v347 = vunpack.c.h.b16 %v128
    %v348 = vunpack.c.l.b16 %v129
    %v349 = vunpack.c.h.b16 %v129
    %v350 = vunpack.c.l.b16 %v130
    %v351 = vunpack.c.h.b16 %v130
    %v352 = vunpack.c.l.b16 %v131
    %v353 = vunpack.c.h.b16 %v131
    %v354 = vunpack.c.l.b16 %v132
    %v355 = vunpack.c.h.b16 %v132
    %v356 = vunpack.c.l.b16 %v133
    %v357 = vunpack.c.h.b16 %v133
    %v358 = vunpack.c.l.b16 %v134
    %v359 = vunpack.c.h.b16 %v134
    %v360 = vunpack.c.l.b16 %v135
    %v361 = vunpack.c.h.b16 %v135
    %v362 = vunpack.c.l.b16 %v136
    %v363 = vunpack.c.h.b16 %v136
    %v364 = vunpack.c.l.b16 %v137
    %v365 = vunpack.c.h.b16 %v137
    %v366 = vunpack.c.l.b16 %v138
    %v367 = vunpack.c.h.b16 %v138
    %v368 = vunpack.c.l.b16 %v139
    %v369 = vunpack.c.h.b16 %v139
    %v370 = vunpack.c.l.b16 %v140
    %v371 = vunpack.c.h.b16 %v140
    %v372 = vunpack.c.l.b16 %v141
    %v373 = vunpack.c.h.b16 %v141
    %v374 = vunpack.c.l.b16 %v142
    %v375 = vunpack.c.h.b16 %v142
    %v376 = vunpack.c.l.b16 %v143
    %v377 = vunpack.c.h.b16 %v143
    %v378 = vunpack.c.l.b16 %v144
    %v379 = vunpack.c.h.b16 %v144
    %v380 = vunpack.c.l.b16 %v145
    %v381 = vunpack.c.h.b16 %v145
    %v382 = vunpack.c.l.b16 %v146
    %v383 = vunpack.c.h.b16 %v146
    %v384 = vunpack.c.l.b16 %v147
    %v385 = vunpack.c.h.b16 %v147
    %v386 = vunpack.c.l.b16 %v148
    %v387 = vunpack.c.h.b16 %v148
    %v388 = vunpack.c.l.b16 %v149
    %v389 = vunpack.c.h.b16 %v149
    %v390 = vunpack.c.l.b16 %v150
    %v391 = vunpack.c.h.b16 %v150
    %v392 = vunpack.c.l.b16 %v151
    %v393 = vunpack.c.h.b16 %v151
    %v394 = vunpack.c.l.b16 %v152
    %v395 = vunpack.c.h.b16 %v152
    %v396 = vunpack.c.l.b16 %v153
    %v397 = vunpack.c.h.b16 %v153
    %v398 = vunpack.c.l.b16 %v154
    %v399 = vunpack.c.h.b16 %v154
    %v400 = vunpack.c.l.b16 %v155
    %v401 = vunpack.c.h.b16 %v155
    %v402 = vunpack.c.l.b16 %v156
    %v403 = vunpack.c.h.b16 %v156
    %v404 = vunpack.c.l.b16 %v157
    %v405 = vunpack.c.h.b16 %v157
    %v406 = vunpack.c.l.b16 %v158
    %v407 = vunpack.c.h.b16 %v158
    %v408 = vunpack.c.l.b16 %v159
    %v409 = vunpack.c.h.b16 %v159
    %v410 = vunpack.c.l.b16 %v160
    %v411 = vunpack.c.h.b16 %v160
    %v412 = vunpack.c.l.b16 %v161
    %v413 = vunpack.c.h.b16 %v161
    %v414 = vunpack.c.l.b16 %v162
    %v415 = vunpack.c.h.b16 %v162
    %v416 = vunpack.c.l.b16 %v163
    %v417 = vunpack.c.h.b16 %v163
    %v418 = vunpack.c.l.b16 %v164
    %v419 = vunpack.c.h.b16 %v164
    %v420 = vunpack.c.l.b16 %v165
    %v421 = vunpack.c.h.b16 %v165
    %v422 = vunpack.c.l.b16 %v166
    %v423 = vunpack.c.h.b16 %v166
    %v424 = vunpack.c.l.b16 %v167
    %v425 = vunpack.c.h.b16 %v167
    %v426 = vunpack.c.l.b16 %v168
    %v427 = vunpack.c.h.b16 %v168
    %v428 = vunpack.c.l.b16 %v169
    %v429 = vunpack.c.h.b16 %v169
    %v430 = vunpack.c.l.b16 %v170
    %v431 = vunpack.c.h.b16 %v170
    %v432 = vunpack.c.l.b16 %v171
    %v433 = vunpack.c.h.b16 %v171
    %v434 = vunpack.c.l.b16 %v172
    %v435 = vunpack.c.h.b16 %v172
    %v436 = vunpack.c.l.b16 %v173
    %v437 = vunpack.c.h.b16 %v173
    %v438 = vunpack.c.l.b16 %v174
    %v439 = vunpack.c.h.b16 %v174
    %v440 = vunpack.c.l.b16 %v175
    %v441 = vunpack.c.h.b16 %v175
    %v442 = vunpack.c.l.b16 %v176
    %v443 = vunpack.c.h.b16 %v176
    %v444 = vunpack.c.l.b16 %v177
    %v445 = vunpack.c.h.b16 %v177
    %v446 = vunpack.c.l.b16 %v178
    %v447 = vunpack.c.h.b16 %v178
    %v448 = vunpack.c.l.b16 %v179
    %v449 = vunpack.c.h.b16 %v179
    %v450 = vunpack.c.l.b16 %v180
    %v451 = vunpack.c.h.b16 %v180
    %v452 = vunpack.c.l.b16 %v181
    %v453 = vunpack.c.h.b16 %v181
    %v454 = vunpack.c.l.b16 %v182
    %v455 = vunpack.c.h.b16 %v182
    %v456 = vunpack.c.l.b16 %v183
    %v457 = vunpack.c.h.b16 %v183
    %v458 = vunpack.c.l.b16 %v184
    %v459 = vunpack.c.h.b16 %v184
    %v460 = vunpack.c.l.b16 %v185
    %v461 = vunpack.c.h.b16 %v185
    %v462 = vunpack.c.l.b16 %v186
    %v463 = vunpack.c.h.b16 %v186
    %v464 = vunpack.c.l.b16 %v187
    %v465 = vunpack.c.h.b16 %v187
    %v466 = vunpack.c.l.b16 %v188
    %v467 = vunpack.c.h.b16 %v188
    %v468 = vunpack.c.l.b16 %v189
    %v469 = vunpack.c.h.b16 %v189
    %v470 = vunpack.c.l.b16 %v190
    %v471 = vunpack.c.h.b16 %v190
    %v472 = vunpack.c.l.b16 %v191
    %v473 = vunpack.c.h.b16 %v191
    %v474 = vunpack.c.l.b16 %v192
    %v475 = vunpack.c.h.b16 %v192
    %v476 = vunpack.c.l.b16 %v193
    %v477 = vunpack.c.h.b16 %v193
    %v478 = vunpack.c.l.b16 %v194
    %v479 = vunpack.c.h.b16 %v194
    %v480 = vunpack.c.l.b16 %v195
    %v481 = vunpack.c.h.b16 %v195
    %v482 = vunpack.c.l.b16 %v196
    %v483 = vunpack.c.h.b16 %v196
    %v484 = vunpack.c.l.b16 %v197
    %v485 = vunpack.c.h.b16 %v197
    %v486 = vunpack.c.l.b16 %v198
    %v487 = vunpack.c.h.b16 %v198
    %v488 = vunpack.c.l.b16 %v199
    %v489 = vunpack.c.h.b16 %v199
    %v490 = vunpack.c.l.b16 %v200
    %v491 = vunpack.c.h.b16 %v200
    %v492 = vunpack.c.l.b16 %v201
    %v493 = vunpack.c.h.b16 %v201
    %v494 = vunpack.c.l.b16 %v202
    %v495 = vunpack.c.h.b16 %v202
    %v496 = vunpack.c.l.b16 %v203
    %v497 = vunpack.c.h.b16 %v203
    %v498 = vunpack.c.l.b16 %v204
    %v499 = vunpack.c.h.b16 %v204
    %v500 = vunpack.c.l.b16 %v205
    %v501 = vunpack.c.h.b16 %v205
    %v502 = vunpack.c.l.b16 %v206
    %v503 = vunpack.c.h.b16 %v206
    %v504 = vunpack.c.l.b16 %v207
    %v505 = vunpack.c.h.b16 %v207
    %v506 = vunpack.c.l.b16 %v208
    %v507 = vunpack.c.h.b16 %v208
    %v508 = vunpack.c.l.b16 %v209
    %v509 = vunpack.c.h.b16 %v209
    %v510 = vunpack.c.l.b16 %v210
    %v511 = vunpack.c.h.b16 %v210
    %v512 = vunpack.c.l.b16 %v211
    %v513 = vunpack.c.h.b16 %v211
    %v514 = vunpack.c.l.b16 %v212
    %v515 = vunpack.c.h.b16 %v212
    %v516 = vunpack.c.l.b16 %v213
    %v517 = vunpack.c.h.b16 %v213
    %v518 = vpack.c.b16 %v330, %v326
    %v519 = vpack.c.b16 %v331, %v327
    %v520 = vpack.c.b16 %v332, %v328
    %v521 = vpack.c.b16 %v333, %v329
    %v522 = vpack.c.b16 %v338, %v334
    %v523 = vpack.c.b16 %v339, %v335
    %v524 = vpack.c.b16 %v340, %v336
    %v525 = vpack.c.b16 %v341, %v337
    %v526 = vpack.c.b16 %v346, %v342
    %v527 = vpack.c.b16 %v347, %v343
    %v528 = vpack.c.b16 %v348, %v344
    %v529 = vpack.c.b16 %v349, %v345
    %v530 = vpack.c.b16 %v354, %v350
    %v531 = vpack.c.b16 %v355, %v351
    %v532 = vpack.c.b16 %v356, %v352
    %v533 = vpack.c.b16 %v357, %v353
    %v534 = vpack.c.b16 %v362, %v358
    %v535 = vpack.c.b16 %v363, %v359
    %v536 = vpack.c.b16 %v364, %v360
    %v537 = vpack.c.b16 %v365, %v361
    %v538 = vpack.c.b16 %v370, %v366
    %v539 = vpack.c.b16 %v371, %v367
    %v540 = vpack.c.b16 %v372, %v368
    %v541 = vpack.c.b16 %v373, %v369
    %v542 = vpack.c.b16 %v378, %v374
    %v543 = vpack.c.b16 %v379, %v375
    %v544 = vpack.c.b16 %v380, %v376
    %v545 = vpack.c.b16 %v381, %v377
    %v546 = vpack.c.b16 %v386, %v382
    %v547 = vpack.c.b16 %v387, %v383
    %v548 = vpack.c.b16 %v388, %v384
    %v549 = vpack.c.b16 %v389, %v385
    %v550 = vpack.c.b16 %v394, %v390
    %v551 = vpack.c.b16 %v395, %v391
    %v552 = vpack.c.b16 %v396, %v392
    %v553 = vpack.c.b16 %v397, %v393
    %v554 = vpack.c.b16 %v402, %v398
    %v555 = vpack.c.b16 %v403, %v399
    %v556 = vpack.c.b16 %v404, %v400
    %v557 = vpack.c.b16 %v405, %v401
    %v558 = vpack.c.b16 %v410, %v406
    %v559 = vpack.c.b16 %v411, %v407
    %v560 = vpack.c.b16 %v412, %v408
    %v561 = vpack.c.b16 %v413, %v409
    %v562 = vpack.c.b16 %v418, %v414
    %v563 = vpack.c.b16 %v419, %v415
    %v564 = vpack.c.b16 %v420, %v416
    %v565 = vpack.c.b16 %v421, %v417
    %v566 = vpack.c.b16 %v426, %v422
    %v567 = vpack.c.b16 %v427, %v423
    %v568 = vpack.c.b16 %v428, %v424
    %v569 = vpack.c.b16 %v429, %v425
    %v570 = vpack.c.b16 %v434, %v430
    %v571 = vpack.c.b16 %v435, %v431
    %v572 = vpack.c.b16 %v436, %v432
    %v573 = vpack.c.b16 %v437, %v433
    %v574 = vpack.c.b16 %v442, %v438
    %v575 = vpack.c.b16 %v443, %v439
    %v576 = vpack.c.b16 %v444, %v440
    %v577 = vpack.c.b16 %v445, %v441
    %v578 = vpack.c.b16 %v450, %v446
    %v579 = vpack.c.b16 %v451, %v447
    %v580 = vpack.c.b16 %v452, %v448
    %v581 = vpack.c.b16 %v453, %v449
    %v582 = vpack.c.b16 %v458, %v454
    %v583 = vpack.c.b16 %v459, %v455
    %v584 = vpack.c.b16 %v460, %v456
    %v585 = vpack.c.b16 %v461, %v457
    %v586 = vpack.c.b16 %v466, %v462
    %v587 = vpack.c.b16 %v467, %v463
    %v588 = vpack.c.b16 %v468, %v464
    %v589 = vpack.c.b16 %v469, %v465
    %v590 = vpack.c.b16 %v474, %v470
    %v591 = vpack.c.b16 %v475, %v471
    %v592 = vpack.c.b16 %v476, %v472
    %v593 = vpack.c.b16 %v477, %v473
    %v594 = vpack.c.b16 %v482, %v478
    %v595 = vpack.c.b16 %v483, %v479
    %v596 = vpack.c.b16 %v484, %v480
    %v597 = vpack.c.b16 %v485, %v481
    %v598 = vpack.c.b16 %v490, %v486
    %v599 = vpack.c.b16 %v491, %v487
    %v600 = vpack.c.b16 %v492, %v488
    %v601 = vpack.c.b16 %v493, %v489
    %v602 = vpack.c.b16 %v498, %v494
    %v603 = vpack.c.b16 %v499, %v495
    %v604 = vpack.c.b16 %v500, %v496
    %v605 = vpack.c.b16 %v501, %v497
    %v606 = vpack.c.b16 %v506, %v502
    %v607 = vpack.c.b16 %v507, %v503
    %v608 = vpack.c.b16 %v508, %v504
    %v609 = vpack.c.b16 %v509, %v505
    %v610 = vpack.c.b16 %v514, %v510
    %v611 = vpack.c.b16 %v515, %v511
    %v612 = vpack.c.b16 %v516, %v512
    %v613 = vpack.c.b16 %v517, %v513
    %710 = vmatprep.subr.bf16.mxu0 %v547
    %711 = vmatpush1.bf16.msra.mxu0 %v546
    %712 = vmatprep.subr.bf16.mxu0 %v543
    %713 = vmatpush1.bf16.msra.mxu0 %v542
    %714 = vmatprep.subr.bf16.mxu0 %v539
    %715 = vmatpush1.bf16.msra.mxu0 %v538
    %716 = vmatprep.subr.bf16.mxu0 %v535
    %717 = vmatpush1.bf16.msra.mxu0 %v534
    %718 = vmatprep.subr.bf16.mxu0 %v531
    %719 = vmatpush1.bf16.msra.mxu0 %v530
    %720 = vmatprep.subr.bf16.mxu0 %v527
    %721 = vmatpush1.bf16.msra.mxu0 %v526
    %722 = vmatprep.subr.bf16.mxu0 %v523
    %723 = vmatpush1.bf16.msra.mxu0 %v522
    %724 = vmatprep.subr.bf16.mxu0 %v519
    %725 = vmatpush1.bf16.msra.mxu0 %v518
    %726 = vmatprep.subr.bf16.mxu0 %v579
    %727 = vmatpush2.bf16.msra.mxu0 %v578
    %728 = vmatprep.subr.bf16.mxu0 %v575
    %729 = vmatpush2.bf16.msra.mxu0 %v574
    %730 = vmatprep.subr.bf16.mxu0 %v571
    %731 = vmatpush2.bf16.msra.mxu0 %v570
    %732 = vmatprep.subr.bf16.mxu0 %v567
    %733 = vmatpush2.bf16.msra.mxu0 %v566
    %734 = vmatprep.subr.bf16.mxu0 %v563
    %735 = vmatpush2.bf16.msra.mxu0 %v562
    %736 = vmatprep.subr.bf16.mxu0 %v559
    %737 = vmatpush2.bf16.msra.mxu0 %v558
    %738 = vmatprep.subr.bf16.mxu0 %v555
    %739 = vmatpush2.bf16.msra.mxu0 %v554
    %740 = vmatprep.subr.bf16.mxu0 %v551
    %741 = vmatpush2.bf16.msra.mxu0 %v550
    %742 = vmatprep.mubr.bf16.mxu0 %v225
    %743 = vmatmul.mubr.bf16.gmra.mxu0 %v224
    %v744 = vpop.f32.mrf.mxu0
    %v745 = vadd.f32 0.0, %v744
    %v746 = vpop.f32.mrf.mxu0
    %v747 = vadd.f32 0.0, %v746
    %v748 = vpop.f32.mrf.mxu0
    %v749 = vadd.f32 0.0, %v748
    %v750 = vpop.f32.mrf.mxu0
    %v751 = vadd.f32 0.0, %v750
    %752 = vdwg.mxu0
    %753 = vmatprep.subr.bf16.mxu0 %v611
    %754 = vmatpush1.bf16.msra.mxu0 %v610
    %755 = vmatprep.subr.bf16.mxu0 %v607
    %756 = vmatpush1.bf16.msra.mxu0 %v606
    %757 = vmatprep.subr.bf16.mxu0 %v603
    %758 = vmatpush1.bf16.msra.mxu0 %v602
    %759 = vmatprep.subr.bf16.mxu0 %v599
    %760 = vmatpush1.bf16.msra.mxu0 %v598
    %761 = vmatprep.subr.bf16.mxu0 %v595
    %762 = vmatpush1.bf16.msra.mxu0 %v594
    %763 = vmatprep.subr.bf16.mxu0 %v591
    %764 = vmatpush1.bf16.msra.mxu0 %v590
    %765 = vmatprep.subr.bf16.mxu0 %v587
    %766 = vmatpush1.bf16.msra.mxu0 %v586
    %767 = vmatprep.subr.bf16.mxu0 %v583
    %768 = vmatpush1.bf16.msra.mxu0 %v582
    %769 = vmatprep.subr.bf16.mxu0 0
    %770 = vmatpush2.bf16.msra.mxu0 0
    %771 = vmatprep.subr.bf16.mxu0 0
    %772 = vmatpush2.bf16.msra.mxu0 0
    %773 = vmatprep.subr.bf16.mxu0 0
    %774 = vmatpush2.bf16.msra.mxu0 0
    %775 = vmatprep.subr.bf16.mxu0 0
    %776 = vmatpush2.bf16.msra.mxu0 0
    %777 = vmatprep.subr.bf16.mxu0 0
    %778 = vmatpush2.bf16.msra.mxu0 0
    %779 = vmatprep.subr.bf16.mxu0 0
    %780 = vmatpush2.bf16.msra.mxu0 0
    %781 = vmatprep.subr.bf16.mxu0 0
    %782 = vmatpush2.bf16.msra.mxu0 0
    %783 = vmatprep.subr.bf16.mxu0 0
    %784 = vmatpush2.bf16.msra.mxu0 0
    %785 = vmatprep.mubr.bf16.mxu0 0
    %786 = vmatmul.mubr.bf16.gmra.mxu0 %v226
    %v787 = vpop.f32.mrf.mxu0
    %v788 = vadd.f32 %v745, %v787
    %v789 = vpop.f32.mrf.mxu0
    %v790 = vadd.f32 %v747, %v789
    %v791 = vpop.f32.mrf.mxu0
    %v792 = vadd.f32 %v749, %v791
    %v793 = vpop.f32.mrf.mxu0
    %v794 = vadd.f32 %v751, %v793
    %795 = vdwg.mxu0
    %796 = vmatprep.subr.bf16.mxu0 %v549
    %797 = vmatpush1.bf16.msra.mxu0 %v548
    %798 = vmatprep.subr.bf16.mxu0 %v545
    %799 = vmatpush1.bf16.msra.mxu0 %v544
    %800 = vmatprep.subr.bf16.mxu0 %v541
    %801 = vmatpush1.bf16.msra.mxu0 %v540
    %802 = vmatprep.subr.bf16.mxu0 %v537
    %803 = vmatpush1.bf16.msra.mxu0 %v536
    %804 = vmatprep.subr.bf16.mxu0 %v533
    %805 = vmatpush1.bf16.msra.mxu0 %v532
    %806 = vmatprep.subr.bf16.mxu0 %v529
    %807 = vmatpush1.bf16.msra.mxu0 %v528
    %808 = vmatprep.subr.bf16.mxu0 %v525
    %809 = vmatpush1.bf16.msra.mxu0 %v524
    %810 = vmatprep.subr.bf16.mxu0 %v521
    %811 = vmatpush1.bf16.msra.mxu0 %v520
    %812 = vmatprep.subr.bf16.mxu0 %v581
    %813 = vmatpush2.bf16.msra.mxu0 %v580
    %814 = vmatprep.subr.bf16.mxu0 %v577
    %815 = vmatpush2.bf16.msra.mxu0 %v576
    %816 = vmatprep.subr.bf16.mxu0 %v573
    %817 = vmatpush2.bf16.msra.mxu0 %v572
    %818 = vmatprep.subr.bf16.mxu0 %v569
    %819 = vmatpush2.bf16.msra.mxu0 %v568
    %820 = vmatprep.subr.bf16.mxu0 %v565
    %821 = vmatpush2.bf16.msra.mxu0 %v564
    %822 = vmatprep.subr.bf16.mxu0 %v561
    %823 = vmatpush2.bf16.msra.mxu0 %v560
    %824 = vmatprep.subr.bf16.mxu0 %v557
    %825 = vmatpush2.bf16.msra.mxu0 %v556
    %826 = vmatprep.subr.bf16.mxu0 %v553
    %827 = vmatpush2.bf16.msra.mxu0 %v552
    %828 = vmatprep.mubr.bf16.mxu0 %v225
    %829 = vmatmul.mubr.bf16.gmra.mxu0 %v224
    %v830 = vpop.f32.mrf.mxu0
    %v831 = vadd.f32 0.0, %v830
    %v832 = vpop.f32.mrf.mxu0
    %v833 = vadd.f32 0.0, %v832
    %v834 = vpop.f32.mrf.mxu0
    %v835 = vadd.f32 0.0, %v834
    %v836 = vpop.f32.mrf.mxu0
    %v837 = vadd.f32 0.0, %v836
    %838 = vdwg.mxu0
    %839 = vmatprep.subr.bf16.mxu0 %v613
    %840 = vmatpush1.bf16.msra.mxu0 %v612
    %841 = vmatprep.subr.bf16.mxu0 %v609
    %842 = vmatpush1.bf16.msra.mxu0 %v608
    %843 = vmatprep.subr.bf16.mxu0 %v605
    %844 = vmatpush1.bf16.msra.mxu0 %v604
    %845 = vmatprep.subr.bf16.mxu0 %v601
    %846 = vmatpush1.bf16.msra.mxu0 %v600
    %847 = vmatprep.subr.bf16.mxu0 %v597
    %848 = vmatpush1.bf16.msra.mxu0 %v596
    %849 = vmatprep.subr.bf16.mxu0 %v593
    %850 = vmatpush1.bf16.msra.mxu0 %v592
    %851 = vmatprep.subr.bf16.mxu0 %v589
    %852 = vmatpush1.bf16.msra.mxu0 %v588
    %853 = vmatprep.subr.bf16.mxu0 %v585
    %854 = vmatpush1.bf16.msra.mxu0 %v584
    %855 = vmatprep.subr.bf16.mxu0 0
    %856 = vmatpush2.bf16.msra.mxu0 0
    %857 = vmatprep.subr.bf16.mxu0 0
    %858 = vmatpush2.bf16.msra.mxu0 0
    %859 = vmatprep.subr.bf16.mxu0 0
    %860 = vmatpush2.bf16.msra.mxu0 0
    %861 = vmatprep.subr.bf16.mxu0 0
    %862 = vmatpush2.bf16.msra.mxu0 0
    %863 = vmatprep.subr.bf16.mxu0 0
    %864 = vmatpush2.bf16.msra.mxu0 0
    %865 = vmatprep.subr.bf16.mxu0 0
    %866 = vmatpush2.bf16.msra.mxu0 0
    %867 = vmatprep.subr.bf16.mxu0 0
    %868 = vmatpush2.bf16.msra.mxu0 0
    %869 = vmatprep.subr.bf16.mxu0 0
    %870 = vmatpush2.bf16.msra.mxu0 0
    %871 = vmatprep.mubr.bf16.mxu0 0
    %872 = vmatmul.mubr.bf16.gmra.mxu0 %v226
    %v873 = vpop.f32.mrf.mxu0
    %v874 = vadd.f32 %v831, %v873
    %v875 = vpop.f32.mrf.mxu0
    %v876 = vadd.f32 %v833, %v875
    %v877 = vpop.f32.mrf.mxu0
    %v878 = vadd.f32 %v835, %v877
    %v879 = vpop.f32.mrf.mxu0
    %v880 = vadd.f32 %v837, %v879
    %881 = vdwg.mxu0
    %v882 = vld [vmem:[%s8] sm:$0xf]
    %v884 = vlaneseq
    %v885 = vshrl.u32 %v884, 7
    %v886 = vsub.s32 0, %v885
    %v887 = vrot.slane %v882, %v886
    %v888 = vlaneseq
    %v889 = vshrl.u32 %v888, 7
    %v890 = vsub.s32 1, %v889
    %v891 = vrot.slane %v882, %v890
    %v892 = vlaneseq
    %v893 = vshrl.u32 %v892, 7
    %v894 = vsub.s32 2, %v893
    %v895 = vrot.slane %v882, %v894
    %v896 = vlaneseq
    %v897 = vshrl.u32 %v896, 7
    %v898 = vsub.s32 3, %v897
    %v899 = vrot.slane %v882, %v898
    %s904 = scalar_lea.vmem %s8, 4
    %v905 = vld [vmem:[%s904] sm:$0xf]
    %v907 = vlaneseq
    %v908 = vshrl.u32 %v907, 7
    %v909 = vsub.s32 0, %v908
    %v910 = vrot.slane %v905, %v909
    %v911 = vlaneseq
    %v912 = vshrl.u32 %v911, 7
    %v913 = vsub.s32 1, %v912
    %v914 = vrot.slane %v905, %v913
    %v915 = vlaneseq
    %v916 = vshrl.u32 %v915, 7
    %v917 = vsub.s32 2, %v916
    %v918 = vrot.slane %v905, %v917
    %v919 = vlaneseq
    %v920 = vshrl.u32 %v919, 7
    %v921 = vsub.s32 3, %v920
    %v922 = vrot.slane %v905, %v921
    %s927 = scalar_lea.vmem %s8, 8
    %v928 = vld [vmem:[%s927] sm:$0xf]
    %v930 = vlaneseq
    %v931 = vshrl.u32 %v930, 7
    %v932 = vsub.s32 0, %v931
    %v933 = vrot.slane %v928, %v932
    %v934 = vlaneseq
    %v935 = vshrl.u32 %v934, 7
    %v936 = vsub.s32 1, %v935
    %v937 = vrot.slane %v928, %v936
    %v938 = vlaneseq
    %v939 = vshrl.u32 %v938, 7
    %v940 = vsub.s32 2, %v939
    %v941 = vrot.slane %v928, %v940
    %v942 = vlaneseq
    %v943 = vshrl.u32 %v942, 7
    %v944 = vsub.s32 3, %v943
    %v945 = vrot.slane %v928, %v944
    %s950 = scalar_lea.vmem %s8, 12
    %v951 = vld [vmem:[%s950] sm:$0xf]
    %v953 = vlaneseq
    %v954 = vshrl.u32 %v953, 7
    %v955 = vsub.s32 0, %v954
    %v956 = vrot.slane %v951, %v955
    %v957 = vlaneseq
    %v958 = vshrl.u32 %v957, 7
    %v959 = vsub.s32 1, %v958
    %v960 = vrot.slane %v951, %v959
    %v961 = vlaneseq
    %v962 = vshrl.u32 %v961, 7
    %v963 = vsub.s32 2, %v962
    %v964 = vrot.slane %v951, %v963
    %v965 = vlaneseq
    %v966 = vshrl.u32 %v965, 7
    %v967 = vsub.s32 3, %v966
    %v968 = vrot.slane %v951, %v967
    %vm973 = vcmask 1041408
    %v974 = vsel %vm973, %v887, %v910
    %v975 = vsel %vm973, %v891, %v914
    %v976 = vsel %vm973, %v895, %v918
    %v977 = vsel %vm973, %v899, %v922
    %vm978 = vcmask 1043456
    %v979 = vsel %vm978, %v974, %v933
    %v980 = vsel %vm978, %v975, %v937
    %v981 = vsel %vm978, %v976, %v941
    %v982 = vsel %vm978, %v977, %v945
    %vm983 = vcmask 1045504
    %v984 = vsel %vm983, %v979, %v956
    %v985 = vsel %vm983, %v980, %v960
    %v986 = vsel %vm983, %v981, %v964
    %v987 = vsel %vm983, %v982, %v968
    %v988 = vld [vmem:[%s1] sm:$0x3]
    %s989 = scalar_lea.vmem %s1, 2
    %v990 = vld [vmem:[%s989] sm:$0x3]
    %s991 = scalar_lea.vmem %s1, 4
    %v992 = vld [vmem:[%s991] sm:$0x3]
    %s993 = scalar_lea.vmem %s1, 6
    %v994 = vld [vmem:[%s993] sm:$0x3]
    %v995 = vld [vmem:[%s2] sm:$0x3]
    %s996 = scalar_lea.vmem %s2, 2
    %v997 = vld [vmem:[%s996] sm:$0x3]
    %s998 = scalar_lea.vmem %s2, 4
    %v999 = vld [vmem:[%s998] sm:$0x3]
    %s1000 = scalar_lea.vmem %s2, 6
    %v1001 = vld [vmem:[%s1000] sm:$0x3]
    %v1002 = vpack.c.bf16 %v988, %v988
    %v1003 = vld [vmem:[#allocation6] sm:$0xff]
    %v1004 = vld [vmem:[#allocation6 + $0x8] sm:$0xff]
    %v1005 = vld [vmem:[#allocation6 + $0x10] sm:$0xff]
    %v1006 = vld [vmem:[#allocation6 + $0x18] sm:$0xff]
    %v1007 = vld [vmem:[#allocation6 + $0x20] sm:$0xff]
    %v1008 = vld [vmem:[#allocation6 + $0x28] sm:$0xff]
    %v1009 = vld [vmem:[#allocation6 + $0x30] sm:$0xff]
    %v1010 = vld [vmem:[#allocation6 + $0x38] sm:$0xff]
    %v1011 = vld [vmem:[#allocation6 + $0x40] sm:$0xff]
    %v1012 = vld [vmem:[#allocation6 + $0x48] sm:$0xff]
    %v1013 = vld [vmem:[#allocation6 + $0x50] sm:$0xff]
    %v1014 = vld [vmem:[#allocation6 + $0x58] sm:$0xff]
    %v1015 = vld [vmem:[#allocation6 + $0x60] sm:$0xff]
    %v1016 = vld [vmem:[#allocation6 + $0x68] sm:$0xff]
    %v1017 = vld [vmem:[#allocation6 + $0x70] sm:$0xff]
    %v1018 = vld [vmem:[#allocation6 + $0x78] sm:$0xff]
    %v1019 = vld [vmem:[#allocation6 + $0x80] sm:$0xff]
    %v1020 = vld [vmem:[#allocation6 + $0x88] sm:$0xff]
    %v1021 = vld [vmem:[#allocation6 + $0x90] sm:$0xff]
    %v1022 = vld [vmem:[#allocation6 + $0x98] sm:$0xff]
    %v1023 = vld [vmem:[#allocation6 + $0xa0] sm:$0xff]
    %v1024 = vld [vmem:[#allocation6 + $0xa8] sm:$0xff]
    %v1025 = vld [vmem:[#allocation6 + $0xb0] sm:$0xff]
    %v1026 = vld [vmem:[#allocation6 + $0xb8] sm:$0xff]
    %v1027 = vld [vmem:[#allocation6 + $0xc0] sm:$0xff]
    %v1028 = vld [vmem:[#allocation6 + $0xc8] sm:$0xff]
    %v1029 = vld [vmem:[#allocation6 + $0xd0] sm:$0xff]
    %v1030 = vld [vmem:[#allocation6 + $0xd8] sm:$0xff]
    %v1031 = vld [vmem:[#allocation6 + $0xe0] sm:$0xff]
    %v1032 = vld [vmem:[#allocation6 + $0xe8] sm:$0xff]
    %v1033 = vld [vmem:[#allocation6 + $0xf0] sm:$0xff]
    %v1034 = vld [vmem:[#allocation6 + $0xf8] sm:$0xff]
    %v1067 = vunpack.c.l.b16 %v1003
    %v1068 = vunpack.c.h.b16 %v1003
    %v1069 = vunpack.c.l.b16 %v1004
    %v1070 = vunpack.c.h.b16 %v1004
    %v1071 = vunpack.c.l.b16 %v1005
    %v1072 = vunpack.c.h.b16 %v1005
    %v1073 = vunpack.c.l.b16 %v1006
    %v1074 = vunpack.c.h.b16 %v1006
    %v1075 = vunpack.c.l.b16 %v1007
    %v1076 = vunpack.c.h.b16 %v1007
    %v1077 = vunpack.c.l.b16 %v1008
    %v1078 = vunpack.c.h.b16 %v1008
    %v1079 = vunpack.c.l.b16 %v1009
    %v1080 = vunpack.c.h.b16 %v1009
    %v1081 = vunpack.c.l.b16 %v1010
    %v1082 = vunpack.c.h.b16 %v1010
    %v1083 = vunpack.c.l.b16 %v1011
    %v1084 = vunpack.c.h.b16 %v1011
    %v1085 = vunpack.c.l.b16 %v1012
    %v1086 = vunpack.c.h.b16 %v1012
    %v1087 = vunpack.c.l.b16 %v1013
    %v1088 = vunpack.c.h.b16 %v1013
    %v1089 = vunpack.c.l.b16 %v1014
    %v1090 = vunpack.c.h.b16 %v1014
    %v1091 = vunpack.c.l.b16 %v1015
    %v1092 = vunpack.c.h.b16 %v1015
    %v1093 = vunpack.c.l.b16 %v1016
    %v1094 = vunpack.c.h.b16 %v1016
    %v1095 = vunpack.c.l.b16 %v1017
    %v1096 = vunpack.c.h.b16 %v1017
    %v1097 = vunpack.c.l.b16 %v1018
    %v1098 = vunpack.c.h.b16 %v1018
    %v1099 = vunpack.c.l.b16 %v1019
    %v1100 = vunpack.c.h.b16 %v1019
    %v1101 = vunpack.c.l.b16 %v1020
    %v1102 = vunpack.c.h.b16 %v1020
    %v1103 = vunpack.c.l.b16 %v1021
    %v1104 = vunpack.c.h.b16 %v1021
    %v1105 = vunpack.c.l.b16 %v1022
    %v1106 = vunpack.c.h.b16 %v1022
    %v1107 = vunpack.c.l.b16 %v1023
    %v1108 = vunpack.c.h.b16 %v1023
    %v1109 = vunpack.c.l.b16 %v1024
    %v1110 = vunpack.c.h.b16 %v1024
    %v1111 = vunpack.c.l.b16 %v1025
    %v1112 = vunpack.c.h.b16 %v1025
    %v1113 = vunpack.c.l.b16 %v1026
    %v1114 = vunpack.c.h.b16 %v1026
    %v1115 = vunpack.c.l.b16 %v1027
    %v1116 = vunpack.c.h.b16 %v1027
    %v1117 = vunpack.c.l.b16 %v1028
    %v1118 = vunpack.c.h.b16 %v1028
    %v1119 = vunpack.c.l.b16 %v1029
    %v1120 = vunpack.c.h.b16 %v1029
    %v1121 = vunpack.c.l.b16 %v1030
    %v1122 = vunpack.c.h.b16 %v1030
    %v1123 = vunpack.c.l.b16 %v1031
    %v1124 = vunpack.c.h.b16 %v1031
    %v1125 = vunpack.c.l.b16 %v1032
    %v1126 = vunpack.c.h.b16 %v1032
    %v1127 = vunpack.c.l.b16 %v1033
    %v1128 = vunpack.c.h.b16 %v1033
    %v1129 = vunpack.c.l.b16 %v1034
    %v1130 = vunpack.c.h.b16 %v1034
    %v1131 = vpack.c.b16 %v1071, %v1067
    %v1132 = vpack.c.b16 %v1072, %v1068
    %v1133 = vpack.c.b16 %v1073, %v1069
    %v1134 = vpack.c.b16 %v1074, %v1070
    %v1135 = vpack.c.b16 %v1079, %v1075
    %v1136 = vpack.c.b16 %v1080, %v1076
    %v1137 = vpack.c.b16 %v1081, %v1077
    %v1138 = vpack.c.b16 %v1082, %v1078
    %v1139 = vpack.c.b16 %v1087, %v1083
    %v1140 = vpack.c.b16 %v1088, %v1084
    %v1141 = vpack.c.b16 %v1089, %v1085
    %v1142 = vpack.c.b16 %v1090, %v1086
    %v1143 = vpack.c.b16 %v1095, %v1091
    %v1144 = vpack.c.b16 %v1096, %v1092
    %v1145 = vpack.c.b16 %v1097, %v1093
    %v1146 = vpack.c.b16 %v1098, %v1094
    %v1147 = vpack.c.b16 %v1103, %v1099
    %v1148 = vpack.c.b16 %v1104, %v1100
    %v1149 = vpack.c.b16 %v1105, %v1101
    %v1150 = vpack.c.b16 %v1106, %v1102
    %v1151 = vpack.c.b16 %v1111, %v1107
    %v1152 = vpack.c.b16 %v1112, %v1108
    %v1153 = vpack.c.b16 %v1113, %v1109
    %v1154 = vpack.c.b16 %v1114, %v1110
    %v1155 = vpack.c.b16 %v1119, %v1115
    %v1156 = vpack.c.b16 %v1120, %v1116
    %v1157 = vpack.c.b16 %v1121, %v1117
    %v1158 = vpack.c.b16 %v1122, %v1118
    %v1159 = vpack.c.b16 %v1127, %v1123
    %v1160 = vpack.c.b16 %v1128, %v1124
    %v1161 = vpack.c.b16 %v1129, %v1125
    %v1162 = vpack.c.b16 %v1130, %v1126
    %1195 = vmatprep.subr.bf16.mxu0 %v1160
    %1196 = vmatpush1.bf16.msra.mxu0 %v1159
    %1197 = vmatprep.subr.bf16.mxu0 %v1156
    %1198 = vmatpush1.bf16.msra.mxu0 %v1155
    %1199 = vmatprep.subr.bf16.mxu0 %v1152
    %1200 = vmatpush1.bf16.msra.mxu0 %v1151
    %1201 = vmatprep.subr.bf16.mxu0 %v1148
    %1202 = vmatpush1.bf16.msra.mxu0 %v1147
    %1203 = vmatprep.subr.bf16.mxu0 %v1144
    %1204 = vmatpush1.bf16.msra.mxu0 %v1143
    %1205 = vmatprep.subr.bf16.mxu0 %v1140
    %1206 = vmatpush1.bf16.msra.mxu0 %v1139
    %1207 = vmatprep.subr.bf16.mxu0 %v1136
    %1208 = vmatpush1.bf16.msra.mxu0 %v1135
    %1209 = vmatprep.subr.bf16.mxu0 %v1132
    %1210 = vmatpush1.bf16.msra.mxu0 %v1131
    %1211 = vmatprep.subr.bf16.mxu0 0
    %1212 = vmatpush2.bf16.msra.mxu0 0
    %1213 = vmatprep.subr.bf16.mxu0 0
    %1214 = vmatpush2.bf16.msra.mxu0 0
    %1215 = vmatprep.subr.bf16.mxu0 0
    %1216 = vmatpush2.bf16.msra.mxu0 0
    %1217 = vmatprep.subr.bf16.mxu0 0
    %1218 = vmatpush2.bf16.msra.mxu0 0
    %1219 = vmatprep.subr.bf16.mxu0 0
    %1220 = vmatpush2.bf16.msra.mxu0 0
    %1221 = vmatprep.subr.bf16.mxu0 0
    %1222 = vmatpush2.bf16.msra.mxu0 0
    %1223 = vmatprep.subr.bf16.mxu0 0
    %1224 = vmatpush2.bf16.msra.mxu0 0
    %1225 = vmatprep.subr.bf16.mxu0 0
    %1226 = vmatpush2.bf16.msra.mxu0 0
    %1227 = vmatprep.mubr.bf16.mxu0 0
    %1228 = vmatmul.mubr.bf16.gmra.mxu0 %v1002
    %v1229 = vpop.f32.mrf.mxu0
    %v1230 = vadd.f32 %v788, %v1229
    %v1231 = vpop.f32.mrf.mxu0
    %v1232 = vadd.f32 %v790, %v1231
    %v1233 = vpop.f32.mrf.mxu0
    %v1234 = vpop.f32.mrf.mxu0
    %1235 = vdwg.mxu0
    %1236 = vmatprep.subr.bf16.mxu0 %v1162
    %1237 = vmatpush1.bf16.msra.mxu0 %v1161
    %1238 = vmatprep.subr.bf16.mxu0 %v1158
    %1239 = vmatpush1.bf16.msra.mxu0 %v1157
    %1240 = vmatprep.subr.bf16.mxu0 %v1154
    %1241 = vmatpush1.bf16.msra.mxu0 %v1153
    %1242 = vmatprep.subr.bf16.mxu0 %v1150
    %1243 = vmatpush1.bf16.msra.mxu0 %v1149
    %1244 = vmatprep.subr.bf16.mxu0 %v1146
    %1245 = vmatpush1.bf16.msra.mxu0 %v1145
    %1246 = vmatprep.subr.bf16.mxu0 %v1142
    %1247 = vmatpush1.bf16.msra.mxu0 %v1141
    %1248 = vmatprep.subr.bf16.mxu0 %v1138
    %1249 = vmatpush1.bf16.msra.mxu0 %v1137
    %1250 = vmatprep.subr.bf16.mxu0 %v1134
    %1251 = vmatpush1.bf16.msra.mxu0 %v1133
    %1252 = vmatprep.subr.bf16.mxu0 0
    %1253 = vmatpush2.bf16.msra.mxu0 0
    %1254 = vmatprep.subr.bf16.mxu0 0
    %1255 = vmatpush2.bf16.msra.mxu0 0
    %1256 = vmatprep.subr.bf16.mxu0 0
    %1257 = vmatpush2.bf16.msra.mxu0 0
    %1258 = vmatprep.subr.bf16.mxu0 0
    %1259 = vmatpush2.bf16.msra.mxu0 0
    %1260 = vmatprep.subr.bf16.mxu0 0
    %1261 = vmatpush2.bf16.msra.mxu0 0
    %1262 = vmatprep.subr.bf16.mxu0 0
    %1263 = vmatpush2.bf16.msra.mxu0 0
    %1264 = vmatprep.subr.bf16.mxu0 0
    %1265 = vmatpush2.bf16.msra.mxu0 0
    %1266 = vmatprep.subr.bf16.mxu0 0
    %1267 = vmatpush2.bf16.msra.mxu0 0
    %1268 = vmatprep.mubr.bf16.mxu0 0
    %1269 = vmatmul.mubr.bf16.gmra.mxu0 %v1002
    %v1270 = vpop.f32.mrf.mxu0
    %v1271 = vadd.f32 %v874, %v1270
    %v1272 = vpop.f32.mrf.mxu0
    %v1273 = vadd.f32 %v876, %v1272
    %v1274 = vpop.f32.mrf.mxu0
    %v1275 = vpop.f32.mrf.mxu0
    %1276 = vdwg.mxu0
    %v1277 = vadd.f32 %v1230, %v984
    %v1278 = vadd.f32 %v1232, %v985
    %v1279 = vadd.f32 %v1271, %v986
    %v1280 = vadd.f32 %v1273, %v987
    %v1281 = vxor.u32 %v1277, 2147483648
    %v1282 = vxor.u32 %v1278, 2147483648
    %v1283 = vxor.u32 %v1279, 2147483648
    %v1284 = vxor.u32 %v1280, 2147483648
    %v1285 = vmul.f32 %v1281, 1.442695
    %v1286 = vpow.pop %v1285
    %v1287 = vmul.f32 %v1282, 1.442695
    %v1288 = vpow.pop %v1287
    %v1289 = vmul.f32 %v1283, 1.442695
    %v1290 = vpow.pop %v1289
    %v1291 = vmul.f32 %v1284, 1.442695
    %v1292 = vpow.pop %v1291
    %v1293 = vadd.f32 %v1286, 1.0
    %v1294 = vadd.f32 %v1288, 1.0
    %v1295 = vadd.f32 %v1290, 1.0
    %v1296 = vadd.f32 %v1292, 1.0
    %v1297 = vrcp.pop %v1293
    %v1298 = vmul.f32 1.0, %v1297
    %v1299 = vrcp.pop %v1294
    %v1300 = vmul.f32 1.0, %v1299
    %v1301 = vrcp.pop %v1295
    %v1302 = vmul.f32 1.0, %v1301
    %v1303 = vrcp.pop %v1296
    %v1304 = vmul.f32 1.0, %v1303
    %v1305 = vmul.f32 %v1302, 2.0
    %v1306 = vsub.f32 %v1305, 1.0
    %v1307 = vmul.f32 %v1300, %v995
    %v1308 = vmul.f32 %v1298, %v1306
    %v1309 = vadd.f32 %v1307, %v1308
    %v1310 = vtanh.pop %v1309
    %v1311 = vmul.f32 %v1304, %v1310
    %v1312 = vpack.c.bf16 %v1311, %v1311
    %v1317 = vrot.slane %v788, 2
    %v1318 = vrot.slane %v790, 2
    %v1319 = vrot.slane %v874, 2
    %v1320 = vrot.slane %v876, 2
    %1325 = vmatprep.subr.bf16.mxu0 %v1160
    %1326 = vmatpush1.bf16.msra.mxu0 %v1159
    %1327 = vmatprep.subr.bf16.mxu0 %v1156
    %1328 = vmatpush1.bf16.msra.mxu0 %v1155
    %1329 = vmatprep.subr.bf16.mxu0 %v1152
    %1330 = vmatpush1.bf16.msra.mxu0 %v1151
    %1331 = vmatprep.subr.bf16.mxu0 %v1148
    %1332 = vmatpush1.bf16.msra.mxu0 %v1147
    %1333 = vmatprep.subr.bf16.mxu0 %v1144
    %1334 = vmatpush1.bf16.msra.mxu0 %v1143
    %1335 = vmatprep.subr.bf16.mxu0 %v1140
    %1336 = vmatpush1.bf16.msra.mxu0 %v1139
    %1337 = vmatprep.subr.bf16.mxu0 %v1136
    %1338 = vmatpush1.bf16.msra.mxu0 %v1135
    %1339 = vmatprep.subr.bf16.mxu0 %v1132
    %1340 = vmatpush1.bf16.msra.mxu0 %v1131
    %1341 = vmatprep.subr.bf16.mxu0 0
    %1342 = vmatpush2.bf16.msra.mxu0 0
    %1343 = vmatprep.subr.bf16.mxu0 0
    %1344 = vmatpush2.bf16.msra.mxu0 0
    %1345 = vmatprep.subr.bf16.mxu0 0
    %1346 = vmatpush2.bf16.msra.mxu0 0
    %1347 = vmatprep.subr.bf16.mxu0 0
    %1348 = vmatpush2.bf16.msra.mxu0 0
    %1349 = vmatprep.subr.bf16.mxu0 0
    %1350 = vmatpush2.bf16.msra.mxu0 0
    %1351 = vmatprep.subr.bf16.mxu0 0
    %1352 = vmatpush2.bf16.msra.mxu0 0
    %1353 = vmatprep.subr.bf16.mxu0 0
    %1354 = vmatpush2.bf16.msra.mxu0 0
    %1355 = vmatprep.subr.bf16.mxu0 0
    %1356 = vmatpush2.bf16.msra.mxu0 0
    %1357 = vmatprep.mubr.bf16.mxu0 0
    %1358 = vmatmul.mubr.bf16.gmra.mxu0 %v1312
    %v1359 = vpop.f32.mrf.mxu0
    %v1360 = vadd.f32 %v1317, %v1359
    %v1361 = vpop.f32.mrf.mxu0
    %v1362 = vadd.f32 %v1318, %v1361
    %v1363 = vpop.f32.mrf.mxu0
    %v1364 = vpop.f32.mrf.mxu0
    %1365 = vdwg.mxu0
    %1366 = vmatprep.subr.bf16.mxu0 %v1162
    %1367 = vmatpush1.bf16.msra.mxu0 %v1161
    %1368 = vmatprep.subr.bf16.mxu0 %v1158
    %1369 = vmatpush1.bf16.msra.mxu0 %v1157
    %1370 = vmatprep.subr.bf16.mxu0 %v1154
    %1371 = vmatpush1.bf16.msra.mxu0 %v1153
    %1372 = vmatprep.subr.bf16.mxu0 %v1150
    %1373 = vmatpush1.bf16.msra.mxu0 %v1149
    %1374 = vmatprep.subr.bf16.mxu0 %v1146
    %1375 = vmatpush1.bf16.msra.mxu0 %v1145
    %1376 = vmatprep.subr.bf16.mxu0 %v1142
    %1377 = vmatpush1.bf16.msra.mxu0 %v1141
    %1378 = vmatprep.subr.bf16.mxu0 %v1138
    %1379 = vmatpush1.bf16.msra.mxu0 %v1137
    %1380 = vmatprep.subr.bf16.mxu0 %v1134
    %1381 = vmatpush1.bf16.msra.mxu0 %v1133
    %1382 = vmatprep.subr.bf16.mxu0 0
    %1383 = vmatpush2.bf16.msra.mxu0 0
    %1384 = vmatprep.subr.bf16.mxu0 0
    %1385 = vmatpush2.bf16.msra.mxu0 0
    %1386 = vmatprep.subr.bf16.mxu0 0
    %1387 = vmatpush2.bf16.msra.mxu0 0
    %1388 = vmatprep.subr.bf16.mxu0 0
    %1389 = vmatpush2.bf16.msra.mxu0 0
    %1390 = vmatprep.subr.bf16.mxu0 0
    %1391 = vmatpush2.bf16.msra.mxu0 0
    %1392 = vmatprep.subr.bf16.mxu0 0
    %1393 = vmatpush2.bf16.msra.mxu0 0
    %1394 = vmatprep.subr.bf16.mxu0 0
    %1395 = vmatpush2.bf16.msra.mxu0 0
    %1396 = vmatprep.subr.bf16.mxu0 0
    %1397 = vmatpush2.bf16.msra.mxu0 0
    %1398 = vmatprep.mubr.bf16.mxu0 0
    %1399 = vmatmul.mubr.bf16.gmra.mxu0 %v1312
    %v1400 = vpop.f32.mrf.mxu0
    %v1401 = vadd.f32 %v1319, %v1400
    %v1402 = vpop.f32.mrf.mxu0
    %v1403 = vadd.f32 %v1320, %v1402
    %v1404 = vpop.f32.mrf.mxu0
    %v1405 = vpop.f32.mrf.mxu0
    %1406 = vdwg.mxu0
    %v1407 = vpack.c.bf16 %v990, %v990
    %v1408 = vld [vmem:[#allocation8] sm:$0xff]
    %v1409 = vld [vmem:[#allocation8 + $0x8] sm:$0xff]
    %v1410 = vld [vmem:[#allocation8 + $0x10] sm:$0xff]
    %v1411 = vld [vmem:[#allocation8 + $0x18] sm:$0xff]
    %v1412 = vld [vmem:[#allocation8 + $0x20] sm:$0xff]
    %v1413 = vld [vmem:[#allocation8 + $0x28] sm:$0xff]
    %v1414 = vld [vmem:[#allocation8 + $0x30] sm:$0xff]
    %v1415 = vld [vmem:[#allocation8 + $0x38] sm:$0xff]
    %v1416 = vld [vmem:[#allocation8 + $0x40] sm:$0xff]
    %v1417 = vld [vmem:[#allocation8 + $0x48] sm:$0xff]
    %v1418 = vld [vmem:[#allocation8 + $0x50] sm:$0xff]
    %v1419 = vld [vmem:[#allocation8 + $0x58] sm:$0xff]
    %v1420 = vld [vmem:[#allocation8 + $0x60] sm:$0xff]
    %v1421 = vld [vmem:[#allocation8 + $0x68] sm:$0xff]
    %v1422 = vld [vmem:[#allocation8 + $0x70] sm:$0xff]
    %v1423 = vld [vmem:[#allocation8 + $0x78] sm:$0xff]
    %v1424 = vld [vmem:[#allocation8 + $0x80] sm:$0xff]
    %v1425 = vld [vmem:[#allocation8 + $0x88] sm:$0xff]
    %v1426 = vld [vmem:[#allocation8 + $0x90] sm:$0xff]
    %v1427 = vld [vmem:[#allocation8 + $0x98] sm:$0xff]
    %v1428 = vld [vmem:[#allocation8 + $0xa0] sm:$0xff]
    %v1429 = vld [vmem:[#allocation8 + $0xa8] sm:$0xff]
    %v1430 = vld [vmem:[#allocation8 + $0xb0] sm:$0xff]
    %v1431 = vld [vmem:[#allocation8 + $0xb8] sm:$0xff]
    %v1432 = vld [vmem:[#allocation8 + $0xc0] sm:$0xff]
    %v1433 = vld [vmem:[#allocation8 + $0xc8] sm:$0xff]
    %v1434 = vld [vmem:[#allocation8 + $0xd0] sm:$0xff]
    %v1435 = vld [vmem:[#allocation8 + $0xd8] sm:$0xff]
    %v1436 = vld [vmem:[#allocation8 + $0xe0] sm:$0xff]
    %v1437 = vld [vmem:[#allocation8 + $0xe8] sm:$0xff]
    %v1438 = vld [vmem:[#allocation8 + $0xf0] sm:$0xff]
    %v1439 = vld [vmem:[#allocation8 + $0xf8] sm:$0xff]
    %v1440 = vld [vmem:[#allocation8 + $0x100] sm:$0xff]
    %v1441 = vld [vmem:[#allocation8 + $0x108] sm:$0xff]
    %v1442 = vld [vmem:[#allocation8 + $0x110] sm:$0xff]
    %v1443 = vld [vmem:[#allocation8 + $0x118] sm:$0xff]
    %v1444 = vld [vmem:[#allocation8 + $0x120] sm:$0xff]
    %v1445 = vld [vmem:[#allocation8 + $0x128] sm:$0xff]
    %v1446 = vld [vmem:[#allocation8 + $0x130] sm:$0xff]
    %v1447 = vld [vmem:[#allocation8 + $0x138] sm:$0xff]
    %v1448 = vld [vmem:[#allocation8 + $0x140] sm:$0xff]
    %v1449 = vld [vmem:[#allocation8 + $0x148] sm:$0xff]
    %v1450 = vld [vmem:[#allocation8 + $0x150] sm:$0xff]
    %v1451 = vld [vmem:[#allocation8 + $0x158] sm:$0xff]
    %v1452 = vld [vmem:[#allocation8 + $0x160] sm:$0xff]
    %v1453 = vld [vmem:[#allocation8 + $0x168] sm:$0xff]
    %v1454 = vld [vmem:[#allocation8 + $0x170] sm:$0xff]
    %v1455 = vld [vmem:[#allocation8 + $0x178] sm:$0xff]
    %v1456 = vld [vmem:[#allocation8 + $0x180] sm:$0xff]
    %v1457 = vld [vmem:[#allocation8 + $0x188] sm:$0xff]
    %v1458 = vld [vmem:[#allocation8 + $0x190] sm:$0xff]
    %v1459 = vld [vmem:[#allocation8 + $0x198] sm:$0xff]
    %v1460 = vld [vmem:[#allocation8 + $0x1a0] sm:$0xff]
    %v1461 = vld [vmem:[#allocation8 + $0x1a8] sm:$0xff]
    %v1462 = vld [vmem:[#allocation8 + $0x1b0] sm:$0xff]
    %v1463 = vld [vmem:[#allocation8 + $0x1b8] sm:$0xff]
    %v1464 = vld [vmem:[#allocation8 + $0x1c0] sm:$0xff]
    %v1465 = vld [vmem:[#allocation8 + $0x1c8] sm:$0xff]
    %v1466 = vld [vmem:[#allocation8 + $0x1d0] sm:$0xff]
    %v1467 = vld [vmem:[#allocation8 + $0x1d8] sm:$0xff]
    %v1468 = vld [vmem:[#allocation8 + $0x1e0] sm:$0xff]
    %v1469 = vld [vmem:[#allocation8 + $0x1e8] sm:$0xff]
    %v1470 = vld [vmem:[#allocation8 + $0x1f0] sm:$0xff]
    %v1471 = vld [vmem:[#allocation8 + $0x1f8] sm:$0xff]
    %v1536 = vunpack.c.l.b16 %v1408
    %v1537 = vunpack.c.h.b16 %v1408
    %v1538 = vunpack.c.l.b16 %v1409
    %v1539 = vunpack.c.h.b16 %v1409
    %v1540 = vunpack.c.l.b16 %v1410
    %v1541 = vunpack.c.h.b16 %v1410
    %v1542 = vunpack.c.l.b16 %v1411
    %v1543 = vunpack.c.h.b16 %v1411
    %v1544 = vunpack.c.l.b16 %v1412
    %v1545 = vunpack.c.h.b16 %v1412
    %v1546 = vunpack.c.l.b16 %v1413
    %v1547 = vunpack.c.h.b16 %v1413
    %v1548 = vunpack.c.l.b16 %v1414
    %v1549 = vunpack.c.h.b16 %v1414
    %v1550 = vunpack.c.l.b16 %v1415
    %v1551 = vunpack.c.h.b16 %v1415
    %v1552 = vunpack.c.l.b16 %v1416
    %v1553 = vunpack.c.h.b16 %v1416
    %v1554 = vunpack.c.l.b16 %v1417
    %v1555 = vunpack.c.h.b16 %v1417
    %v1556 = vunpack.c.l.b16 %v1418
    %v1557 = vunpack.c.h.b16 %v1418
    %v1558 = vunpack.c.l.b16 %v1419
    %v1559 = vunpack.c.h.b16 %v1419
    %v1560 = vunpack.c.l.b16 %v1420
    %v1561 = vunpack.c.h.b16 %v1420
    %v1562 = vunpack.c.l.b16 %v1421
    %v1563 = vunpack.c.h.b16 %v1421
    %v1564 = vunpack.c.l.b16 %v1422
    %v1565 = vunpack.c.h.b16 %v1422
    %v1566 = vunpack.c.l.b16 %v1423
    %v1567 = vunpack.c.h.b16 %v1423
    %v1568 = vunpack.c.l.b16 %v1424
    %v1569 = vunpack.c.h.b16 %v1424
    %v1570 = vunpack.c.l.b16 %v1425
    %v1571 = vunpack.c.h.b16 %v1425
    %v1572 = vunpack.c.l.b16 %v1426
    %v1573 = vunpack.c.h.b16 %v1426
    %v1574 = vunpack.c.l.b16 %v1427
    %v1575 = vunpack.c.h.b16 %v1427
    %v1576 = vunpack.c.l.b16 %v1428
    %v1577 = vunpack.c.h.b16 %v1428
    %v1578 = vunpack.c.l.b16 %v1429
    %v1579 = vunpack.c.h.b16 %v1429
    %v1580 = vunpack.c.l.b16 %v1430
    %v1581 = vunpack.c.h.b16 %v1430
    %v1582 = vunpack.c.l.b16 %v1431
    %v1583 = vunpack.c.h.b16 %v1431
    %v1584 = vunpack.c.l.b16 %v1432
    %v1585 = vunpack.c.h.b16 %v1432
    %v1586 = vunpack.c.l.b16 %v1433
    %v1587 = vunpack.c.h.b16 %v1433
    %v1588 = vunpack.c.l.b16 %v1434
    %v1589 = vunpack.c.h.b16 %v1434
    %v1590 = vunpack.c.l.b16 %v1435
    %v1591 = vunpack.c.h.b16 %v1435
    %v1592 = vunpack.c.l.b16 %v1436
    %v1593 = vunpack.c.h.b16 %v1436
    %v1594 = vunpack.c.l.b16 %v1437
    %v1595 = vunpack.c.h.b16 %v1437
    %v1596 = vunpack.c.l.b16 %v1438
    %v1597 = vunpack.c.h.b16 %v1438
    %v1598 = vunpack.c.l.b16 %v1439
    %v1599 = vunpack.c.h.b16 %v1439
    %v1600 = vunpack.c.l.b16 %v1440
    %v1601 = vunpack.c.h.b16 %v1440
    %v1602 = vunpack.c.l.b16 %v1441
    %v1603 = vunpack.c.h.b16 %v1441
    %v1604 = vunpack.c.l.b16 %v1442
    %v1605 = vunpack.c.h.b16 %v1442
    %v1606 = vunpack.c.l.b16 %v1443
    %v1607 = vunpack.c.h.b16 %v1443
    %v1608 = vunpack.c.l.b16 %v1444
    %v1609 = vunpack.c.h.b16 %v1444
    %v1610 = vunpack.c.l.b16 %v1445
    %v1611 = vunpack.c.h.b16 %v1445
    %v1612 = vunpack.c.l.b16 %v1446
    %v1613 = vunpack.c.h.b16 %v1446
    %v1614 = vunpack.c.l.b16 %v1447
    %v1615 = vunpack.c.h.b16 %v1447
    %v1616 = vunpack.c.l.b16 %v1448
    %v1617 = vunpack.c.h.b16 %v1448
    %v1618 = vunpack.c.l.b16 %v1449
    %v1619 = vunpack.c.h.b16 %v1449
    %v1620 = vunpack.c.l.b16 %v1450
    %v1621 = vunpack.c.h.b16 %v1450
    %v1622 = vunpack.c.l.b16 %v1451
    %v1623 = vunpack.c.h.b16 %v1451
    %v1624 = vunpack.c.l.b16 %v1452
    %v1625 = vunpack.c.h.b16 %v1452
    %v1626 = vunpack.c.l.b16 %v1453
    %v1627 = vunpack.c.h.b16 %v1453
    %v1628 = vunpack.c.l.b16 %v1454
    %v1629 = vunpack.c.h.b16 %v1454
    %v1630 = vunpack.c.l.b16 %v1455
    %v1631 = vunpack.c.h.b16 %v1455
    %v1632 = vunpack.c.l.b16 %v1456
    %v1633 = vunpack.c.h.b16 %v1456
    %v1634 = vunpack.c.l.b16 %v1457
    %v1635 = vunpack.c.h.b16 %v1457
    %v1636 = vunpack.c.l.b16 %v1458
    %v1637 = vunpack.c.h.b16 %v1458
    %v1638 = vunpack.c.l.b16 %v1459
    %v1639 = vunpack.c.h.b16 %v1459
    %v1640 = vunpack.c.l.b16 %v1460
    %v1641 = vunpack.c.h.b16 %v1460
    %v1642 = vunpack.c.l.b16 %v1461
    %v1643 = vunpack.c.h.b16 %v1461
    %v1644 = vunpack.c.l.b16 %v1462
    %v1645 = vunpack.c.h.b16 %v1462
    %v1646 = vunpack.c.l.b16 %v1463
    %v1647 = vunpack.c.h.b16 %v1463
    %v1648 = vunpack.c.l.b16 %v1464
    %v1649 = vunpack.c.h.b16 %v1464
    %v1650 = vunpack.c.l.b16 %v1465
    %v1651 = vunpack.c.h.b16 %v1465
    %v1652 = vunpack.c.l.b16 %v1466
    %v1653 = vunpack.c.h.b16 %v1466
    %v1654 = vunpack.c.l.b16 %v1467
    %v1655 = vunpack.c.h.b16 %v1467
    %v1656 = vunpack.c.l.b16 %v1468
    %v1657 = vunpack.c.h.b16 %v1468
    %v1658 = vunpack.c.l.b16 %v1469
    %v1659 = vunpack.c.h.b16 %v1469
    %v1660 = vunpack.c.l.b16 %v1470
    %v1661 = vunpack.c.h.b16 %v1470
    %v1662 = vunpack.c.l.b16 %v1471
    %v1663 = vunpack.c.h.b16 %v1471
    %v1664 = vpack.c.b16 %v1540, %v1536
    %v1665 = vpack.c.b16 %v1541, %v1537
    %v1666 = vpack.c.b16 %v1542, %v1538
    %v1667 = vpack.c.b16 %v1543, %v1539
    %v1668 = vpack.c.b16 %v1548, %v1544
    %v1669 = vpack.c.b16 %v1549, %v1545
    %v1670 = vpack.c.b16 %v1550, %v1546
    %v1671 = vpack.c.b16 %v1551, %v1547
    %v1672 = vpack.c.b16 %v1556, %v1552
    %v1673 = vpack.c.b16 %v1557, %v1553
    %v1674 = vpack.c.b16 %v1558, %v1554
    %v1675 = vpack.c.b16 %v1559, %v1555
    %v1676 = vpack.c.b16 %v1564, %v1560
    %v1677 = vpack.c.b16 %v1565, %v1561
    %v1678 = vpack.c.b16 %v1566, %v1562
    %v1679 = vpack.c.b16 %v1567, %v1563
    %v1680 = vpack.c.b16 %v1572, %v1568
    %v1681 = vpack.c.b16 %v1573, %v1569
    %v1682 = vpack.c.b16 %v1574, %v1570
    %v1683 = vpack.c.b16 %v1575, %v1571
    %v1684 = vpack.c.b16 %v1580, %v1576
    %v1685 = vpack.c.b16 %v1581, %v1577
    %v1686 = vpack.c.b16 %v1582, %v1578
    %v1687 = vpack.c.b16 %v1583, %v1579
    %v1688 = vpack.c.b16 %v1588, %v1584
    %v1689 = vpack.c.b16 %v1589, %v1585
    %v1690 = vpack.c.b16 %v1590, %v1586
    %v1691 = vpack.c.b16 %v1591, %v1587
    %v1692 = vpack.c.b16 %v1596, %v1592
    %v1693 = vpack.c.b16 %v1597, %v1593
    %v1694 = vpack.c.b16 %v1598, %v1594
    %v1695 = vpack.c.b16 %v1599, %v1595
    %v1696 = vpack.c.b16 %v1604, %v1600
    %v1697 = vpack.c.b16 %v1605, %v1601
    %v1698 = vpack.c.b16 %v1606, %v1602
    %v1699 = vpack.c.b16 %v1607, %v1603
    %v1700 = vpack.c.b16 %v1612, %v1608
    %v1701 = vpack.c.b16 %v1613, %v1609
    %v1702 = vpack.c.b16 %v1614, %v1610
    %v1703 = vpack.c.b16 %v1615, %v1611
    %v1704 = vpack.c.b16 %v1620, %v1616
    %v1705 = vpack.c.b16 %v1621, %v1617
    %v1706 = vpack.c.b16 %v1622, %v1618
    %v1707 = vpack.c.b16 %v1623, %v1619
    %v1708 = vpack.c.b16 %v1628, %v1624
    %v1709 = vpack.c.b16 %v1629, %v1625
    %v1710 = vpack.c.b16 %v1630, %v1626
    %v1711 = vpack.c.b16 %v1631, %v1627
    %v1712 = vpack.c.b16 %v1636, %v1632
    %v1713 = vpack.c.b16 %v1637, %v1633
    %v1714 = vpack.c.b16 %v1638, %v1634
    %v1715 = vpack.c.b16 %v1639, %v1635
    %v1716 = vpack.c.b16 %v1644, %v1640
    %v1717 = vpack.c.b16 %v1645, %v1641
    %v1718 = vpack.c.b16 %v1646, %v1642
    %v1719 = vpack.c.b16 %v1647, %v1643
    %v1720 = vpack.c.b16 %v1652, %v1648
    %v1721 = vpack.c.b16 %v1653, %v1649
    %v1722 = vpack.c.b16 %v1654, %v1650
    %v1723 = vpack.c.b16 %v1655, %v1651
    %v1724 = vpack.c.b16 %v1660, %v1656
    %v1725 = vpack.c.b16 %v1661, %v1657
    %v1726 = vpack.c.b16 %v1662, %v1658
    %v1727 = vpack.c.b16 %v1663, %v1659
    %1792 = vmatprep.subr.bf16.mxu0 %v1693
    %1793 = vmatpush1.bf16.msra.mxu0 %v1692
    %1794 = vmatprep.subr.bf16.mxu0 %v1689
    %1795 = vmatpush1.bf16.msra.mxu0 %v1688
    %1796 = vmatprep.subr.bf16.mxu0 %v1685
    %1797 = vmatpush1.bf16.msra.mxu0 %v1684
    %1798 = vmatprep.subr.bf16.mxu0 %v1681
    %1799 = vmatpush1.bf16.msra.mxu0 %v1680
    %1800 = vmatprep.subr.bf16.mxu0 %v1677
    %1801 = vmatpush1.bf16.msra.mxu0 %v1676
    %1802 = vmatprep.subr.bf16.mxu0 %v1673
    %1803 = vmatpush1.bf16.msra.mxu0 %v1672
    %1804 = vmatprep.subr.bf16.mxu0 %v1669
    %1805 = vmatpush1.bf16.msra.mxu0 %v1668
    %1806 = vmatprep.subr.bf16.mxu0 %v1665
    %1807 = vmatpush1.bf16.msra.mxu0 %v1664
    %1808 = vmatprep.subr.bf16.mxu0 %v1725
    %1809 = vmatpush2.bf16.msra.mxu0 %v1724
    %1810 = vmatprep.subr.bf16.mxu0 %v1721
    %1811 = vmatpush2.bf16.msra.mxu0 %v1720
    %1812 = vmatprep.subr.bf16.mxu0 %v1717
    %1813 = vmatpush2.bf16.msra.mxu0 %v1716
    %1814 = vmatprep.subr.bf16.mxu0 %v1713
    %1815 = vmatpush2.bf16.msra.mxu0 %v1712
    %1816 = vmatprep.subr.bf16.mxu0 %v1709
    %1817 = vmatpush2.bf16.msra.mxu0 %v1708
    %1818 = vmatprep.subr.bf16.mxu0 %v1705
    %1819 = vmatpush2.bf16.msra.mxu0 %v1704
    %1820 = vmatprep.subr.bf16.mxu0 %v1701
    %1821 = vmatpush2.bf16.msra.mxu0 %v1700
    %1822 = vmatprep.subr.bf16.mxu0 %v1697
    %1823 = vmatpush2.bf16.msra.mxu0 %v1696
    %1824 = vmatprep.mubr.bf16.mxu0 %v1312
    %1825 = vmatmul.mubr.bf16.gmra.mxu0 %v1407
    %v1826 = vpop.f32.mrf.mxu0
    %v1827 = vadd.f32 0.0, %v1826
    %v1828 = vpop.f32.mrf.mxu0
    %v1829 = vadd.f32 0.0, %v1828
    %v1830 = vpop.f32.mrf.mxu0
    %v1831 = vpop.f32.mrf.mxu0
    %1832 = vdwg.mxu0
    %1833 = vmatprep.subr.bf16.mxu0 %v1695
    %1834 = vmatpush1.bf16.msra.mxu0 %v1694
    %1835 = vmatprep.subr.bf16.mxu0 %v1691
    %1836 = vmatpush1.bf16.msra.mxu0 %v1690
    %1837 = vmatprep.subr.bf16.mxu0 %v1687
    %1838 = vmatpush1.bf16.msra.mxu0 %v1686
    %1839 = vmatprep.subr.bf16.mxu0 %v1683
    %1840 = vmatpush1.bf16.msra.mxu0 %v1682
    %1841 = vmatprep.subr.bf16.mxu0 %v1679
    %1842 = vmatpush1.bf16.msra.mxu0 %v1678
    %1843 = vmatprep.subr.bf16.mxu0 %v1675
    %1844 = vmatpush1.bf16.msra.mxu0 %v1674
    %1845 = vmatprep.subr.bf16.mxu0 %v1671
    %1846 = vmatpush1.bf16.msra.mxu0 %v1670
    %1847 = vmatprep.subr.bf16.mxu0 %v1667
    %1848 = vmatpush1.bf16.msra.mxu0 %v1666
    %1849 = vmatprep.subr.bf16.mxu0 %v1727
    %1850 = vmatpush2.bf16.msra.mxu0 %v1726
    %1851 = vmatprep.subr.bf16.mxu0 %v1723
    %1852 = vmatpush2.bf16.msra.mxu0 %v1722
    %1853 = vmatprep.subr.bf16.mxu0 %v1719
    %1854 = vmatpush2.bf16.msra.mxu0 %v1718
    %1855 = vmatprep.subr.bf16.mxu0 %v1715
    %1856 = vmatpush2.bf16.msra.mxu0 %v1714
    %1857 = vmatprep.subr.bf16.mxu0 %v1711
    %1858 = vmatpush2.bf16.msra.mxu0 %v1710
    %1859 = vmatprep.subr.bf16.mxu0 %v1707
    %1860 = vmatpush2.bf16.msra.mxu0 %v1706
    %1861 = vmatprep.subr.bf16.mxu0 %v1703
    %1862 = vmatpush2.bf16.msra.mxu0 %v1702
    %1863 = vmatprep.subr.bf16.mxu0 %v1699
    %1864 = vmatpush2.bf16.msra.mxu0 %v1698
    %1865 = vmatprep.mubr.bf16.mxu0 %v1312
    %1866 = vmatmul.mubr.bf16.gmra.mxu0 %v1407
    %v1867 = vpop.f32.mrf.mxu0
    %v1868 = vadd.f32 0.0, %v1867
    %v1869 = vpop.f32.mrf.mxu0
    %v1870 = vadd.f32 0.0, %v1869
    %v1871 = vpop.f32.mrf.mxu0
    %v1872 = vpop.f32.mrf.mxu0
    %1873 = vdwg.mxu0
    %v1878 = vrot.slane %v1827, 6
    %v1879 = vrot.slane %v1829, 6
    %v1880 = vrot.slane %v1868, 6
    %v1881 = vrot.slane %v1870, 6
    %v1886 = vsel %vm973, %v1360, %v1878
    %v1887 = vsel %vm973, %v1362, %v1879
    %v1888 = vsel %vm973, %v1401, %v1880
    %v1889 = vsel %vm973, %v1403, %v1881
    %v1890 = vadd.f32 %v1886, %v984
    %v1891 = vadd.f32 %v1887, %v985
    %v1892 = vadd.f32 %v1888, %v986
    %v1893 = vadd.f32 %v1889, %v987
    %v1895 = vrot.slane %v997, 6
    %v1897 = vsel %vm973, %v1309, %v1895
    %v1898 = vxor.u32 %v1890, 2147483648
    %v1899 = vxor.u32 %v1891, 2147483648
    %v1900 = vxor.u32 %v1892, 2147483648
    %v1901 = vxor.u32 %v1893, 2147483648
    %v1902 = vmul.f32 %v1898, 1.442695
    %v1903 = vpow.pop %v1902
    %v1904 = vmul.f32 %v1899, 1.442695
    %v1905 = vpow.pop %v1904
    %v1906 = vmul.f32 %v1900, 1.442695
    %v1907 = vpow.pop %v1906
    %v1908 = vmul.f32 %v1901, 1.442695
    %v1909 = vpow.pop %v1908
    %v1910 = vadd.f32 %v1903, 1.0
    %v1911 = vadd.f32 %v1905, 1.0
    %v1912 = vadd.f32 %v1907, 1.0
    %v1913 = vadd.f32 %v1909, 1.0
    %v1914 = vrcp.pop %v1910
    %v1915 = vmul.f32 1.0, %v1914
    %v1916 = vrcp.pop %v1911
    %v1917 = vmul.f32 1.0, %v1916
    %v1918 = vrcp.pop %v1912
    %v1919 = vmul.f32 1.0, %v1918
    %v1920 = vrcp.pop %v1913
    %v1921 = vmul.f32 1.0, %v1920
    %v1922 = vmul.f32 %v1919, 2.0
    %v1923 = vsub.f32 %v1922, 1.0
    %v1924 = vmul.f32 %v1917, %v1897
    %v1925 = vmul.f32 %v1915, %v1923
    %v1926 = vadd.f32 %v1924, %v1925
    %v1927 = vtanh.pop %v1926
    %v1928 = vmul.f32 %v1921, %v1927
    %v1929 = vpack.c.bf16 %v1928, %v1928
    %v1930 = vrot.slane %v788, 4
    %v1931 = vrot.slane %v790, 4
    %v1932 = vrot.slane %v874, 4
    %v1933 = vrot.slane %v876, 4
    %1938 = vmatprep.subr.bf16.mxu0 %v1160
    %1939 = vmatpush1.bf16.msra.mxu0 %v1159
    %1940 = vmatprep.subr.bf16.mxu0 %v1156
    %1941 = vmatpush1.bf16.msra.mxu0 %v1155
    %1942 = vmatprep.subr.bf16.mxu0 %v1152
    %1943 = vmatpush1.bf16.msra.mxu0 %v1151
    %1944 = vmatprep.subr.bf16.mxu0 %v1148
    %1945 = vmatpush1.bf16.msra.mxu0 %v1147
    %1946 = vmatprep.subr.bf16.mxu0 %v1144
    %1947 = vmatpush1.bf16.msra.mxu0 %v1143
    %1948 = vmatprep.subr.bf16.mxu0 %v1140
    %1949 = vmatpush1.bf16.msra.mxu0 %v1139
    %1950 = vmatprep.subr.bf16.mxu0 %v1136
    %1951 = vmatpush1.bf16.msra.mxu0 %v1135
    %1952 = vmatprep.subr.bf16.mxu0 %v1132
    %1953 = vmatpush1.bf16.msra.mxu0 %v1131
    %1954 = vmatprep.subr.bf16.mxu0 0
    %1955 = vmatpush2.bf16.msra.mxu0 0
    %1956 = vmatprep.subr.bf16.mxu0 0
    %1957 = vmatpush2.bf16.msra.mxu0 0
    %1958 = vmatprep.subr.bf16.mxu0 0
    %1959 = vmatpush2.bf16.msra.mxu0 0
    %1960 = vmatprep.subr.bf16.mxu0 0
    %1961 = vmatpush2.bf16.msra.mxu0 0
    %1962 = vmatprep.subr.bf16.mxu0 0
    %1963 = vmatpush2.bf16.msra.mxu0 0
    %1964 = vmatprep.subr.bf16.mxu0 0
    %1965 = vmatpush2.bf16.msra.mxu0 0
    %1966 = vmatprep.subr.bf16.mxu0 0
    %1967 = vmatpush2.bf16.msra.mxu0 0
    %1968 = vmatprep.subr.bf16.mxu0 0
    %1969 = vmatpush2.bf16.msra.mxu0 0
    %1970 = vmatprep.mubr.bf16.mxu0 0
    %1971 = vmatmul.mubr.bf16.gmra.mxu0 %v1929
    %v1972 = vpop.f32.mrf.mxu0
    %v1973 = vadd.f32 %v1930, %v1972
    %v1974 = vpop.f32.mrf.mxu0
    %v1975 = vadd.f32 %v1931, %v1974
    %v1976 = vpop.f32.mrf.mxu0
    %v1977 = vpop.f32.mrf.mxu0
    %1978 = vdwg.mxu0
    %1979 = vmatprep.subr.bf16.mxu0 %v1162
    %1980 = vmatpush1.bf16.msra.mxu0 %v1161
    %1981 = vmatprep.subr.bf16.mxu0 %v1158
    %1982 = vmatpush1.bf16.msra.mxu0 %v1157
    %1983 = vmatprep.subr.bf16.mxu0 %v1154
    %1984 = vmatpush1.bf16.msra.mxu0 %v1153
    %1985 = vmatprep.subr.bf16.mxu0 %v1150
    %1986 = vmatpush1.bf16.msra.mxu0 %v1149
    %1987 = vmatprep.subr.bf16.mxu0 %v1146
    %1988 = vmatpush1.bf16.msra.mxu0 %v1145
    %1989 = vmatprep.subr.bf16.mxu0 %v1142
    %1990 = vmatpush1.bf16.msra.mxu0 %v1141
    %1991 = vmatprep.subr.bf16.mxu0 %v1138
    %1992 = vmatpush1.bf16.msra.mxu0 %v1137
    %1993 = vmatprep.subr.bf16.mxu0 %v1134
    %1994 = vmatpush1.bf16.msra.mxu0 %v1133
    %1995 = vmatprep.subr.bf16.mxu0 0
    %1996 = vmatpush2.bf16.msra.mxu0 0
    %1997 = vmatprep.subr.bf16.mxu0 0
    %1998 = vmatpush2.bf16.msra.mxu0 0
    %1999 = vmatprep.subr.bf16.mxu0 0
    %2000 = vmatpush2.bf16.msra.mxu0 0
    %2001 = vmatprep.subr.bf16.mxu0 0
    %2002 = vmatpush2.bf16.msra.mxu0 0
    %2003 = vmatprep.subr.bf16.mxu0 0
    %2004 = vmatpush2.bf16.msra.mxu0 0
    %2005 = vmatprep.subr.bf16.mxu0 0
    %2006 = vmatpush2.bf16.msra.mxu0 0
    %2007 = vmatprep.subr.bf16.mxu0 0
    %2008 = vmatpush2.bf16.msra.mxu0 0
    %2009 = vmatprep.subr.bf16.mxu0 0
    %2010 = vmatpush2.bf16.msra.mxu0 0
    %2011 = vmatprep.mubr.bf16.mxu0 0
    %2012 = vmatmul.mubr.bf16.gmra.mxu0 %v1929
    %v2013 = vpop.f32.mrf.mxu0
    %v2014 = vadd.f32 %v1932, %v2013
    %v2015 = vpop.f32.mrf.mxu0
    %v2016 = vadd.f32 %v1933, %v2015
    %v2017 = vpop.f32.mrf.mxu0
    %v2018 = vpop.f32.mrf.mxu0
    %2019 = vdwg.mxu0
    %v2021 = vrot.slane %v1928, 6
    %v2023 = vpack.c.bf16 %v2021, %v2021
    %v2026 = vrot.slane %v1929, 1
    %v2027 = vrot.slane %v2023, 1
    %2030 = vmatprep.subr.bf16.mxu0 %v1693
    %2031 = vmatpush1.bf16.msra.mxu0 %v1692
    %2032 = vmatprep.subr.bf16.mxu0 %v1689
    %2033 = vmatpush1.bf16.msra.mxu0 %v1688
    %2034 = vmatprep.subr.bf16.mxu0 %v1685
    %2035 = vmatpush1.bf16.msra.mxu0 %v1684
    %2036 = vmatprep.subr.bf16.mxu0 %v1681
    %2037 = vmatpush1.bf16.msra.mxu0 %v1680
    %2038 = vmatprep.subr.bf16.mxu0 %v1677
    %2039 = vmatpush1.bf16.msra.mxu0 %v1676
    %2040 = vmatprep.subr.bf16.mxu0 %v1673
    %2041 = vmatpush1.bf16.msra.mxu0 %v1672
    %2042 = vmatprep.subr.bf16.mxu0 %v1669
    %2043 = vmatpush1.bf16.msra.mxu0 %v1668
    %2044 = vmatprep.subr.bf16.mxu0 %v1665
    %2045 = vmatpush1.bf16.msra.mxu0 %v1664
    %2046 = vmatprep.subr.bf16.mxu0 %v1725
    %2047 = vmatpush2.bf16.msra.mxu0 %v1724
    %2048 = vmatprep.subr.bf16.mxu0 %v1721
    %2049 = vmatpush2.bf16.msra.mxu0 %v1720
    %2050 = vmatprep.subr.bf16.mxu0 %v1717
    %2051 = vmatpush2.bf16.msra.mxu0 %v1716
    %2052 = vmatprep.subr.bf16.mxu0 %v1713
    %2053 = vmatpush2.bf16.msra.mxu0 %v1712
    %2054 = vmatprep.subr.bf16.mxu0 %v1709
    %2055 = vmatpush2.bf16.msra.mxu0 %v1708
    %2056 = vmatprep.subr.bf16.mxu0 %v1705
    %2057 = vmatpush2.bf16.msra.mxu0 %v1704
    %2058 = vmatprep.subr.bf16.mxu0 %v1701
    %2059 = vmatpush2.bf16.msra.mxu0 %v1700
    %2060 = vmatprep.subr.bf16.mxu0 %v1697
    %2061 = vmatpush2.bf16.msra.mxu0 %v1696
    %2062 = vmatprep.mubr.bf16.mxu0 %v2027
    %2063 = vmatmul.mubr.bf16.gmra.mxu0 %v2026
    %v2064 = vpop.f32.mrf.mxu0
    %v2065 = vadd.f32 0.0, %v2064
    %v2066 = vpop.f32.mrf.mxu0
    %v2067 = vadd.f32 0.0, %v2066
    %v2068 = vpop.f32.mrf.mxu0
    %v2069 = vpop.f32.mrf.mxu0
    %2070 = vdwg.mxu0
    %2071 = vmatprep.subr.bf16.mxu0 %v1695
    %2072 = vmatpush1.bf16.msra.mxu0 %v1694
    %2073 = vmatprep.subr.bf16.mxu0 %v1691
    %2074 = vmatpush1.bf16.msra.mxu0 %v1690
    %2075 = vmatprep.subr.bf16.mxu0 %v1687
    %2076 = vmatpush1.bf16.msra.mxu0 %v1686
    %2077 = vmatprep.subr.bf16.mxu0 %v1683
    %2078 = vmatpush1.bf16.msra.mxu0 %v1682
    %2079 = vmatprep.subr.bf16.mxu0 %v1679
    %2080 = vmatpush1.bf16.msra.mxu0 %v1678
    %2081 = vmatprep.subr.bf16.mxu0 %v1675
    %2082 = vmatpush1.bf16.msra.mxu0 %v1674
    %2083 = vmatprep.subr.bf16.mxu0 %v1671
    %2084 = vmatpush1.bf16.msra.mxu0 %v1670
    %2085 = vmatprep.subr.bf16.mxu0 %v1667
    %2086 = vmatpush1.bf16.msra.mxu0 %v1666
    %2087 = vmatprep.subr.bf16.mxu0 %v1727
    %2088 = vmatpush2.bf16.msra.mxu0 %v1726
    %2089 = vmatprep.subr.bf16.mxu0 %v1723
    %2090 = vmatpush2.bf16.msra.mxu0 %v1722
    %2091 = vmatprep.subr.bf16.mxu0 %v1719
    %2092 = vmatpush2.bf16.msra.mxu0 %v1718
    %2093 = vmatprep.subr.bf16.mxu0 %v1715
    %2094 = vmatpush2.bf16.msra.mxu0 %v1714
    %2095 = vmatprep.subr.bf16.mxu0 %v1711
    %2096 = vmatpush2.bf16.msra.mxu0 %v1710
    %2097 = vmatprep.subr.bf16.mxu0 %v1707
    %2098 = vmatpush2.bf16.msra.mxu0 %v1706
    %2099 = vmatprep.subr.bf16.mxu0 %v1703
    %2100 = vmatpush2.bf16.msra.mxu0 %v1702
    %2101 = vmatprep.subr.bf16.mxu0 %v1699
    %2102 = vmatpush2.bf16.msra.mxu0 %v1698
    %2103 = vmatprep.mubr.bf16.mxu0 %v2027
    %2104 = vmatmul.mubr.bf16.gmra.mxu0 %v2026
    %v2105 = vpop.f32.mrf.mxu0
    %v2106 = vadd.f32 0.0, %v2105
    %v2107 = vpop.f32.mrf.mxu0
    %v2108 = vadd.f32 0.0, %v2107
    %v2109 = vpop.f32.mrf.mxu0
    %v2110 = vpop.f32.mrf.mxu0
    %2111 = vdwg.mxu0
    %v2112 = vrot.slane %v1928, 2
    %v2114 = vpack.c.bf16 %v992, %v992
    %v2115 = vpack.c.bf16 %v2112, %v2112
    %v2116 = vld [vmem:[#allocation9] sm:$0xff]
    %v2117 = vld [vmem:[#allocation9 + $0x8] sm:$0xff]
    %v2118 = vld [vmem:[#allocation9 + $0x10] sm:$0xff]
    %v2119 = vld [vmem:[#allocation9 + $0x18] sm:$0xff]
    %v2120 = vld [vmem:[#allocation9 + $0x20] sm:$0xff]
    %v2121 = vld [vmem:[#allocation9 + $0x28] sm:$0xff]
    %v2122 = vld [vmem:[#allocation9 + $0x30] sm:$0xff]
    %v2123 = vld [vmem:[#allocation9 + $0x38] sm:$0xff]
    %v2124 = vld [vmem:[#allocation9 + $0x40] sm:$0xff]
    %v2125 = vld [vmem:[#allocation9 + $0x48] sm:$0xff]
    %v2126 = vld [vmem:[#allocation9 + $0x50] sm:$0xff]
    %v2127 = vld [vmem:[#allocation9 + $0x58] sm:$0xff]
    %v2128 = vld [vmem:[#allocation9 + $0x60] sm:$0xff]
    %v2129 = vld [vmem:[#allocation9 + $0x68] sm:$0xff]
    %v2130 = vld [vmem:[#allocation9 + $0x70] sm:$0xff]
    %v2131 = vld [vmem:[#allocation9 + $0x78] sm:$0xff]
    %v2132 = vld [vmem:[#allocation9 + $0x80] sm:$0xff]
    %v2133 = vld [vmem:[#allocation9 + $0x88] sm:$0xff]
    %v2134 = vld [vmem:[#allocation9 + $0x90] sm:$0xff]
    %v2135 = vld [vmem:[#allocation9 + $0x98] sm:$0xff]
    %v2136 = vld [vmem:[#allocation9 + $0xa0] sm:$0xff]
    %v2137 = vld [vmem:[#allocation9 + $0xa8] sm:$0xff]
    %v2138 = vld [vmem:[#allocation9 + $0xb0] sm:$0xff]
    %v2139 = vld [vmem:[#allocation9 + $0xb8] sm:$0xff]
    %v2140 = vld [vmem:[#allocation9 + $0xc0] sm:$0xff]
    %v2141 = vld [vmem:[#allocation9 + $0xc8] sm:$0xff]
    %v2142 = vld [vmem:[#allocation9 + $0xd0] sm:$0xff]
    %v2143 = vld [vmem:[#allocation9 + $0xd8] sm:$0xff]
    %v2144 = vld [vmem:[#allocation9 + $0xe0] sm:$0xff]
    %v2145 = vld [vmem:[#allocation9 + $0xe8] sm:$0xff]
    %v2146 = vld [vmem:[#allocation9 + $0xf0] sm:$0xff]
    %v2147 = vld [vmem:[#allocation9 + $0xf8] sm:$0xff]
    %v2148 = vld [vmem:[#allocation9 + $0x100] sm:$0xff]
    %v2149 = vld [vmem:[#allocation9 + $0x108] sm:$0xff]
    %v2150 = vld [vmem:[#allocation9 + $0x110] sm:$0xff]
    %v2151 = vld [vmem:[#allocation9 + $0x118] sm:$0xff]
    %v2152 = vld [vmem:[#allocation9 + $0x120] sm:$0xff]
    %v2153 = vld [vmem:[#allocation9 + $0x128] sm:$0xff]
    %v2154 = vld [vmem:[#allocation9 + $0x130] sm:$0xff]
    %v2155 = vld [vmem:[#allocation9 + $0x138] sm:$0xff]
    %v2156 = vld [vmem:[#allocation9 + $0x140] sm:$0xff]
    %v2157 = vld [vmem:[#allocation9 + $0x148] sm:$0xff]
    %v2158 = vld [vmem:[#allocation9 + $0x150] sm:$0xff]
    %v2159 = vld [vmem:[#allocation9 + $0x158] sm:$0xff]
    %v2160 = vld [vmem:[#allocation9 + $0x160] sm:$0xff]
    %v2161 = vld [vmem:[#allocation9 + $0x168] sm:$0xff]
    %v2162 = vld [vmem:[#allocation9 + $0x170] sm:$0xff]
    %v2163 = vld [vmem:[#allocation9 + $0x178] sm:$0xff]
    %v2164 = vld [vmem:[#allocation9 + $0x180] sm:$0xff]
    %v2165 = vld [vmem:[#allocation9 + $0x188] sm:$0xff]
    %v2166 = vld [vmem:[#allocation9 + $0x190] sm:$0xff]
    %v2167 = vld [vmem:[#allocation9 + $0x198] sm:$0xff]
    %v2168 = vld [vmem:[#allocation9 + $0x1a0] sm:$0xff]
    %v2169 = vld [vmem:[#allocation9 + $0x1a8] sm:$0xff]
    %v2170 = vld [vmem:[#allocation9 + $0x1b0] sm:$0xff]
    %v2171 = vld [vmem:[#allocation9 + $0x1b8] sm:$0xff]
    %v2172 = vld [vmem:[#allocation9 + $0x1c0] sm:$0xff]
    %v2173 = vld [vmem:[#allocation9 + $0x1c8] sm:$0xff]
    %v2174 = vld [vmem:[#allocation9 + $0x1d0] sm:$0xff]
    %v2175 = vld [vmem:[#allocation9 + $0x1d8] sm:$0xff]
    %v2176 = vld [vmem:[#allocation9 + $0x1e0] sm:$0xff]
    %v2177 = vld [vmem:[#allocation9 + $0x1e8] sm:$0xff]
    %v2178 = vld [vmem:[#allocation9 + $0x1f0] sm:$0xff]
    %v2179 = vld [vmem:[#allocation9 + $0x1f8] sm:$0xff]
    %v2244 = vunpack.c.l.b16 %v2116
    %v2245 = vunpack.c.h.b16 %v2116
    %v2246 = vunpack.c.l.b16 %v2117
    %v2247 = vunpack.c.h.b16 %v2117
    %v2248 = vunpack.c.l.b16 %v2118
    %v2249 = vunpack.c.h.b16 %v2118
    %v2250 = vunpack.c.l.b16 %v2119
    %v2251 = vunpack.c.h.b16 %v2119
    %v2252 = vunpack.c.l.b16 %v2120
    %v2253 = vunpack.c.h.b16 %v2120
    %v2254 = vunpack.c.l.b16 %v2121
    %v2255 = vunpack.c.h.b16 %v2121
    %v2256 = vunpack.c.l.b16 %v2122
    %v2257 = vunpack.c.h.b16 %v2122
    %v2258 = vunpack.c.l.b16 %v2123
    %v2259 = vunpack.c.h.b16 %v2123
    %v2260 = vunpack.c.l.b16 %v2124
    %v2261 = vunpack.c.h.b16 %v2124
    %v2262 = vunpack.c.l.b16 %v2125
    %v2263 = vunpack.c.h.b16 %v2125
    %v2264 = vunpack.c.l.b16 %v2126
    %v2265 = vunpack.c.h.b16 %v2126
    %v2266 = vunpack.c.l.b16 %v2127
    %v2267 = vunpack.c.h.b16 %v2127
    %v2268 = vunpack.c.l.b16 %v2128
    %v2269 = vunpack.c.h.b16 %v2128
    %v2270 = vunpack.c.l.b16 %v2129
    %v2271 = vunpack.c.h.b16 %v2129
    %v2272 = vunpack.c.l.b16 %v2130
    %v2273 = vunpack.c.h.b16 %v2130
    %v2274 = vunpack.c.l.b16 %v2131
    %v2275 = vunpack.c.h.b16 %v2131
    %v2276 = vunpack.c.l.b16 %v2132
    %v2277 = vunpack.c.h.b16 %v2132
    %v2278 = vunpack.c.l.b16 %v2133
    %v2279 = vunpack.c.h.b16 %v2133
    %v2280 = vunpack.c.l.b16 %v2134
    %v2281 = vunpack.c.h.b16 %v2134
    %v2282 = vunpack.c.l.b16 %v2135
    %v2283 = vunpack.c.h.b16 %v2135
    %v2284 = vunpack.c.l.b16 %v2136
    %v2285 = vunpack.c.h.b16 %v2136
    %v2286 = vunpack.c.l.b16 %v2137
    %v2287 = vunpack.c.h.b16 %v2137
    %v2288 = vunpack.c.l.b16 %v2138
    %v2289 = vunpack.c.h.b16 %v2138
    %v2290 = vunpack.c.l.b16 %v2139
    %v2291 = vunpack.c.h.b16 %v2139
    %v2292 = vunpack.c.l.b16 %v2140
    %v2293 = vunpack.c.h.b16 %v2140
    %v2294 = vunpack.c.l.b16 %v2141
    %v2295 = vunpack.c.h.b16 %v2141
    %v2296 = vunpack.c.l.b16 %v2142
    %v2297 = vunpack.c.h.b16 %v2142
    %v2298 = vunpack.c.l.b16 %v2143
    %v2299 = vunpack.c.h.b16 %v2143
    %v2300 = vunpack.c.l.b16 %v2144
    %v2301 = vunpack.c.h.b16 %v2144
    %v2302 = vunpack.c.l.b16 %v2145
    %v2303 = vunpack.c.h.b16 %v2145
    %v2304 = vunpack.c.l.b16 %v2146
    %v2305 = vunpack.c.h.b16 %v2146
    %v2306 = vunpack.c.l.b16 %v2147
    %v2307 = vunpack.c.h.b16 %v2147
    %v2308 = vunpack.c.l.b16 %v2148
    %v2309 = vunpack.c.h.b16 %v2148
    %v2310 = vunpack.c.l.b16 %v2149
    %v2311 = vunpack.c.h.b16 %v2149
    %v2312 = vunpack.c.l.b16 %v2150
    %v2313 = vunpack.c.h.b16 %v2150
    %v2314 = vunpack.c.l.b16 %v2151
    %v2315 = vunpack.c.h.b16 %v2151
    %v2316 = vunpack.c.l.b16 %v2152
    %v2317 = vunpack.c.h.b16 %v2152
    %v2318 = vunpack.c.l.b16 %v2153
    %v2319 = vunpack.c.h.b16 %v2153
    %v2320 = vunpack.c.l.b16 %v2154
    %v2321 = vunpack.c.h.b16 %v2154
    %v2322 = vunpack.c.l.b16 %v2155
    %v2323 = vunpack.c.h.b16 %v2155
    %v2324 = vunpack.c.l.b16 %v2156
    %v2325 = vunpack.c.h.b16 %v2156
    %v2326 = vunpack.c.l.b16 %v2157
    %v2327 = vunpack.c.h.b16 %v2157
    %v2328 = vunpack.c.l.b16 %v2158
    %v2329 = vunpack.c.h.b16 %v2158
    %v2330 = vunpack.c.l.b16 %v2159
    %v2331 = vunpack.c.h.b16 %v2159
    %v2332 = vunpack.c.l.b16 %v2160
    %v2333 = vunpack.c.h.b16 %v2160
    %v2334 = vunpack.c.l.b16 %v2161
    %v2335 = vunpack.c.h.b16 %v2161
    %v2336 = vunpack.c.l.b16 %v2162
    %v2337 = vunpack.c.h.b16 %v2162
    %v2338 = vunpack.c.l.b16 %v2163
    %v2339 = vunpack.c.h.b16 %v2163
    %v2340 = vunpack.c.l.b16 %v2164
    %v2341 = vunpack.c.h.b16 %v2164
    %v2342 = vunpack.c.l.b16 %v2165
    %v2343 = vunpack.c.h.b16 %v2165
    %v2344 = vunpack.c.l.b16 %v2166
    %v2345 = vunpack.c.h.b16 %v2166
    %v2346 = vunpack.c.l.b16 %v2167
    %v2347 = vunpack.c.h.b16 %v2167
    %v2348 = vunpack.c.l.b16 %v2168
    %v2349 = vunpack.c.h.b16 %v2168
    %v2350 = vunpack.c.l.b16 %v2169
    %v2351 = vunpack.c.h.b16 %v2169
    %v2352 = vunpack.c.l.b16 %v2170
    %v2353 = vunpack.c.h.b16 %v2170
    %v2354 = vunpack.c.l.b16 %v2171
    %v2355 = vunpack.c.h.b16 %v2171
    %v2356 = vunpack.c.l.b16 %v2172
    %v2357 = vunpack.c.h.b16 %v2172
    %v2358 = vunpack.c.l.b16 %v2173
    %v2359 = vunpack.c.h.b16 %v2173
    %v2360 = vunpack.c.l.b16 %v2174
    %v2361 = vunpack.c.h.b16 %v2174
    %v2362 = vunpack.c.l.b16 %v2175
    %v2363 = vunpack.c.h.b16 %v2175
    %v2364 = vunpack.c.l.b16 %v2176
    %v2365 = vunpack.c.h.b16 %v2176
    %v2366 = vunpack.c.l.b16 %v2177
    %v2367 = vunpack.c.h.b16 %v2177
    %v2368 = vunpack.c.l.b16 %v2178
    %v2369 = vunpack.c.h.b16 %v2178
    %v2370 = vunpack.c.l.b16 %v2179
    %v2371 = vunpack.c.h.b16 %v2179
    %v2372 = vpack.c.b16 %v2248, %v2244
    %v2373 = vpack.c.b16 %v2249, %v2245
    %v2374 = vpack.c.b16 %v2250, %v2246
    %v2375 = vpack.c.b16 %v2251, %v2247
    %v2376 = vpack.c.b16 %v2256, %v2252
    %v2377 = vpack.c.b16 %v2257, %v2253
    %v2378 = vpack.c.b16 %v2258, %v2254
    %v2379 = vpack.c.b16 %v2259, %v2255
    %v2380 = vpack.c.b16 %v2264, %v2260
    %v2381 = vpack.c.b16 %v2265, %v2261
    %v2382 = vpack.c.b16 %v2266, %v2262
    %v2383 = vpack.c.b16 %v2267, %v2263
    %v2384 = vpack.c.b16 %v2272, %v2268
    %v2385 = vpack.c.b16 %v2273, %v2269
    %v2386 = vpack.c.b16 %v2274, %v2270
    %v2387 = vpack.c.b16 %v2275, %v2271
    %v2388 = vpack.c.b16 %v2280, %v2276
    %v2389 = vpack.c.b16 %v2281, %v2277
    %v2390 = vpack.c.b16 %v2282, %v2278
    %v2391 = vpack.c.b16 %v2283, %v2279
    %v2392 = vpack.c.b16 %v2288, %v2284
    %v2393 = vpack.c.b16 %v2289, %v2285
    %v2394 = vpack.c.b16 %v2290, %v2286
    %v2395 = vpack.c.b16 %v2291, %v2287
    %v2396 = vpack.c.b16 %v2296, %v2292
    %v2397 = vpack.c.b16 %v2297, %v2293
    %v2398 = vpack.c.b16 %v2298, %v2294
    %v2399 = vpack.c.b16 %v2299, %v2295
    %v2400 = vpack.c.b16 %v2304, %v2300
    %v2401 = vpack.c.b16 %v2305, %v2301
    %v2402 = vpack.c.b16 %v2306, %v2302
    %v2403 = vpack.c.b16 %v2307, %v2303
    %v2404 = vpack.c.b16 %v2312, %v2308
    %v2405 = vpack.c.b16 %v2313, %v2309
    %v2406 = vpack.c.b16 %v2314, %v2310
    %v2407 = vpack.c.b16 %v2315, %v2311
    %v2408 = vpack.c.b16 %v2320, %v2316
    %v2409 = vpack.c.b16 %v2321, %v2317
    %v2410 = vpack.c.b16 %v2322, %v2318
    %v2411 = vpack.c.b16 %v2323, %v2319
    %v2412 = vpack.c.b16 %v2328, %v2324
    %v2413 = vpack.c.b16 %v2329, %v2325
    %v2414 = vpack.c.b16 %v2330, %v2326
    %v2415 = vpack.c.b16 %v2331, %v2327
    %v2416 = vpack.c.b16 %v2336, %v2332
    %v2417 = vpack.c.b16 %v2337, %v2333
    %v2418 = vpack.c.b16 %v2338, %v2334
    %v2419 = vpack.c.b16 %v2339, %v2335
    %v2420 = vpack.c.b16 %v2344, %v2340
    %v2421 = vpack.c.b16 %v2345, %v2341
    %v2422 = vpack.c.b16 %v2346, %v2342
    %v2423 = vpack.c.b16 %v2347, %v2343
    %v2424 = vpack.c.b16 %v2352, %v2348
    %v2425 = vpack.c.b16 %v2353, %v2349
    %v2426 = vpack.c.b16 %v2354, %v2350
    %v2427 = vpack.c.b16 %v2355, %v2351
    %v2428 = vpack.c.b16 %v2360, %v2356
    %v2429 = vpack.c.b16 %v2361, %v2357
    %v2430 = vpack.c.b16 %v2362, %v2358
    %v2431 = vpack.c.b16 %v2363, %v2359
    %v2432 = vpack.c.b16 %v2368, %v2364
    %v2433 = vpack.c.b16 %v2369, %v2365
    %v2434 = vpack.c.b16 %v2370, %v2366
    %v2435 = vpack.c.b16 %v2371, %v2367
    %2500 = vmatprep.subr.bf16.mxu0 %v2401
    %2501 = vmatpush1.bf16.msra.mxu0 %v2400
    %2502 = vmatprep.subr.bf16.mxu0 %v2397
    %2503 = vmatpush1.bf16.msra.mxu0 %v2396
    %2504 = vmatprep.subr.bf16.mxu0 %v2393
    %2505 = vmatpush1.bf16.msra.mxu0 %v2392
    %2506 = vmatprep.subr.bf16.mxu0 %v2389
    %2507 = vmatpush1.bf16.msra.mxu0 %v2388
    %2508 = vmatprep.subr.bf16.mxu0 %v2385
    %2509 = vmatpush1.bf16.msra.mxu0 %v2384
    %2510 = vmatprep.subr.bf16.mxu0 %v2381
    %2511 = vmatpush1.bf16.msra.mxu0 %v2380
    %2512 = vmatprep.subr.bf16.mxu0 %v2377
    %2513 = vmatpush1.bf16.msra.mxu0 %v2376
    %2514 = vmatprep.subr.bf16.mxu0 %v2373
    %2515 = vmatpush1.bf16.msra.mxu0 %v2372
    %2516 = vmatprep.subr.bf16.mxu0 %v2433
    %2517 = vmatpush2.bf16.msra.mxu0 %v2432
    %2518 = vmatprep.subr.bf16.mxu0 %v2429
    %2519 = vmatpush2.bf16.msra.mxu0 %v2428
    %2520 = vmatprep.subr.bf16.mxu0 %v2425
    %2521 = vmatpush2.bf16.msra.mxu0 %v2424
    %2522 = vmatprep.subr.bf16.mxu0 %v2421
    %2523 = vmatpush2.bf16.msra.mxu0 %v2420
    %2524 = vmatprep.subr.bf16.mxu0 %v2417
    %2525 = vmatpush2.bf16.msra.mxu0 %v2416
    %2526 = vmatprep.subr.bf16.mxu0 %v2413
    %2527 = vmatpush2.bf16.msra.mxu0 %v2412
    %2528 = vmatprep.subr.bf16.mxu0 %v2409
    %2529 = vmatpush2.bf16.msra.mxu0 %v2408
    %2530 = vmatprep.subr.bf16.mxu0 %v2405
    %2531 = vmatpush2.bf16.msra.mxu0 %v2404
    %2532 = vmatprep.mubr.bf16.mxu0 %v2115
    %2533 = vmatmul.mubr.bf16.gmra.mxu0 %v2114
    %v2534 = vpop.f32.mrf.mxu0
    %v2535 = vadd.f32 0.0, %v2534
    %v2536 = vpop.f32.mrf.mxu0
    %v2537 = vadd.f32 0.0, %v2536
    %v2538 = vpop.f32.mrf.mxu0
    %v2539 = vpop.f32.mrf.mxu0
    %2540 = vdwg.mxu0
    %2541 = vmatprep.subr.bf16.mxu0 %v2403
    %2542 = vmatpush1.bf16.msra.mxu0 %v2402
    %2543 = vmatprep.subr.bf16.mxu0 %v2399
    %2544 = vmatpush1.bf16.msra.mxu0 %v2398
    %2545 = vmatprep.subr.bf16.mxu0 %v2395
    %2546 = vmatpush1.bf16.msra.mxu0 %v2394
    %2547 = vmatprep.subr.bf16.mxu0 %v2391
    %2548 = vmatpush1.bf16.msra.mxu0 %v2390
    %2549 = vmatprep.subr.bf16.mxu0 %v2387
    %2550 = vmatpush1.bf16.msra.mxu0 %v2386
    %2551 = vmatprep.subr.bf16.mxu0 %v2383
    %2552 = vmatpush1.bf16.msra.mxu0 %v2382
    %2553 = vmatprep.subr.bf16.mxu0 %v2379
    %2554 = vmatpush1.bf16.msra.mxu0 %v2378
    %2555 = vmatprep.subr.bf16.mxu0 %v2375
    %2556 = vmatpush1.bf16.msra.mxu0 %v2374
    %2557 = vmatprep.subr.bf16.mxu0 %v2435
    %2558 = vmatpush2.bf16.msra.mxu0 %v2434
    %2559 = vmatprep.subr.bf16.mxu0 %v2431
    %2560 = vmatpush2.bf16.msra.mxu0 %v2430
    %2561 = vmatprep.subr.bf16.mxu0 %v2427
    %2562 = vmatpush2.bf16.msra.mxu0 %v2426
    %2563 = vmatprep.subr.bf16.mxu0 %v2423
    %2564 = vmatpush2.bf16.msra.mxu0 %v2422
    %2565 = vmatprep.subr.bf16.mxu0 %v2419
    %2566 = vmatpush2.bf16.msra.mxu0 %v2418
    %2567 = vmatprep.subr.bf16.mxu0 %v2415
    %2568 = vmatpush2.bf16.msra.mxu0 %v2414
    %2569 = vmatprep.subr.bf16.mxu0 %v2411
    %2570 = vmatpush2.bf16.msra.mxu0 %v2410
    %2571 = vmatprep.subr.bf16.mxu0 %v2407
    %2572 = vmatpush2.bf16.msra.mxu0 %v2406
    %2573 = vmatprep.mubr.bf16.mxu0 %v2115
    %2574 = vmatmul.mubr.bf16.gmra.mxu0 %v2114
    %v2575 = vpop.f32.mrf.mxu0
    %v2576 = vadd.f32 0.0, %v2575
    %v2577 = vpop.f32.mrf.mxu0
    %v2578 = vadd.f32 0.0, %v2577
    %v2579 = vpop.f32.mrf.mxu0
    %v2580 = vpop.f32.mrf.mxu0
    %2581 = vdwg.mxu0
    %v2586 = vrot.slane %v2065, 6
    %v2587 = vrot.slane %v2067, 6
    %v2588 = vrot.slane %v2106, 6
    %v2589 = vrot.slane %v2108, 6
    %v2598 = vrot.slane %v2535, 4
    %v2599 = vrot.slane %v2537, 4
    %v2600 = vrot.slane %v2576, 4
    %v2601 = vrot.slane %v2578, 4
    %v2606 = vsel %vm973, %v1973, %v2586
    %v2607 = vsel %vm973, %v1975, %v2587
    %v2608 = vsel %vm973, %v2014, %v2588
    %v2609 = vsel %vm973, %v2016, %v2589
    %v2610 = vsel %vm978, %v2606, %v2598
    %v2611 = vsel %vm978, %v2607, %v2599
    %v2612 = vsel %vm978, %v2608, %v2600
    %v2613 = vsel %vm978, %v2609, %v2601
    %v2614 = vadd.f32 %v2610, %v984
    %v2615 = vadd.f32 %v2611, %v985
    %v2616 = vadd.f32 %v2612, %v986
    %v2617 = vadd.f32 %v2613, %v987
    %v2619 = vrot.slane %v999, 4
    %v2621 = vsel %vm978, %v1926, %v2619
    %v2622 = vxor.u32 %v2614, 2147483648
    %v2623 = vxor.u32 %v2615, 2147483648
    %v2624 = vxor.u32 %v2616, 2147483648
    %v2625 = vxor.u32 %v2617, 2147483648
    %v2626 = vmul.f32 %v2622, 1.442695
    %v2627 = vpow.pop %v2626
    %v2628 = vmul.f32 %v2623, 1.442695
    %v2629 = vpow.pop %v2628
    %v2630 = vmul.f32 %v2624, 1.442695
    %v2631 = vpow.pop %v2630
    %v2632 = vmul.f32 %v2625, 1.442695
    %v2633 = vpow.pop %v2632
    %v2634 = vadd.f32 %v2627, 1.0
    %v2635 = vadd.f32 %v2629, 1.0
    %v2636 = vadd.f32 %v2631, 1.0
    %v2637 = vadd.f32 %v2633, 1.0
    %v2638 = vrcp.pop %v2634
    %v2639 = vmul.f32 1.0, %v2638
    %v2640 = vrcp.pop %v2635
    %v2641 = vmul.f32 1.0, %v2640
    %v2642 = vrcp.pop %v2636
    %v2643 = vmul.f32 1.0, %v2642
    %v2644 = vrcp.pop %v2637
    %v2645 = vmul.f32 1.0, %v2644
    %v2646 = vmul.f32 %v2643, 2.0
    %v2647 = vsub.f32 %v2646, 1.0
    %v2648 = vmul.f32 %v2641, %v2621
    %v2649 = vmul.f32 %v2639, %v2647
    %v2650 = vadd.f32 %v2648, %v2649
    %v2651 = vtanh.pop %v2650
    %v2652 = vmul.f32 %v2645, %v2651
    %v2653 = vpack.c.bf16 %v2652, %v2652
    %v2654 = vrot.slane %v788, 6
    %v2655 = vrot.slane %v790, 6
    %v2656 = vrot.slane %v874, 6
    %v2657 = vrot.slane %v876, 6
    %2662 = vmatprep.subr.bf16.mxu0 %v1160
    %2663 = vmatpush1.bf16.msra.mxu0 %v1159
    %2664 = vmatprep.subr.bf16.mxu0 %v1156
    %2665 = vmatpush1.bf16.msra.mxu0 %v1155
    %2666 = vmatprep.subr.bf16.mxu0 %v1152
    %2667 = vmatpush1.bf16.msra.mxu0 %v1151
    %2668 = vmatprep.subr.bf16.mxu0 %v1148
    %2669 = vmatpush1.bf16.msra.mxu0 %v1147
    %2670 = vmatprep.subr.bf16.mxu0 %v1144
    %2671 = vmatpush1.bf16.msra.mxu0 %v1143
    %2672 = vmatprep.subr.bf16.mxu0 %v1140
    %2673 = vmatpush1.bf16.msra.mxu0 %v1139
    %2674 = vmatprep.subr.bf16.mxu0 %v1136
    %2675 = vmatpush1.bf16.msra.mxu0 %v1135
    %2676 = vmatprep.subr.bf16.mxu0 %v1132
    %2677 = vmatpush1.bf16.msra.mxu0 %v1131
    %2678 = vmatprep.subr.bf16.mxu0 0
    %2679 = vmatpush2.bf16.msra.mxu0 0
    %2680 = vmatprep.subr.bf16.mxu0 0
    %2681 = vmatpush2.bf16.msra.mxu0 0
    %2682 = vmatprep.subr.bf16.mxu0 0
    %2683 = vmatpush2.bf16.msra.mxu0 0
    %2684 = vmatprep.subr.bf16.mxu0 0
    %2685 = vmatpush2.bf16.msra.mxu0 0
    %2686 = vmatprep.subr.bf16.mxu0 0
    %2687 = vmatpush2.bf16.msra.mxu0 0
    %2688 = vmatprep.subr.bf16.mxu0 0
    %2689 = vmatpush2.bf16.msra.mxu0 0
    %2690 = vmatprep.subr.bf16.mxu0 0
    %2691 = vmatpush2.bf16.msra.mxu0 0
    %2692 = vmatprep.subr.bf16.mxu0 0
    %2693 = vmatpush2.bf16.msra.mxu0 0
    %2694 = vmatprep.mubr.bf16.mxu0 0
    %2695 = vmatmul.mubr.bf16.gmra.mxu0 %v2653
    %v2696 = vpop.f32.mrf.mxu0
    %v2697 = vadd.f32 %v2654, %v2696
    %v2698 = vpop.f32.mrf.mxu0
    %v2699 = vadd.f32 %v2655, %v2698
    %v2700 = vpop.f32.mrf.mxu0
    %v2701 = vpop.f32.mrf.mxu0
    %2702 = vdwg.mxu0
    %2703 = vmatprep.subr.bf16.mxu0 %v1162
    %2704 = vmatpush1.bf16.msra.mxu0 %v1161
    %2705 = vmatprep.subr.bf16.mxu0 %v1158
    %2706 = vmatpush1.bf16.msra.mxu0 %v1157
    %2707 = vmatprep.subr.bf16.mxu0 %v1154
    %2708 = vmatpush1.bf16.msra.mxu0 %v1153
    %2709 = vmatprep.subr.bf16.mxu0 %v1150
    %2710 = vmatpush1.bf16.msra.mxu0 %v1149
    %2711 = vmatprep.subr.bf16.mxu0 %v1146
    %2712 = vmatpush1.bf16.msra.mxu0 %v1145
    %2713 = vmatprep.subr.bf16.mxu0 %v1142
    %2714 = vmatpush1.bf16.msra.mxu0 %v1141
    %2715 = vmatprep.subr.bf16.mxu0 %v1138
    %2716 = vmatpush1.bf16.msra.mxu0 %v1137
    %2717 = vmatprep.subr.bf16.mxu0 %v1134
    %2718 = vmatpush1.bf16.msra.mxu0 %v1133
    %2719 = vmatprep.subr.bf16.mxu0 0
    %2720 = vmatpush2.bf16.msra.mxu0 0
    %2721 = vmatprep.subr.bf16.mxu0 0
    %2722 = vmatpush2.bf16.msra.mxu0 0
    %2723 = vmatprep.subr.bf16.mxu0 0
    %2724 = vmatpush2.bf16.msra.mxu0 0
    %2725 = vmatprep.subr.bf16.mxu0 0
    %2726 = vmatpush2.bf16.msra.mxu0 0
    %2727 = vmatprep.subr.bf16.mxu0 0
    %2728 = vmatpush2.bf16.msra.mxu0 0
    %2729 = vmatprep.subr.bf16.mxu0 0
    %2730 = vmatpush2.bf16.msra.mxu0 0
    %2731 = vmatprep.subr.bf16.mxu0 0
    %2732 = vmatpush2.bf16.msra.mxu0 0
    %2733 = vmatprep.subr.bf16.mxu0 0
    %2734 = vmatpush2.bf16.msra.mxu0 0
    %2735 = vmatprep.mubr.bf16.mxu0 0
    %2736 = vmatmul.mubr.bf16.gmra.mxu0 %v2653
    %v2737 = vpop.f32.mrf.mxu0
    %v2738 = vadd.f32 %v2656, %v2737
    %v2739 = vpop.f32.mrf.mxu0
    %v2740 = vadd.f32 %v2657, %v2739
    %v2741 = vpop.f32.mrf.mxu0
    %v2742 = vpop.f32.mrf.mxu0
    %2743 = vdwg.mxu0
    %v2745 = vrot.slane %v2652, 6
    %v2747 = vpack.c.bf16 %v2745, %v2745
    %v2750 = vrot.slane %v2653, 1
    %v2751 = vrot.slane %v2747, 1
    %2754 = vmatprep.subr.bf16.mxu0 %v1693
    %2755 = vmatpush1.bf16.msra.mxu0 %v1692
    %2756 = vmatprep.subr.bf16.mxu0 %v1689
    %2757 = vmatpush1.bf16.msra.mxu0 %v1688
    %2758 = vmatprep.subr.bf16.mxu0 %v1685
    %2759 = vmatpush1.bf16.msra.mxu0 %v1684
    %2760 = vmatprep.subr.bf16.mxu0 %v1681
    %2761 = vmatpush1.bf16.msra.mxu0 %v1680
    %2762 = vmatprep.subr.bf16.mxu0 %v1677
    %2763 = vmatpush1.bf16.msra.mxu0 %v1676
    %2764 = vmatprep.subr.bf16.mxu0 %v1673
    %2765 = vmatpush1.bf16.msra.mxu0 %v1672
    %2766 = vmatprep.subr.bf16.mxu0 %v1669
    %2767 = vmatpush1.bf16.msra.mxu0 %v1668
    %2768 = vmatprep.subr.bf16.mxu0 %v1665
    %2769 = vmatpush1.bf16.msra.mxu0 %v1664
    %2770 = vmatprep.subr.bf16.mxu0 %v1725
    %2771 = vmatpush2.bf16.msra.mxu0 %v1724
    %2772 = vmatprep.subr.bf16.mxu0 %v1721
    %2773 = vmatpush2.bf16.msra.mxu0 %v1720
    %2774 = vmatprep.subr.bf16.mxu0 %v1717
    %2775 = vmatpush2.bf16.msra.mxu0 %v1716
    %2776 = vmatprep.subr.bf16.mxu0 %v1713
    %2777 = vmatpush2.bf16.msra.mxu0 %v1712
    %2778 = vmatprep.subr.bf16.mxu0 %v1709
    %2779 = vmatpush2.bf16.msra.mxu0 %v1708
    %2780 = vmatprep.subr.bf16.mxu0 %v1705
    %2781 = vmatpush2.bf16.msra.mxu0 %v1704
    %2782 = vmatprep.subr.bf16.mxu0 %v1701
    %2783 = vmatpush2.bf16.msra.mxu0 %v1700
    %2784 = vmatprep.subr.bf16.mxu0 %v1697
    %2785 = vmatpush2.bf16.msra.mxu0 %v1696
    %2786 = vmatprep.mubr.bf16.mxu0 %v2751
    %2787 = vmatmul.mubr.bf16.gmra.mxu0 %v2750
    %v2788 = vpop.f32.mrf.mxu0
    %v2789 = vadd.f32 0.0, %v2788
    %v2790 = vpop.f32.mrf.mxu0
    %v2791 = vadd.f32 0.0, %v2790
    %v2792 = vpop.f32.mrf.mxu0
    %v2793 = vpop.f32.mrf.mxu0
    %2794 = vdwg.mxu0
    %2795 = vmatprep.subr.bf16.mxu0 %v1695
    %2796 = vmatpush1.bf16.msra.mxu0 %v1694
    %2797 = vmatprep.subr.bf16.mxu0 %v1691
    %2798 = vmatpush1.bf16.msra.mxu0 %v1690
    %2799 = vmatprep.subr.bf16.mxu0 %v1687
    %2800 = vmatpush1.bf16.msra.mxu0 %v1686
    %2801 = vmatprep.subr.bf16.mxu0 %v1683
    %2802 = vmatpush1.bf16.msra.mxu0 %v1682
    %2803 = vmatprep.subr.bf16.mxu0 %v1679
    %2804 = vmatpush1.bf16.msra.mxu0 %v1678
    %2805 = vmatprep.subr.bf16.mxu0 %v1675
    %2806 = vmatpush1.bf16.msra.mxu0 %v1674
    %2807 = vmatprep.subr.bf16.mxu0 %v1671
    %2808 = vmatpush1.bf16.msra.mxu0 %v1670
    %2809 = vmatprep.subr.bf16.mxu0 %v1667
    %2810 = vmatpush1.bf16.msra.mxu0 %v1666
    %2811 = vmatprep.subr.bf16.mxu0 %v1727
    %2812 = vmatpush2.bf16.msra.mxu0 %v1726
    %2813 = vmatprep.subr.bf16.mxu0 %v1723
    %2814 = vmatpush2.bf16.msra.mxu0 %v1722
    %2815 = vmatprep.subr.bf16.mxu0 %v1719
    %2816 = vmatpush2.bf16.msra.mxu0 %v1718
    %2817 = vmatprep.subr.bf16.mxu0 %v1715
    %2818 = vmatpush2.bf16.msra.mxu0 %v1714
    %2819 = vmatprep.subr.bf16.mxu0 %v1711
    %2820 = vmatpush2.bf16.msra.mxu0 %v1710
    %2821 = vmatprep.subr.bf16.mxu0 %v1707
    %2822 = vmatpush2.bf16.msra.mxu0 %v1706
    %2823 = vmatprep.subr.bf16.mxu0 %v1703
    %2824 = vmatpush2.bf16.msra.mxu0 %v1702
    %2825 = vmatprep.subr.bf16.mxu0 %v1699
    %2826 = vmatpush2.bf16.msra.mxu0 %v1698
    %2827 = vmatprep.mubr.bf16.mxu0 %v2751
    %2828 = vmatmul.mubr.bf16.gmra.mxu0 %v2750
    %v2829 = vpop.f32.mrf.mxu0
    %v2830 = vadd.f32 0.0, %v2829
    %v2831 = vpop.f32.mrf.mxu0
    %v2832 = vadd.f32 0.0, %v2831
    %v2833 = vpop.f32.mrf.mxu0
    %v2834 = vpop.f32.mrf.mxu0
    %2835 = vdwg.mxu0
    %v2836 = vrot.slane %v2653, 2
    %v2837 = vrot.slane %v2747, 2
    %2840 = vmatprep.subr.bf16.mxu0 %v2401
    %2841 = vmatpush1.bf16.msra.mxu0 %v2400
    %2842 = vmatprep.subr.bf16.mxu0 %v2397
    %2843 = vmatpush1.bf16.msra.mxu0 %v2396
    %2844 = vmatprep.subr.bf16.mxu0 %v2393
    %2845 = vmatpush1.bf16.msra.mxu0 %v2392
    %2846 = vmatprep.subr.bf16.mxu0 %v2389
    %2847 = vmatpush1.bf16.msra.mxu0 %v2388
    %2848 = vmatprep.subr.bf16.mxu0 %v2385
    %2849 = vmatpush1.bf16.msra.mxu0 %v2384
    %2850 = vmatprep.subr.bf16.mxu0 %v2381
    %2851 = vmatpush1.bf16.msra.mxu0 %v2380
    %2852 = vmatprep.subr.bf16.mxu0 %v2377
    %2853 = vmatpush1.bf16.msra.mxu0 %v2376
    %2854 = vmatprep.subr.bf16.mxu0 %v2373
    %2855 = vmatpush1.bf16.msra.mxu0 %v2372
    %2856 = vmatprep.subr.bf16.mxu0 %v2433
    %2857 = vmatpush2.bf16.msra.mxu0 %v2432
    %2858 = vmatprep.subr.bf16.mxu0 %v2429
    %2859 = vmatpush2.bf16.msra.mxu0 %v2428
    %2860 = vmatprep.subr.bf16.mxu0 %v2425
    %2861 = vmatpush2.bf16.msra.mxu0 %v2424
    %2862 = vmatprep.subr.bf16.mxu0 %v2421
    %2863 = vmatpush2.bf16.msra.mxu0 %v2420
    %2864 = vmatprep.subr.bf16.mxu0 %v2417
    %2865 = vmatpush2.bf16.msra.mxu0 %v2416
    %2866 = vmatprep.subr.bf16.mxu0 %v2413
    %2867 = vmatpush2.bf16.msra.mxu0 %v2412
    %2868 = vmatprep.subr.bf16.mxu0 %v2409
    %2869 = vmatpush2.bf16.msra.mxu0 %v2408
    %2870 = vmatprep.subr.bf16.mxu0 %v2405
    %2871 = vmatpush2.bf16.msra.mxu0 %v2404
    %2872 = vmatprep.mubr.bf16.mxu0 %v2837
    %2873 = vmatmul.mubr.bf16.gmra.mxu0 %v2836
    %v2874 = vpop.f32.mrf.mxu0
    %v2875 = vadd.f32 0.0, %v2874
    %v2876 = vpop.f32.mrf.mxu0
    %v2877 = vadd.f32 0.0, %v2876
    %v2878 = vpop.f32.mrf.mxu0
    %v2879 = vpop.f32.mrf.mxu0
    %2880 = vdwg.mxu0
    %2881 = vmatprep.subr.bf16.mxu0 %v2403
    %2882 = vmatpush1.bf16.msra.mxu0 %v2402
    %2883 = vmatprep.subr.bf16.mxu0 %v2399
    %2884 = vmatpush1.bf16.msra.mxu0 %v2398
    %2885 = vmatprep.subr.bf16.mxu0 %v2395
    %2886 = vmatpush1.bf16.msra.mxu0 %v2394
    %2887 = vmatprep.subr.bf16.mxu0 %v2391
    %2888 = vmatpush1.bf16.msra.mxu0 %v2390
    %2889 = vmatprep.subr.bf16.mxu0 %v2387
    %2890 = vmatpush1.bf16.msra.mxu0 %v2386
    %2891 = vmatprep.subr.bf16.mxu0 %v2383
    %2892 = vmatpush1.bf16.msra.mxu0 %v2382
    %2893 = vmatprep.subr.bf16.mxu0 %v2379
    %2894 = vmatpush1.bf16.msra.mxu0 %v2378
    %2895 = vmatprep.subr.bf16.mxu0 %v2375
    %2896 = vmatpush1.bf16.msra.mxu0 %v2374
    %2897 = vmatprep.subr.bf16.mxu0 %v2435
    %2898 = vmatpush2.bf16.msra.mxu0 %v2434
    %2899 = vmatprep.subr.bf16.mxu0 %v2431
    %2900 = vmatpush2.bf16.msra.mxu0 %v2430
    %2901 = vmatprep.subr.bf16.mxu0 %v2427
    %2902 = vmatpush2.bf16.msra.mxu0 %v2426
    %2903 = vmatprep.subr.bf16.mxu0 %v2423
    %2904 = vmatpush2.bf16.msra.mxu0 %v2422
    %2905 = vmatprep.subr.bf16.mxu0 %v2419
    %2906 = vmatpush2.bf16.msra.mxu0 %v2418
    %2907 = vmatprep.subr.bf16.mxu0 %v2415
    %2908 = vmatpush2.bf16.msra.mxu0 %v2414
    %2909 = vmatprep.subr.bf16.mxu0 %v2411
    %2910 = vmatpush2.bf16.msra.mxu0 %v2410
    %2911 = vmatprep.subr.bf16.mxu0 %v2407
    %2912 = vmatpush2.bf16.msra.mxu0 %v2406
    %2913 = vmatprep.mubr.bf16.mxu0 %v2837
    %2914 = vmatmul.mubr.bf16.gmra.mxu0 %v2836
    %v2915 = vpop.f32.mrf.mxu0
    %v2916 = vadd.f32 0.0, %v2915
    %v2917 = vpop.f32.mrf.mxu0
    %v2918 = vadd.f32 0.0, %v2917
    %v2919 = vpop.f32.mrf.mxu0
    %v2920 = vpop.f32.mrf.mxu0
    %2921 = vdwg.mxu0
    %v2922 = vrot.slane %v2652, 4
    %v2924 = vpack.c.bf16 %v994, %v994
    %v2925 = vpack.c.bf16 %v2922, %v2922
    %v2926 = vld [vmem:[#allocation11] sm:$0xff]
    %v2927 = vld [vmem:[#allocation11 + $0x8] sm:$0xff]
    %v2928 = vld [vmem:[#allocation11 + $0x10] sm:$0xff]
    %v2929 = vld [vmem:[#allocation11 + $0x18] sm:$0xff]
    %v2930 = vld [vmem:[#allocation11 + $0x20] sm:$0xff]
    %v2931 = vld [vmem:[#allocation11 + $0x28] sm:$0xff]
    %v2932 = vld [vmem:[#allocation11 + $0x30] sm:$0xff]
    %v2933 = vld [vmem:[#allocation11 + $0x38] sm:$0xff]
    %v2934 = vld [vmem:[#allocation11 + $0x40] sm:$0xff]
    %v2935 = vld [vmem:[#allocation11 + $0x48] sm:$0xff]
    %v2936 = vld [vmem:[#allocation11 + $0x50] sm:$0xff]
    %v2937 = vld [vmem:[#allocation11 + $0x58] sm:$0xff]
    %v2938 = vld [vmem:[#allocation11 + $0x60] sm:$0xff]
    %v2939 = vld [vmem:[#allocation11 + $0x68] sm:$0xff]
    %v2940 = vld [vmem:[#allocation11 + $0x70] sm:$0xff]
    %v2941 = vld [vmem:[#allocation11 + $0x78] sm:$0xff]
    %v2942 = vld [vmem:[#allocation11 + $0x80] sm:$0xff]
    %v2943 = vld [vmem:[#allocation11 + $0x88] sm:$0xff]
    %v2944 = vld [vmem:[#allocation11 + $0x90] sm:$0xff]
    %v2945 = vld [vmem:[#allocation11 + $0x98] sm:$0xff]
    %v2946 = vld [vmem:[#allocation11 + $0xa0] sm:$0xff]
    %v2947 = vld [vmem:[#allocation11 + $0xa8] sm:$0xff]
    %v2948 = vld [vmem:[#allocation11 + $0xb0] sm:$0xff]
    %v2949 = vld [vmem:[#allocation11 + $0xb8] sm:$0xff]
    %v2950 = vld [vmem:[#allocation11 + $0xc0] sm:$0xff]
    %v2951 = vld [vmem:[#allocation11 + $0xc8] sm:$0xff]
    %v2952 = vld [vmem:[#allocation11 + $0xd0] sm:$0xff]
    %v2953 = vld [vmem:[#allocation11 + $0xd8] sm:$0xff]
    %v2954 = vld [vmem:[#allocation11 + $0xe0] sm:$0xff]
    %v2955 = vld [vmem:[#allocation11 + $0xe8] sm:$0xff]
    %v2956 = vld [vmem:[#allocation11 + $0xf0] sm:$0xff]
    %v2957 = vld [vmem:[#allocation11 + $0xf8] sm:$0xff]
    %v2958 = vld [vmem:[#allocation11 + $0x100] sm:$0xff]
    %v2959 = vld [vmem:[#allocation11 + $0x108] sm:$0xff]
    %v2960 = vld [vmem:[#allocation11 + $0x110] sm:$0xff]
    %v2961 = vld [vmem:[#allocation11 + $0x118] sm:$0xff]
    %v2962 = vld [vmem:[#allocation11 + $0x120] sm:$0xff]
    %v2963 = vld [vmem:[#allocation11 + $0x128] sm:$0xff]
    %v2964 = vld [vmem:[#allocation11 + $0x130] sm:$0xff]
    %v2965 = vld [vmem:[#allocation11 + $0x138] sm:$0xff]
    %v2966 = vld [vmem:[#allocation11 + $0x140] sm:$0xff]
    %v2967 = vld [vmem:[#allocation11 + $0x148] sm:$0xff]
    %v2968 = vld [vmem:[#allocation11 + $0x150] sm:$0xff]
    %v2969 = vld [vmem:[#allocation11 + $0x158] sm:$0xff]
    %v2970 = vld [vmem:[#allocation11 + $0x160] sm:$0xff]
    %v2971 = vld [vmem:[#allocation11 + $0x168] sm:$0xff]
    %v2972 = vld [vmem:[#allocation11 + $0x170] sm:$0xff]
    %v2973 = vld [vmem:[#allocation11 + $0x178] sm:$0xff]
    %v2974 = vld [vmem:[#allocation11 + $0x180] sm:$0xff]
    %v2975 = vld [vmem:[#allocation11 + $0x188] sm:$0xff]
    %v2976 = vld [vmem:[#allocation11 + $0x190] sm:$0xff]
    %v2977 = vld [vmem:[#allocation11 + $0x198] sm:$0xff]
    %v2978 = vld [vmem:[#allocation11 + $0x1a0] sm:$0xff]
    %v2979 = vld [vmem:[#allocation11 + $0x1a8] sm:$0xff]
    %v2980 = vld [vmem:[#allocation11 + $0x1b0] sm:$0xff]
    %v2981 = vld [vmem:[#allocation11 + $0x1b8] sm:$0xff]
    %v2982 = vld [vmem:[#allocation11 + $0x1c0] sm:$0xff]
    %v2983 = vld [vmem:[#allocation11 + $0x1c8] sm:$0xff]
    %v2984 = vld [vmem:[#allocation11 + $0x1d0] sm:$0xff]
    %v2985 = vld [vmem:[#allocation11 + $0x1d8] sm:$0xff]
    %v2986 = vld [vmem:[#allocation11 + $0x1e0] sm:$0xff]
    %v2987 = vld [vmem:[#allocation11 + $0x1e8] sm:$0xff]
    %v2988 = vld [vmem:[#allocation11 + $0x1f0] sm:$0xff]
    %v2989 = vld [vmem:[#allocation11 + $0x1f8] sm:$0xff]
    %v3054 = vunpack.c.l.b16 %v2926
    %v3055 = vunpack.c.h.b16 %v2926
    %v3056 = vunpack.c.l.b16 %v2927
    %v3057 = vunpack.c.h.b16 %v2927
    %v3058 = vunpack.c.l.b16 %v2928
    %v3059 = vunpack.c.h.b16 %v2928
    %v3060 = vunpack.c.l.b16 %v2929
    %v3061 = vunpack.c.h.b16 %v2929
    %v3062 = vunpack.c.l.b16 %v2930
    %v3063 = vunpack.c.h.b16 %v2930
    %v3064 = vunpack.c.l.b16 %v2931
    %v3065 = vunpack.c.h.b16 %v2931
    %v3066 = vunpack.c.l.b16 %v2932
    %v3067 = vunpack.c.h.b16 %v2932
    %v3068 = vunpack.c.l.b16 %v2933
    %v3069 = vunpack.c.h.b16 %v2933
    %v3070 = vunpack.c.l.b16 %v2934
    %v3071 = vunpack.c.h.b16 %v2934
    %v3072 = vunpack.c.l.b16 %v2935
    %v3073 = vunpack.c.h.b16 %v2935
    %v3074 = vunpack.c.l.b16 %v2936
    %v3075 = vunpack.c.h.b16 %v2936
    %v3076 = vunpack.c.l.b16 %v2937
    %v3077 = vunpack.c.h.b16 %v2937
    %v3078 = vunpack.c.l.b16 %v2938
    %v3079 = vunpack.c.h.b16 %v2938
    %v3080 = vunpack.c.l.b16 %v2939
    %v3081 = vunpack.c.h.b16 %v2939
    %v3082 = vunpack.c.l.b16 %v2940
    %v3083 = vunpack.c.h.b16 %v2940
    %v3084 = vunpack.c.l.b16 %v2941
    %v3085 = vunpack.c.h.b16 %v2941
    %v3086 = vunpack.c.l.b16 %v2942
    %v3087 = vunpack.c.h.b16 %v2942
    %v3088 = vunpack.c.l.b16 %v2943
    %v3089 = vunpack.c.h.b16 %v2943
    %v3090 = vunpack.c.l.b16 %v2944
    %v3091 = vunpack.c.h.b16 %v2944
    %v3092 = vunpack.c.l.b16 %v2945
    %v3093 = vunpack.c.h.b16 %v2945
    %v3094 = vunpack.c.l.b16 %v2946
    %v3095 = vunpack.c.h.b16 %v2946
    %v3096 = vunpack.c.l.b16 %v2947
    %v3097 = vunpack.c.h.b16 %v2947
    %v3098 = vunpack.c.l.b16 %v2948
    %v3099 = vunpack.c.h.b16 %v2948
    %v3100 = vunpack.c.l.b16 %v2949
    %v3101 = vunpack.c.h.b16 %v2949
    %v3102 = vunpack.c.l.b16 %v2950
    %v3103 = vunpack.c.h.b16 %v2950
    %v3104 = vunpack.c.l.b16 %v2951
    %v3105 = vunpack.c.h.b16 %v2951
    %v3106 = vunpack.c.l.b16 %v2952
    %v3107 = vunpack.c.h.b16 %v2952
    %v3108 = vunpack.c.l.b16 %v2953
    %v3109 = vunpack.c.h.b16 %v2953
    %v3110 = vunpack.c.l.b16 %v2954
    %v3111 = vunpack.c.h.b16 %v2954
    %v3112 = vunpack.c.l.b16 %v2955
    %v3113 = vunpack.c.h.b16 %v2955
    %v3114 = vunpack.c.l.b16 %v2956
    %v3115 = vunpack.c.h.b16 %v2956
    %v3116 = vunpack.c.l.b16 %v2957
    %v3117 = vunpack.c.h.b16 %v2957
    %v3118 = vunpack.c.l.b16 %v2958
    %v3119 = vunpack.c.h.b16 %v2958
    %v3120 = vunpack.c.l.b16 %v2959
    %v3121 = vunpack.c.h.b16 %v2959
    %v3122 = vunpack.c.l.b16 %v2960
    %v3123 = vunpack.c.h.b16 %v2960
    %v3124 = vunpack.c.l.b16 %v2961
    %v3125 = vunpack.c.h.b16 %v2961
    %v3126 = vunpack.c.l.b16 %v2962
    %v3127 = vunpack.c.h.b16 %v2962
    %v3128 = vunpack.c.l.b16 %v2963
    %v3129 = vunpack.c.h.b16 %v2963
    %v3130 = vunpack.c.l.b16 %v2964
    %v3131 = vunpack.c.h.b16 %v2964
    %v3132 = vunpack.c.l.b16 %v2965
    %v3133 = vunpack.c.h.b16 %v2965
    %v3134 = vunpack.c.l.b16 %v2966
    %v3135 = vunpack.c.h.b16 %v2966
    %v3136 = vunpack.c.l.b16 %v2967
    %v3137 = vunpack.c.h.b16 %v2967
    %v3138 = vunpack.c.l.b16 %v2968
    %v3139 = vunpack.c.h.b16 %v2968
    %v3140 = vunpack.c.l.b16 %v2969
    %v3141 = vunpack.c.h.b16 %v2969
    %v3142 = vunpack.c.l.b16 %v2970
    %v3143 = vunpack.c.h.b16 %v2970
    %v3144 = vunpack.c.l.b16 %v2971
    %v3145 = vunpack.c.h.b16 %v2971
    %v3146 = vunpack.c.l.b16 %v2972
    %v3147 = vunpack.c.h.b16 %v2972
    %v3148 = vunpack.c.l.b16 %v2973
    %v3149 = vunpack.c.h.b16 %v2973
    %v3150 = vunpack.c.l.b16 %v2974
    %v3151 = vunpack.c.h.b16 %v2974
    %v3152 = vunpack.c.l.b16 %v2975
    %v3153 = vunpack.c.h.b16 %v2975
    %v3154 = vunpack.c.l.b16 %v2976
    %v3155 = vunpack.c.h.b16 %v2976
    %v3156 = vunpack.c.l.b16 %v2977
    %v3157 = vunpack.c.h.b16 %v2977
    %v3158 = vunpack.c.l.b16 %v2978
    %v3159 = vunpack.c.h.b16 %v2978
    %v3160 = vunpack.c.l.b16 %v2979
    %v3161 = vunpack.c.h.b16 %v2979
    %v3162 = vunpack.c.l.b16 %v2980
    %v3163 = vunpack.c.h.b16 %v2980
    %v3164 = vunpack.c.l.b16 %v2981
    %v3165 = vunpack.c.h.b16 %v2981
    %v3166 = vunpack.c.l.b16 %v2982
    %v3167 = vunpack.c.h.b16 %v2982
    %v3168 = vunpack.c.l.b16 %v2983
    %v3169 = vunpack.c.h.b16 %v2983
    %v3170 = vunpack.c.l.b16 %v2984
    %v3171 = vunpack.c.h.b16 %v2984
    %v3172 = vunpack.c.l.b16 %v2985
    %v3173 = vunpack.c.h.b16 %v2985
    %v3174 = vunpack.c.l.b16 %v2986
    %v3175 = vunpack.c.h.b16 %v2986
    %v3176 = vunpack.c.l.b16 %v2987
    %v3177 = vunpack.c.h.b16 %v2987
    %v3178 = vunpack.c.l.b16 %v2988
    %v3179 = vunpack.c.h.b16 %v2988
    %v3180 = vunpack.c.l.b16 %v2989
    %v3181 = vunpack.c.h.b16 %v2989
    %v3182 = vpack.c.b16 %v3058, %v3054
    %v3183 = vpack.c.b16 %v3059, %v3055
    %v3184 = vpack.c.b16 %v3060, %v3056
    %v3185 = vpack.c.b16 %v3061, %v3057
    %v3186 = vpack.c.b16 %v3066, %v3062
    %v3187 = vpack.c.b16 %v3067, %v3063
    %v3188 = vpack.c.b16 %v3068, %v3064
    %v3189 = vpack.c.b16 %v3069, %v3065
    %v3190 = vpack.c.b16 %v3074, %v3070
    %v3191 = vpack.c.b16 %v3075, %v3071
    %v3192 = vpack.c.b16 %v3076, %v3072
    %v3193 = vpack.c.b16 %v3077, %v3073
    %v3194 = vpack.c.b16 %v3082, %v3078
    %v3195 = vpack.c.b16 %v3083, %v3079
    %v3196 = vpack.c.b16 %v3084, %v3080
    %v3197 = vpack.c.b16 %v3085, %v3081
    %v3198 = vpack.c.b16 %v3090, %v3086
    %v3199 = vpack.c.b16 %v3091, %v3087
    %v3200 = vpack.c.b16 %v3092, %v3088
    %v3201 = vpack.c.b16 %v3093, %v3089
    %v3202 = vpack.c.b16 %v3098, %v3094
    %v3203 = vpack.c.b16 %v3099, %v3095
    %v3204 = vpack.c.b16 %v3100, %v3096
    %v3205 = vpack.c.b16 %v3101, %v3097
    %v3206 = vpack.c.b16 %v3106, %v3102
    %v3207 = vpack.c.b16 %v3107, %v3103
    %v3208 = vpack.c.b16 %v3108, %v3104
    %v3209 = vpack.c.b16 %v3109, %v3105
    %v3210 = vpack.c.b16 %v3114, %v3110
    %v3211 = vpack.c.b16 %v3115, %v3111
    %v3212 = vpack.c.b16 %v3116, %v3112
    %v3213 = vpack.c.b16 %v3117, %v3113
    %v3214 = vpack.c.b16 %v3122, %v3118
    %v3215 = vpack.c.b16 %v3123, %v3119
    %v3216 = vpack.c.b16 %v3124, %v3120
    %v3217 = vpack.c.b16 %v3125, %v3121
    %v3218 = vpack.c.b16 %v3130, %v3126
    %v3219 = vpack.c.b16 %v3131, %v3127
    %v3220 = vpack.c.b16 %v3132, %v3128
    %v3221 = vpack.c.b16 %v3133, %v3129
    %v3222 = vpack.c.b16 %v3138, %v3134
    %v3223 = vpack.c.b16 %v3139, %v3135
    %v3224 = vpack.c.b16 %v3140, %v3136
    %v3225 = vpack.c.b16 %v3141, %v3137
    %v3226 = vpack.c.b16 %v3146, %v3142
    %v3227 = vpack.c.b16 %v3147, %v3143
    %v3228 = vpack.c.b16 %v3148, %v3144
    %v3229 = vpack.c.b16 %v3149, %v3145
    %v3230 = vpack.c.b16 %v3154, %v3150
    %v3231 = vpack.c.b16 %v3155, %v3151
    %v3232 = vpack.c.b16 %v3156, %v3152
    %v3233 = vpack.c.b16 %v3157, %v3153
    %v3234 = vpack.c.b16 %v3162, %v3158
    %v3235 = vpack.c.b16 %v3163, %v3159
    %v3236 = vpack.c.b16 %v3164, %v3160
    %v3237 = vpack.c.b16 %v3165, %v3161
    %v3238 = vpack.c.b16 %v3170, %v3166
    %v3239 = vpack.c.b16 %v3171, %v3167
    %v3240 = vpack.c.b16 %v3172, %v3168
    %v3241 = vpack.c.b16 %v3173, %v3169
    %v3242 = vpack.c.b16 %v3178, %v3174
    %v3243 = vpack.c.b16 %v3179, %v3175
    %v3244 = vpack.c.b16 %v3180, %v3176
    %v3245 = vpack.c.b16 %v3181, %v3177
    %3310 = vmatprep.subr.bf16.mxu0 %v3211
    %3311 = vmatpush1.bf16.msra.mxu0 %v3210
    %3312 = vmatprep.subr.bf16.mxu0 %v3207
    %3313 = vmatpush1.bf16.msra.mxu0 %v3206
    %3314 = vmatprep.subr.bf16.mxu0 %v3203
    %3315 = vmatpush1.bf16.msra.mxu0 %v3202
    %3316 = vmatprep.subr.bf16.mxu0 %v3199
    %3317 = vmatpush1.bf16.msra.mxu0 %v3198
    %3318 = vmatprep.subr.bf16.mxu0 %v3195
    %3319 = vmatpush1.bf16.msra.mxu0 %v3194
    %3320 = vmatprep.subr.bf16.mxu0 %v3191
    %3321 = vmatpush1.bf16.msra.mxu0 %v3190
    %3322 = vmatprep.subr.bf16.mxu0 %v3187
    %3323 = vmatpush1.bf16.msra.mxu0 %v3186
    %3324 = vmatprep.subr.bf16.mxu0 %v3183
    %3325 = vmatpush1.bf16.msra.mxu0 %v3182
    %3326 = vmatprep.subr.bf16.mxu0 %v3243
    %3327 = vmatpush2.bf16.msra.mxu0 %v3242
    %3328 = vmatprep.subr.bf16.mxu0 %v3239
    %3329 = vmatpush2.bf16.msra.mxu0 %v3238
    %3330 = vmatprep.subr.bf16.mxu0 %v3235
    %3331 = vmatpush2.bf16.msra.mxu0 %v3234
    %3332 = vmatprep.subr.bf16.mxu0 %v3231
    %3333 = vmatpush2.bf16.msra.mxu0 %v3230
    %3334 = vmatprep.subr.bf16.mxu0 %v3227
    %3335 = vmatpush2.bf16.msra.mxu0 %v3226
    %3336 = vmatprep.subr.bf16.mxu0 %v3223
    %3337 = vmatpush2.bf16.msra.mxu0 %v3222
    %3338 = vmatprep.subr.bf16.mxu0 %v3219
    %3339 = vmatpush2.bf16.msra.mxu0 %v3218
    %3340 = vmatprep.subr.bf16.mxu0 %v3215
    %3341 = vmatpush2.bf16.msra.mxu0 %v3214
    %3342 = vmatprep.mubr.bf16.mxu0 %v2925
    %3343 = vmatmul.mubr.bf16.gmra.mxu0 %v2924
    %v3344 = vpop.f32.mrf.mxu0
    %v3345 = vadd.f32 0.0, %v3344
    %v3346 = vpop.f32.mrf.mxu0
    %v3347 = vadd.f32 0.0, %v3346
    %v3348 = vpop.f32.mrf.mxu0
    %v3349 = vpop.f32.mrf.mxu0
    %3350 = vdwg.mxu0
    %3351 = vmatprep.subr.bf16.mxu0 %v3213
    %3352 = vmatpush1.bf16.msra.mxu0 %v3212
    %3353 = vmatprep.subr.bf16.mxu0 %v3209
    %3354 = vmatpush1.bf16.msra.mxu0 %v3208
    %3355 = vmatprep.subr.bf16.mxu0 %v3205
    %3356 = vmatpush1.bf16.msra.mxu0 %v3204
    %3357 = vmatprep.subr.bf16.mxu0 %v3201
    %3358 = vmatpush1.bf16.msra.mxu0 %v3200
    %3359 = vmatprep.subr.bf16.mxu0 %v3197
    %3360 = vmatpush1.bf16.msra.mxu0 %v3196
    %3361 = vmatprep.subr.bf16.mxu0 %v3193
    %3362 = vmatpush1.bf16.msra.mxu0 %v3192
    %3363 = vmatprep.subr.bf16.mxu0 %v3189
    %3364 = vmatpush1.bf16.msra.mxu0 %v3188
    %3365 = vmatprep.subr.bf16.mxu0 %v3185
    %3366 = vmatpush1.bf16.msra.mxu0 %v3184
    %3367 = vmatprep.subr.bf16.mxu0 %v3245
    %3368 = vmatpush2.bf16.msra.mxu0 %v3244
    %3369 = vmatprep.subr.bf16.mxu0 %v3241
    %3370 = vmatpush2.bf16.msra.mxu0 %v3240
    %3371 = vmatprep.subr.bf16.mxu0 %v3237
    %3372 = vmatpush2.bf16.msra.mxu0 %v3236
    %3373 = vmatprep.subr.bf16.mxu0 %v3233
    %3374 = vmatpush2.bf16.msra.mxu0 %v3232
    %3375 = vmatprep.subr.bf16.mxu0 %v3229
    %3376 = vmatpush2.bf16.msra.mxu0 %v3228
    %3377 = vmatprep.subr.bf16.mxu0 %v3225
    %3378 = vmatpush2.bf16.msra.mxu0 %v3224
    %3379 = vmatprep.subr.bf16.mxu0 %v3221
    %3380 = vmatpush2.bf16.msra.mxu0 %v3220
    %3381 = vmatprep.subr.bf16.mxu0 %v3217
    %3382 = vmatpush2.bf16.msra.mxu0 %v3216
    %3383 = vmatprep.mubr.bf16.mxu0 %v2925
    %3384 = vmatmul.mubr.bf16.gmra.mxu0 %v2924
    %v3385 = vpop.f32.mrf.mxu0
    %v3386 = vadd.f32 0.0, %v3385
    %v3387 = vpop.f32.mrf.mxu0
    %v3388 = vadd.f32 0.0, %v3387
    %v3389 = vpop.f32.mrf.mxu0
    %v3390 = vpop.f32.mrf.mxu0
    %3391 = vdwg.mxu0
    %v3396 = vrot.slane %v2789, 6
    %v3397 = vrot.slane %v2791, 6
    %v3398 = vrot.slane %v2830, 6
    %v3399 = vrot.slane %v2832, 6
    %v3408 = vrot.slane %v2875, 4
    %v3409 = vrot.slane %v2877, 4
    %v3410 = vrot.slane %v2916, 4
    %v3411 = vrot.slane %v2918, 4
    %v3420 = vrot.slane %v3345, 2
    %v3421 = vrot.slane %v3347, 2
    %v3422 = vrot.slane %v3386, 2
    %v3423 = vrot.slane %v3388, 2
    %v3428 = vsel %vm973, %v2697, %v3396
    %v3429 = vsel %vm973, %v2699, %v3397
    %v3430 = vsel %vm973, %v2738, %v3398
    %v3431 = vsel %vm973, %v2740, %v3399
    %v3432 = vsel %vm978, %v3428, %v3408
    %v3433 = vsel %vm978, %v3429, %v3409
    %v3434 = vsel %vm978, %v3430, %v3410
    %v3435 = vsel %vm978, %v3431, %v3411
    %v3436 = vsel %vm983, %v3432, %v3420
    %v3437 = vsel %vm983, %v3433, %v3421
    %v3438 = vsel %vm983, %v3434, %v3422
    %v3439 = vsel %vm983, %v3435, %v3423
    %v3440 = vadd.f32 %v3436, %v984
    %v3441 = vadd.f32 %v3437, %v985
    %v3442 = vadd.f32 %v3438, %v986
    %v3443 = vadd.f32 %v3439, %v987
    %v3445 = vrot.slane %v1001, 2
    %v3447 = vsel %vm983, %v2650, %v3445
    %v3448 = vxor.u32 %v3440, 2147483648
    %v3449 = vxor.u32 %v3441, 2147483648
    %v3450 = vxor.u32 %v3442, 2147483648
    %v3451 = vxor.u32 %v3443, 2147483648
    %v3452 = vmul.f32 %v3448, 1.442695
    %v3453 = vpow.pop %v3452
    %v3454 = vmul.f32 %v3449, 1.442695
    %v3455 = vpow.pop %v3454
    %v3456 = vmul.f32 %v3450, 1.442695
    %v3457 = vpow.pop %v3456
    %v3458 = vmul.f32 %v3451, 1.442695
    %v3459 = vpow.pop %v3458
    %v3460 = vadd.f32 %v3453, 1.0
    %v3461 = vadd.f32 %v3455, 1.0
    %v3462 = vadd.f32 %v3457, 1.0
    %v3463 = vadd.f32 %v3459, 1.0
    %v3464 = vrcp.pop %v3460
    %v3465 = vmul.f32 1.0, %v3464
    %v3466 = vrcp.pop %v3461
    %v3467 = vmul.f32 1.0, %v3466
    %v3468 = vrcp.pop %v3462
    %v3469 = vmul.f32 1.0, %v3468
    %v3470 = vrcp.pop %v3463
    %v3471 = vmul.f32 1.0, %v3470
    %v3472 = vmul.f32 %v3469, 2.0
    %v3473 = vsub.f32 %v3472, 1.0
    %v3474 = vmul.f32 %v3467, %v3447
    %v3475 = vmul.f32 %v3465, %v3473
    %v3476 = vadd.f32 %v3474, %v3475
    %v3477 = vtanh.pop %v3476
    %v3478 = vmul.f32 %v3471, %v3477
    %v3479 = vpack.c.bf16 %v3478, %v3478
    %3480 = vmatprep.subr.bf16.mxu0 %v1160
    %3481 = vmatpush1.bf16.msra.mxu0 %v1159
    %3482 = vmatprep.subr.bf16.mxu0 %v1156
    %3483 = vmatpush1.bf16.msra.mxu0 %v1155
    %3484 = vmatprep.subr.bf16.mxu0 %v1152
    %3485 = vmatpush1.bf16.msra.mxu0 %v1151
    %3486 = vmatprep.subr.bf16.mxu0 %v1148
    %3487 = vmatpush1.bf16.msra.mxu0 %v1147
    %3488 = vmatprep.subr.bf16.mxu0 %v1144
    %3489 = vmatpush1.bf16.msra.mxu0 %v1143
    %3490 = vmatprep.subr.bf16.mxu0 %v1140
    %3491 = vmatpush1.bf16.msra.mxu0 %v1139
    %3492 = vmatprep.subr.bf16.mxu0 %v1136
    %3493 = vmatpush1.bf16.msra.mxu0 %v1135
    %3494 = vmatprep.subr.bf16.mxu0 %v1132
    %3495 = vmatpush1.bf16.msra.mxu0 %v1131
    %3496 = vmatprep.subr.bf16.mxu0 0
    %3497 = vmatpush2.bf16.msra.mxu0 0
    %3498 = vmatprep.subr.bf16.mxu0 0
    %3499 = vmatpush2.bf16.msra.mxu0 0
    %3500 = vmatprep.subr.bf16.mxu0 0
    %3501 = vmatpush2.bf16.msra.mxu0 0
    %3502 = vmatprep.subr.bf16.mxu0 0
    %3503 = vmatpush2.bf16.msra.mxu0 0
    %3504 = vmatprep.subr.bf16.mxu0 0
    %3505 = vmatpush2.bf16.msra.mxu0 0
    %3506 = vmatprep.subr.bf16.mxu0 0
    %3507 = vmatpush2.bf16.msra.mxu0 0
    %3508 = vmatprep.subr.bf16.mxu0 0
    %3509 = vmatpush2.bf16.msra.mxu0 0
    %3510 = vmatprep.subr.bf16.mxu0 0
    %3511 = vmatpush2.bf16.msra.mxu0 0
    %3512 = vmatprep.mubr.bf16.mxu0 0
    %3513 = vmatmul.mubr.bf16.gmra.mxu0 %v3479
    %v3514 = vpop.f32.mrf.mxu0
    %v3515 = vadd.f32 %v792, %v3514
    %v3516 = vpop.f32.mrf.mxu0
    %v3517 = vadd.f32 %v794, %v3516
    %v3518 = vpop.f32.mrf.mxu0
    %v3519 = vpop.f32.mrf.mxu0
    %3520 = vdwg.mxu0
    %3521 = vmatprep.subr.bf16.mxu0 %v1162
    %3522 = vmatpush1.bf16.msra.mxu0 %v1161
    %3523 = vmatprep.subr.bf16.mxu0 %v1158
    %3524 = vmatpush1.bf16.msra.mxu0 %v1157
    %3525 = vmatprep.subr.bf16.mxu0 %v1154
    %3526 = vmatpush1.bf16.msra.mxu0 %v1153
    %3527 = vmatprep.subr.bf16.mxu0 %v1150
    %3528 = vmatpush1.bf16.msra.mxu0 %v1149
    %3529 = vmatprep.subr.bf16.mxu0 %v1146
    %3530 = vmatpush1.bf16.msra.mxu0 %v1145
    %3531 = vmatprep.subr.bf16.mxu0 %v1142
    %3532 = vmatpush1.bf16.msra.mxu0 %v1141
    %3533 = vmatprep.subr.bf16.mxu0 %v1138
    %3534 = vmatpush1.bf16.msra.mxu0 %v1137
    %3535 = vmatprep.subr.bf16.mxu0 %v1134
    %3536 = vmatpush1.bf16.msra.mxu0 %v1133
    %3537 = vmatprep.subr.bf16.mxu0 0
    %3538 = vmatpush2.bf16.msra.mxu0 0
    %3539 = vmatprep.subr.bf16.mxu0 0
    %3540 = vmatpush2.bf16.msra.mxu0 0
    %3541 = vmatprep.subr.bf16.mxu0 0
    %3542 = vmatpush2.bf16.msra.mxu0 0
    %3543 = vmatprep.subr.bf16.mxu0 0
    %3544 = vmatpush2.bf16.msra.mxu0 0
    %3545 = vmatprep.subr.bf16.mxu0 0
    %3546 = vmatpush2.bf16.msra.mxu0 0
    %3547 = vmatprep.subr.bf16.mxu0 0
    %3548 = vmatpush2.bf16.msra.mxu0 0
    %3549 = vmatprep.subr.bf16.mxu0 0
    %3550 = vmatpush2.bf16.msra.mxu0 0
    %3551 = vmatprep.subr.bf16.mxu0 0
    %3552 = vmatpush2.bf16.msra.mxu0 0
    %3553 = vmatprep.mubr.bf16.mxu0 0
    %3554 = vmatmul.mubr.bf16.gmra.mxu0 %v3479
    %v3555 = vpop.f32.mrf.mxu0
    %v3556 = vadd.f32 %v878, %v3555
    %v3557 = vpop.f32.mrf.mxu0
    %v3558 = vadd.f32 %v880, %v3557
    %v3559 = vpop.f32.mrf.mxu0
    %v3560 = vpop.f32.mrf.mxu0
    %3561 = vdwg.mxu0
    %v3563 = vrot.slane %v3478, 6
    %v3565 = vpack.c.bf16 %v3563, %v3563
    %v3568 = vrot.slane %v3479, 1
    %v3569 = vrot.slane %v3565, 1
    %3572 = vmatprep.subr.bf16.mxu0 %v1693
    %3573 = vmatpush1.bf16.msra.mxu0 %v1692
    %3574 = vmatprep.subr.bf16.mxu0 %v1689
    %3575 = vmatpush1.bf16.msra.mxu0 %v1688
    %3576 = vmatprep.subr.bf16.mxu0 %v1685
    %3577 = vmatpush1.bf16.msra.mxu0 %v1684
    %3578 = vmatprep.subr.bf16.mxu0 %v1681
    %3579 = vmatpush1.bf16.msra.mxu0 %v1680
    %3580 = vmatprep.subr.bf16.mxu0 %v1677
    %3581 = vmatpush1.bf16.msra.mxu0 %v1676
    %3582 = vmatprep.subr.bf16.mxu0 %v1673
    %3583 = vmatpush1.bf16.msra.mxu0 %v1672
    %3584 = vmatprep.subr.bf16.mxu0 %v1669
    %3585 = vmatpush1.bf16.msra.mxu0 %v1668
    %3586 = vmatprep.subr.bf16.mxu0 %v1665
    %3587 = vmatpush1.bf16.msra.mxu0 %v1664
    %3588 = vmatprep.subr.bf16.mxu0 %v1725
    %3589 = vmatpush2.bf16.msra.mxu0 %v1724
    %3590 = vmatprep.subr.bf16.mxu0 %v1721
    %3591 = vmatpush2.bf16.msra.mxu0 %v1720
    %3592 = vmatprep.subr.bf16.mxu0 %v1717
    %3593 = vmatpush2.bf16.msra.mxu0 %v1716
    %3594 = vmatprep.subr.bf16.mxu0 %v1713
    %3595 = vmatpush2.bf16.msra.mxu0 %v1712
    %3596 = vmatprep.subr.bf16.mxu0 %v1709
    %3597 = vmatpush2.bf16.msra.mxu0 %v1708
    %3598 = vmatprep.subr.bf16.mxu0 %v1705
    %3599 = vmatpush2.bf16.msra.mxu0 %v1704
    %3600 = vmatprep.subr.bf16.mxu0 %v1701
    %3601 = vmatpush2.bf16.msra.mxu0 %v1700
    %3602 = vmatprep.subr.bf16.mxu0 %v1697
    %3603 = vmatpush2.bf16.msra.mxu0 %v1696
    %3604 = vmatprep.mubr.bf16.mxu0 %v3569
    %3605 = vmatmul.mubr.bf16.gmra.mxu0 %v3568
    %v3606 = vpop.f32.mrf.mxu0
    %v3607 = vadd.f32 0.0, %v3606
    %v3608 = vpop.f32.mrf.mxu0
    %v3609 = vadd.f32 0.0, %v3608
    %v3610 = vpop.f32.mrf.mxu0
    %v3611 = vpop.f32.mrf.mxu0
    %3612 = vdwg.mxu0
    %3613 = vmatprep.subr.bf16.mxu0 %v1695
    %3614 = vmatpush1.bf16.msra.mxu0 %v1694
    %3615 = vmatprep.subr.bf16.mxu0 %v1691
    %3616 = vmatpush1.bf16.msra.mxu0 %v1690
    %3617 = vmatprep.subr.bf16.mxu0 %v1687
    %3618 = vmatpush1.bf16.msra.mxu0 %v1686
    %3619 = vmatprep.subr.bf16.mxu0 %v1683
    %3620 = vmatpush1.bf16.msra.mxu0 %v1682
    %3621 = vmatprep.subr.bf16.mxu0 %v1679
    %3622 = vmatpush1.bf16.msra.mxu0 %v1678
    %3623 = vmatprep.subr.bf16.mxu0 %v1675
    %3624 = vmatpush1.bf16.msra.mxu0 %v1674
    %3625 = vmatprep.subr.bf16.mxu0 %v1671
    %3626 = vmatpush1.bf16.msra.mxu0 %v1670
    %3627 = vmatprep.subr.bf16.mxu0 %v1667
    %3628 = vmatpush1.bf16.msra.mxu0 %v1666
    %3629 = vmatprep.subr.bf16.mxu0 %v1727
    %3630 = vmatpush2.bf16.msra.mxu0 %v1726
    %3631 = vmatprep.subr.bf16.mxu0 %v1723
    %3632 = vmatpush2.bf16.msra.mxu0 %v1722
    %3633 = vmatprep.subr.bf16.mxu0 %v1719
    %3634 = vmatpush2.bf16.msra.mxu0 %v1718
    %3635 = vmatprep.subr.bf16.mxu0 %v1715
    %3636 = vmatpush2.bf16.msra.mxu0 %v1714
    %3637 = vmatprep.subr.bf16.mxu0 %v1711
    %3638 = vmatpush2.bf16.msra.mxu0 %v1710
    %3639 = vmatprep.subr.bf16.mxu0 %v1707
    %3640 = vmatpush2.bf16.msra.mxu0 %v1706
    %3641 = vmatprep.subr.bf16.mxu0 %v1703
    %3642 = vmatpush2.bf16.msra.mxu0 %v1702
    %3643 = vmatprep.subr.bf16.mxu0 %v1699
    %3644 = vmatpush2.bf16.msra.mxu0 %v1698
    %3645 = vmatprep.mubr.bf16.mxu0 %v3569
    %3646 = vmatmul.mubr.bf16.gmra.mxu0 %v3568
    %v3647 = vpop.f32.mrf.mxu0
    %v3648 = vadd.f32 0.0, %v3647
    %v3649 = vpop.f32.mrf.mxu0
    %v3650 = vadd.f32 0.0, %v3649
    %v3651 = vpop.f32.mrf.mxu0
    %v3652 = vpop.f32.mrf.mxu0
    %3653 = vdwg.mxu0
    %v3654 = vrot.slane %v3479, 2
    %v3655 = vrot.slane %v3565, 2
    %3658 = vmatprep.subr.bf16.mxu0 %v2401
    %3659 = vmatpush1.bf16.msra.mxu0 %v2400
    %3660 = vmatprep.subr.bf16.mxu0 %v2397
    %3661 = vmatpush1.bf16.msra.mxu0 %v2396
    %3662 = vmatprep.subr.bf16.mxu0 %v2393
    %3663 = vmatpush1.bf16.msra.mxu0 %v2392
    %3664 = vmatprep.subr.bf16.mxu0 %v2389
    %3665 = vmatpush1.bf16.msra.mxu0 %v2388
    %3666 = vmatprep.subr.bf16.mxu0 %v2385
    %3667 = vmatpush1.bf16.msra.mxu0 %v2384
    %3668 = vmatprep.subr.bf16.mxu0 %v2381
    %3669 = vmatpush1.bf16.msra.mxu0 %v2380
    %3670 = vmatprep.subr.bf16.mxu0 %v2377
    %3671 = vmatpush1.bf16.msra.mxu0 %v2376
    %3672 = vmatprep.subr.bf16.mxu0 %v2373
    %3673 = vmatpush1.bf16.msra.mxu0 %v2372
    %3674 = vmatprep.subr.bf16.mxu0 %v2433
    %3675 = vmatpush2.bf16.msra.mxu0 %v2432
    %3676 = vmatprep.subr.bf16.mxu0 %v2429
    %3677 = vmatpush2.bf16.msra.mxu0 %v2428
    %3678 = vmatprep.subr.bf16.mxu0 %v2425
    %3679 = vmatpush2.bf16.msra.mxu0 %v2424
    %3680 = vmatprep.subr.bf16.mxu0 %v2421
    %3681 = vmatpush2.bf16.msra.mxu0 %v2420
    %3682 = vmatprep.subr.bf16.mxu0 %v2417
    %3683 = vmatpush2.bf16.msra.mxu0 %v2416
    %3684 = vmatprep.subr.bf16.mxu0 %v2413
    %3685 = vmatpush2.bf16.msra.mxu0 %v2412
    %3686 = vmatprep.subr.bf16.mxu0 %v2409
    %3687 = vmatpush2.bf16.msra.mxu0 %v2408
    %3688 = vmatprep.subr.bf16.mxu0 %v2405
    %3689 = vmatpush2.bf16.msra.mxu0 %v2404
    %3690 = vmatprep.mubr.bf16.mxu0 %v3655
    %3691 = vmatmul.mubr.bf16.gmra.mxu0 %v3654
    %v3692 = vpop.f32.mrf.mxu0
    %v3693 = vadd.f32 0.0, %v3692
    %v3694 = vpop.f32.mrf.mxu0
    %v3695 = vadd.f32 0.0, %v3694
    %v3696 = vpop.f32.mrf.mxu0
    %v3697 = vpop.f32.mrf.mxu0
    %3698 = vdwg.mxu0
    %3699 = vmatprep.subr.bf16.mxu0 %v2403
    %3700 = vmatpush1.bf16.msra.mxu0 %v2402
    %3701 = vmatprep.subr.bf16.mxu0 %v2399
    %3702 = vmatpush1.bf16.msra.mxu0 %v2398
    %3703 = vmatprep.subr.bf16.mxu0 %v2395
    %3704 = vmatpush1.bf16.msra.mxu0 %v2394
    %3705 = vmatprep.subr.bf16.mxu0 %v2391
    %3706 = vmatpush1.bf16.msra.mxu0 %v2390
    %3707 = vmatprep.subr.bf16.mxu0 %v2387
    %3708 = vmatpush1.bf16.msra.mxu0 %v2386
    %3709 = vmatprep.subr.bf16.mxu0 %v2383
    %3710 = vmatpush1.bf16.msra.mxu0 %v2382
    %3711 = vmatprep.subr.bf16.mxu0 %v2379
    %3712 = vmatpush1.bf16.msra.mxu0 %v2378
    %3713 = vmatprep.subr.bf16.mxu0 %v2375
    %3714 = vmatpush1.bf16.msra.mxu0 %v2374
    %3715 = vmatprep.subr.bf16.mxu0 %v2435
    %3716 = vmatpush2.bf16.msra.mxu0 %v2434
    %3717 = vmatprep.subr.bf16.mxu0 %v2431
    %3718 = vmatpush2.bf16.msra.mxu0 %v2430
    %3719 = vmatprep.subr.bf16.mxu0 %v2427
    %3720 = vmatpush2.bf16.msra.mxu0 %v2426
    %3721 = vmatprep.subr.bf16.mxu0 %v2423
    %3722 = vmatpush2.bf16.msra.mxu0 %v2422
    %3723 = vmatprep.subr.bf16.mxu0 %v2419
    %3724 = vmatpush2.bf16.msra.mxu0 %v2418
    %3725 = vmatprep.subr.bf16.mxu0 %v2415
    %3726 = vmatpush2.bf16.msra.mxu0 %v2414
    %3727 = vmatprep.subr.bf16.mxu0 %v2411
    %3728 = vmatpush2.bf16.msra.mxu0 %v2410
    %3729 = vmatprep.subr.bf16.mxu0 %v2407
    %3730 = vmatpush2.bf16.msra.mxu0 %v2406
    %3731 = vmatprep.mubr.bf16.mxu0 %v3655
    %3732 = vmatmul.mubr.bf16.gmra.mxu0 %v3654
    %v3733 = vpop.f32.mrf.mxu0
    %v3734 = vadd.f32 0.0, %v3733
    %v3735 = vpop.f32.mrf.mxu0
    %v3736 = vadd.f32 0.0, %v3735
    %v3737 = vpop.f32.mrf.mxu0
    %v3738 = vpop.f32.mrf.mxu0
    %3739 = vdwg.mxu0
    %v3740 = vrot.slane %v3479, 3
    %v3741 = vrot.slane %v3565, 3
    %3744 = vmatprep.subr.bf16.mxu0 %v3211
    %3745 = vmatpush1.bf16.msra.mxu0 %v3210
    %3746 = vmatprep.subr.bf16.mxu0 %v3207
    %3747 = vmatpush1.bf16.msra.mxu0 %v3206
    %3748 = vmatprep.subr.bf16.mxu0 %v3203
    %3749 = vmatpush1.bf16.msra.mxu0 %v3202
    %3750 = vmatprep.subr.bf16.mxu0 %v3199
    %3751 = vmatpush1.bf16.msra.mxu0 %v3198
    %3752 = vmatprep.subr.bf16.mxu0 %v3195
    %3753 = vmatpush1.bf16.msra.mxu0 %v3194
    %3754 = vmatprep.subr.bf16.mxu0 %v3191
    %3755 = vmatpush1.bf16.msra.mxu0 %v3190
    %3756 = vmatprep.subr.bf16.mxu0 %v3187
    %3757 = vmatpush1.bf16.msra.mxu0 %v3186
    %3758 = vmatprep.subr.bf16.mxu0 %v3183
    %3759 = vmatpush1.bf16.msra.mxu0 %v3182
    %3760 = vmatprep.subr.bf16.mxu0 %v3243
    %3761 = vmatpush2.bf16.msra.mxu0 %v3242
    %3762 = vmatprep.subr.bf16.mxu0 %v3239
    %3763 = vmatpush2.bf16.msra.mxu0 %v3238
    %3764 = vmatprep.subr.bf16.mxu0 %v3235
    %3765 = vmatpush2.bf16.msra.mxu0 %v3234
    %3766 = vmatprep.subr.bf16.mxu0 %v3231
    %3767 = vmatpush2.bf16.msra.mxu0 %v3230
    %3768 = vmatprep.subr.bf16.mxu0 %v3227
    %3769 = vmatpush2.bf16.msra.mxu0 %v3226
    %3770 = vmatprep.subr.bf16.mxu0 %v3223
    %3771 = vmatpush2.bf16.msra.mxu0 %v3222
    %3772 = vmatprep.subr.bf16.mxu0 %v3219
    %3773 = vmatpush2.bf16.msra.mxu0 %v3218
    %3774 = vmatprep.subr.bf16.mxu0 %v3215
    %3775 = vmatpush2.bf16.msra.mxu0 %v3214
    %3776 = vmatprep.mubr.bf16.mxu0 %v3741
    %3777 = vmatmul.mubr.bf16.gmra.mxu0 %v3740
    %v3778 = vpop.f32.mrf.mxu0
    %v3779 = vadd.f32 0.0, %v3778
    %v3780 = vpop.f32.mrf.mxu0
    %v3781 = vadd.f32 0.0, %v3780
    %v3782 = vpop.f32.mrf.mxu0
    %v3783 = vpop.f32.mrf.mxu0
    %3784 = vdwg.mxu0
    %3785 = vmatprep.subr.bf16.mxu0 %v3213
    %3786 = vmatpush1.bf16.msra.mxu0 %v3212
    %3787 = vmatprep.subr.bf16.mxu0 %v3209
    %3788 = vmatpush1.bf16.msra.mxu0 %v3208
    %3789 = vmatprep.subr.bf16.mxu0 %v3205
    %3790 = vmatpush1.bf16.msra.mxu0 %v3204
    %3791 = vmatprep.subr.bf16.mxu0 %v3201
    %3792 = vmatpush1.bf16.msra.mxu0 %v3200
    %3793 = vmatprep.subr.bf16.mxu0 %v3197
    %3794 = vmatpush1.bf16.msra.mxu0 %v3196
    %3795 = vmatprep.subr.bf16.mxu0 %v3193
    %3796 = vmatpush1.bf16.msra.mxu0 %v3192
    %3797 = vmatprep.subr.bf16.mxu0 %v3189
    %3798 = vmatpush1.bf16.msra.mxu0 %v3188
    %3799 = vmatprep.subr.bf16.mxu0 %v3185
    %3800 = vmatpush1.bf16.msra.mxu0 %v3184
    %3801 = vmatprep.subr.bf16.mxu0 %v3245
    %3802 = vmatpush2.bf16.msra.mxu0 %v3244
    %3803 = vmatprep.subr.bf16.mxu0 %v3241
    %3804 = vmatpush2.bf16.msra.mxu0 %v3240
    %3805 = vmatprep.subr.bf16.mxu0 %v3237
    %3806 = vmatpush2.bf16.msra.mxu0 %v3236
    %3807 = vmatprep.subr.bf16.mxu0 %v3233
    %3808 = vmatpush2.bf16.msra.mxu0 %v3232
    %3809 = vmatprep.subr.bf16.mxu0 %v3229
    %3810 = vmatpush2.bf16.msra.mxu0 %v3228
    %3811 = vmatprep.subr.bf16.mxu0 %v3225
    %3812 = vmatpush2.bf16.msra.mxu0 %v3224
    %3813 = vmatprep.subr.bf16.mxu0 %v3221
    %3814 = vmatpush2.bf16.msra.mxu0 %v3220
    %3815 = vmatprep.subr.bf16.mxu0 %v3217
    %3816 = vmatpush2.bf16.msra.mxu0 %v3216
    %3817 = vmatprep.mubr.bf16.mxu0 %v3741
    %3818 = vmatmul.mubr.bf16.gmra.mxu0 %v3740
    %v3819 = vpop.f32.mrf.mxu0
    %v3820 = vadd.f32 0.0, %v3819
    %v3821 = vpop.f32.mrf.mxu0
    %v3822 = vadd.f32 0.0, %v3821
    %v3823 = vpop.f32.mrf.mxu0
    %v3824 = vpop.f32.mrf.mxu0
    %3825 = vdwg.mxu0
    %v3830 = vrot.slane %v3607, 6
    %v3831 = vrot.slane %v3609, 6
    %v3832 = vrot.slane %v3648, 6
    %v3833 = vrot.slane %v3650, 6
    %v3842 = vrot.slane %v3693, 4
    %v3843 = vrot.slane %v3695, 4
    %v3844 = vrot.slane %v3734, 4
    %v3845 = vrot.slane %v3736, 4
    %v3854 = vrot.slane %v3779, 2
    %v3855 = vrot.slane %v3781, 2
    %v3856 = vrot.slane %v3820, 2
    %v3857 = vrot.slane %v3822, 2
    %v3862 = vsel %vm973, %v3515, %v3830
    %v3863 = vsel %vm973, %v3517, %v3831
    %v3864 = vsel %vm973, %v3556, %v3832
    %v3865 = vsel %vm973, %v3558, %v3833
    %v3866 = vsel %vm978, %v3862, %v3842
    %v3867 = vsel %vm978, %v3863, %v3843
    %v3868 = vsel %vm978, %v3864, %v3844
    %v3869 = vsel %vm978, %v3865, %v3845
    %v3870 = vsel %vm983, %v3866, %v3854
    %v3871 = vsel %vm983, %v3867, %v3855
    %v3872 = vsel %vm983, %v3868, %v3856
    %v3873 = vsel %vm983, %v3869, %v3857
    %v3874 = vadd.f32 %v3870, %v984
    %v3875 = vadd.f32 %v3871, %v985
    %v3876 = vadd.f32 %v3872, %v986
    %v3877 = vadd.f32 %v3873, %v987
    %v3878 = vxor.u32 %v3874, 2147483648
    %v3879 = vxor.u32 %v3875, 2147483648
    %v3880 = vxor.u32 %v3876, 2147483648
    %v3881 = vxor.u32 %v3877, 2147483648
    %v3882 = vmul.f32 %v3878, 1.442695
    %v3883 = vpow.pop %v3882
    %v3884 = vmul.f32 %v3879, 1.442695
    %v3885 = vpow.pop %v3884
    %v3886 = vmul.f32 %v3880, 1.442695
    %v3887 = vpow.pop %v3886
    %v3888 = vmul.f32 %v3881, 1.442695
    %v3889 = vpow.pop %v3888
    %v3890 = vadd.f32 %v3883, 1.0
    %v3891 = vadd.f32 %v3885, 1.0
    %v3892 = vadd.f32 %v3887, 1.0
    %v3893 = vadd.f32 %v3889, 1.0
    %v3894 = vrcp.pop %v3890
    %v3895 = vmul.f32 1.0, %v3894
    %v3896 = vrcp.pop %v3891
    %v3897 = vmul.f32 1.0, %v3896
    %v3898 = vrcp.pop %v3892
    %v3899 = vmul.f32 1.0, %v3898
    %v3900 = vrcp.pop %v3893
    %v3901 = vmul.f32 1.0, %v3900
    %v3902 = vmul.f32 %v3899, 2.0
    %v3903 = vsub.f32 %v3902, 1.0
    %v3904 = vmul.f32 %v3897, %v3476
    %v3905 = vmul.f32 %v3895, %v3903
    %v3906 = vadd.f32 %v3904, %v3905
    %v3907 = vtanh.pop %v3906
    %v3908 = vmul.f32 %v3901, %v3907
    %v3909 = vpack.c.bf16 %v3908, %v3908
    %v3914 = vrot.slane %v792, 2
    %v3915 = vrot.slane %v794, 2
    %v3916 = vrot.slane %v878, 2
    %v3917 = vrot.slane %v880, 2
    %3922 = vmatprep.subr.bf16.mxu0 %v1160
    %3923 = vmatpush1.bf16.msra.mxu0 %v1159
    %3924 = vmatprep.subr.bf16.mxu0 %v1156
    %3925 = vmatpush1.bf16.msra.mxu0 %v1155
    %3926 = vmatprep.subr.bf16.mxu0 %v1152
    %3927 = vmatpush1.bf16.msra.mxu0 %v1151
    %3928 = vmatprep.subr.bf16.mxu0 %v1148
    %3929 = vmatpush1.bf16.msra.mxu0 %v1147
    %3930 = vmatprep.subr.bf16.mxu0 %v1144
    %3931 = vmatpush1.bf16.msra.mxu0 %v1143
    %3932 = vmatprep.subr.bf16.mxu0 %v1140
    %3933 = vmatpush1.bf16.msra.mxu0 %v1139
    %3934 = vmatprep.subr.bf16.mxu0 %v1136
    %3935 = vmatpush1.bf16.msra.mxu0 %v1135
    %3936 = vmatprep.subr.bf16.mxu0 %v1132
    %3937 = vmatpush1.bf16.msra.mxu0 %v1131
    %3938 = vmatprep.subr.bf16.mxu0 0
    %3939 = vmatpush2.bf16.msra.mxu0 0
    %3940 = vmatprep.subr.bf16.mxu0 0
    %3941 = vmatpush2.bf16.msra.mxu0 0
    %3942 = vmatprep.subr.bf16.mxu0 0
    %3943 = vmatpush2.bf16.msra.mxu0 0
    %3944 = vmatprep.subr.bf16.mxu0 0
    %3945 = vmatpush2.bf16.msra.mxu0 0
    %3946 = vmatprep.subr.bf16.mxu0 0
    %3947 = vmatpush2.bf16.msra.mxu0 0
    %3948 = vmatprep.subr.bf16.mxu0 0
    %3949 = vmatpush2.bf16.msra.mxu0 0
    %3950 = vmatprep.subr.bf16.mxu0 0
    %3951 = vmatpush2.bf16.msra.mxu0 0
    %3952 = vmatprep.subr.bf16.mxu0 0
    %3953 = vmatpush2.bf16.msra.mxu0 0
    %3954 = vmatprep.mubr.bf16.mxu0 0
    %3955 = vmatmul.mubr.bf16.gmra.mxu0 %v3909
    %v3956 = vpop.f32.mrf.mxu0
    %v3957 = vadd.f32 %v3914, %v3956
    %v3958 = vpop.f32.mrf.mxu0
    %v3959 = vadd.f32 %v3915, %v3958
    %v3960 = vpop.f32.mrf.mxu0
    %v3961 = vpop.f32.mrf.mxu0
    %3962 = vdwg.mxu0
    %3963 = vmatprep.subr.bf16.mxu0 %v1162
    %3964 = vmatpush1.bf16.msra.mxu0 %v1161
    %3965 = vmatprep.subr.bf16.mxu0 %v1158
    %3966 = vmatpush1.bf16.msra.mxu0 %v1157
    %3967 = vmatprep.subr.bf16.mxu0 %v1154
    %3968 = vmatpush1.bf16.msra.mxu0 %v1153
    %3969 = vmatprep.subr.bf16.mxu0 %v1150
    %3970 = vmatpush1.bf16.msra.mxu0 %v1149
    %3971 = vmatprep.subr.bf16.mxu0 %v1146
    %3972 = vmatpush1.bf16.msra.mxu0 %v1145
    %3973 = vmatprep.subr.bf16.mxu0 %v1142
    %3974 = vmatpush1.bf16.msra.mxu0 %v1141
    %3975 = vmatprep.subr.bf16.mxu0 %v1138
    %3976 = vmatpush1.bf16.msra.mxu0 %v1137
    %3977 = vmatprep.subr.bf16.mxu0 %v1134
    %3978 = vmatpush1.bf16.msra.mxu0 %v1133
    %3979 = vmatprep.subr.bf16.mxu0 0
    %3980 = vmatpush2.bf16.msra.mxu0 0
    %3981 = vmatprep.subr.bf16.mxu0 0
    %3982 = vmatpush2.bf16.msra.mxu0 0
    %3983 = vmatprep.subr.bf16.mxu0 0
    %3984 = vmatpush2.bf16.msra.mxu0 0
    %3985 = vmatprep.subr.bf16.mxu0 0
    %3986 = vmatpush2.bf16.msra.mxu0 0
    %3987 = vmatprep.subr.bf16.mxu0 0
    %3988 = vmatpush2.bf16.msra.mxu0 0
    %3989 = vmatprep.subr.bf16.mxu0 0
    %3990 = vmatpush2.bf16.msra.mxu0 0
    %3991 = vmatprep.subr.bf16.mxu0 0
    %3992 = vmatpush2.bf16.msra.mxu0 0
    %3993 = vmatprep.subr.bf16.mxu0 0
    %3994 = vmatpush2.bf16.msra.mxu0 0
    %3995 = vmatprep.mubr.bf16.mxu0 0
    %3996 = vmatmul.mubr.bf16.gmra.mxu0 %v3909
    %v3997 = vpop.f32.mrf.mxu0
    %v3998 = vadd.f32 %v3916, %v3997
    %v3999 = vpop.f32.mrf.mxu0
    %v4000 = vadd.f32 %v3917, %v3999
    %v4001 = vpop.f32.mrf.mxu0
    %v4002 = vpop.f32.mrf.mxu0
    %4003 = vdwg.mxu0
    %v4005 = vrot.slane %v3908, 6
    %v4007 = vpack.c.bf16 %v4005, %v4005
    %v4010 = vrot.slane %v3909, 1
    %v4011 = vrot.slane %v4007, 1
    %4014 = vmatprep.subr.bf16.mxu0 %v1693
    %4015 = vmatpush1.bf16.msra.mxu0 %v1692
    %4016 = vmatprep.subr.bf16.mxu0 %v1689
    %4017 = vmatpush1.bf16.msra.mxu0 %v1688
    %4018 = vmatprep.subr.bf16.mxu0 %v1685
    %4019 = vmatpush1.bf16.msra.mxu0 %v1684
    %4020 = vmatprep.subr.bf16.mxu0 %v1681
    %4021 = vmatpush1.bf16.msra.mxu0 %v1680
    %4022 = vmatprep.subr.bf16.mxu0 %v1677
    %4023 = vmatpush1.bf16.msra.mxu0 %v1676
    %4024 = vmatprep.subr.bf16.mxu0 %v1673
    %4025 = vmatpush1.bf16.msra.mxu0 %v1672
    %4026 = vmatprep.subr.bf16.mxu0 %v1669
    %4027 = vmatpush1.bf16.msra.mxu0 %v1668
    %4028 = vmatprep.subr.bf16.mxu0 %v1665
    %4029 = vmatpush1.bf16.msra.mxu0 %v1664
    %4030 = vmatprep.subr.bf16.mxu0 %v1725
    %4031 = vmatpush2.bf16.msra.mxu0 %v1724
    %4032 = vmatprep.subr.bf16.mxu0 %v1721
    %4033 = vmatpush2.bf16.msra.mxu0 %v1720
    %4034 = vmatprep.subr.bf16.mxu0 %v1717
    %4035 = vmatpush2.bf16.msra.mxu0 %v1716
    %4036 = vmatprep.subr.bf16.mxu0 %v1713
    %4037 = vmatpush2.bf16.msra.mxu0 %v1712
    %4038 = vmatprep.subr.bf16.mxu0 %v1709
    %4039 = vmatpush2.bf16.msra.mxu0 %v1708
    %4040 = vmatprep.subr.bf16.mxu0 %v1705
    %4041 = vmatpush2.bf16.msra.mxu0 %v1704
    %4042 = vmatprep.subr.bf16.mxu0 %v1701
    %4043 = vmatpush2.bf16.msra.mxu0 %v1700
    %4044 = vmatprep.subr.bf16.mxu0 %v1697
    %4045 = vmatpush2.bf16.msra.mxu0 %v1696
    %4046 = vmatprep.mubr.bf16.mxu0 %v4011
    %4047 = vmatmul.mubr.bf16.gmra.mxu0 %v4010
    %v4048 = vpop.f32.mrf.mxu0
    %v4049 = vadd.f32 0.0, %v4048
    %v4050 = vpop.f32.mrf.mxu0
    %v4051 = vadd.f32 0.0, %v4050
    %v4052 = vpop.f32.mrf.mxu0
    %v4053 = vpop.f32.mrf.mxu0
    %4054 = vdwg.mxu0
    %4055 = vmatprep.subr.bf16.mxu0 %v1695
    %4056 = vmatpush1.bf16.msra.mxu0 %v1694
    %4057 = vmatprep.subr.bf16.mxu0 %v1691
    %4058 = vmatpush1.bf16.msra.mxu0 %v1690
    %4059 = vmatprep.subr.bf16.mxu0 %v1687
    %4060 = vmatpush1.bf16.msra.mxu0 %v1686
    %4061 = vmatprep.subr.bf16.mxu0 %v1683
    %4062 = vmatpush1.bf16.msra.mxu0 %v1682
    %4063 = vmatprep.subr.bf16.mxu0 %v1679
    %4064 = vmatpush1.bf16.msra.mxu0 %v1678
    %4065 = vmatprep.subr.bf16.mxu0 %v1675
    %4066 = vmatpush1.bf16.msra.mxu0 %v1674
    %4067 = vmatprep.subr.bf16.mxu0 %v1671
    %4068 = vmatpush1.bf16.msra.mxu0 %v1670
    %4069 = vmatprep.subr.bf16.mxu0 %v1667
    %4070 = vmatpush1.bf16.msra.mxu0 %v1666
    %4071 = vmatprep.subr.bf16.mxu0 %v1727
    %4072 = vmatpush2.bf16.msra.mxu0 %v1726
    %4073 = vmatprep.subr.bf16.mxu0 %v1723
    %4074 = vmatpush2.bf16.msra.mxu0 %v1722
    %4075 = vmatprep.subr.bf16.mxu0 %v1719
    %4076 = vmatpush2.bf16.msra.mxu0 %v1718
    %4077 = vmatprep.subr.bf16.mxu0 %v1715
    %4078 = vmatpush2.bf16.msra.mxu0 %v1714
    %4079 = vmatprep.subr.bf16.mxu0 %v1711
    %4080 = vmatpush2.bf16.msra.mxu0 %v1710
    %4081 = vmatprep.subr.bf16.mxu0 %v1707
    %4082 = vmatpush2.bf16.msra.mxu0 %v1706
    %4083 = vmatprep.subr.bf16.mxu0 %v1703
    %4084 = vmatpush2.bf16.msra.mxu0 %v1702
    %4085 = vmatprep.subr.bf16.mxu0 %v1699
    %4086 = vmatpush2.bf16.msra.mxu0 %v1698
    %4087 = vmatprep.mubr.bf16.mxu0 %v4011
    %4088 = vmatmul.mubr.bf16.gmra.mxu0 %v4010
    %v4089 = vpop.f32.mrf.mxu0
    %v4090 = vadd.f32 0.0, %v4089
    %v4091 = vpop.f32.mrf.mxu0
    %v4092 = vadd.f32 0.0, %v4091
    %v4093 = vpop.f32.mrf.mxu0
    %v4094 = vpop.f32.mrf.mxu0
    %4095 = vdwg.mxu0
    %v4096 = vrot.slane %v3909, 2
    %v4097 = vrot.slane %v4007, 2
    %4100 = vmatprep.subr.bf16.mxu0 %v2401
    %4101 = vmatpush1.bf16.msra.mxu0 %v2400
    %4102 = vmatprep.subr.bf16.mxu0 %v2397
    %4103 = vmatpush1.bf16.msra.mxu0 %v2396
    %4104 = vmatprep.subr.bf16.mxu0 %v2393
    %4105 = vmatpush1.bf16.msra.mxu0 %v2392
    %4106 = vmatprep.subr.bf16.mxu0 %v2389
    %4107 = vmatpush1.bf16.msra.mxu0 %v2388
    %4108 = vmatprep.subr.bf16.mxu0 %v2385
    %4109 = vmatpush1.bf16.msra.mxu0 %v2384
    %4110 = vmatprep.subr.bf16.mxu0 %v2381
    %4111 = vmatpush1.bf16.msra.mxu0 %v2380
    %4112 = vmatprep.subr.bf16.mxu0 %v2377
    %4113 = vmatpush1.bf16.msra.mxu0 %v2376
    %4114 = vmatprep.subr.bf16.mxu0 %v2373
    %4115 = vmatpush1.bf16.msra.mxu0 %v2372
    %4116 = vmatprep.subr.bf16.mxu0 %v2433
    %4117 = vmatpush2.bf16.msra.mxu0 %v2432
    %4118 = vmatprep.subr.bf16.mxu0 %v2429
    %4119 = vmatpush2.bf16.msra.mxu0 %v2428
    %4120 = vmatprep.subr.bf16.mxu0 %v2425
    %4121 = vmatpush2.bf16.msra.mxu0 %v2424
    %4122 = vmatprep.subr.bf16.mxu0 %v2421
    %4123 = vmatpush2.bf16.msra.mxu0 %v2420
    %4124 = vmatprep.subr.bf16.mxu0 %v2417
    %4125 = vmatpush2.bf16.msra.mxu0 %v2416
    %4126 = vmatprep.subr.bf16.mxu0 %v2413
    %4127 = vmatpush2.bf16.msra.mxu0 %v2412
    %4128 = vmatprep.subr.bf16.mxu0 %v2409
    %4129 = vmatpush2.bf16.msra.mxu0 %v2408
    %4130 = vmatprep.subr.bf16.mxu0 %v2405
    %4131 = vmatpush2.bf16.msra.mxu0 %v2404
    %4132 = vmatprep.mubr.bf16.mxu0 %v4097
    %4133 = vmatmul.mubr.bf16.gmra.mxu0 %v4096
    %v4134 = vpop.f32.mrf.mxu0
    %v4135 = vadd.f32 0.0, %v4134
    %v4136 = vpop.f32.mrf.mxu0
    %v4137 = vadd.f32 0.0, %v4136
    %v4138 = vpop.f32.mrf.mxu0
    %v4139 = vpop.f32.mrf.mxu0
    %4140 = vdwg.mxu0
    %4141 = vmatprep.subr.bf16.mxu0 %v2403
    %4142 = vmatpush1.bf16.msra.mxu0 %v2402
    %4143 = vmatprep.subr.bf16.mxu0 %v2399
    %4144 = vmatpush1.bf16.msra.mxu0 %v2398
    %4145 = vmatprep.subr.bf16.mxu0 %v2395
    %4146 = vmatpush1.bf16.msra.mxu0 %v2394
    %4147 = vmatprep.subr.bf16.mxu0 %v2391
    %4148 = vmatpush1.bf16.msra.mxu0 %v2390
    %4149 = vmatprep.subr.bf16.mxu0 %v2387
    %4150 = vmatpush1.bf16.msra.mxu0 %v2386
    %4151 = vmatprep.subr.bf16.mxu0 %v2383
    %4152 = vmatpush1.bf16.msra.mxu0 %v2382
    %4153 = vmatprep.subr.bf16.mxu0 %v2379
    %4154 = vmatpush1.bf16.msra.mxu0 %v2378
    %4155 = vmatprep.subr.bf16.mxu0 %v2375
    %4156 = vmatpush1.bf16.msra.mxu0 %v2374
    %4157 = vmatprep.subr.bf16.mxu0 %v2435
    %4158 = vmatpush2.bf16.msra.mxu0 %v2434
    %4159 = vmatprep.subr.bf16.mxu0 %v2431
    %4160 = vmatpush2.bf16.msra.mxu0 %v2430
    %4161 = vmatprep.subr.bf16.mxu0 %v2427
    %4162 = vmatpush2.bf16.msra.mxu0 %v2426
    %4163 = vmatprep.subr.bf16.mxu0 %v2423
    %4164 = vmatpush2.bf16.msra.mxu0 %v2422
    %4165 = vmatprep.subr.bf16.mxu0 %v2419
    %4166 = vmatpush2.bf16.msra.mxu0 %v2418
    %4167 = vmatprep.subr.bf16.mxu0 %v2415
    %4168 = vmatpush2.bf16.msra.mxu0 %v2414
    %4169 = vmatprep.subr.bf16.mxu0 %v2411
    %4170 = vmatpush2.bf16.msra.mxu0 %v2410
    %4171 = vmatprep.subr.bf16.mxu0 %v2407
    %4172 = vmatpush2.bf16.msra.mxu0 %v2406
    %4173 = vmatprep.mubr.bf16.mxu0 %v4097
    %4174 = vmatmul.mubr.bf16.gmra.mxu0 %v4096
    %v4175 = vpop.f32.mrf.mxu0
    %v4176 = vadd.f32 0.0, %v4175
    %v4177 = vpop.f32.mrf.mxu0
    %v4178 = vadd.f32 0.0, %v4177
    %v4179 = vpop.f32.mrf.mxu0
    %v4180 = vpop.f32.mrf.mxu0
    %4181 = vdwg.mxu0
    %v4182 = vrot.slane %v3909, 3
    %v4183 = vrot.slane %v4007, 3
    %4186 = vmatprep.subr.bf16.mxu0 %v3211
    %4187 = vmatpush1.bf16.msra.mxu0 %v3210
    %4188 = vmatprep.subr.bf16.mxu0 %v3207
    %4189 = vmatpush1.bf16.msra.mxu0 %v3206
    %4190 = vmatprep.subr.bf16.mxu0 %v3203
    %4191 = vmatpush1.bf16.msra.mxu0 %v3202
    %4192 = vmatprep.subr.bf16.mxu0 %v3199
    %4193 = vmatpush1.bf16.msra.mxu0 %v3198
    %4194 = vmatprep.subr.bf16.mxu0 %v3195
    %4195 = vmatpush1.bf16.msra.mxu0 %v3194
    %4196 = vmatprep.subr.bf16.mxu0 %v3191
    %4197 = vmatpush1.bf16.msra.mxu0 %v3190
    %4198 = vmatprep.subr.bf16.mxu0 %v3187
    %4199 = vmatpush1.bf16.msra.mxu0 %v3186
    %4200 = vmatprep.subr.bf16.mxu0 %v3183
    %4201 = vmatpush1.bf16.msra.mxu0 %v3182
    %4202 = vmatprep.subr.bf16.mxu0 %v3243
    %4203 = vmatpush2.bf16.msra.mxu0 %v3242
    %4204 = vmatprep.subr.bf16.mxu0 %v3239
    %4205 = vmatpush2.bf16.msra.mxu0 %v3238
    %4206 = vmatprep.subr.bf16.mxu0 %v3235
    %4207 = vmatpush2.bf16.msra.mxu0 %v3234
    %4208 = vmatprep.subr.bf16.mxu0 %v3231
    %4209 = vmatpush2.bf16.msra.mxu0 %v3230
    %4210 = vmatprep.subr.bf16.mxu0 %v3227
    %4211 = vmatpush2.bf16.msra.mxu0 %v3226
    %4212 = vmatprep.subr.bf16.mxu0 %v3223
    %4213 = vmatpush2.bf16.msra.mxu0 %v3222
    %4214 = vmatprep.subr.bf16.mxu0 %v3219
    %4215 = vmatpush2.bf16.msra.mxu0 %v3218
    %4216 = vmatprep.subr.bf16.mxu0 %v3215
    %4217 = vmatpush2.bf16.msra.mxu0 %v3214
    %4218 = vmatprep.mubr.bf16.mxu0 %v4183
    %4219 = vmatmul.mubr.bf16.gmra.mxu0 %v4182
    %v4220 = vpop.f32.mrf.mxu0
    %v4221 = vadd.f32 0.0, %v4220
    %v4222 = vpop.f32.mrf.mxu0
    %v4223 = vadd.f32 0.0, %v4222
    %v4224 = vpop.f32.mrf.mxu0
    %v4225 = vpop.f32.mrf.mxu0
    %4226 = vdwg.mxu0
    %4227 = vmatprep.subr.bf16.mxu0 %v3213
    %4228 = vmatpush1.bf16.msra.mxu0 %v3212
    %4229 = vmatprep.subr.bf16.mxu0 %v3209
    %4230 = vmatpush1.bf16.msra.mxu0 %v3208
    %4231 = vmatprep.subr.bf16.mxu0 %v3205
    %4232 = vmatpush1.bf16.msra.mxu0 %v3204
    %4233 = vmatprep.subr.bf16.mxu0 %v3201
    %4234 = vmatpush1.bf16.msra.mxu0 %v3200
    %4235 = vmatprep.subr.bf16.mxu0 %v3197
    %4236 = vmatpush1.bf16.msra.mxu0 %v3196
    %4237 = vmatprep.subr.bf16.mxu0 %v3193
    %4238 = vmatpush1.bf16.msra.mxu0 %v3192
    %4239 = vmatprep.subr.bf16.mxu0 %v3189
    %4240 = vmatpush1.bf16.msra.mxu0 %v3188
    %4241 = vmatprep.subr.bf16.mxu0 %v3185
    %4242 = vmatpush1.bf16.msra.mxu0 %v3184
    %4243 = vmatprep.subr.bf16.mxu0 %v3245
    %4244 = vmatpush2.bf16.msra.mxu0 %v3244
    %4245 = vmatprep.subr.bf16.mxu0 %v3241
    %4246 = vmatpush2.bf16.msra.mxu0 %v3240
    %4247 = vmatprep.subr.bf16.mxu0 %v3237
    %4248 = vmatpush2.bf16.msra.mxu0 %v3236
    %4249 = vmatprep.subr.bf16.mxu0 %v3233
    %4250 = vmatpush2.bf16.msra.mxu0 %v3232
    %4251 = vmatprep.subr.bf16.mxu0 %v3229
    %4252 = vmatpush2.bf16.msra.mxu0 %v3228
    %4253 = vmatprep.subr.bf16.mxu0 %v3225
    %4254 = vmatpush2.bf16.msra.mxu0 %v3224
    %4255 = vmatprep.subr.bf16.mxu0 %v3221
    %4256 = vmatpush2.bf16.msra.mxu0 %v3220
    %4257 = vmatprep.subr.bf16.mxu0 %v3217
    %4258 = vmatpush2.bf16.msra.mxu0 %v3216
    %4259 = vmatprep.mubr.bf16.mxu0 %v4183
    %4260 = vmatmul.mubr.bf16.gmra.mxu0 %v4182
    %v4261 = vpop.f32.mrf.mxu0
    %v4262 = vadd.f32 0.0, %v4261
    %v4263 = vpop.f32.mrf.mxu0
    %v4264 = vadd.f32 0.0, %v4263
    %v4265 = vpop.f32.mrf.mxu0
    %v4266 = vpop.f32.mrf.mxu0
    %4267 = vdwg.mxu0
    %v4272 = vrot.slane %v4049, 6
    %v4273 = vrot.slane %v4051, 6
    %v4274 = vrot.slane %v4090, 6
    %v4275 = vrot.slane %v4092, 6
    %v4284 = vrot.slane %v4135, 4
    %v4285 = vrot.slane %v4137, 4
    %v4286 = vrot.slane %v4176, 4
    %v4287 = vrot.slane %v4178, 4
    %v4296 = vrot.slane %v4221, 2
    %v4297 = vrot.slane %v4223, 2
    %v4298 = vrot.slane %v4262, 2
    %v4299 = vrot.slane %v4264, 2
    %v4304 = vsel %vm973, %v3957, %v4272
    %v4305 = vsel %vm973, %v3959, %v4273
    %v4306 = vsel %vm973, %v3998, %v4274
    %v4307 = vsel %vm973, %v4000, %v4275
    %v4308 = vsel %vm978, %v4304, %v4284
    %v4309 = vsel %vm978, %v4305, %v4285
    %v4310 = vsel %vm978, %v4306, %v4286
    %v4311 = vsel %vm978, %v4307, %v4287
    %v4312 = vsel %vm983, %v4308, %v4296
    %v4313 = vsel %vm983, %v4309, %v4297
    %v4314 = vsel %vm983, %v4310, %v4298
    %v4315 = vsel %vm983, %v4311, %v4299
    %v4316 = vadd.f32 %v4312, %v984
    %v4317 = vadd.f32 %v4313, %v985
    %v4318 = vadd.f32 %v4314, %v986
    %v4319 = vadd.f32 %v4315, %v987
    %v4320 = vxor.u32 %v4316, 2147483648
    %v4321 = vxor.u32 %v4317, 2147483648
    %v4322 = vxor.u32 %v4318, 2147483648
    %v4323 = vxor.u32 %v4319, 2147483648
    %v4324 = vmul.f32 %v4320, 1.442695
    %v4325 = vpow.pop %v4324
    %v4326 = vmul.f32 %v4321, 1.442695
    %v4327 = vpow.pop %v4326
    %v4328 = vmul.f32 %v4322, 1.442695
    %v4329 = vpow.pop %v4328
    %v4330 = vmul.f32 %v4323, 1.442695
    %v4331 = vpow.pop %v4330
    %v4332 = vadd.f32 %v4325, 1.0
    %v4333 = vadd.f32 %v4327, 1.0
    %v4334 = vadd.f32 %v4329, 1.0
    %v4335 = vadd.f32 %v4331, 1.0
    %v4336 = vrcp.pop %v4332
    %v4337 = vmul.f32 1.0, %v4336
    %v4338 = vrcp.pop %v4333
    %v4339 = vmul.f32 1.0, %v4338
    %v4340 = vrcp.pop %v4334
    %v4341 = vmul.f32 1.0, %v4340
    %v4342 = vrcp.pop %v4335
    %v4343 = vmul.f32 1.0, %v4342
    %v4344 = vmul.f32 %v4341, 2.0
    %v4345 = vsub.f32 %v4344, 1.0
    %v4346 = vmul.f32 %v4339, %v3906
    %v4347 = vmul.f32 %v4337, %v4345
    %v4348 = vadd.f32 %v4346, %v4347
    %v4349 = vtanh.pop %v4348
    %v4350 = vmul.f32 %v4343, %v4349
    %v4351 = vpack.c.bf16 %v4350, %v4350
    %v4352 = vrot.slane %v792, 4
    %v4353 = vrot.slane %v794, 4
    %v4354 = vrot.slane %v878, 4
    %v4355 = vrot.slane %v880, 4
    %4360 = vmatprep.subr.bf16.mxu0 %v1160
    %4361 = vmatpush1.bf16.msra.mxu0 %v1159
    %4362 = vmatprep.subr.bf16.mxu0 %v1156
    %4363 = vmatpush1.bf16.msra.mxu0 %v1155
    %4364 = vmatprep.subr.bf16.mxu0 %v1152
    %4365 = vmatpush1.bf16.msra.mxu0 %v1151
    %4366 = vmatprep.subr.bf16.mxu0 %v1148
    %4367 = vmatpush1.bf16.msra.mxu0 %v1147
    %4368 = vmatprep.subr.bf16.mxu0 %v1144
    %4369 = vmatpush1.bf16.msra.mxu0 %v1143
    %4370 = vmatprep.subr.bf16.mxu0 %v1140
    %4371 = vmatpush1.bf16.msra.mxu0 %v1139
    %4372 = vmatprep.subr.bf16.mxu0 %v1136
    %4373 = vmatpush1.bf16.msra.mxu0 %v1135
    %4374 = vmatprep.subr.bf16.mxu0 %v1132
    %4375 = vmatpush1.bf16.msra.mxu0 %v1131
    %4376 = vmatprep.subr.bf16.mxu0 0
    %4377 = vmatpush2.bf16.msra.mxu0 0
    %4378 = vmatprep.subr.bf16.mxu0 0
    %4379 = vmatpush2.bf16.msra.mxu0 0
    %4380 = vmatprep.subr.bf16.mxu0 0
    %4381 = vmatpush2.bf16.msra.mxu0 0
    %4382 = vmatprep.subr.bf16.mxu0 0
    %4383 = vmatpush2.bf16.msra.mxu0 0
    %4384 = vmatprep.subr.bf16.mxu0 0
    %4385 = vmatpush2.bf16.msra.mxu0 0
    %4386 = vmatprep.subr.bf16.mxu0 0
    %4387 = vmatpush2.bf16.msra.mxu0 0
    %4388 = vmatprep.subr.bf16.mxu0 0
    %4389 = vmatpush2.bf16.msra.mxu0 0
    %4390 = vmatprep.subr.bf16.mxu0 0
    %4391 = vmatpush2.bf16.msra.mxu0 0
    %4392 = vmatprep.mubr.bf16.mxu0 0
    %4393 = vmatmul.mubr.bf16.gmra.mxu0 %v4351
    %v4394 = vpop.f32.mrf.mxu0
    %v4395 = vadd.f32 %v4352, %v4394
    %v4396 = vpop.f32.mrf.mxu0
    %v4397 = vadd.f32 %v4353, %v4396
    %v4398 = vpop.f32.mrf.mxu0
    %v4399 = vpop.f32.mrf.mxu0
    %4400 = vdwg.mxu0
    %4401 = vmatprep.subr.bf16.mxu0 %v1162
    %4402 = vmatpush1.bf16.msra.mxu0 %v1161
    %4403 = vmatprep.subr.bf16.mxu0 %v1158
    %4404 = vmatpush1.bf16.msra.mxu0 %v1157
    %4405 = vmatprep.subr.bf16.mxu0 %v1154
    %4406 = vmatpush1.bf16.msra.mxu0 %v1153
    %4407 = vmatprep.subr.bf16.mxu0 %v1150
    %4408 = vmatpush1.bf16.msra.mxu0 %v1149
    %4409 = vmatprep.subr.bf16.mxu0 %v1146
    %4410 = vmatpush1.bf16.msra.mxu0 %v1145
    %4411 = vmatprep.subr.bf16.mxu0 %v1142
    %4412 = vmatpush1.bf16.msra.mxu0 %v1141
    %4413 = vmatprep.subr.bf16.mxu0 %v1138
    %4414 = vmatpush1.bf16.msra.mxu0 %v1137
    %4415 = vmatprep.subr.bf16.mxu0 %v1134
    %4416 = vmatpush1.bf16.msra.mxu0 %v1133
    %4417 = vmatprep.subr.bf16.mxu0 0
    %4418 = vmatpush2.bf16.msra.mxu0 0
    %4419 = vmatprep.subr.bf16.mxu0 0
    %4420 = vmatpush2.bf16.msra.mxu0 0
    %4421 = vmatprep.subr.bf16.mxu0 0
    %4422 = vmatpush2.bf16.msra.mxu0 0
    %4423 = vmatprep.subr.bf16.mxu0 0
    %4424 = vmatpush2.bf16.msra.mxu0 0
    %4425 = vmatprep.subr.bf16.mxu0 0
    %4426 = vmatpush2.bf16.msra.mxu0 0
    %4427 = vmatprep.subr.bf16.mxu0 0
    %4428 = vmatpush2.bf16.msra.mxu0 0
    %4429 = vmatprep.subr.bf16.mxu0 0
    %4430 = vmatpush2.bf16.msra.mxu0 0
    %4431 = vmatprep.subr.bf16.mxu0 0
    %4432 = vmatpush2.bf16.msra.mxu0 0
    %4433 = vmatprep.mubr.bf16.mxu0 0
    %4434 = vmatmul.mubr.bf16.gmra.mxu0 %v4351
    %v4435 = vpop.f32.mrf.mxu0
    %v4436 = vadd.f32 %v4354, %v4435
    %v4437 = vpop.f32.mrf.mxu0
    %v4438 = vadd.f32 %v4355, %v4437
    %v4439 = vpop.f32.mrf.mxu0
    %v4440 = vpop.f32.mrf.mxu0
    %4441 = vdwg.mxu0
    %v4443 = vrot.slane %v4350, 6
    %v4445 = vpack.c.bf16 %v4443, %v4443
    %v4448 = vrot.slane %v4351, 1
    %v4449 = vrot.slane %v4445, 1
    %4452 = vmatprep.subr.bf16.mxu0 %v1693
    %4453 = vmatpush1.bf16.msra.mxu0 %v1692
    %4454 = vmatprep.subr.bf16.mxu0 %v1689
    %4455 = vmatpush1.bf16.msra.mxu0 %v1688
    %4456 = vmatprep.subr.bf16.mxu0 %v1685
    %4457 = vmatpush1.bf16.msra.mxu0 %v1684
    %4458 = vmatprep.subr.bf16.mxu0 %v1681
    %4459 = vmatpush1.bf16.msra.mxu0 %v1680
    %4460 = vmatprep.subr.bf16.mxu0 %v1677
    %4461 = vmatpush1.bf16.msra.mxu0 %v1676
    %4462 = vmatprep.subr.bf16.mxu0 %v1673
    %4463 = vmatpush1.bf16.msra.mxu0 %v1672
    %4464 = vmatprep.subr.bf16.mxu0 %v1669
    %4465 = vmatpush1.bf16.msra.mxu0 %v1668
    %4466 = vmatprep.subr.bf16.mxu0 %v1665
    %4467 = vmatpush1.bf16.msra.mxu0 %v1664
    %4468 = vmatprep.subr.bf16.mxu0 %v1725
    %4469 = vmatpush2.bf16.msra.mxu0 %v1724
    %4470 = vmatprep.subr.bf16.mxu0 %v1721
    %4471 = vmatpush2.bf16.msra.mxu0 %v1720
    %4472 = vmatprep.subr.bf16.mxu0 %v1717
    %4473 = vmatpush2.bf16.msra.mxu0 %v1716
    %4474 = vmatprep.subr.bf16.mxu0 %v1713
    %4475 = vmatpush2.bf16.msra.mxu0 %v1712
    %4476 = vmatprep.subr.bf16.mxu0 %v1709
    %4477 = vmatpush2.bf16.msra.mxu0 %v1708
    %4478 = vmatprep.subr.bf16.mxu0 %v1705
    %4479 = vmatpush2.bf16.msra.mxu0 %v1704
    %4480 = vmatprep.subr.bf16.mxu0 %v1701
    %4481 = vmatpush2.bf16.msra.mxu0 %v1700
    %4482 = vmatprep.subr.bf16.mxu0 %v1697
    %4483 = vmatpush2.bf16.msra.mxu0 %v1696
    %4484 = vmatprep.mubr.bf16.mxu0 %v4449
    %4485 = vmatmul.mubr.bf16.gmra.mxu0 %v4448
    %v4486 = vpop.f32.mrf.mxu0
    %v4487 = vadd.f32 0.0, %v4486
    %v4488 = vpop.f32.mrf.mxu0
    %v4489 = vadd.f32 0.0, %v4488
    %v4490 = vpop.f32.mrf.mxu0
    %v4491 = vpop.f32.mrf.mxu0
    %4492 = vdwg.mxu0
    %4493 = vmatprep.subr.bf16.mxu0 %v1695
    %4494 = vmatpush1.bf16.msra.mxu0 %v1694
    %4495 = vmatprep.subr.bf16.mxu0 %v1691
    %4496 = vmatpush1.bf16.msra.mxu0 %v1690
    %4497 = vmatprep.subr.bf16.mxu0 %v1687
    %4498 = vmatpush1.bf16.msra.mxu0 %v1686
    %4499 = vmatprep.subr.bf16.mxu0 %v1683
    %4500 = vmatpush1.bf16.msra.mxu0 %v1682
    %4501 = vmatprep.subr.bf16.mxu0 %v1679
    %4502 = vmatpush1.bf16.msra.mxu0 %v1678
    %4503 = vmatprep.subr.bf16.mxu0 %v1675
    %4504 = vmatpush1.bf16.msra.mxu0 %v1674
    %4505 = vmatprep.subr.bf16.mxu0 %v1671
    %4506 = vmatpush1.bf16.msra.mxu0 %v1670
    %4507 = vmatprep.subr.bf16.mxu0 %v1667
    %4508 = vmatpush1.bf16.msra.mxu0 %v1666
    %4509 = vmatprep.subr.bf16.mxu0 %v1727
    %4510 = vmatpush2.bf16.msra.mxu0 %v1726
    %4511 = vmatprep.subr.bf16.mxu0 %v1723
    %4512 = vmatpush2.bf16.msra.mxu0 %v1722
    %4513 = vmatprep.subr.bf16.mxu0 %v1719
    %4514 = vmatpush2.bf16.msra.mxu0 %v1718
    %4515 = vmatprep.subr.bf16.mxu0 %v1715
    %4516 = vmatpush2.bf16.msra.mxu0 %v1714
    %4517 = vmatprep.subr.bf16.mxu0 %v1711
    %4518 = vmatpush2.bf16.msra.mxu0 %v1710
    %4519 = vmatprep.subr.bf16.mxu0 %v1707
    %4520 = vmatpush2.bf16.msra.mxu0 %v1706
    %4521 = vmatprep.subr.bf16.mxu0 %v1703
    %4522 = vmatpush2.bf16.msra.mxu0 %v1702
    %4523 = vmatprep.subr.bf16.mxu0 %v1699
    %4524 = vmatpush2.bf16.msra.mxu0 %v1698
    %4525 = vmatprep.mubr.bf16.mxu0 %v4449
    %4526 = vmatmul.mubr.bf16.gmra.mxu0 %v4448
    %v4527 = vpop.f32.mrf.mxu0
    %v4528 = vadd.f32 0.0, %v4527
    %v4529 = vpop.f32.mrf.mxu0
    %v4530 = vadd.f32 0.0, %v4529
    %v4531 = vpop.f32.mrf.mxu0
    %v4532 = vpop.f32.mrf.mxu0
    %4533 = vdwg.mxu0
    %v4534 = vrot.slane %v4351, 2
    %v4535 = vrot.slane %v4445, 2
    %4538 = vmatprep.subr.bf16.mxu0 %v2401
    %4539 = vmatpush1.bf16.msra.mxu0 %v2400
    %4540 = vmatprep.subr.bf16.mxu0 %v2397
    %4541 = vmatpush1.bf16.msra.mxu0 %v2396
    %4542 = vmatprep.subr.bf16.mxu0 %v2393
    %4543 = vmatpush1.bf16.msra.mxu0 %v2392
    %4544 = vmatprep.subr.bf16.mxu0 %v2389
    %4545 = vmatpush1.bf16.msra.mxu0 %v2388
    %4546 = vmatprep.subr.bf16.mxu0 %v2385
    %4547 = vmatpush1.bf16.msra.mxu0 %v2384
    %4548 = vmatprep.subr.bf16.mxu0 %v2381
    %4549 = vmatpush1.bf16.msra.mxu0 %v2380
    %4550 = vmatprep.subr.bf16.mxu0 %v2377
    %4551 = vmatpush1.bf16.msra.mxu0 %v2376
    %4552 = vmatprep.subr.bf16.mxu0 %v2373
    %4553 = vmatpush1.bf16.msra.mxu0 %v2372
    %4554 = vmatprep.subr.bf16.mxu0 %v2433
    %4555 = vmatpush2.bf16.msra.mxu0 %v2432
    %4556 = vmatprep.subr.bf16.mxu0 %v2429
    %4557 = vmatpush2.bf16.msra.mxu0 %v2428
    %4558 = vmatprep.subr.bf16.mxu0 %v2425
    %4559 = vmatpush2.bf16.msra.mxu0 %v2424
    %4560 = vmatprep.subr.bf16.mxu0 %v2421
    %4561 = vmatpush2.bf16.msra.mxu0 %v2420
    %4562 = vmatprep.subr.bf16.mxu0 %v2417
    %4563 = vmatpush2.bf16.msra.mxu0 %v2416
    %4564 = vmatprep.subr.bf16.mxu0 %v2413
    %4565 = vmatpush2.bf16.msra.mxu0 %v2412
    %4566 = vmatprep.subr.bf16.mxu0 %v2409
    %4567 = vmatpush2.bf16.msra.mxu0 %v2408
    %4568 = vmatprep.subr.bf16.mxu0 %v2405
    %4569 = vmatpush2.bf16.msra.mxu0 %v2404
    %4570 = vmatprep.mubr.bf16.mxu0 %v4535
    %4571 = vmatmul.mubr.bf16.gmra.mxu0 %v4534
    %v4572 = vpop.f32.mrf.mxu0
    %v4573 = vadd.f32 0.0, %v4572
    %v4574 = vpop.f32.mrf.mxu0
    %v4575 = vadd.f32 0.0, %v4574
    %v4576 = vpop.f32.mrf.mxu0
    %v4577 = vpop.f32.mrf.mxu0
    %4578 = vdwg.mxu0
    %4579 = vmatprep.subr.bf16.mxu0 %v2403
    %4580 = vmatpush1.bf16.msra.mxu0 %v2402
    %4581 = vmatprep.subr.bf16.mxu0 %v2399
    %4582 = vmatpush1.bf16.msra.mxu0 %v2398
    %4583 = vmatprep.subr.bf16.mxu0 %v2395
    %4584 = vmatpush1.bf16.msra.mxu0 %v2394
    %4585 = vmatprep.subr.bf16.mxu0 %v2391
    %4586 = vmatpush1.bf16.msra.mxu0 %v2390
    %4587 = vmatprep.subr.bf16.mxu0 %v2387
    %4588 = vmatpush1.bf16.msra.mxu0 %v2386
    %4589 = vmatprep.subr.bf16.mxu0 %v2383
    %4590 = vmatpush1.bf16.msra.mxu0 %v2382
    %4591 = vmatprep.subr.bf16.mxu0 %v2379
    %4592 = vmatpush1.bf16.msra.mxu0 %v2378
    %4593 = vmatprep.subr.bf16.mxu0 %v2375
    %4594 = vmatpush1.bf16.msra.mxu0 %v2374
    %4595 = vmatprep.subr.bf16.mxu0 %v2435
    %4596 = vmatpush2.bf16.msra.mxu0 %v2434
    %4597 = vmatprep.subr.bf16.mxu0 %v2431
    %4598 = vmatpush2.bf16.msra.mxu0 %v2430
    %4599 = vmatprep.subr.bf16.mxu0 %v2427
    %4600 = vmatpush2.bf16.msra.mxu0 %v2426
    %4601 = vmatprep.subr.bf16.mxu0 %v2423
    %4602 = vmatpush2.bf16.msra.mxu0 %v2422
    %4603 = vmatprep.subr.bf16.mxu0 %v2419
    %4604 = vmatpush2.bf16.msra.mxu0 %v2418
    %4605 = vmatprep.subr.bf16.mxu0 %v2415
    %4606 = vmatpush2.bf16.msra.mxu0 %v2414
    %4607 = vmatprep.subr.bf16.mxu0 %v2411
    %4608 = vmatpush2.bf16.msra.mxu0 %v2410
    %4609 = vmatprep.subr.bf16.mxu0 %v2407
    %4610 = vmatpush2.bf16.msra.mxu0 %v2406
    %4611 = vmatprep.mubr.bf16.mxu0 %v4535
    %4612 = vmatmul.mubr.bf16.gmra.mxu0 %v4534
    %v4613 = vpop.f32.mrf.mxu0
    %v4614 = vadd.f32 0.0, %v4613
    %v4615 = vpop.f32.mrf.mxu0
    %v4616 = vadd.f32 0.0, %v4615
    %v4617 = vpop.f32.mrf.mxu0
    %v4618 = vpop.f32.mrf.mxu0
    %4619 = vdwg.mxu0
    %v4620 = vrot.slane %v4351, 3
    %v4621 = vrot.slane %v4445, 3
    %4624 = vmatprep.subr.bf16.mxu0 %v3211
    %4625 = vmatpush1.bf16.msra.mxu0 %v3210
    %4626 = vmatprep.subr.bf16.mxu0 %v3207
    %4627 = vmatpush1.bf16.msra.mxu0 %v3206
    %4628 = vmatprep.subr.bf16.mxu0 %v3203
    %4629 = vmatpush1.bf16.msra.mxu0 %v3202
    %4630 = vmatprep.subr.bf16.mxu0 %v3199
    %4631 = vmatpush1.bf16.msra.mxu0 %v3198
    %4632 = vmatprep.subr.bf16.mxu0 %v3195
    %4633 = vmatpush1.bf16.msra.mxu0 %v3194
    %4634 = vmatprep.subr.bf16.mxu0 %v3191
    %4635 = vmatpush1.bf16.msra.mxu0 %v3190
    %4636 = vmatprep.subr.bf16.mxu0 %v3187
    %4637 = vmatpush1.bf16.msra.mxu0 %v3186
    %4638 = vmatprep.subr.bf16.mxu0 %v3183
    %4639 = vmatpush1.bf16.msra.mxu0 %v3182
    %4640 = vmatprep.subr.bf16.mxu0 %v3243
    %4641 = vmatpush2.bf16.msra.mxu0 %v3242
    %4642 = vmatprep.subr.bf16.mxu0 %v3239
    %4643 = vmatpush2.bf16.msra.mxu0 %v3238
    %4644 = vmatprep.subr.bf16.mxu0 %v3235
    %4645 = vmatpush2.bf16.msra.mxu0 %v3234
    %4646 = vmatprep.subr.bf16.mxu0 %v3231
    %4647 = vmatpush2.bf16.msra.mxu0 %v3230
    %4648 = vmatprep.subr.bf16.mxu0 %v3227
    %4649 = vmatpush2.bf16.msra.mxu0 %v3226
    %4650 = vmatprep.subr.bf16.mxu0 %v3223
    %4651 = vmatpush2.bf16.msra.mxu0 %v3222
    %4652 = vmatprep.subr.bf16.mxu0 %v3219
    %4653 = vmatpush2.bf16.msra.mxu0 %v3218
    %4654 = vmatprep.subr.bf16.mxu0 %v3215
    %4655 = vmatpush2.bf16.msra.mxu0 %v3214
    %4656 = vmatprep.mubr.bf16.mxu0 %v4621
    %4657 = vmatmul.mubr.bf16.gmra.mxu0 %v4620
    %v4658 = vpop.f32.mrf.mxu0
    %v4659 = vadd.f32 0.0, %v4658
    %v4660 = vpop.f32.mrf.mxu0
    %v4661 = vadd.f32 0.0, %v4660
    %v4662 = vpop.f32.mrf.mxu0
    %v4663 = vpop.f32.mrf.mxu0
    %4664 = vdwg.mxu0
    %4665 = vmatprep.subr.bf16.mxu0 %v3213
    %4666 = vmatpush1.bf16.msra.mxu0 %v3212
    %4667 = vmatprep.subr.bf16.mxu0 %v3209
    %4668 = vmatpush1.bf16.msra.mxu0 %v3208
    %4669 = vmatprep.subr.bf16.mxu0 %v3205
    %4670 = vmatpush1.bf16.msra.mxu0 %v3204
    %4671 = vmatprep.subr.bf16.mxu0 %v3201
    %4672 = vmatpush1.bf16.msra.mxu0 %v3200
    %4673 = vmatprep.subr.bf16.mxu0 %v3197
    %4674 = vmatpush1.bf16.msra.mxu0 %v3196
    %4675 = vmatprep.subr.bf16.mxu0 %v3193
    %4676 = vmatpush1.bf16.msra.mxu0 %v3192
    %4677 = vmatprep.subr.bf16.mxu0 %v3189
    %4678 = vmatpush1.bf16.msra.mxu0 %v3188
    %4679 = vmatprep.subr.bf16.mxu0 %v3185
    %4680 = vmatpush1.bf16.msra.mxu0 %v3184
    %4681 = vmatprep.subr.bf16.mxu0 %v3245
    %4682 = vmatpush2.bf16.msra.mxu0 %v3244
    %4683 = vmatprep.subr.bf16.mxu0 %v3241
    %4684 = vmatpush2.bf16.msra.mxu0 %v3240
    %4685 = vmatprep.subr.bf16.mxu0 %v3237
    %4686 = vmatpush2.bf16.msra.mxu0 %v3236
    %4687 = vmatprep.subr.bf16.mxu0 %v3233
    %4688 = vmatpush2.bf16.msra.mxu0 %v3232
    %4689 = vmatprep.subr.bf16.mxu0 %v3229
    %4690 = vmatpush2.bf16.msra.mxu0 %v3228
    %4691 = vmatprep.subr.bf16.mxu0 %v3225
    %4692 = vmatpush2.bf16.msra.mxu0 %v3224
    %4693 = vmatprep.subr.bf16.mxu0 %v3221
    %4694 = vmatpush2.bf16.msra.mxu0 %v3220
    %4695 = vmatprep.subr.bf16.mxu0 %v3217
    %4696 = vmatpush2.bf16.msra.mxu0 %v3216
    %4697 = vmatprep.mubr.bf16.mxu0 %v4621
    %4698 = vmatmul.mubr.bf16.gmra.mxu0 %v4620
    %v4699 = vpop.f32.mrf.mxu0
    %v4700 = vadd.f32 0.0, %v4699
    %v4701 = vpop.f32.mrf.mxu0
    %v4702 = vadd.f32 0.0, %v4701
    %v4703 = vpop.f32.mrf.mxu0
    %v4704 = vpop.f32.mrf.mxu0
    %4705 = vdwg.mxu0
    %v4710 = vrot.slane %v4487, 6
    %v4711 = vrot.slane %v4489, 6
    %v4712 = vrot.slane %v4528, 6
    %v4713 = vrot.slane %v4530, 6
    %v4722 = vrot.slane %v4573, 4
    %v4723 = vrot.slane %v4575, 4
    %v4724 = vrot.slane %v4614, 4
    %v4725 = vrot.slane %v4616, 4
    %v4734 = vrot.slane %v4659, 2
    %v4735 = vrot.slane %v4661, 2
    %v4736 = vrot.slane %v4700, 2
    %v4737 = vrot.slane %v4702, 2
    %v4742 = vsel %vm973, %v4395, %v4710
    %v4743 = vsel %vm973, %v4397, %v4711
    %v4744 = vsel %vm973, %v4436, %v4712
    %v4745 = vsel %vm973, %v4438, %v4713
    %v4746 = vsel %vm978, %v4742, %v4722
    %v4747 = vsel %vm978, %v4743, %v4723
    %v4748 = vsel %vm978, %v4744, %v4724
    %v4749 = vsel %vm978, %v4745, %v4725
    %v4750 = vsel %vm983, %v4746, %v4734
    %v4751 = vsel %vm983, %v4747, %v4735
    %v4752 = vsel %vm983, %v4748, %v4736
    %v4753 = vsel %vm983, %v4749, %v4737
    %v4754 = vadd.f32 %v4750, %v984
    %v4755 = vadd.f32 %v4751, %v985
    %v4756 = vadd.f32 %v4752, %v986
    %v4757 = vadd.f32 %v4753, %v987
    %v4758 = vxor.u32 %v4754, 2147483648
    %v4759 = vxor.u32 %v4755, 2147483648
    %v4760 = vxor.u32 %v4756, 2147483648
    %v4761 = vxor.u32 %v4757, 2147483648
    %v4762 = vmul.f32 %v4758, 1.442695
    %v4763 = vpow.pop %v4762
    %v4764 = vmul.f32 %v4759, 1.442695
    %v4765 = vpow.pop %v4764
    %v4766 = vmul.f32 %v4760, 1.442695
    %v4767 = vpow.pop %v4766
    %v4768 = vmul.f32 %v4761, 1.442695
    %v4769 = vpow.pop %v4768
    %v4770 = vadd.f32 %v4763, 1.0
    %v4771 = vadd.f32 %v4765, 1.0
    %v4772 = vadd.f32 %v4767, 1.0
    %v4773 = vadd.f32 %v4769, 1.0
    %v4774 = vrcp.pop %v4770
    %v4775 = vmul.f32 1.0, %v4774
    %v4776 = vrcp.pop %v4771
    %v4777 = vmul.f32 1.0, %v4776
    %v4778 = vrcp.pop %v4772
    %v4779 = vmul.f32 1.0, %v4778
    %v4780 = vrcp.pop %v4773
    %v4781 = vmul.f32 1.0, %v4780
    %v4782 = vmul.f32 %v4779, 2.0
    %v4783 = vsub.f32 %v4782, 1.0
    %v4784 = vmul.f32 %v4777, %v4348
    %v4785 = vmul.f32 %v4775, %v4783
    %v4786 = vadd.f32 %v4784, %v4785
    %v4787 = vtanh.pop %v4786
    %v4788 = vmul.f32 %v4781, %v4787
    %v4789 = vpack.c.bf16 %v4788, %v4788
    %v4790 = vrot.slane %v792, 6
    %v4791 = vrot.slane %v794, 6
    %v4792 = vrot.slane %v878, 6
    %v4793 = vrot.slane %v880, 6
    %4798 = vmatprep.subr.bf16.mxu0 %v1160
    %4799 = vmatpush1.bf16.msra.mxu0 %v1159
    %4800 = vmatprep.subr.bf16.mxu0 %v1156
    %4801 = vmatpush1.bf16.msra.mxu0 %v1155
    %4802 = vmatprep.subr.bf16.mxu0 %v1152
    %4803 = vmatpush1.bf16.msra.mxu0 %v1151
    %4804 = vmatprep.subr.bf16.mxu0 %v1148
    %4805 = vmatpush1.bf16.msra.mxu0 %v1147
    %4806 = vmatprep.subr.bf16.mxu0 %v1144
    %4807 = vmatpush1.bf16.msra.mxu0 %v1143
    %4808 = vmatprep.subr.bf16.mxu0 %v1140
    %4809 = vmatpush1.bf16.msra.mxu0 %v1139
    %4810 = vmatprep.subr.bf16.mxu0 %v1136
    %4811 = vmatpush1.bf16.msra.mxu0 %v1135
    %4812 = vmatprep.subr.bf16.mxu0 %v1132
    %4813 = vmatpush1.bf16.msra.mxu0 %v1131
    %4814 = vmatprep.subr.bf16.mxu0 0
    %4815 = vmatpush2.bf16.msra.mxu0 0
    %4816 = vmatprep.subr.bf16.mxu0 0
    %4817 = vmatpush2.bf16.msra.mxu0 0
    %4818 = vmatprep.subr.bf16.mxu0 0
    %4819 = vmatpush2.bf16.msra.mxu0 0
    %4820 = vmatprep.subr.bf16.mxu0 0
    %4821 = vmatpush2.bf16.msra.mxu0 0
    %4822 = vmatprep.subr.bf16.mxu0 0
    %4823 = vmatpush2.bf16.msra.mxu0 0
    %4824 = vmatprep.subr.bf16.mxu0 0
    %4825 = vmatpush2.bf16.msra.mxu0 0
    %4826 = vmatprep.subr.bf16.mxu0 0
    %4827 = vmatpush2.bf16.msra.mxu0 0
    %4828 = vmatprep.subr.bf16.mxu0 0
    %4829 = vmatpush2.bf16.msra.mxu0 0
    %4830 = vmatprep.mubr.bf16.mxu0 0
    %4831 = vmatmul.mubr.bf16.gmra.mxu0 %v4789
    %v4832 = vpop.f32.mrf.mxu0
    %v4833 = vadd.f32 %v4790, %v4832
    %v4834 = vpop.f32.mrf.mxu0
    %v4835 = vadd.f32 %v4791, %v4834
    %v4836 = vpop.f32.mrf.mxu0
    %v4837 = vpop.f32.mrf.mxu0
    %4838 = vdwg.mxu0
    %4839 = vmatprep.subr.bf16.mxu0 %v1162
    %4840 = vmatpush1.bf16.msra.mxu0 %v1161
    %4841 = vmatprep.subr.bf16.mxu0 %v1158
    %4842 = vmatpush1.bf16.msra.mxu0 %v1157
    %4843 = vmatprep.subr.bf16.mxu0 %v1154
    %4844 = vmatpush1.bf16.msra.mxu0 %v1153
    %4845 = vmatprep.subr.bf16.mxu0 %v1150
    %4846 = vmatpush1.bf16.msra.mxu0 %v1149
    %4847 = vmatprep.subr.bf16.mxu0 %v1146
    %4848 = vmatpush1.bf16.msra.mxu0 %v1145
    %4849 = vmatprep.subr.bf16.mxu0 %v1142
    %4850 = vmatpush1.bf16.msra.mxu0 %v1141
    %4851 = vmatprep.subr.bf16.mxu0 %v1138
    %4852 = vmatpush1.bf16.msra.mxu0 %v1137
    %4853 = vmatprep.subr.bf16.mxu0 %v1134
    %4854 = vmatpush1.bf16.msra.mxu0 %v1133
    %4855 = vmatprep.subr.bf16.mxu0 0
    %4856 = vmatpush2.bf16.msra.mxu0 0
    %4857 = vmatprep.subr.bf16.mxu0 0
    %4858 = vmatpush2.bf16.msra.mxu0 0
    %4859 = vmatprep.subr.bf16.mxu0 0
    %4860 = vmatpush2.bf16.msra.mxu0 0
    %4861 = vmatprep.subr.bf16.mxu0 0
    %4862 = vmatpush2.bf16.msra.mxu0 0
    %4863 = vmatprep.subr.bf16.mxu0 0
    %4864 = vmatpush2.bf16.msra.mxu0 0
    %4865 = vmatprep.subr.bf16.mxu0 0
    %4866 = vmatpush2.bf16.msra.mxu0 0
    %4867 = vmatprep.subr.bf16.mxu0 0
    %4868 = vmatpush2.bf16.msra.mxu0 0
    %4869 = vmatprep.subr.bf16.mxu0 0
    %4870 = vmatpush2.bf16.msra.mxu0 0
    %4871 = vmatprep.mubr.bf16.mxu0 0
    %4872 = vmatmul.mubr.bf16.gmra.mxu0 %v4789
    %v4873 = vpop.f32.mrf.mxu0
    %v4874 = vadd.f32 %v4792, %v4873
    %v4875 = vpop.f32.mrf.mxu0
    %v4876 = vadd.f32 %v4793, %v4875
    %v4877 = vpop.f32.mrf.mxu0
    %v4878 = vpop.f32.mrf.mxu0
    %4879 = vdwg.mxu0
    %v4881 = vrot.slane %v4788, 6
    %v4883 = vpack.c.bf16 %v4881, %v4881
    %v4886 = vrot.slane %v4789, 1
    %v4887 = vrot.slane %v4883, 1
    %4890 = vmatprep.subr.bf16.mxu0 %v1693
    %4891 = vmatpush1.bf16.msra.mxu0 %v1692
    %4892 = vmatprep.subr.bf16.mxu0 %v1689
    %4893 = vmatpush1.bf16.msra.mxu0 %v1688
    %4894 = vmatprep.subr.bf16.mxu0 %v1685
    %4895 = vmatpush1.bf16.msra.mxu0 %v1684
    %4896 = vmatprep.subr.bf16.mxu0 %v1681
    %4897 = vmatpush1.bf16.msra.mxu0 %v1680
    %4898 = vmatprep.subr.bf16.mxu0 %v1677
    %4899 = vmatpush1.bf16.msra.mxu0 %v1676
    %4900 = vmatprep.subr.bf16.mxu0 %v1673
    %4901 = vmatpush1.bf16.msra.mxu0 %v1672
    %4902 = vmatprep.subr.bf16.mxu0 %v1669
    %4903 = vmatpush1.bf16.msra.mxu0 %v1668
    %4904 = vmatprep.subr.bf16.mxu0 %v1665
    %4905 = vmatpush1.bf16.msra.mxu0 %v1664
    %4906 = vmatprep.subr.bf16.mxu0 %v1725
    %4907 = vmatpush2.bf16.msra.mxu0 %v1724
    %4908 = vmatprep.subr.bf16.mxu0 %v1721
    %4909 = vmatpush2.bf16.msra.mxu0 %v1720
    %4910 = vmatprep.subr.bf16.mxu0 %v1717
    %4911 = vmatpush2.bf16.msra.mxu0 %v1716
    %4912 = vmatprep.subr.bf16.mxu0 %v1713
    %4913 = vmatpush2.bf16.msra.mxu0 %v1712
    %4914 = vmatprep.subr.bf16.mxu0 %v1709
    %4915 = vmatpush2.bf16.msra.mxu0 %v1708
    %4916 = vmatprep.subr.bf16.mxu0 %v1705
    %4917 = vmatpush2.bf16.msra.mxu0 %v1704
    %4918 = vmatprep.subr.bf16.mxu0 %v1701
    %4919 = vmatpush2.bf16.msra.mxu0 %v1700
    %4920 = vmatprep.subr.bf16.mxu0 %v1697
    %4921 = vmatpush2.bf16.msra.mxu0 %v1696
    %4922 = vmatprep.mubr.bf16.mxu0 %v4887
    %4923 = vmatmul.mubr.bf16.gmra.mxu0 %v4886
    %v4924 = vpop.f32.mrf.mxu0
    %v4925 = vadd.f32 0.0, %v4924
    %v4926 = vpop.f32.mrf.mxu0
    %v4927 = vadd.f32 0.0, %v4926
    %v4928 = vpop.f32.mrf.mxu0
    %v4929 = vpop.f32.mrf.mxu0
    %4930 = vdwg.mxu0
    %4931 = vmatprep.subr.bf16.mxu0 %v1695
    %4932 = vmatpush1.bf16.msra.mxu0 %v1694
    %4933 = vmatprep.subr.bf16.mxu0 %v1691
    %4934 = vmatpush1.bf16.msra.mxu0 %v1690
    %4935 = vmatprep.subr.bf16.mxu0 %v1687
    %4936 = vmatpush1.bf16.msra.mxu0 %v1686
    %4937 = vmatprep.subr.bf16.mxu0 %v1683
    %4938 = vmatpush1.bf16.msra.mxu0 %v1682
    %4939 = vmatprep.subr.bf16.mxu0 %v1679
    %4940 = vmatpush1.bf16.msra.mxu0 %v1678
    %4941 = vmatprep.subr.bf16.mxu0 %v1675
    %4942 = vmatpush1.bf16.msra.mxu0 %v1674
    %4943 = vmatprep.subr.bf16.mxu0 %v1671
    %4944 = vmatpush1.bf16.msra.mxu0 %v1670
    %4945 = vmatprep.subr.bf16.mxu0 %v1667
    %4946 = vmatpush1.bf16.msra.mxu0 %v1666
    %4947 = vmatprep.subr.bf16.mxu0 %v1727
    %4948 = vmatpush2.bf16.msra.mxu0 %v1726
    %4949 = vmatprep.subr.bf16.mxu0 %v1723
    %4950 = vmatpush2.bf16.msra.mxu0 %v1722
    %4951 = vmatprep.subr.bf16.mxu0 %v1719
    %4952 = vmatpush2.bf16.msra.mxu0 %v1718
    %4953 = vmatprep.subr.bf16.mxu0 %v1715
    %4954 = vmatpush2.bf16.msra.mxu0 %v1714
    %4955 = vmatprep.subr.bf16.mxu0 %v1711
    %4956 = vmatpush2.bf16.msra.mxu0 %v1710
    %4957 = vmatprep.subr.bf16.mxu0 %v1707
    %4958 = vmatpush2.bf16.msra.mxu0 %v1706
    %4959 = vmatprep.subr.bf16.mxu0 %v1703
    %4960 = vmatpush2.bf16.msra.mxu0 %v1702
    %4961 = vmatprep.subr.bf16.mxu0 %v1699
    %4962 = vmatpush2.bf16.msra.mxu0 %v1698
    %4963 = vmatprep.mubr.bf16.mxu0 %v4887
    %4964 = vmatmul.mubr.bf16.gmra.mxu0 %v4886
    %v4965 = vpop.f32.mrf.mxu0
    %v4966 = vadd.f32 0.0, %v4965
    %v4967 = vpop.f32.mrf.mxu0
    %v4968 = vadd.f32 0.0, %v4967
    %v4969 = vpop.f32.mrf.mxu0
    %v4970 = vpop.f32.mrf.mxu0
    %4971 = vdwg.mxu0
    %v4972 = vrot.slane %v4789, 2
    %v4973 = vrot.slane %v4883, 2
    %4976 = vmatprep.subr.bf16.mxu0 %v2401
    %4977 = vmatpush1.bf16.msra.mxu0 %v2400
    %4978 = vmatprep.subr.bf16.mxu0 %v2397
    %4979 = vmatpush1.bf16.msra.mxu0 %v2396
    %4980 = vmatprep.subr.bf16.mxu0 %v2393
    %4981 = vmatpush1.bf16.msra.mxu0 %v2392
    %4982 = vmatprep.subr.bf16.mxu0 %v2389
    %4983 = vmatpush1.bf16.msra.mxu0 %v2388
    %4984 = vmatprep.subr.bf16.mxu0 %v2385
    %4985 = vmatpush1.bf16.msra.mxu0 %v2384
    %4986 = vmatprep.subr.bf16.mxu0 %v2381
    %4987 = vmatpush1.bf16.msra.mxu0 %v2380
    %4988 = vmatprep.subr.bf16.mxu0 %v2377
    %4989 = vmatpush1.bf16.msra.mxu0 %v2376
    %4990 = vmatprep.subr.bf16.mxu0 %v2373
    %4991 = vmatpush1.bf16.msra.mxu0 %v2372
    %4992 = vmatprep.subr.bf16.mxu0 %v2433
    %4993 = vmatpush2.bf16.msra.mxu0 %v2432
    %4994 = vmatprep.subr.bf16.mxu0 %v2429
    %4995 = vmatpush2.bf16.msra.mxu0 %v2428
    %4996 = vmatprep.subr.bf16.mxu0 %v2425
    %4997 = vmatpush2.bf16.msra.mxu0 %v2424
    %4998 = vmatprep.subr.bf16.mxu0 %v2421
    %4999 = vmatpush2.bf16.msra.mxu0 %v2420
    %5000 = vmatprep.subr.bf16.mxu0 %v2417
    %5001 = vmatpush2.bf16.msra.mxu0 %v2416
    %5002 = vmatprep.subr.bf16.mxu0 %v2413
    %5003 = vmatpush2.bf16.msra.mxu0 %v2412
    %5004 = vmatprep.subr.bf16.mxu0 %v2409
    %5005 = vmatpush2.bf16.msra.mxu0 %v2408
    %5006 = vmatprep.subr.bf16.mxu0 %v2405
    %5007 = vmatpush2.bf16.msra.mxu0 %v2404
    %5008 = vmatprep.mubr.bf16.mxu0 %v4973
    %5009 = vmatmul.mubr.bf16.gmra.mxu0 %v4972
    %v5010 = vpop.f32.mrf.mxu0
    %v5011 = vadd.f32 0.0, %v5010
    %v5012 = vpop.f32.mrf.mxu0
    %v5013 = vadd.f32 0.0, %v5012
    %v5014 = vpop.f32.mrf.mxu0
    %v5015 = vpop.f32.mrf.mxu0
    %5016 = vdwg.mxu0
    %5017 = vmatprep.subr.bf16.mxu0 %v2403
    %5018 = vmatpush1.bf16.msra.mxu0 %v2402
    %5019 = vmatprep.subr.bf16.mxu0 %v2399
    %5020 = vmatpush1.bf16.msra.mxu0 %v2398
    %5021 = vmatprep.subr.bf16.mxu0 %v2395
    %5022 = vmatpush1.bf16.msra.mxu0 %v2394
    %5023 = vmatprep.subr.bf16.mxu0 %v2391
    %5024 = vmatpush1.bf16.msra.mxu0 %v2390
    %5025 = vmatprep.subr.bf16.mxu0 %v2387
    %5026 = vmatpush1.bf16.msra.mxu0 %v2386
    %5027 = vmatprep.subr.bf16.mxu0 %v2383
    %5028 = vmatpush1.bf16.msra.mxu0 %v2382
    %5029 = vmatprep.subr.bf16.mxu0 %v2379
    %5030 = vmatpush1.bf16.msra.mxu0 %v2378
    %5031 = vmatprep.subr.bf16.mxu0 %v2375
    %5032 = vmatpush1.bf16.msra.mxu0 %v2374
    %5033 = vmatprep.subr.bf16.mxu0 %v2435
    %5034 = vmatpush2.bf16.msra.mxu0 %v2434
    %5035 = vmatprep.subr.bf16.mxu0 %v2431
    %5036 = vmatpush2.bf16.msra.mxu0 %v2430
    %5037 = vmatprep.subr.bf16.mxu0 %v2427
    %5038 = vmatpush2.bf16.msra.mxu0 %v2426
    %5039 = vmatprep.subr.bf16.mxu0 %v2423
    %5040 = vmatpush2.bf16.msra.mxu0 %v2422
    %5041 = vmatprep.subr.bf16.mxu0 %v2419
    %5042 = vmatpush2.bf16.msra.mxu0 %v2418
    %5043 = vmatprep.subr.bf16.mxu0 %v2415
    %5044 = vmatpush2.bf16.msra.mxu0 %v2414
    %5045 = vmatprep.subr.bf16.mxu0 %v2411
    %5046 = vmatpush2.bf16.msra.mxu0 %v2410
    %5047 = vmatprep.subr.bf16.mxu0 %v2407
    %5048 = vmatpush2.bf16.msra.mxu0 %v2406
    %5049 = vmatprep.mubr.bf16.mxu0 %v4973
    %5050 = vmatmul.mubr.bf16.gmra.mxu0 %v4972
    %v5051 = vpop.f32.mrf.mxu0
    %v5052 = vadd.f32 0.0, %v5051
    %v5053 = vpop.f32.mrf.mxu0
    %v5054 = vadd.f32 0.0, %v5053
    %v5055 = vpop.f32.mrf.mxu0
    %v5056 = vpop.f32.mrf.mxu0
    %5057 = vdwg.mxu0
    %v5058 = vrot.slane %v4789, 3
    %v5059 = vrot.slane %v4883, 3
    %5062 = vmatprep.subr.bf16.mxu0 %v3211
    %5063 = vmatpush1.bf16.msra.mxu0 %v3210
    %5064 = vmatprep.subr.bf16.mxu0 %v3207
    %5065 = vmatpush1.bf16.msra.mxu0 %v3206
    %5066 = vmatprep.subr.bf16.mxu0 %v3203
    %5067 = vmatpush1.bf16.msra.mxu0 %v3202
    %5068 = vmatprep.subr.bf16.mxu0 %v3199
    %5069 = vmatpush1.bf16.msra.mxu0 %v3198
    %5070 = vmatprep.subr.bf16.mxu0 %v3195
    %5071 = vmatpush1.bf16.msra.mxu0 %v3194
    %5072 = vmatprep.subr.bf16.mxu0 %v3191
    %5073 = vmatpush1.bf16.msra.mxu0 %v3190
    %5074 = vmatprep.subr.bf16.mxu0 %v3187
    %5075 = vmatpush1.bf16.msra.mxu0 %v3186
    %5076 = vmatprep.subr.bf16.mxu0 %v3183
    %5077 = vmatpush1.bf16.msra.mxu0 %v3182
    %5078 = vmatprep.subr.bf16.mxu0 %v3243
    %5079 = vmatpush2.bf16.msra.mxu0 %v3242
    %5080 = vmatprep.subr.bf16.mxu0 %v3239
    %5081 = vmatpush2.bf16.msra.mxu0 %v3238
    %5082 = vmatprep.subr.bf16.mxu0 %v3235
    %5083 = vmatpush2.bf16.msra.mxu0 %v3234
    %5084 = vmatprep.subr.bf16.mxu0 %v3231
    %5085 = vmatpush2.bf16.msra.mxu0 %v3230
    %5086 = vmatprep.subr.bf16.mxu0 %v3227
    %5087 = vmatpush2.bf16.msra.mxu0 %v3226
    %5088 = vmatprep.subr.bf16.mxu0 %v3223
    %5089 = vmatpush2.bf16.msra.mxu0 %v3222
    %5090 = vmatprep.subr.bf16.mxu0 %v3219
    %5091 = vmatpush2.bf16.msra.mxu0 %v3218
    %5092 = vmatprep.subr.bf16.mxu0 %v3215
    %5093 = vmatpush2.bf16.msra.mxu0 %v3214
    %5094 = vmatprep.mubr.bf16.mxu0 %v5059
    %5095 = vmatmul.mubr.bf16.gmra.mxu0 %v5058
    %v5096 = vpop.f32.mrf.mxu0
    %v5097 = vadd.f32 0.0, %v5096
    %v5098 = vpop.f32.mrf.mxu0
    %v5099 = vadd.f32 0.0, %v5098
    %v5100 = vpop.f32.mrf.mxu0
    %v5101 = vpop.f32.mrf.mxu0
    %5102 = vdwg.mxu0
    %5103 = vmatprep.subr.bf16.mxu0 %v3213
    %5104 = vmatpush1.bf16.msra.mxu0 %v3212
    %5105 = vmatprep.subr.bf16.mxu0 %v3209
    %5106 = vmatpush1.bf16.msra.mxu0 %v3208
    %5107 = vmatprep.subr.bf16.mxu0 %v3205
    %5108 = vmatpush1.bf16.msra.mxu0 %v3204
    %5109 = vmatprep.subr.bf16.mxu0 %v3201
    %5110 = vmatpush1.bf16.msra.mxu0 %v3200
    %5111 = vmatprep.subr.bf16.mxu0 %v3197
    %5112 = vmatpush1.bf16.msra.mxu0 %v3196
    %5113 = vmatprep.subr.bf16.mxu0 %v3193
    %5114 = vmatpush1.bf16.msra.mxu0 %v3192
    %5115 = vmatprep.subr.bf16.mxu0 %v3189
    %5116 = vmatpush1.bf16.msra.mxu0 %v3188
    %5117 = vmatprep.subr.bf16.mxu0 %v3185
    %5118 = vmatpush1.bf16.msra.mxu0 %v3184
    %5119 = vmatprep.subr.bf16.mxu0 %v3245
    %5120 = vmatpush2.bf16.msra.mxu0 %v3244
    %5121 = vmatprep.subr.bf16.mxu0 %v3241
    %5122 = vmatpush2.bf16.msra.mxu0 %v3240
    %5123 = vmatprep.subr.bf16.mxu0 %v3237
    %5124 = vmatpush2.bf16.msra.mxu0 %v3236
    %5125 = vmatprep.subr.bf16.mxu0 %v3233
    %5126 = vmatpush2.bf16.msra.mxu0 %v3232
    %5127 = vmatprep.subr.bf16.mxu0 %v3229
    %5128 = vmatpush2.bf16.msra.mxu0 %v3228
    %5129 = vmatprep.subr.bf16.mxu0 %v3225
    %5130 = vmatpush2.bf16.msra.mxu0 %v3224
    %5131 = vmatprep.subr.bf16.mxu0 %v3221
    %5132 = vmatpush2.bf16.msra.mxu0 %v3220
    %5133 = vmatprep.subr.bf16.mxu0 %v3217
    %5134 = vmatpush2.bf16.msra.mxu0 %v3216
    %5135 = vmatprep.mubr.bf16.mxu0 %v5059
    %5136 = vmatmul.mubr.bf16.gmra.mxu0 %v5058
    %v5137 = vpop.f32.mrf.mxu0
    %v5138 = vadd.f32 0.0, %v5137
    %v5139 = vpop.f32.mrf.mxu0
    %v5140 = vadd.f32 0.0, %v5139
    %v5141 = vpop.f32.mrf.mxu0
    %v5142 = vpop.f32.mrf.mxu0
    %5143 = vdwg.mxu0
    %v5148 = vrot.slane %v4925, 6
    %v5149 = vrot.slane %v4927, 6
    %v5150 = vrot.slane %v4966, 6
    %v5151 = vrot.slane %v4968, 6
    %v5160 = vrot.slane %v5011, 4
    %v5161 = vrot.slane %v5013, 4
    %v5162 = vrot.slane %v5052, 4
    %v5163 = vrot.slane %v5054, 4
    %v5172 = vrot.slane %v5097, 2
    %v5173 = vrot.slane %v5099, 2
    %v5174 = vrot.slane %v5138, 2
    %v5175 = vrot.slane %v5140, 2
    %v5180 = vsel %vm973, %v4833, %v5148
    %v5181 = vsel %vm973, %v4835, %v5149
    %v5182 = vsel %vm973, %v4874, %v5150
    %v5183 = vsel %vm973, %v4876, %v5151
    %v5184 = vsel %vm978, %v5180, %v5160
    %v5185 = vsel %vm978, %v5181, %v5161
    %v5186 = vsel %vm978, %v5182, %v5162
    %v5187 = vsel %vm978, %v5183, %v5163
    %v5188 = vsel %vm983, %v5184, %v5172
    %v5189 = vsel %vm983, %v5185, %v5173
    %v5190 = vsel %vm983, %v5186, %v5174
    %v5191 = vsel %vm983, %v5187, %v5175
    %v5192 = vadd.f32 %v5188, %v984
    %v5193 = vadd.f32 %v5189, %v985
    %v5194 = vadd.f32 %v5190, %v986
    %v5195 = vadd.f32 %v5191, %v987
    %v5196 = vxor.u32 %v5192, 2147483648
    %v5197 = vxor.u32 %v5193, 2147483648
    %v5198 = vxor.u32 %v5194, 2147483648
    %v5199 = vxor.u32 %v5195, 2147483648
    %v5200 = vmul.f32 %v5196, 1.442695
    %v5201 = vpow.pop %v5200
    %v5202 = vmul.f32 %v5197, 1.442695
    %v5203 = vpow.pop %v5202
    %v5204 = vmul.f32 %v5198, 1.442695
    %v5205 = vpow.pop %v5204
    %v5206 = vmul.f32 %v5199, 1.442695
    %v5207 = vpow.pop %v5206
    %v5208 = vadd.f32 %v5201, 1.0
    %v5209 = vadd.f32 %v5203, 1.0
    %v5210 = vadd.f32 %v5205, 1.0
    %v5211 = vadd.f32 %v5207, 1.0
    %v5212 = vrcp.pop %v5208
    %v5213 = vmul.f32 1.0, %v5212
    %v5214 = vrcp.pop %v5209
    %v5215 = vmul.f32 1.0, %v5214
    %v5216 = vrcp.pop %v5210
    %v5217 = vmul.f32 1.0, %v5216
    %v5218 = vrcp.pop %v5211
    %v5219 = vmul.f32 1.0, %v5218
    %v5220 = vmul.f32 %v5217, 2.0
    %v5221 = vsub.f32 %v5220, 1.0
    %v5222 = vmul.f32 %v5215, %v4786
    %v5223 = vmul.f32 %v5213, %v5221
    %v5224 = vadd.f32 %v5222, %v5223
    %v5225 = vtanh.pop %v5224
    %v5226 = vmul.f32 %v5219, %v5225
    %v5228 = vrot.slane %v5226, 6
    %v5230 = vpack.c.bf16 %v5226, %v5226
    %v5231 = vpack.c.bf16 %v5228, %v5228
    %v5234 = vrot.slane %v5230, 1
    %v5235 = vrot.slane %v5231, 1
    %5238 = vmatprep.subr.bf16.mxu0 %v1693
    %5239 = vmatpush1.bf16.msra.mxu0 %v1692
    %5240 = vmatprep.subr.bf16.mxu0 %v1689
    %5241 = vmatpush1.bf16.msra.mxu0 %v1688
    %5242 = vmatprep.subr.bf16.mxu0 %v1685
    %5243 = vmatpush1.bf16.msra.mxu0 %v1684
    %5244 = vmatprep.subr.bf16.mxu0 %v1681
    %5245 = vmatpush1.bf16.msra.mxu0 %v1680
    %5246 = vmatprep.subr.bf16.mxu0 %v1677
    %5247 = vmatpush1.bf16.msra.mxu0 %v1676
    %5248 = vmatprep.subr.bf16.mxu0 %v1673
    %5249 = vmatpush1.bf16.msra.mxu0 %v1672
    %5250 = vmatprep.subr.bf16.mxu0 %v1669
    %5251 = vmatpush1.bf16.msra.mxu0 %v1668
    %5252 = vmatprep.subr.bf16.mxu0 %v1665
    %5253 = vmatpush1.bf16.msra.mxu0 %v1664
    %5254 = vmatprep.subr.bf16.mxu0 %v1725
    %5255 = vmatpush2.bf16.msra.mxu0 %v1724
    %5256 = vmatprep.subr.bf16.mxu0 %v1721
    %5257 = vmatpush2.bf16.msra.mxu0 %v1720
    %5258 = vmatprep.subr.bf16.mxu0 %v1717
    %5259 = vmatpush2.bf16.msra.mxu0 %v1716
    %5260 = vmatprep.subr.bf16.mxu0 %v1713
    %5261 = vmatpush2.bf16.msra.mxu0 %v1712
    %5262 = vmatprep.subr.bf16.mxu0 %v1709
    %5263 = vmatpush2.bf16.msra.mxu0 %v1708
    %5264 = vmatprep.subr.bf16.mxu0 %v1705
    %5265 = vmatpush2.bf16.msra.mxu0 %v1704
    %5266 = vmatprep.subr.bf16.mxu0 %v1701
    %5267 = vmatpush2.bf16.msra.mxu0 %v1700
    %5268 = vmatprep.subr.bf16.mxu0 %v1697
    %5269 = vmatpush2.bf16.msra.mxu0 %v1696
    %5270 = vmatprep.mubr.bf16.mxu0 %v5235
    %5271 = vmatmul.mubr.bf16.gmra.mxu0 %v5234
    %v5272 = vpop.f32.mrf.mxu0
    %v5273 = vadd.f32 0.0, %v5272
    %v5274 = vpop.f32.mrf.mxu0
    %v5275 = vadd.f32 0.0, %v5274
    %v5276 = vpop.f32.mrf.mxu0
    %v5277 = vpop.f32.mrf.mxu0
    %5278 = vdwg.mxu0
    %5279 = vmatprep.subr.bf16.mxu0 %v1695
    %5280 = vmatpush1.bf16.msra.mxu0 %v1694
    %5281 = vmatprep.subr.bf16.mxu0 %v1691
    %5282 = vmatpush1.bf16.msra.mxu0 %v1690
    %5283 = vmatprep.subr.bf16.mxu0 %v1687
    %5284 = vmatpush1.bf16.msra.mxu0 %v1686
    %5285 = vmatprep.subr.bf16.mxu0 %v1683
    %5286 = vmatpush1.bf16.msra.mxu0 %v1682
    %5287 = vmatprep.subr.bf16.mxu0 %v1679
    %5288 = vmatpush1.bf16.msra.mxu0 %v1678
    %5289 = vmatprep.subr.bf16.mxu0 %v1675
    %5290 = vmatpush1.bf16.msra.mxu0 %v1674
    %5291 = vmatprep.subr.bf16.mxu0 %v1671
    %5292 = vmatpush1.bf16.msra.mxu0 %v1670
    %5293 = vmatprep.subr.bf16.mxu0 %v1667
    %5294 = vmatpush1.bf16.msra.mxu0 %v1666
    %5295 = vmatprep.subr.bf16.mxu0 %v1727
    %5296 = vmatpush2.bf16.msra.mxu0 %v1726
    %5297 = vmatprep.subr.bf16.mxu0 %v1723
    %5298 = vmatpush2.bf16.msra.mxu0 %v1722
    %5299 = vmatprep.subr.bf16.mxu0 %v1719
    %5300 = vmatpush2.bf16.msra.mxu0 %v1718
    %5301 = vmatprep.subr.bf16.mxu0 %v1715
    %5302 = vmatpush2.bf16.msra.mxu0 %v1714
    %5303 = vmatprep.subr.bf16.mxu0 %v1711
    %5304 = vmatpush2.bf16.msra.mxu0 %v1710
    %5305 = vmatprep.subr.bf16.mxu0 %v1707
    %5306 = vmatpush2.bf16.msra.mxu0 %v1706
    %5307 = vmatprep.subr.bf16.mxu0 %v1703
    %5308 = vmatpush2.bf16.msra.mxu0 %v1702
    %5309 = vmatprep.subr.bf16.mxu0 %v1699
    %5310 = vmatpush2.bf16.msra.mxu0 %v1698
    %5311 = vmatprep.mubr.bf16.mxu0 %v5235
    %5312 = vmatmul.mubr.bf16.gmra.mxu0 %v5234
    %v5313 = vpop.f32.mrf.mxu0
    %v5314 = vadd.f32 0.0, %v5313
    %v5315 = vpop.f32.mrf.mxu0
    %v5316 = vadd.f32 0.0, %v5315
    %v5317 = vpop.f32.mrf.mxu0
    %v5318 = vpop.f32.mrf.mxu0
    %5319 = vdwg.mxu0
    %v5320 = vrot.slane %v5230, 2
    %v5321 = vrot.slane %v5231, 2
    %5324 = vmatprep.subr.bf16.mxu0 %v2401
    %5325 = vmatpush1.bf16.msra.mxu0 %v2400
    %5326 = vmatprep.subr.bf16.mxu0 %v2397
    %5327 = vmatpush1.bf16.msra.mxu0 %v2396
    %5328 = vmatprep.subr.bf16.mxu0 %v2393
    %5329 = vmatpush1.bf16.msra.mxu0 %v2392
    %5330 = vmatprep.subr.bf16.mxu0 %v2389
    %5331 = vmatpush1.bf16.msra.mxu0 %v2388
    %5332 = vmatprep.subr.bf16.mxu0 %v2385
    %5333 = vmatpush1.bf16.msra.mxu0 %v2384
    %5334 = vmatprep.subr.bf16.mxu0 %v2381
    %5335 = vmatpush1.bf16.msra.mxu0 %v2380
    %5336 = vmatprep.subr.bf16.mxu0 %v2377
    %5337 = vmatpush1.bf16.msra.mxu0 %v2376
    %5338 = vmatprep.subr.bf16.mxu0 %v2373
    %5339 = vmatpush1.bf16.msra.mxu0 %v2372
    %5340 = vmatprep.subr.bf16.mxu0 %v2433
    %5341 = vmatpush2.bf16.msra.mxu0 %v2432
    %5342 = vmatprep.subr.bf16.mxu0 %v2429
    %5343 = vmatpush2.bf16.msra.mxu0 %v2428
    %5344 = vmatprep.subr.bf16.mxu0 %v2425
    %5345 = vmatpush2.bf16.msra.mxu0 %v2424
    %5346 = vmatprep.subr.bf16.mxu0 %v2421
    %5347 = vmatpush2.bf16.msra.mxu0 %v2420
    %5348 = vmatprep.subr.bf16.mxu0 %v2417
    %5349 = vmatpush2.bf16.msra.mxu0 %v2416
    %5350 = vmatprep.subr.bf16.mxu0 %v2413
    %5351 = vmatpush2.bf16.msra.mxu0 %v2412
    %5352 = vmatprep.subr.bf16.mxu0 %v2409
    %5353 = vmatpush2.bf16.msra.mxu0 %v2408
    %5354 = vmatprep.subr.bf16.mxu0 %v2405
    %5355 = vmatpush2.bf16.msra.mxu0 %v2404
    %5356 = vmatprep.mubr.bf16.mxu0 %v5321
    %5357 = vmatmul.mubr.bf16.gmra.mxu0 %v5320
    %v5358 = vpop.f32.mrf.mxu0
    %v5359 = vadd.f32 0.0, %v5358
    %v5360 = vpop.f32.mrf.mxu0
    %v5361 = vadd.f32 0.0, %v5360
    %v5362 = vpop.f32.mrf.mxu0
    %v5363 = vpop.f32.mrf.mxu0
    %5364 = vdwg.mxu0
    %5365 = vmatprep.subr.bf16.mxu0 %v2403
    %5366 = vmatpush1.bf16.msra.mxu0 %v2402
    %5367 = vmatprep.subr.bf16.mxu0 %v2399
    %5368 = vmatpush1.bf16.msra.mxu0 %v2398
    %5369 = vmatprep.subr.bf16.mxu0 %v2395
    %5370 = vmatpush1.bf16.msra.mxu0 %v2394
    %5371 = vmatprep.subr.bf16.mxu0 %v2391
    %5372 = vmatpush1.bf16.msra.mxu0 %v2390
    %5373 = vmatprep.subr.bf16.mxu0 %v2387
    %5374 = vmatpush1.bf16.msra.mxu0 %v2386
    %5375 = vmatprep.subr.bf16.mxu0 %v2383
    %5376 = vmatpush1.bf16.msra.mxu0 %v2382
    %5377 = vmatprep.subr.bf16.mxu0 %v2379
    %5378 = vmatpush1.bf16.msra.mxu0 %v2378
    %5379 = vmatprep.subr.bf16.mxu0 %v2375
    %5380 = vmatpush1.bf16.msra.mxu0 %v2374
    %5381 = vmatprep.subr.bf16.mxu0 %v2435
    %5382 = vmatpush2.bf16.msra.mxu0 %v2434
    %5383 = vmatprep.subr.bf16.mxu0 %v2431
    %5384 = vmatpush2.bf16.msra.mxu0 %v2430
    %5385 = vmatprep.subr.bf16.mxu0 %v2427
    %5386 = vmatpush2.bf16.msra.mxu0 %v2426
    %5387 = vmatprep.subr.bf16.mxu0 %v2423
    %5388 = vmatpush2.bf16.msra.mxu0 %v2422
    %5389 = vmatprep.subr.bf16.mxu0 %v2419
    %5390 = vmatpush2.bf16.msra.mxu0 %v2418
    %5391 = vmatprep.subr.bf16.mxu0 %v2415
    %5392 = vmatpush2.bf16.msra.mxu0 %v2414
    %5393 = vmatprep.subr.bf16.mxu0 %v2411
    %5394 = vmatpush2.bf16.msra.mxu0 %v2410
    %5395 = vmatprep.subr.bf16.mxu0 %v2407
    %5396 = vmatpush2.bf16.msra.mxu0 %v2406
    %5397 = vmatprep.mubr.bf16.mxu0 %v5321
    %5398 = vmatmul.mubr.bf16.gmra.mxu0 %v5320
    %v5399 = vpop.f32.mrf.mxu0
    %v5400 = vadd.f32 0.0, %v5399
    %v5401 = vpop.f32.mrf.mxu0
    %v5402 = vadd.f32 0.0, %v5401
    %v5403 = vpop.f32.mrf.mxu0
    %v5404 = vpop.f32.mrf.mxu0
    %5405 = vdwg.mxu0
    %v5406 = vrot.slane %v5230, 3
    %v5407 = vrot.slane %v5231, 3
    %5410 = vmatprep.subr.bf16.mxu0 %v3211
    %5411 = vmatpush1.bf16.msra.mxu0 %v3210
    %5412 = vmatprep.subr.bf16.mxu0 %v3207
    %5413 = vmatpush1.bf16.msra.mxu0 %v3206
    %5414 = vmatprep.subr.bf16.mxu0 %v3203
    %5415 = vmatpush1.bf16.msra.mxu0 %v3202
    %5416 = vmatprep.subr.bf16.mxu0 %v3199
    %5417 = vmatpush1.bf16.msra.mxu0 %v3198
    %5418 = vmatprep.subr.bf16.mxu0 %v3195
    %5419 = vmatpush1.bf16.msra.mxu0 %v3194
    %5420 = vmatprep.subr.bf16.mxu0 %v3191
    %5421 = vmatpush1.bf16.msra.mxu0 %v3190
    %5422 = vmatprep.subr.bf16.mxu0 %v3187
    %5423 = vmatpush1.bf16.msra.mxu0 %v3186
    %5424 = vmatprep.subr.bf16.mxu0 %v3183
    %5425 = vmatpush1.bf16.msra.mxu0 %v3182
    %5426 = vmatprep.subr.bf16.mxu0 %v3243
    %5427 = vmatpush2.bf16.msra.mxu0 %v3242
    %5428 = vmatprep.subr.bf16.mxu0 %v3239
    %5429 = vmatpush2.bf16.msra.mxu0 %v3238
    %5430 = vmatprep.subr.bf16.mxu0 %v3235
    %5431 = vmatpush2.bf16.msra.mxu0 %v3234
    %5432 = vmatprep.subr.bf16.mxu0 %v3231
    %5433 = vmatpush2.bf16.msra.mxu0 %v3230
    %5434 = vmatprep.subr.bf16.mxu0 %v3227
    %5435 = vmatpush2.bf16.msra.mxu0 %v3226
    %5436 = vmatprep.subr.bf16.mxu0 %v3223
    %5437 = vmatpush2.bf16.msra.mxu0 %v3222
    %5438 = vmatprep.subr.bf16.mxu0 %v3219
    %5439 = vmatpush2.bf16.msra.mxu0 %v3218
    %5440 = vmatprep.subr.bf16.mxu0 %v3215
    %5441 = vmatpush2.bf16.msra.mxu0 %v3214
    %5442 = vmatprep.mubr.bf16.mxu0 %v5407
    %5443 = vmatmul.mubr.bf16.gmra.mxu0 %v5406
    %v5444 = vpop.f32.mrf.mxu0
    %v5445 = vadd.f32 0.0, %v5444
    %v5446 = vpop.f32.mrf.mxu0
    %v5447 = vadd.f32 0.0, %v5446
    %v5448 = vpop.f32.mrf.mxu0
    %v5449 = vpop.f32.mrf.mxu0
    %5450 = vdwg.mxu0
    %5451 = vmatprep.subr.bf16.mxu0 %v3213
    %5452 = vmatpush1.bf16.msra.mxu0 %v3212
    %5453 = vmatprep.subr.bf16.mxu0 %v3209
    %5454 = vmatpush1.bf16.msra.mxu0 %v3208
    %5455 = vmatprep.subr.bf16.mxu0 %v3205
    %5456 = vmatpush1.bf16.msra.mxu0 %v3204
    %5457 = vmatprep.subr.bf16.mxu0 %v3201
    %5458 = vmatpush1.bf16.msra.mxu0 %v3200
    %5459 = vmatprep.subr.bf16.mxu0 %v3197
    %5460 = vmatpush1.bf16.msra.mxu0 %v3196
    %5461 = vmatprep.subr.bf16.mxu0 %v3193
    %5462 = vmatpush1.bf16.msra.mxu0 %v3192
    %5463 = vmatprep.subr.bf16.mxu0 %v3189
    %5464 = vmatpush1.bf16.msra.mxu0 %v3188
    %5465 = vmatprep.subr.bf16.mxu0 %v3185
    %5466 = vmatpush1.bf16.msra.mxu0 %v3184
    %5467 = vmatprep.subr.bf16.mxu0 %v3245
    %5468 = vmatpush2.bf16.msra.mxu0 %v3244
    %5469 = vmatprep.subr.bf16.mxu0 %v3241
    %5470 = vmatpush2.bf16.msra.mxu0 %v3240
    %5471 = vmatprep.subr.bf16.mxu0 %v3237
    %5472 = vmatpush2.bf16.msra.mxu0 %v3236
    %5473 = vmatprep.subr.bf16.mxu0 %v3233
    %5474 = vmatpush2.bf16.msra.mxu0 %v3232
    %5475 = vmatprep.subr.bf16.mxu0 %v3229
    %5476 = vmatpush2.bf16.msra.mxu0 %v3228
    %5477 = vmatprep.subr.bf16.mxu0 %v3225
    %5478 = vmatpush2.bf16.msra.mxu0 %v3224
    %5479 = vmatprep.subr.bf16.mxu0 %v3221
    %5480 = vmatpush2.bf16.msra.mxu0 %v3220
    %5481 = vmatprep.subr.bf16.mxu0 %v3217
    %5482 = vmatpush2.bf16.msra.mxu0 %v3216
    %5483 = vmatprep.mubr.bf16.mxu0 %v5407
    %5484 = vmatmul.mubr.bf16.gmra.mxu0 %v5406
    %v5485 = vpop.f32.mrf.mxu0
    %v5486 = vadd.f32 0.0, %v5485
    %v5487 = vpop.f32.mrf.mxu0
    %v5488 = vadd.f32 0.0, %v5487
    %v5489 = vpop.f32.mrf.mxu0
    %v5490 = vpop.f32.mrf.mxu0
    %5491 = vdwg.mxu0
    %v5496 = vrot.slane %v5359, 6
    %v5497 = vrot.slane %v5361, 6
    %v5498 = vrot.slane %v5400, 6
    %v5499 = vrot.slane %v5402, 6
    %v5508 = vrot.slane %v5445, 4
    %v5509 = vrot.slane %v5447, 4
    %v5510 = vrot.slane %v5486, 4
    %v5511 = vrot.slane %v5488, 4
    %v5516 = vsel %vm973, %v5273, %v5496
    %v5517 = vsel %vm973, %v5275, %v5497
    %v5518 = vsel %vm973, %v5314, %v5498
    %v5519 = vsel %vm973, %v5316, %v5499
    %v5520 = vsel %vm978, %v5516, %v5508
    %v5521 = vsel %vm978, %v5517, %v5509
    %v5522 = vsel %vm978, %v5518, %v5510
    %v5523 = vsel %vm978, %v5519, %v5511
    %v5528 = vrot.slane %v984, 2
    %v5529 = vrot.slane %v985, 2
    %v5530 = vrot.slane %v986, 2
    %v5531 = vrot.slane %v987, 2
    %v5536 = vadd.f32 %v5520, %v5528
    %v5537 = vadd.f32 %v5521, %v5529
    %v5538 = vadd.f32 %v5522, %v5530
    %v5539 = vadd.f32 %v5523, %v5531
    %v5541 = vrot.slane %v5224, 2
    %v5543 = vsel %vm978, %v5541, %v5541
    %v5544 = vxor.u32 %v5536, 2147483648
    %v5545 = vxor.u32 %v5537, 2147483648
    %v5546 = vxor.u32 %v5538, 2147483648
    %v5547 = vxor.u32 %v5539, 2147483648
    %v5548 = vmul.f32 %v5544, 1.442695
    %v5549 = vpow.pop %v5548
    %v5550 = vmul.f32 %v5545, 1.442695
    %v5551 = vpow.pop %v5550
    %v5552 = vmul.f32 %v5546, 1.442695
    %v5553 = vpow.pop %v5552
    %v5554 = vmul.f32 %v5547, 1.442695
    %v5555 = vpow.pop %v5554
    %v5556 = vadd.f32 %v5549, 1.0
    %v5557 = vadd.f32 %v5551, 1.0
    %v5558 = vadd.f32 %v5553, 1.0
    %v5559 = vadd.f32 %v5555, 1.0
    %v5560 = vrcp.pop %v5556
    %v5561 = vmul.f32 1.0, %v5560
    %v5562 = vrcp.pop %v5557
    %v5563 = vmul.f32 1.0, %v5562
    %v5564 = vrcp.pop %v5558
    %v5565 = vmul.f32 1.0, %v5564
    %v5566 = vrcp.pop %v5559
    %v5567 = vmul.f32 1.0, %v5566
    %v5568 = vmul.f32 %v5565, 2.0
    %v5569 = vsub.f32 %v5568, 1.0
    %v5570 = vmul.f32 %v5563, %v5543
    %v5571 = vmul.f32 %v5561, %v5569
    %v5572 = vadd.f32 %v5570, %v5571
    %v5573 = vtanh.pop %v5572
    %v5574 = vmul.f32 %v5567, %v5573
    %v5576 = vrot.slane %v5574, 6
    %v5578 = vpack.c.bf16 %v5574, %v5574
    %v5579 = vpack.c.bf16 %v5576, %v5576
    %v5582 = vrot.slane %v5578, 1
    %v5583 = vrot.slane %v5579, 1
    %5586 = vmatprep.subr.bf16.mxu0 %v2401
    %5587 = vmatpush1.bf16.msra.mxu0 %v2400
    %5588 = vmatprep.subr.bf16.mxu0 %v2397
    %5589 = vmatpush1.bf16.msra.mxu0 %v2396
    %5590 = vmatprep.subr.bf16.mxu0 %v2393
    %5591 = vmatpush1.bf16.msra.mxu0 %v2392
    %5592 = vmatprep.subr.bf16.mxu0 %v2389
    %5593 = vmatpush1.bf16.msra.mxu0 %v2388
    %5594 = vmatprep.subr.bf16.mxu0 %v2385
    %5595 = vmatpush1.bf16.msra.mxu0 %v2384
    %5596 = vmatprep.subr.bf16.mxu0 %v2381
    %5597 = vmatpush1.bf16.msra.mxu0 %v2380
    %5598 = vmatprep.subr.bf16.mxu0 %v2377
    %5599 = vmatpush1.bf16.msra.mxu0 %v2376
    %5600 = vmatprep.subr.bf16.mxu0 %v2373
    %5601 = vmatpush1.bf16.msra.mxu0 %v2372
    %5602 = vmatprep.subr.bf16.mxu0 %v2433
    %5603 = vmatpush2.bf16.msra.mxu0 %v2432
    %5604 = vmatprep.subr.bf16.mxu0 %v2429
    %5605 = vmatpush2.bf16.msra.mxu0 %v2428
    %5606 = vmatprep.subr.bf16.mxu0 %v2425
    %5607 = vmatpush2.bf16.msra.mxu0 %v2424
    %5608 = vmatprep.subr.bf16.mxu0 %v2421
    %5609 = vmatpush2.bf16.msra.mxu0 %v2420
    %5610 = vmatprep.subr.bf16.mxu0 %v2417
    %5611 = vmatpush2.bf16.msra.mxu0 %v2416
    %5612 = vmatprep.subr.bf16.mxu0 %v2413
    %5613 = vmatpush2.bf16.msra.mxu0 %v2412
    %5614 = vmatprep.subr.bf16.mxu0 %v2409
    %5615 = vmatpush2.bf16.msra.mxu0 %v2408
    %5616 = vmatprep.subr.bf16.mxu0 %v2405
    %5617 = vmatpush2.bf16.msra.mxu0 %v2404
    %5618 = vmatprep.mubr.bf16.mxu0 %v5583
    %5619 = vmatmul.mubr.bf16.gmra.mxu0 %v5582
    %v5620 = vpop.f32.mrf.mxu0
    %v5621 = vadd.f32 0.0, %v5620
    %v5622 = vpop.f32.mrf.mxu0
    %v5623 = vadd.f32 0.0, %v5622
    %v5624 = vpop.f32.mrf.mxu0
    %v5625 = vpop.f32.mrf.mxu0
    %5626 = vdwg.mxu0
    %5627 = vmatprep.subr.bf16.mxu0 %v2403
    %5628 = vmatpush1.bf16.msra.mxu0 %v2402
    %5629 = vmatprep.subr.bf16.mxu0 %v2399
    %5630 = vmatpush1.bf16.msra.mxu0 %v2398
    %5631 = vmatprep.subr.bf16.mxu0 %v2395
    %5632 = vmatpush1.bf16.msra.mxu0 %v2394
    %5633 = vmatprep.subr.bf16.mxu0 %v2391
    %5634 = vmatpush1.bf16.msra.mxu0 %v2390
    %5635 = vmatprep.subr.bf16.mxu0 %v2387
    %5636 = vmatpush1.bf16.msra.mxu0 %v2386
    %5637 = vmatprep.subr.bf16.mxu0 %v2383
    %5638 = vmatpush1.bf16.msra.mxu0 %v2382
    %5639 = vmatprep.subr.bf16.mxu0 %v2379
    %5640 = vmatpush1.bf16.msra.mxu0 %v2378
    %5641 = vmatprep.subr.bf16.mxu0 %v2375
    %5642 = vmatpush1.bf16.msra.mxu0 %v2374
    %5643 = vmatprep.subr.bf16.mxu0 %v2435
    %5644 = vmatpush2.bf16.msra.mxu0 %v2434
    %5645 = vmatprep.subr.bf16.mxu0 %v2431
    %5646 = vmatpush2.bf16.msra.mxu0 %v2430
    %5647 = vmatprep.subr.bf16.mxu0 %v2427
    %5648 = vmatpush2.bf16.msra.mxu0 %v2426
    %5649 = vmatprep.subr.bf16.mxu0 %v2423
    %5650 = vmatpush2.bf16.msra.mxu0 %v2422
    %5651 = vmatprep.subr.bf16.mxu0 %v2419
    %5652 = vmatpush2.bf16.msra.mxu0 %v2418
    %5653 = vmatprep.subr.bf16.mxu0 %v2415
    %5654 = vmatpush2.bf16.msra.mxu0 %v2414
    %5655 = vmatprep.subr.bf16.mxu0 %v2411
    %5656 = vmatpush2.bf16.msra.mxu0 %v2410
    %5657 = vmatprep.subr.bf16.mxu0 %v2407
    %5658 = vmatpush2.bf16.msra.mxu0 %v2406
    %5659 = vmatprep.mubr.bf16.mxu0 %v5583
    %5660 = vmatmul.mubr.bf16.gmra.mxu0 %v5582
    %v5661 = vpop.f32.mrf.mxu0
    %v5662 = vadd.f32 0.0, %v5661
    %v5663 = vpop.f32.mrf.mxu0
    %v5664 = vadd.f32 0.0, %v5663
    %v5665 = vpop.f32.mrf.mxu0
    %v5666 = vpop.f32.mrf.mxu0
    %5667 = vdwg.mxu0
    %v5668 = vrot.slane %v5578, 2
    %v5669 = vrot.slane %v5579, 2
    %5672 = vmatprep.subr.bf16.mxu0 %v3211
    %5673 = vmatpush1.bf16.msra.mxu0 %v3210
    %5674 = vmatprep.subr.bf16.mxu0 %v3207
    %5675 = vmatpush1.bf16.msra.mxu0 %v3206
    %5676 = vmatprep.subr.bf16.mxu0 %v3203
    %5677 = vmatpush1.bf16.msra.mxu0 %v3202
    %5678 = vmatprep.subr.bf16.mxu0 %v3199
    %5679 = vmatpush1.bf16.msra.mxu0 %v3198
    %5680 = vmatprep.subr.bf16.mxu0 %v3195
    %5681 = vmatpush1.bf16.msra.mxu0 %v3194
    %5682 = vmatprep.subr.bf16.mxu0 %v3191
    %5683 = vmatpush1.bf16.msra.mxu0 %v3190
    %5684 = vmatprep.subr.bf16.mxu0 %v3187
    %5685 = vmatpush1.bf16.msra.mxu0 %v3186
    %5686 = vmatprep.subr.bf16.mxu0 %v3183
    %5687 = vmatpush1.bf16.msra.mxu0 %v3182
    %5688 = vmatprep.subr.bf16.mxu0 %v3243
    %5689 = vmatpush2.bf16.msra.mxu0 %v3242
    %5690 = vmatprep.subr.bf16.mxu0 %v3239
    %5691 = vmatpush2.bf16.msra.mxu0 %v3238
    %5692 = vmatprep.subr.bf16.mxu0 %v3235
    %5693 = vmatpush2.bf16.msra.mxu0 %v3234
    %5694 = vmatprep.subr.bf16.mxu0 %v3231
    %5695 = vmatpush2.bf16.msra.mxu0 %v3230
    %5696 = vmatprep.subr.bf16.mxu0 %v3227
    %5697 = vmatpush2.bf16.msra.mxu0 %v3226
    %5698 = vmatprep.subr.bf16.mxu0 %v3223
    %5699 = vmatpush2.bf16.msra.mxu0 %v3222
    %5700 = vmatprep.subr.bf16.mxu0 %v3219
    %5701 = vmatpush2.bf16.msra.mxu0 %v3218
    %5702 = vmatprep.subr.bf16.mxu0 %v3215
    %5703 = vmatpush2.bf16.msra.mxu0 %v3214
    %5704 = vmatprep.mubr.bf16.mxu0 %v5669
    %5705 = vmatmul.mubr.bf16.gmra.mxu0 %v5668
    %v5706 = vpop.f32.mrf.mxu0
    %v5707 = vadd.f32 0.0, %v5706
    %v5708 = vpop.f32.mrf.mxu0
    %v5709 = vadd.f32 0.0, %v5708
    %v5710 = vpop.f32.mrf.mxu0
    %v5711 = vpop.f32.mrf.mxu0
    %5712 = vdwg.mxu0
    %5713 = vmatprep.subr.bf16.mxu0 %v3213
    %5714 = vmatpush1.bf16.msra.mxu0 %v3212
    %5715 = vmatprep.subr.bf16.mxu0 %v3209
    %5716 = vmatpush1.bf16.msra.mxu0 %v3208
    %5717 = vmatprep.subr.bf16.mxu0 %v3205
    %5718 = vmatpush1.bf16.msra.mxu0 %v3204
    %5719 = vmatprep.subr.bf16.mxu0 %v3201
    %5720 = vmatpush1.bf16.msra.mxu0 %v3200
    %5721 = vmatprep.subr.bf16.mxu0 %v3197
    %5722 = vmatpush1.bf16.msra.mxu0 %v3196
    %5723 = vmatprep.subr.bf16.mxu0 %v3193
    %5724 = vmatpush1.bf16.msra.mxu0 %v3192
    %5725 = vmatprep.subr.bf16.mxu0 %v3189
    %5726 = vmatpush1.bf16.msra.mxu0 %v3188
    %5727 = vmatprep.subr.bf16.mxu0 %v3185
    %5728 = vmatpush1.bf16.msra.mxu0 %v3184
    %5729 = vmatprep.subr.bf16.mxu0 %v3245
    %5730 = vmatpush2.bf16.msra.mxu0 %v3244
    %5731 = vmatprep.subr.bf16.mxu0 %v3241
    %5732 = vmatpush2.bf16.msra.mxu0 %v3240
    %5733 = vmatprep.subr.bf16.mxu0 %v3237
    %5734 = vmatpush2.bf16.msra.mxu0 %v3236
    %5735 = vmatprep.subr.bf16.mxu0 %v3233
    %5736 = vmatpush2.bf16.msra.mxu0 %v3232
    %5737 = vmatprep.subr.bf16.mxu0 %v3229
    %5738 = vmatpush2.bf16.msra.mxu0 %v3228
    %5739 = vmatprep.subr.bf16.mxu0 %v3225
    %5740 = vmatpush2.bf16.msra.mxu0 %v3224
    %5741 = vmatprep.subr.bf16.mxu0 %v3221
    %5742 = vmatpush2.bf16.msra.mxu0 %v3220
    %5743 = vmatprep.subr.bf16.mxu0 %v3217
    %5744 = vmatpush2.bf16.msra.mxu0 %v3216
    %5745 = vmatprep.mubr.bf16.mxu0 %v5669
    %5746 = vmatmul.mubr.bf16.gmra.mxu0 %v5668
    %v5747 = vpop.f32.mrf.mxu0
    %v5748 = vadd.f32 0.0, %v5747
    %v5749 = vpop.f32.mrf.mxu0
    %v5750 = vadd.f32 0.0, %v5749
    %v5751 = vpop.f32.mrf.mxu0
    %v5752 = vpop.f32.mrf.mxu0
    %5753 = vdwg.mxu0
    %v5758 = vrot.slane %v5707, 6
    %v5759 = vrot.slane %v5709, 6
    %v5760 = vrot.slane %v5748, 6
    %v5761 = vrot.slane %v5750, 6
    %v5766 = vsel %vm973, %v5621, %v5758
    %v5767 = vsel %vm973, %v5623, %v5759
    %v5768 = vsel %vm973, %v5662, %v5760
    %v5769 = vsel %vm973, %v5664, %v5761
    %v5770 = vrot.slane %v984, 4
    %v5771 = vrot.slane %v985, 4
    %v5772 = vrot.slane %v986, 4
    %v5773 = vrot.slane %v987, 4
    %v5778 = vadd.f32 %v5766, %v5770
    %v5779 = vadd.f32 %v5767, %v5771
    %v5780 = vadd.f32 %v5768, %v5772
    %v5781 = vadd.f32 %v5769, %v5773
    %v5783 = vrot.slane %v5572, 2
    %v5785 = vxor.u32 %v5778, 2147483648
    %v5786 = vxor.u32 %v5779, 2147483648
    %v5787 = vxor.u32 %v5780, 2147483648
    %v5788 = vxor.u32 %v5781, 2147483648
    %v5789 = vmul.f32 %v5785, 1.442695
    %v5790 = vpow.pop %v5789
    %v5791 = vmul.f32 %v5786, 1.442695
    %v5792 = vpow.pop %v5791
    %v5793 = vmul.f32 %v5787, 1.442695
    %v5794 = vpow.pop %v5793
    %v5795 = vmul.f32 %v5788, 1.442695
    %v5796 = vpow.pop %v5795
    %v5797 = vadd.f32 %v5790, 1.0
    %v5798 = vadd.f32 %v5792, 1.0
    %v5799 = vadd.f32 %v5794, 1.0
    %v5800 = vadd.f32 %v5796, 1.0
    %v5801 = vrcp.pop %v5797
    %v5802 = vmul.f32 1.0, %v5801
    %v5803 = vrcp.pop %v5798
    %v5804 = vmul.f32 1.0, %v5803
    %v5805 = vrcp.pop %v5799
    %v5806 = vmul.f32 1.0, %v5805
    %v5807 = vrcp.pop %v5800
    %v5808 = vmul.f32 1.0, %v5807
    %v5809 = vmul.f32 %v5806, 2.0
    %v5810 = vsub.f32 %v5809, 1.0
    %v5811 = vmul.f32 %v5804, %v5783
    %v5812 = vmul.f32 %v5802, %v5810
    %v5813 = vadd.f32 %v5811, %v5812
    %v5814 = vtanh.pop %v5813
    %v5815 = vmul.f32 %v5808, %v5814
    %v5817 = vrot.slane %v5815, 6
    %v5819 = vpack.c.bf16 %v5815, %v5815
    %v5820 = vpack.c.bf16 %v5817, %v5817
    %v5823 = vrot.slane %v5819, 1
    %v5824 = vrot.slane %v5820, 1
    %v5827 = vrot.slane %v984, 6
    %v5828 = vrot.slane %v985, 6
    %v5829 = vrot.slane %v986, 6
    %v5830 = vrot.slane %v987, 6
    %5835 = vmatprep.subr.bf16.mxu0 %v3211
    %5836 = vmatpush1.bf16.msra.mxu0 %v3210
    %5837 = vmatprep.subr.bf16.mxu0 %v3207
    %5838 = vmatpush1.bf16.msra.mxu0 %v3206
    %5839 = vmatprep.subr.bf16.mxu0 %v3203
    %5840 = vmatpush1.bf16.msra.mxu0 %v3202
    %5841 = vmatprep.subr.bf16.mxu0 %v3199
    %5842 = vmatpush1.bf16.msra.mxu0 %v3198
    %5843 = vmatprep.subr.bf16.mxu0 %v3195
    %5844 = vmatpush1.bf16.msra.mxu0 %v3194
    %5845 = vmatprep.subr.bf16.mxu0 %v3191
    %5846 = vmatpush1.bf16.msra.mxu0 %v3190
    %5847 = vmatprep.subr.bf16.mxu0 %v3187
    %5848 = vmatpush1.bf16.msra.mxu0 %v3186
    %5849 = vmatprep.subr.bf16.mxu0 %v3183
    %5850 = vmatpush1.bf16.msra.mxu0 %v3182
    %5851 = vmatprep.subr.bf16.mxu0 %v3243
    %5852 = vmatpush2.bf16.msra.mxu0 %v3242
    %5853 = vmatprep.subr.bf16.mxu0 %v3239
    %5854 = vmatpush2.bf16.msra.mxu0 %v3238
    %5855 = vmatprep.subr.bf16.mxu0 %v3235
    %5856 = vmatpush2.bf16.msra.mxu0 %v3234
    %5857 = vmatprep.subr.bf16.mxu0 %v3231
    %5858 = vmatpush2.bf16.msra.mxu0 %v3230
    %5859 = vmatprep.subr.bf16.mxu0 %v3227
    %5860 = vmatpush2.bf16.msra.mxu0 %v3226
    %5861 = vmatprep.subr.bf16.mxu0 %v3223
    %5862 = vmatpush2.bf16.msra.mxu0 %v3222
    %5863 = vmatprep.subr.bf16.mxu0 %v3219
    %5864 = vmatpush2.bf16.msra.mxu0 %v3218
    %5865 = vmatprep.subr.bf16.mxu0 %v3215
    %5866 = vmatpush2.bf16.msra.mxu0 %v3214
    %5867 = vmatprep.mubr.bf16.mxu0 %v5824
    %5868 = vmatmul.mubr.bf16.gmra.mxu0 %v5823
    %v5869 = vpop.f32.mrf.mxu0
    %v5870 = vadd.f32 %v5827, %v5869
    %v5871 = vpop.f32.mrf.mxu0
    %v5872 = vadd.f32 %v5828, %v5871
    %v5873 = vpop.f32.mrf.mxu0
    %v5874 = vpop.f32.mrf.mxu0
    %5875 = vdwg.mxu0
    %5876 = vmatprep.subr.bf16.mxu0 %v3213
    %5877 = vmatpush1.bf16.msra.mxu0 %v3212
    %5878 = vmatprep.subr.bf16.mxu0 %v3209
    %5879 = vmatpush1.bf16.msra.mxu0 %v3208
    %5880 = vmatprep.subr.bf16.mxu0 %v3205
    %5881 = vmatpush1.bf16.msra.mxu0 %v3204
    %5882 = vmatprep.subr.bf16.mxu0 %v3201
    %5883 = vmatpush1.bf16.msra.mxu0 %v3200
    %5884 = vmatprep.subr.bf16.mxu0 %v3197
    %5885 = vmatpush1.bf16.msra.mxu0 %v3196
    %5886 = vmatprep.subr.bf16.mxu0 %v3193
    %5887 = vmatpush1.bf16.msra.mxu0 %v3192
    %5888 = vmatprep.subr.bf16.mxu0 %v3189
    %5889 = vmatpush1.bf16.msra.mxu0 %v3188
    %5890 = vmatprep.subr.bf16.mxu0 %v3185
    %5891 = vmatpush1.bf16.msra.mxu0 %v3184
    %5892 = vmatprep.subr.bf16.mxu0 %v3245
    %5893 = vmatpush2.bf16.msra.mxu0 %v3244
    %5894 = vmatprep.subr.bf16.mxu0 %v3241
    %5895 = vmatpush2.bf16.msra.mxu0 %v3240
    %5896 = vmatprep.subr.bf16.mxu0 %v3237
    %5897 = vmatpush2.bf16.msra.mxu0 %v3236
    %5898 = vmatprep.subr.bf16.mxu0 %v3233
    %5899 = vmatpush2.bf16.msra.mxu0 %v3232
    %5900 = vmatprep.subr.bf16.mxu0 %v3229
    %5901 = vmatpush2.bf16.msra.mxu0 %v3228
    %5902 = vmatprep.subr.bf16.mxu0 %v3225
    %5903 = vmatpush2.bf16.msra.mxu0 %v3224
    %5904 = vmatprep.subr.bf16.mxu0 %v3221
    %5905 = vmatpush2.bf16.msra.mxu0 %v3220
    %5906 = vmatprep.subr.bf16.mxu0 %v3217
    %5907 = vmatpush2.bf16.msra.mxu0 %v3216
    %5908 = vmatprep.mubr.bf16.mxu0 %v5824
    %5909 = vmatmul.mubr.bf16.gmra.mxu0 %v5823
    %v5910 = vpop.f32.mrf.mxu0
    %v5911 = vadd.f32 %v5829, %v5910
    %v5912 = vpop.f32.mrf.mxu0
    %v5913 = vadd.f32 %v5830, %v5912
    %v5914 = vpop.f32.mrf.mxu0
    %v5915 = vpop.f32.mrf.mxu0
    %5916 = vdwg.mxu0
    %v5917 = vxor.u32 %v5870, 2147483648
    %v5918 = vxor.u32 %v5872, 2147483648
    %v5919 = vxor.u32 %v5911, 2147483648
    %v5920 = vxor.u32 %v5913, 2147483648
    %v5921 = vmul.f32 %v5917, 1.442695
    %v5922 = vpow.pop %v5921
    %v5923 = vmul.f32 %v5918, 1.442695
    %v5924 = vpow.pop %v5923
    %v5925 = vmul.f32 %v5919, 1.442695
    %v5926 = vpow.pop %v5925
    %v5927 = vmul.f32 %v5920, 1.442695
    %v5928 = vpow.pop %v5927
    %v5929 = vadd.f32 %v5922, 1.0
    %v5930 = vadd.f32 %v5924, 1.0
    %v5931 = vadd.f32 %v5926, 1.0
    %v5932 = vadd.f32 %v5928, 1.0
    %v5933 = vrcp.pop %v5929
    %v5934 = vmul.f32 1.0, %v5933
    %v5935 = vrcp.pop %v5930
    %v5936 = vmul.f32 1.0, %v5935
    %v5937 = vrcp.pop %v5931
    %v5938 = vmul.f32 1.0, %v5937
    %v5939 = vrcp.pop %v5932
    %v5940 = vmul.f32 1.0, %v5939
    %v5941 = vmul.f32 %v5938, 2.0
    %v5942 = vsub.f32 %v5941, 1.0
    %v5944 = vrot.slane %v5813, 2
    %v5946 = vmul.f32 %v5936, %v5944
    %v5947 = vmul.f32 %v5934, %v5942
    %v5948 = vadd.f32 %v5946, %v5947
    %v5949 = vtanh.pop %v5948
    %v5950 = vmul.f32 %v5940, %v5949
    %5951 = vst [vmem:[#allocation12] sm:$0x3] %v5226
    %5952 = vst [vmem:[#allocation13] sm:$0x3] %v5224
    %s5953 = scalar_lea.vmem [#allocation12], 2
    %5954 = vst [vmem:[%s5953] sm:$0x3] %v5574
    %s5955 = scalar_lea.vmem [#allocation13], 2
    %5956 = vst [vmem:[%s5955] sm:$0x3] %v5572
    %s5957 = scalar_lea.vmem [#allocation12], 4
    %5958 = vst [vmem:[%s5957] sm:$0x3] %v5815
    %s5959 = scalar_lea.vmem [#allocation13], 4
    %5960 = vst [vmem:[%s5959] sm:$0x3] %v5813
    %s5961 = scalar_lea.vmem [#allocation12], 6
    %5962 = vst [vmem:[%s5961] sm:$0x3] %v5950
    %s5963 = scalar_lea.vmem [#allocation13], 6
    %5964 = vst [vmem:[%s5963] sm:$0x3] %v5948
    %v5965 = vld [vmem:[%s9] sm:$0x1]
    %v5967 = vlaneseq
    %v5968 = vshrl.u32 %v5967, 7
    %v5969 = vsub.s32 0, %v5968
    %v5970 = vrot.slane %v5965, %v5969
    %v5972 = vmul.f32 %v5950, %v5970
    %vm5973 = vcmask 1041409
    %v5974 = vsel %vm5973, %v5972, 0.0
    %5975 = vadd.xlane.f32.xlu0 %v5974
    %v5976 = vpop.xlane.xlu0 %5975
    %v5977 = vld [vmem:[#allocation2] sm:$0x1]
    %v5979 = vlaneseq
    %v5980 = vshrl.u32 %v5979, 7
    %v5981 = vsub.s32 0, %v5980
    %v5982 = vrot.slane %v5977, %v5981
    %v5984 = vadd.f32 %v5976, %v5982
    %v5985 = vxor.u32 %v5984, 2147483648
    %v5986 = vmul.f32 %v5985, 1.442695
    %v5987 = vpow.pop %v5986
    %v5988 = vadd.f32 %v5987, 1.0
    %v5989 = vrcp.pop %v5988
    %v5990 = vmul.f32 1.0, %v5989
    %vm5991 = vcmask 1025
    %5992 = vst.msk [vmem:[#allocation15 - $0x1] sm:$0x2] %vm5991, %v5990
    // Predicated region
    $region66: #{lstm_forward.1} parent=1 // pred_check
      _
    $region67: #{lstm_forward.1} parent=1 // pred_check_branch
      %5994 = sbr.rel (0) target = $region69
    $region68: #{lstm_forward.1} parent=1 // pred_region
      %s5996 = ssub.s32 128, 128
      %5997 = vsyncadd [#allocation5], %s5996
      %s5998 = sshll.u32 [#allocation12], 4
      %s5999 = int_to_ptr.vmem [resolvable:$true] %s5998
      %6004 = dma.vmem_to_hbm [thread:$0]  %s5999, 128, %s11, [#allocation5], 32, 32, 2
    $region69: #{lstm_forward.1} parent=1 // pred_fallthru
      _
    // Predicated region
    $region70: #{lstm_forward.1} parent=1 // pred_check
      _
    $region71: #{lstm_forward.1} parent=1 // pred_check_branch
      %6006 = sbr.rel (0) target = $region73
    $region72: #{lstm_forward.1} parent=1 // pred_region
      %s6008 = ssub.s32 128, 128
      %6009 = vsyncadd [#allocation14], %s6008
      %s6010 = sshll.u32 [#allocation13], 4
      %s6011 = int_to_ptr.vmem [resolvable:$true] %s6010
      %6016 = dma.vmem_to_hbm [thread:$0]  %s6011, 128, %s12, [#allocation14], 32, 32, 2
    $region73: #{lstm_forward.1} parent=1 // pred_fallthru
      _
    // Predicated region
    $region74: #{lstm_forward.1} parent=1 // pred_check
      _
    $region75: #{lstm_forward.1} parent=1 // pred_check_branch
      %6018 = sbr.rel (0) target = $region77
    $region76: #{lstm_forward.1} parent=1 // pred_region
      %s6020 = ssub.s32 16, 16
      %6021 = vsyncadd [#allocation14], %s6020
      %s6023 = sshll.u32 [#allocation15], 4
      %s6024 = int_to_ptr.vmem [resolvable:$true] %s6023
      %6026 = dma.vmem_to_hbm [thread:$0]  %s6024, 16, %s13, [#allocation14]
    $region77: #{lstm_forward.1} parent=1 // pred_fallthru
      _
    // Predicated region
    $region78: #{lstm_forward.1} parent=1 // pred_check
      _
    $region79: #{lstm_forward.1} parent=1 // pred_check_branch
      %6028 = sbr.rel (0) target = $region81
    $region80: #{lstm_forward.1} parent=1 // pred_region
      %6029 = dma.done [#allocation5], 128
    $region81: #{lstm_forward.1} parent=1 // pred_fallthru
      _
    // Predicated region
    $region82: #{lstm_forward.1} parent=1 // pred_check
      _
    $region83: #{lstm_forward.1} parent=1 // pred_check_branch
      %6031 = sbr.rel (0) target = $region85
    $region84: #{lstm_forward.1} parent=1 // pred_region
      %6032 = dma.done [#allocation14], 128
    $region85: #{lstm_forward.1} parent=1 // pred_fallthru
      _
    // Predicated region
    $region86: #{lstm_forward.1} parent=1 // pred_check
      _
    $region87: #{lstm_forward.1} parent=1 // pred_check_branch
      %6034 = sbr.rel (0) target = $region89
    $region88: #{lstm_forward.1} parent=1 // pred_region
      %6035 = dma.done [#allocation14], 16
    $region89: #{lstm_forward.1} parent=1 // pred_fallthru
      _
    %6036 = vsyncpa [#allocation4], 1
    %6037 = vsyncpa [#allocation7], 1
    %6038 = vsyncpa [#allocation10], 1
    %6039 = vsyncpa [#allocation5], 1
    %6040 = vsyncpa [#allocation14], 1

</llo_original>
